<compile_context>
chip_gen: v5e
topology: v5e:2x2
jax: 0.10.0
libtpu: 0.0.40
codegen_flags: <defaults>
</compile_context>

<pallas_src>
import jax
import jax.numpy as jnp
from jax.experimental import pallas as pl
from jax.experimental.pallas import tpu as pltpu

C_IN, H, W = 3, 6, 7                 # Connect-Four: 3 planes, 6 rows, 7 columns
KH = KW = 2
C_OUT = 128                          # conv1 output channels
OH, OW = H - KH + 1, W - KW + 1      # 5, 6
S_REAL = OH * OW                     # 30 spatial positions (no padded positions computed)
K_TAPS = C_IN * KH * KW              # 12 conv taps
K_SUB = 16                           # taps padded to a bf16 sublane tile (12 -> 16)
HID = 64                             # fc hidden width (PyTorch)
HID_PAD = 128                        # lane-dense padded hidden width
B_TILE = 128                         # boards per grid step (fills the MXU board dim)


def dqn_kernel(pT_ref, wcT_ref, bcT_ref, w1T_ref, b1T_ref, w2T_ref, b2T_ref,
               woT_ref, boT_ref, outT_ref):
    """Everything is (features, boards) transposed; boards live on lanes."""
    nb = outT_ref.shape[2]                       # boards in this invocation (static)
    wcT = wcT_ref[...]                           # (128, 16) bf16
    bcT = bcT_ref[...]                           # (128, 1)  f32

    # conv + fc1 fused: per spatial position, one tiny conv matmul feeds one (128,128)
    # fc1 accumulation matmul.  No conv activation is ever materialized in VMEM.
    accT = jnp.zeros((HID_PAD, nb), jnp.float32)
    for s in range(S_REAL):
        pT_s = pT_ref[0, s]                      # (16, nb) bf16 patch taps for position s
        convT = jnp.dot(wcT, pT_s, preferred_element_type=jnp.float32)      # (128, nb)
        convT = jnp.maximum(convT + bcT, 0.0)
        accT = accT + jnp.dot(w1T_ref[s], convT.astype(jnp.bfloat16),
                              preferred_element_type=jnp.float32)

    h1T = jnp.maximum(accT + b1T_ref[...], 0.0)                              # (128, nb)
    h2T = jnp.dot(w2T_ref[...], h1T.astype(jnp.bfloat16),
                  preferred_element_type=jnp.float32)
    h2T = jnp.maximum(h2T + b2T_ref[...], 0.0)
    oT = jnp.dot(woT_ref[...], h2T.astype(jnp.bfloat16),
                 preferred_element_type=jnp.float32)
    outT_ref[0] = oT + boT_ref[...]                                          # (oc_pad, nb)


def _im2col(x):
    """x: (B, 3, 6, 7) f32 -> (B, 30, 12) patches; tap index = c*4 + dh*2 + dw."""
    b = x.shape[0]
    cols = [x[:, :, dh:dh + OH, dw:dw + OW] for dh in range(KH) for dw in range(KW)]
    p = jnp.stack(cols, axis=-1)                 # (B, C, OH, OW, 4), last idx = dh*2+dw
    p = p.transpose(0, 2, 3, 1, 4)               # (B, OH, OW, C, 4)
    return p.reshape(b, S_REAL, K_TAPS)


def _relayout_params(params, output_channels):
    conv_w, conv_b, fc1_w, fc1_b, fc2_w, fc2_b, out_w, out_b = params
    oc = max(output_channels, 1)
    oc_pad = ((oc + 127) // 128) * 128

    # conv weight (128,3,2,2) -> (128, 12) rows=out-channel, cols=tap; zero-pad taps to 16
    wcT = jnp.zeros((C_OUT, K_SUB), jnp.float32)
    wcT = wcT.at[:, :K_TAPS].set(conv_w.reshape(C_OUT, K_TAPS)).astype(jnp.bfloat16)
    bcT = conv_b.reshape(C_OUT, 1).astype(jnp.float32)

    # fc1: PyTorch flat index = c*30 + s  ->  w1T[s, j, c]  (per-position (128,128) slabs)
    w1t = fc1_w.reshape(HID, C_OUT, S_REAL).transpose(2, 0, 1)       # (30, 64, 128)
    w1T = jnp.zeros((S_REAL, HID_PAD, C_OUT), jnp.float32).at[:, :HID, :].set(w1t)
    w1T = w1T.astype(jnp.bfloat16)
    b1T = jnp.zeros((HID_PAD, 1), jnp.float32).at[:HID, 0].set(fc1_b)

    # transposed formulation needs W as (out, in) -- exactly PyTorch Linear layout.
    w2T = jnp.zeros((HID_PAD, HID_PAD), jnp.float32).at[:HID, :HID].set(fc2_w)
    w2T = w2T.astype(jnp.bfloat16)
    b2T = jnp.zeros((HID_PAD, 1), jnp.float32).at[:HID, 0].set(fc2_b)

    woT = jnp.zeros((oc_pad, HID_PAD), jnp.float32).at[:oc, :HID].set(out_w)
    woT = woT.astype(jnp.bfloat16)
    boT = jnp.zeros((oc_pad, 1), jnp.float32).at[:oc, 0].set(out_b)
    return (wcT, bcT, w1T, b1T, w2T, b2T, woT, boT), oc_pad


def _const(shape):
    return pl.BlockSpec(shape, lambda i: (0,) * len(shape))


def dqn_forward(x, params, output_channels):
    x = x.astype(jnp.float32)                    # matches x.type(torch.float32)
    if x.ndim == 3:
        x = x[None]                              # PyTorch's x.unsqueeze(0)
    B = x.shape[0]

    weights, oc_pad = _relayout_params(params, output_channels)
    wcT, bcT, w1T, b1T, w2T, b2T, woT, boT = weights
    p = _im2col(x).astype(jnp.bfloat16)          # (B, 30, 12) bf16 (halves the HBM stream)

    if B > B_TILE:
        # ---- batched path: 128 boards per grid step; batch axis "parallel" so a
        # multi-TensorCore chip (v7x) splits the steps.  (For best v7x balance keep an
        # even number of tiles; correctness does not depend on it.)
        nt = (B + B_TILE - 1) // B_TILE
        nb = B_TILE
        bp = nt * B_TILE
        p_pad = jnp.zeros((bp, S_REAL, K_TAPS), jnp.bfloat16).at[:B].set(p)
        # (nt, S_REAL, K_SUB, B_TILE): taps on sublanes, boards on lanes, spatial on a
        # leading axis so the kernel slices per position without any in-vreg lane slicing.
        slab = jnp.zeros((nt, S_REAL, K_SUB, B_TILE), jnp.bfloat16)
        slab = slab.at[:, :, :K_TAPS, :].set(
            p_pad.reshape(nt, B_TILE, S_REAL, K_TAPS).transpose(0, 2, 3, 1))
        call_kwargs = dict(
            grid=(nt,),
            in_specs=[
                pl.BlockSpec((1, S_REAL, K_SUB, B_TILE), lambda i: (i, 0, 0, 0)),
                _const(wcT.shape), _const(bcT.shape),
                _const(w1T.shape), _const(b1T.shape),
                _const(w2T.shape), _const(b2T.shape),
                _const(woT.shape), _const(boT.shape),
            ],
            out_specs=pl.BlockSpec((1, oc_pad, B_TILE), lambda i: (i, 0, 0)),
        )
        dim_sem = ("parallel",)
    else:
        # ---- small-batch path: one grid-less invocation, everything resident in VMEM.
        nt, nb, bp = 1, B, B
        slab = jnp.zeros((1, S_REAL, K_SUB, nb), jnp.bfloat16)
        slab = slab.at[0, :, :K_TAPS, :].set(p.transpose(1, 2, 0))
        vmem = pl.BlockSpec(memory_space=pltpu.MemorySpace.VMEM)
        call_kwargs = dict(in_specs=[vmem] * 9, out_specs=vmem)
        dim_sem = None

    # VMEM budget (gridded path, default double-buffering, per TensorCore):
    #   weights  2 * (w1T 0.94 MiB + w2T/woT 64 KiB + wcT 4 KiB + biases ~0.25 MiB) ~ 2.6 MiB
    #   patches  2 * 120 KiB ~ 0.24 MiB     output 2 * 64 KiB ~ 0.13 MiB
    #   live accumulator/temps < 0.5 MiB    total ~ 3.5 MiB  << 16 MiB (fits v5e/v6e/v7x)
    compiler_params = pltpu.CompilerParams(
        dimension_semantics=dim_sem, vmem_limit_bytes=16 * 1024 * 1024)

    oc = max(output_channels, 1)
    flops = 2 * bp * (S_REAL * (K_TAPS * C_OUT + C_OUT * HID) + HID * HID + HID * oc)
    weight_bytes = sum(int(a.size) * a.dtype.itemsize for a in weights)
    bytes_accessed = int(slab.size) * 2 + weight_bytes + bp * oc_pad * 4
    cost = pl.CostEstimate(flops=int(flops), transcendentals=0,
                           bytes_accessed=int(bytes_accessed))

    outT = pl.pallas_call(
        dqn_kernel,
        out_shape=jax.ShapeDtypeStruct((nt, oc_pad, nb), jnp.float32),
        compiler_params=compiler_params,
        cost_estimate=cost,
        **call_kwargs,
    )(slab, wcT, bcT, w1T, b1T, w2T, b2T, woT, boT)

    out = outT.transpose(0, 2, 1).reshape(nt * nb, oc_pad)[:B, :output_channels]
    if output_channels == 1:
        out = jax.nn.log_softmax(out, axis=1)    # degenerate-head branch (wrapper glue)
    return out


def dqn_reference(x, params, output_channels):
    """Pure-JAX f32 reference matching the PyTorch forward exactly."""
    conv_w, conv_b, fc1_w, fc1_b, fc2_w, fc2_b, out_w, out_b = params
    xf = x.astype(jnp.float32)
    if xf.ndim == 3:
        xf = xf[None]
    y = jax.lax.conv_general_dilated(xf, conv_w, (1, 1), 'VALID',
                                     dimension_numbers=('NCHW', 'OIHW', 'NCHW'))
    y = jnp.maximum(y + conv_b[None, :, None, None], 0.0)
    flat = y.reshape(y.shape[0], C_OUT * OH * OW)
    h1 = jnp.maximum(flat @ fc1_w.T + fc1_b, 0.0)
    h2 = jnp.maximum(h1 @ fc2_w.T + fc2_b, 0.0)
    o = h2 @ out_w.T + out_b
    if output_channels == 1:
        o = jax.nn.log_softmax(o, axis=1)
    return o


if __name__ == "__main__":
    oc = 7                                       # 7 Connect-Four columns
    key = jax.random.PRNGKey(0)
    ks = jax.random.split(key, 13)

    def uniform(k, shape, fan_in):
        bound = 1.0 / jnp.sqrt(jnp.float32(fan_in))
        return jax.random.uniform(k, shape, jnp.float32, -bound, bound)

    conv_w = uniform(ks[0], (C_OUT, C_IN, KH, KW), K_TAPS)
    conv_b = uniform(ks[1], (C_OUT,), K_TAPS)
    fc1_w = uniform(ks[2], (HID, C_OUT * OH * OW), C_OUT * OH * OW)
    fc1_b = uniform(ks[3], (HID,), C_OUT * OH * OW)
    fc2_w = uniform(ks[4], (HID, HID), HID)
    fc2_b = uniform(ks[5], (HID,), HID)
    out_w = uniform(ks[6], (oc, HID), HID)
    out_b = uniform(ks[7], (oc,), HID)
    params = (conv_w, conv_b, fc1_w, fc1_b, fc2_w, fc2_b, out_w, out_b)

    fwd = jax.jit(dqn_forward, static_argnums=2)

    # --- single board (PyTorch forward's implicit batch=1; grid-less path) ---
    x1 = jax.random.normal(ks[8], (C_IN, H, W), jnp.float32)
    out1 = jax.block_until_ready(fwd(x1, params, oc))
    ref1 = dqn_reference(x1, params, oc)
    assert out1.shape == (1, oc), out1.shape
    assert jnp.allclose(out1, ref1, rtol=2e-2, atol=2e-2), (out1, ref1)

    # --- small batch (grid-less path, batch not a multiple of 8) ---
    xs = jax.random.normal(ks[9], (20, C_IN, H, W), jnp.float32)
    outs = jax.block_until_ready(fwd(xs, params, oc))
    refs = dqn_reference(xs, params, oc)
    assert outs.shape == (20, oc), outs.shape
    assert jnp.allclose(outs, refs, rtol=2e-2, atol=2e-2), (outs, refs)

    # --- large batch (gridded 'parallel' path; partial last tile) ---
    xb = jax.random.normal(ks[12], (200, C_IN, H, W), jnp.float32)
    outb = jax.block_until_ready(fwd(xb, params, oc))
    refb = dqn_reference(xb, params, oc)
    assert outb.shape == (200, oc), outb.shape
    assert jnp.allclose(outb, refb, rtol=2e-2, atol=2e-2), (outb, refb)

    # --- output_channels == 1 branch (log_softmax of a single logit == 0) ---
    out_w1 = uniform(ks[10], (1, HID), HID)
    out_b1 = uniform(ks[11], (1,), HID)
    params1 = params[:6] + (out_w1, out_b1)
    o1 = jax.block_until_ready(fwd(x1, params1, 1))
    r1 = dqn_reference(x1, params1, 1)
    assert o1.shape == (1, 1) and jnp.allclose(o1, r1, atol=1e-6), (o1, r1)

    print("KERNEL_OK")
</pallas_src>

<mosaic_0001>
module attributes {stable_mosaic.version = 11 : i64} {
  func.func @dqn_kernel(%arg0: memref<1x30x16x1xbf16, #tpu.memory_space<vmem>>, %arg1: memref<128x16xbf16, #tpu.memory_space<vmem>>, %arg2: memref<128x1xf32, #tpu.memory_space<vmem>>, %arg3: memref<30x128x128xbf16, #tpu.memory_space<vmem>>, %arg4: memref<128x1xf32, #tpu.memory_space<vmem>>, %arg5: memref<128x128xbf16, #tpu.memory_space<vmem>>, %arg6: memref<128x1xf32, #tpu.memory_space<vmem>>, %arg7: memref<128x128xbf16, #tpu.memory_space<vmem>>, %arg8: memref<128x1xf32, #tpu.memory_space<vmem>>, %arg9: memref<1x128x1xf32, #tpu.memory_space<vmem>>) attributes {dimension_semantics = [], scalar_prefetch = 0 : i64, scratch_operands = 0 : i64, tpu.core_type = #tpu.core_type<tc>} {
    %c0 = arith.constant 0 : index
    %c0_0 = arith.constant 0 : index
    %0 = vector.load %arg1[%c0, %c0_0] : memref<128x16xbf16, #tpu.memory_space<vmem>>, vector<128x16xbf16>
    %c0_1 = arith.constant 0 : index
    %c0_2 = arith.constant 0 : index
    %1 = vector.load %arg2[%c0_1, %c0_2] : memref<128x1xf32, #tpu.memory_space<vmem>>, vector<128x1xf32>
    %cst = arith.constant 0.000000e+00 : f32
    %2 = vector.broadcast %cst : f32 to vector<128x1xf32>
    %c0_3 = arith.constant 0 : index
    %c0_4 = arith.constant 0 : index
    %c0_5 = arith.constant 0 : index
    %c0_6 = arith.constant 0 : index
    %3 = vector.load %arg0[%c0_3, %c0_4, %c0_5, %c0_6] : memref<1x30x16x1xbf16, #tpu.memory_space<vmem>>, vector<1x1x16x1xbf16>
    %4 = vector.shape_cast %3 : vector<1x1x16x1xbf16> to vector<16x1xbf16>
    %cst_7 = arith.constant dense<0.000000e+00> : vector<128x1xf32>
    %5 = tpu.matmul %0, %4, %cst_7 {dimension_numbers = #tpu.dot_dimension_numbers<[1], [0], [0], [1], [0, 0, 1, 1], [], []>} : vector<128x16xbf16>, vector<16x1xbf16>, vector<128x1xf32> -> vector<128x1xf32>
    %6 = arith.addf %5, %1 : vector<128x1xf32>
    %cst_8 = arith.constant 0.000000e+00 : f32
    %7 = vector.broadcast %cst_8 : f32 to vector<128x1xf32>
    %8 = arith.maximumf %6, %7 : vector<128x1xf32>
    %c0_9 = arith.constant 0 : index
    %c0_10 = arith.constant 0 : index
    %c0_11 = arith.constant 0 : index
    %9 = vector.load %arg3[%c0_9, %c0_10, %c0_11] : memref<30x128x128xbf16, #tpu.memory_space<vmem>>, vector<1x128x128xbf16>
    %10 = vector.shape_cast %9 : vector<1x128x128xbf16> to vector<128x128xbf16>
    %11 = arith.truncf %8 : vector<128x1xf32> to vector<128x1xbf16>
    %cst_12 = arith.constant dense<0.000000e+00> : vector<128x1xf32>
    %12 = tpu.matmul %10, %11, %cst_12 {dimension_numbers = #tpu.dot_dimension_numbers<[1], [0], [0], [1], [0, 0, 1, 1], [], []>} : vector<128x128xbf16>, vector<128x1xbf16>, vector<128x1xf32> -> vector<128x1xf32>
    %13 = arith.addf %2, %12 : vector<128x1xf32>
    %c0_13 = arith.constant 0 : index
    %c1 = arith.constant 1 : index
    %c0_14 = arith.constant 0 : index
    %c0_15 = arith.constant 0 : index
    %14 = vector.load %arg0[%c0_13, %c1, %c0_14, %c0_15] : memref<1x30x16x1xbf16, #tpu.memory_space<vmem>>, vector<1x1x16x1xbf16>
    %15 = vector.shape_cast %14 : vector<1x1x16x1xbf16> to vector<16x1xbf16>
    %cst_16 = arith.constant dense<0.000000e+00> : vector<128x1xf32>
    %16 = tpu.matmul %0, %15, %cst_16 {dimension_numbers = #tpu.dot_dimension_numbers<[1], [0], [0], [1], [0, 0, 1, 1], [], []>} : vector<128x16xbf16>, vector<16x1xbf16>, vector<128x1xf32> -> vector<128x1xf32>
    %17 = arith.addf %16, %1 : vector<128x1xf32>
    %cst_17 = arith.constant 0.000000e+00 : f32
    %18 = vector.broadcast %cst_17 : f32 to vector<128x1xf32>
    %19 = arith.maximumf %17, %18 : vector<128x1xf32>
    %c1_18 = arith.constant 1 : index
    %c0_19 = arith.constant 0 : index
    %c0_20 = arith.constant 0 : index
    %20 = vector.load %arg3[%c1_18, %c0_19, %c0_20] : memref<30x128x128xbf16, #tpu.memory_space<vmem>>, vector<1x128x128xbf16>
    %21 = vector.shape_cast %20 : vector<1x128x128xbf16> to vector<128x128xbf16>
    %22 = arith.truncf %19 : vector<128x1xf32> to vector<128x1xbf16>
    %cst_21 = arith.constant dense<0.000000e+00> : vector<128x1xf32>
    %23 = tpu.matmul %21, %22, %cst_21 {dimension_numbers = #tpu.dot_dimension_numbers<[1], [0], [0], [1], [0, 0, 1, 1], [], []>} : vector<128x128xbf16>, vector<128x1xbf16>, vector<128x1xf32> -> vector<128x1xf32>
    %24 = arith.addf %13, %23 : vector<128x1xf32>
    %c0_22 = arith.constant 0 : index
    %c2 = arith.constant 2 : index
    %c0_23 = arith.constant 0 : index
    %c0_24 = arith.constant 0 : index
    %25 = vector.load %arg0[%c0_22, %c2, %c0_23, %c0_24] : memref<1x30x16x1xbf16, #tpu.memory_space<vmem>>, vector<1x1x16x1xbf16>
    %26 = vector.shape_cast %25 : vector<1x1x16x1xbf16> to vector<16x1xbf16>
    %cst_25 = arith.constant dense<0.000000e+00> : vector<128x1xf32>
    %27 = tpu.matmul %0, %26, %cst_25 {dimension_numbers = #tpu.dot_dimension_numbers<[1], [0], [0], [1], [0, 0, 1, 1], [], []>} : vector<128x16xbf16>, vector<16x1xbf16>, vector<128x1xf32> -> vector<128x1xf32>
    %28 = arith.addf %27, %1 : vector<128x1xf32>
    %cst_26 = arith.constant 0.000000e+00 : f32
    %29 = vector.broadcast %cst_26 : f32 to vector<128x1xf32>
    %30 = arith.maximumf %28, %29 : vector<128x1xf32>
    %c2_27 = arith.constant 2 : index
    %c0_28 = arith.constant 0 : index
    %c0_29 = arith.constant 0 : index
    %31 = vector.load %arg3[%c2_27, %c0_28, %c0_29] : memref<30x128x128xbf16, #tpu.memory_space<vmem>>, vector<1x128x128xbf16>
    %32 = vector.shape_cast %31 : vector<1x128x128xbf16> to vector<128x128xbf16>
    %33 = arith.truncf %30 : vector<128x1xf32> to vector<128x1xbf16>
    %cst_30 = arith.constant dense<0.000000e+00> : vector<128x1xf32>
    %34 = tpu.matmul %32, %33, %cst_30 {dimension_numbers = #tpu.dot_dimension_numbers<[1], [0], [0], [1], [0, 0, 1, 1], [], []>} : vector<128x128xbf16>, vector<128x1xbf16>, vector<128x1xf32> -> vector<128x1xf32>
    %35 = arith.addf %24, %34 : vector<128x1xf32>
    %c0_31 = arith.constant 0 : index
    %c3 = arith.constant 3 : index
    %c0_32 = arith.constant 0 : index
    %c0_33 = arith.constant 0 : index
    %36 = vector.load %arg0[%c0_31, %c3, %c0_32, %c0_33] : memref<1x30x16x1xbf16, #tpu.memory_space<vmem>>, vector<1x1x16x1xbf16>
    %37 = vector.shape_cast %36 : vector<1x1x16x1xbf16> to vector<16x1xbf16>
    %cst_34 = arith.constant dense<0.000000e+00> : vector<128x1xf32>
    %38 = tpu.matmul %0, %37, %cst_34 {dimension_numbers = #tpu.dot_dimension_numbers<[1], [0], [0], [1], [0, 0, 1, 1], [], []>} : vector<128x16xbf16>, vector<16x1xbf16>, vector<128x1xf32> -> vector<128x1xf32>
    %39 = arith.addf %38, %1 : vector<128x1xf32>
    %cst_35 = arith.constant 0.000000e+00 : f32
    %40 = vector.broadcast %cst_35 : f32 to vector<128x1xf32>
    %41 = arith.maximumf %39, %40 : vector<128x1xf32>
    %c3_36 = arith.constant 3 : index
    %c0_37 = arith.constant 0 : index
    %c0_38 = arith.constant 0 : index
    %42 = vector.load %arg3[%c3_36, %c0_37, %c0_38] : memref<30x128x128xbf16, #tpu.memory_space<vmem>>, vector<1x128x128xbf16>
    %43 = vector.shape_cast %42 : vector<1x128x128xbf16> to vector<128x128xbf16>
    %44 = arith.truncf %41 : vector<128x1xf32> to vector<128x1xbf16>
    %cst_39 = arith.constant dense<0.000000e+00> : vector<128x1xf32>
    %45 = tpu.matmul %43, %44, %cst_39 {dimension_numbers = #tpu.dot_dimension_numbers<[1], [0], [0], [1], [0, 0, 1, 1], [], []>} : vector<128x128xbf16>, vector<128x1xbf16>, vector<128x1xf32> -> vector<128x1xf32>
    %46 = arith.addf %35, %45 : vector<128x1xf32>
    %c0_40 = arith.constant 0 : index
    %c4 = arith.constant 4 : index
    %c0_41 = arith.constant 0 : index
    %c0_42 = arith.constant 0 : index
    %47 = vector.load %arg0[%c0_40, %c4, %c0_41, %c0_42] : memref<1x30x16x1xbf16, #tpu.memory_space<vmem>>, vector<1x1x16x1xbf16>
    %48 = vector.shape_cast %47 : vector<1x1x16x1xbf16> to vector<16x1xbf16>
    %cst_43 = arith.constant dense<0.000000e+00> : vector<128x1xf32>
    %49 = tpu.matmul %0, %48, %cst_43 {dimension_numbers = #tpu.dot_dimension_numbers<[1], [0], [0], [1], [0, 0, 1, 1], [], []>} : vector<128x16xbf16>, vector<16x1xbf16>, vector<128x1xf32> -> vector<128x1xf32>
    %50 = arith.addf %49, %1 : vector<128x1xf32>
    %cst_44 = arith.constant 0.000000e+00 : f32
    %51 = vector.broadcast %cst_44 : f32 to vector<128x1xf32>
    %52 = arith.maximumf %50, %51 : vector<128x1xf32>
    %c4_45 = arith.constant 4 : index
    %c0_46 = arith.constant 0 : index
    %c0_47 = arith.constant 0 : index
    %53 = vector.load %arg3[%c4_45, %c0_46, %c0_47] : memref<30x128x128xbf16, #tpu.memory_space<vmem>>, vector<1x128x128xbf16>
    %54 = vector.shape_cast %53 : vector<1x128x128xbf16> to vector<128x128xbf16>
    %55 = arith.truncf %52 : vector<128x1xf32> to vector<128x1xbf16>
    %cst_48 = arith.constant dense<0.000000e+00> : vector<128x1xf32>
    %56 = tpu.matmul %54, %55, %cst_48 {dimension_numbers = #tpu.dot_dimension_numbers<[1], [0], [0], [1], [0, 0, 1, 1], [], []>} : vector<128x128xbf16>, vector<128x1xbf16>, vector<128x1xf32> -> vector<128x1xf32>
    %57 = arith.addf %46, %56 : vector<128x1xf32>
    %c0_49 = arith.constant 0 : index
    %c5 = arith.constant 5 : index
    %c0_50 = arith.constant 0 : index
    %c0_51 = arith.constant 0 : index
    %58 = vector.load %arg0[%c0_49, %c5, %c0_50, %c0_51] : memref<1x30x16x1xbf16, #tpu.memory_space<vmem>>, vector<1x1x16x1xbf16>
    %59 = vector.shape_cast %58 : vector<1x1x16x1xbf16> to vector<16x1xbf16>
    %cst_52 = arith.constant dense<0.000000e+00> : vector<128x1xf32>
    %60 = tpu.matmul %0, %59, %cst_52 {dimension_numbers = #tpu.dot_dimension_numbers<[1], [0], [0], [1], [0, 0, 1, 1], [], []>} : vector<128x16xbf16>, vector<16x1xbf16>, vector<128x1xf32> -> vector<128x1xf32>
    %61 = arith.addf %60, %1 : vector<128x1xf32>
    %cst_53 = arith.constant 0.000000e+00 : f32
    %62 = vector.broadcast %cst_53 : f32 to vector<128x1xf32>
    %63 = arith.maximumf %61, %62 : vector<128x1xf32>
    %c5_54 = arith.constant 5 : index
    %c0_55 = arith.constant 0 : index
    %c0_56 = arith.constant 0 : index
    %64 = vector.load %arg3[%c5_54, %c0_55, %c0_56] : memref<30x128x128xbf16, #tpu.memory_space<vmem>>, vector<1x128x128xbf16>
    %65 = vector.shape_cast %64 : vector<1x128x128xbf16> to vector<128x128xbf16>
    %66 = arith.truncf %63 : vector<128x1xf32> to vector<128x1xbf16>
    %cst_57 = arith.constant dense<0.000000e+00> : vector<128x1xf32>
    %67 = tpu.matmul %65, %66, %cst_57 {dimension_numbers = #tpu.dot_dimension_numbers<[1], [0], [0], [1], [0, 0, 1, 1], [], []>} : vector<128x128xbf16>, vector<128x1xbf16>, vector<128x1xf32> -> vector<128x1xf32>
    %68 = arith.addf %57, %67 : vector<128x1xf32>
    %c0_58 = arith.constant 0 : index
    %c6 = arith.constant 6 : index
    %c0_59 = arith.constant 0 : index
    %c0_60 = arith.constant 0 : index
    %69 = vector.load %arg0[%c0_58, %c6, %c0_59, %c0_60] : memref<1x30x16x1xbf16, #tpu.memory_space<vmem>>, vector<1x1x16x1xbf16>
    %70 = vector.shape_cast %69 : vector<1x1x16x1xbf16> to vector<16x1xbf16>
    %cst_61 = arith.constant dense<0.000000e+00> : vector<128x1xf32>
    %71 = tpu.matmul %0, %70, %cst_61 {dimension_numbers = #tpu.dot_dimension_numbers<[1], [0], [0], [1], [0, 0, 1, 1], [], []>} : vector<128x16xbf16>, vector<16x1xbf16>, vector<128x1xf32> -> vector<128x1xf32>
    %72 = arith.addf %71, %1 : vector<128x1xf32>
    %cst_62 = arith.constant 0.000000e+00 : f32
    %73 = vector.broadcast %cst_62 : f32 to vector<128x1xf32>
    %74 = arith.maximumf %72, %73 : vector<128x1xf32>
    %c6_63 = arith.constant 6 : index
    %c0_64 = arith.constant 0 : index
    %c0_65 = arith.constant 0 : index
    %75 = vector.load %arg3[%c6_63, %c0_64, %c0_65] : memref<30x128x128xbf16, #tpu.memory_space<vmem>>, vector<1x128x128xbf16>
    %76 = vector.shape_cast %75 : vector<1x128x128xbf16> to vector<128x128xbf16>
    %77 = arith.truncf %74 : vector<128x1xf32> to vector<128x1xbf16>
    %cst_66 = arith.constant dense<0.000000e+00> : vector<128x1xf32>
    %78 = tpu.matmul %76, %77, %cst_66 {dimension_numbers = #tpu.dot_dimension_numbers<[1], [0], [0], [1], [0, 0, 1, 1], [], []>} : vector<128x128xbf16>, vector<128x1xbf16>, vector<128x1xf32> -> vector<128x1xf32>
    %79 = arith.addf %68, %78 : vector<128x1xf32>
    %c0_67 = arith.constant 0 : index
    %c7 = arith.constant 7 : index
    %c0_68 = arith.constant 0 : index
    %c0_69 = arith.constant 0 : index
    %80 = vector.load %arg0[%c0_67, %c7, %c0_68, %c0_69] : memref<1x30x16x1xbf16, #tpu.memory_space<vmem>>, vector<1x1x16x1xbf16>
    %81 = vector.shape_cast %80 : vector<1x1x16x1xbf16> to vector<16x1xbf16>
    %cst_70 = arith.constant dense<0.000000e+00> : vector<128x1xf32>
    %82 = tpu.matmul %0, %81, %cst_70 {dimension_numbers = #tpu.dot_dimension_numbers<[1], [0], [0], [1], [0, 0, 1, 1], [], []>} : vector<128x16xbf16>, vector<16x1xbf16>, vector<128x1xf32> -> vector<128x1xf32>
    %83 = arith.addf %82, %1 : vector<128x1xf32>
    %cst_71 = arith.constant 0.000000e+00 : f32
    %84 = vector.broadcast %cst_71 : f32 to vector<128x1xf32>
    %85 = arith.maximumf %83, %84 : vector<128x1xf32>
    %c7_72 = arith.constant 7 : index
    %c0_73 = arith.constant 0 : index
    %c0_74 = arith.constant 0 : index
    %86 = vector.load %arg3[%c7_72, %c0_73, %c0_74] : memref<30x128x128xbf16, #tpu.memory_space<vmem>>, vector<1x128x128xbf16>
    %87 = vector.shape_cast %86 : vector<1x128x128xbf16> to vector<128x128xbf16>
    %88 = arith.truncf %85 : vector<128x1xf32> to vector<128x1xbf16>
    %cst_75 = arith.constant dense<0.000000e+00> : vector<128x1xf32>
    %89 = tpu.matmul %87, %88, %cst_75 {dimension_numbers = #tpu.dot_dimension_numbers<[1], [0], [0], [1], [0, 0, 1, 1], [], []>} : vector<128x128xbf16>, vector<128x1xbf16>, vector<128x1xf32> -> vector<128x1xf32>
    %90 = arith.addf %79, %89 : vector<128x1xf32>
    %c0_76 = arith.constant 0 : index
    %c8 = arith.constant 8 : index
    %c0_77 = arith.constant 0 : index
    %c0_78 = arith.constant 0 : index
    %91 = vector.load %arg0[%c0_76, %c8, %c0_77, %c0_78] : memref<1x30x16x1xbf16, #tpu.memory_space<vmem>>, vector<1x1x16x1xbf16>
    %92 = vector.shape_cast %91 : vector<1x1x16x1xbf16> to vector<16x1xbf16>
    %cst_79 = arith.constant dense<0.000000e+00> : vector<128x1xf32>
    %93 = tpu.matmul %0, %92, %cst_79 {dimension_numbers = #tpu.dot_dimension_numbers<[1], [0], [0], [1], [0, 0, 1, 1], [], []>} : vector<128x16xbf16>, vector<16x1xbf16>, vector<128x1xf32> -> vector<128x1xf32>
    %94 = arith.addf %93, %1 : vector<128x1xf32>
    %cst_80 = arith.constant 0.000000e+00 : f32
    %95 = vector.broadcast %cst_80 : f32 to vector<128x1xf32>
    %96 = arith.maximumf %94, %95 : vector<128x1xf32>
    %c8_81 = arith.constant 8 : index
    %c0_82 = arith.constant 0 : index
    %c0_83 = arith.constant 0 : index
    %97 = vector.load %arg3[%c8_81, %c0_82, %c0_83] : memref<30x128x128xbf16, #tpu.memory_space<vmem>>, vector<1x128x128xbf16>
    %98 = vector.shape_cast %97 : vector<1x128x128xbf16> to vector<128x128xbf16>
    %99 = arith.truncf %96 : vector<128x1xf32> to vector<128x1xbf16>
    %cst_84 = arith.constant dense<0.000000e+00> : vector<128x1xf32>
    %100 = tpu.matmul %98, %99, %cst_84 {dimension_numbers = #tpu.dot_dimension_numbers<[1], [0], [0], [1], [0, 0, 1, 1], [], []>} : vector<128x128xbf16>, vector<128x1xbf16>, vector<128x1xf32> -> vector<128x1xf32>
    %101 = arith.addf %90, %100 : vector<128x1xf32>
    %c0_85 = arith.constant 0 : index
    %c9 = arith.constant 9 : index
    %c0_86 = arith.constant 0 : index
    %c0_87 = arith.constant 0 : index
    %102 = vector.load %arg0[%c0_85, %c9, %c0_86, %c0_87] : memref<1x30x16x1xbf16, #tpu.memory_space<vmem>>, vector<1x1x16x1xbf16>
    %103 = vector.shape_cast %102 : vector<1x1x16x1xbf16> to vector<16x1xbf16>
    %cst_88 = arith.constant dense<0.000000e+00> : vector<128x1xf32>
    %104 = tpu.matmul %0, %103, %cst_88 {dimension_numbers = #tpu.dot_dimension_numbers<[1], [0], [0], [1], [0, 0, 1, 1], [], []>} : vector<128x16xbf16>, vector<16x1xbf16>, vector<128x1xf32> -> vector<128x1xf32>
    %105 = arith.addf %104, %1 : vector<128x1xf32>
    %cst_89 = arith.constant 0.000000e+00 : f32
    %106 = vector.broadcast %cst_89 : f32 to vector<128x1xf32>
    %107 = arith.maximumf %105, %106 : vector<128x1xf32>
    %c9_90 = arith.constant 9 : index
    %c0_91 = arith.constant 0 : index
    %c0_92 = arith.constant 0 : index
    %108 = vector.load %arg3[%c9_90, %c0_91, %c0_92] : memref<30x128x128xbf16, #tpu.memory_space<vmem>>, vector<1x128x128xbf16>
    %109 = vector.shape_cast %108 : vector<1x128x128xbf16> to vector<128x128xbf16>
    %110 = arith.truncf %107 : vector<128x1xf32> to vector<128x1xbf16>
    %cst_93 = arith.constant dense<0.000000e+00> : vector<128x1xf32>
    %111 = tpu.matmul %109, %110, %cst_93 {dimension_numbers = #tpu.dot_dimension_numbers<[1], [0], [0], [1], [0, 0, 1, 1], [], []>} : vector<128x128xbf16>, vector<128x1xbf16>, vector<128x1xf32> -> vector<128x1xf32>
    %112 = arith.addf %101, %111 : vector<128x1xf32>
    %c0_94 = arith.constant 0 : index
    %c10 = arith.constant 10 : index
    %c0_95 = arith.constant 0 : index
    %c0_96 = arith.constant 0 : index
    %113 = vector.load %arg0[%c0_94, %c10, %c0_95, %c0_96] : memref<1x30x16x1xbf16, #tpu.memory_space<vmem>>, vector<1x1x16x1xbf16>
    %114 = vector.shape_cast %113 : vector<1x1x16x1xbf16> to vector<16x1xbf16>
    %cst_97 = arith.constant dense<0.000000e+00> : vector<128x1xf32>
    %115 = tpu.matmul %0, %114, %cst_97 {dimension_numbers = #tpu.dot_dimension_numbers<[1], [0], [0], [1], [0, 0, 1, 1], [], []>} : vector<128x16xbf16>, vector<16x1xbf16>, vector<128x1xf32> -> vector<128x1xf32>
    %116 = arith.addf %115, %1 : vector<128x1xf32>
    %cst_98 = arith.constant 0.000000e+00 : f32
    %117 = vector.broadcast %cst_98 : f32 to vector<128x1xf32>
    %118 = arith.maximumf %116, %117 : vector<128x1xf32>
    %c10_99 = arith.constant 10 : index
    %c0_100 = arith.constant 0 : index
    %c0_101 = arith.constant 0 : index
    %119 = vector.load %arg3[%c10_99, %c0_100, %c0_101] : memref<30x128x128xbf16, #tpu.memory_space<vmem>>, vector<1x128x128xbf16>
    %120 = vector.shape_cast %119 : vector<1x128x128xbf16> to vector<128x128xbf16>
    %121 = arith.truncf %118 : vector<128x1xf32> to vector<128x1xbf16>
    %cst_102 = arith.constant dense<0.000000e+00> : vector<128x1xf32>
    %122 = tpu.matmul %120, %121, %cst_102 {dimension_numbers = #tpu.dot_dimension_numbers<[1], [0], [0], [1], [0, 0, 1, 1], [], []>} : vector<128x128xbf16>, vector<128x1xbf16>, vector<128x1xf32> -> vector<128x1xf32>
    %123 = arith.addf %112, %122 : vector<128x1xf32>
    %c0_103 = arith.constant 0 : index
    %c11 = arith.constant 11 : index
    %c0_104 = arith.constant 0 : index
    %c0_105 = arith.constant 0 : index
    %124 = vector.load %arg0[%c0_103, %c11, %c0_104, %c0_105] : memref<1x30x16x1xbf16, #tpu.memory_space<vmem>>, vector<1x1x16x1xbf16>
    %125 = vector.shape_cast %124 : vector<1x1x16x1xbf16> to vector<16x1xbf16>
    %cst_106 = arith.constant dense<0.000000e+00> : vector<128x1xf32>
    %126 = tpu.matmul %0, %125, %cst_106 {dimension_numbers = #tpu.dot_dimension_numbers<[1], [0], [0], [1], [0, 0, 1, 1], [], []>} : vector<128x16xbf16>, vector<16x1xbf16>, vector<128x1xf32> -> vector<128x1xf32>
    %127 = arith.addf %126, %1 : vector<128x1xf32>
    %cst_107 = arith.constant 0.000000e+00 : f32
    %128 = vector.broadcast %cst_107 : f32 to vector<128x1xf32>
    %129 = arith.maximumf %127, %128 : vector<128x1xf32>
    %c11_108 = arith.constant 11 : index
    %c0_109 = arith.constant 0 : index
    %c0_110 = arith.constant 0 : index
    %130 = vector.load %arg3[%c11_108, %c0_109, %c0_110] : memref<30x128x128xbf16, #tpu.memory_space<vmem>>, vector<1x128x128xbf16>
    %131 = vector.shape_cast %130 : vector<1x128x128xbf16> to vector<128x128xbf16>
    %132 = arith.truncf %129 : vector<128x1xf32> to vector<128x1xbf16>
    %cst_111 = arith.constant dense<0.000000e+00> : vector<128x1xf32>
    %133 = tpu.matmul %131, %132, %cst_111 {dimension_numbers = #tpu.dot_dimension_numbers<[1], [0], [0], [1], [0, 0, 1, 1], [], []>} : vector<128x128xbf16>, vector<128x1xbf16>, vector<128x1xf32> -> vector<128x1xf32>
    %134 = arith.addf %123, %133 : vector<128x1xf32>
    %c0_112 = arith.constant 0 : index
    %c12 = arith.constant 12 : index
    %c0_113 = arith.constant 0 : index
    %c0_114 = arith.constant 0 : index
    %135 = vector.load %arg0[%c0_112, %c12, %c0_113, %c0_114] : memref<1x30x16x1xbf16, #tpu.memory_space<vmem>>, vector<1x1x16x1xbf16>
    %136 = vector.shape_cast %135 : vector<1x1x16x1xbf16> to vector<16x1xbf16>
    %cst_115 = arith.constant dense<0.000000e+00> : vector<128x1xf32>
    %137 = tpu.matmul %0, %136, %cst_115 {dimension_numbers = #tpu.dot_dimension_numbers<[1], [0], [0], [1], [0, 0, 1, 1], [], []>} : vector<128x16xbf16>, vector<16x1xbf16>, vector<128x1xf32> -> vector<128x1xf32>
    %138 = arith.addf %137, %1 : vector<128x1xf32>
    %cst_116 = arith.constant 0.000000e+00 : f32
    %139 = vector.broadcast %cst_116 : f32 to vector<128x1xf32>
    %140 = arith.maximumf %138, %139 : vector<128x1xf32>
    %c12_117 = arith.constant 12 : index
    %c0_118 = arith.constant 0 : index
    %c0_119 = arith.constant 0 : index
    %141 = vector.load %arg3[%c12_117, %c0_118, %c0_119] : memref<30x128x128xbf16, #tpu.memory_space<vmem>>, vector<1x128x128xbf16>
    %142 = vector.shape_cast %141 : vector<1x128x128xbf16> to vector<128x128xbf16>
    %143 = arith.truncf %140 : vector<128x1xf32> to vector<128x1xbf16>
    %cst_120 = arith.constant dense<0.000000e+00> : vector<128x1xf32>
    %144 = tpu.matmul %142, %143, %cst_120 {dimension_numbers = #tpu.dot_dimension_numbers<[1], [0], [0], [1], [0, 0, 1, 1], [], []>} : vector<128x128xbf16>, vector<128x1xbf16>, vector<128x1xf32> -> vector<128x1xf32>
    %145 = arith.addf %134, %144 : vector<128x1xf32>
    %c0_121 = arith.constant 0 : index
    %c13 = arith.constant 13 : index
    %c0_122 = arith.constant 0 : index
    %c0_123 = arith.constant 0 : index
    %146 = vector.load %arg0[%c0_121, %c13, %c0_122, %c0_123] : memref<1x30x16x1xbf16, #tpu.memory_space<vmem>>, vector<1x1x16x1xbf16>
    %147 = vector.shape_cast %146 : vector<1x1x16x1xbf16> to vector<16x1xbf16>
    %cst_124 = arith.constant dense<0.000000e+00> : vector<128x1xf32>
    %148 = tpu.matmul %0, %147, %cst_124 {dimension_numbers = #tpu.dot_dimension_numbers<[1], [0], [0], [1], [0, 0, 1, 1], [], []>} : vector<128x16xbf16>, vector<16x1xbf16>, vector<128x1xf32> -> vector<128x1xf32>
    %149 = arith.addf %148, %1 : vector<128x1xf32>
    %cst_125 = arith.constant 0.000000e+00 : f32
    %150 = vector.broadcast %cst_125 : f32 to vector<128x1xf32>
    %151 = arith.maximumf %149, %150 : vector<128x1xf32>
    %c13_126 = arith.constant 13 : index
    %c0_127 = arith.constant 0 : index
    %c0_128 = arith.constant 0 : index
    %152 = vector.load %arg3[%c13_126, %c0_127, %c0_128] : memref<30x128x128xbf16, #tpu.memory_space<vmem>>, vector<1x128x128xbf16>
    %153 = vector.shape_cast %152 : vector<1x128x128xbf16> to vector<128x128xbf16>
    %154 = arith.truncf %151 : vector<128x1xf32> to vector<128x1xbf16>
    %cst_129 = arith.constant dense<0.000000e+00> : vector<128x1xf32>
    %155 = tpu.matmul %153, %154, %cst_129 {dimension_numbers = #tpu.dot_dimension_numbers<[1], [0], [0], [1], [0, 0, 1, 1], [], []>} : vector<128x128xbf16>, vector<128x1xbf16>, vector<128x1xf32> -> vector<128x1xf32>
    %156 = arith.addf %145, %155 : vector<128x1xf32>
    %c0_130 = arith.constant 0 : index
    %c14 = arith.constant 14 : index
    %c0_131 = arith.constant 0 : index
    %c0_132 = arith.constant 0 : index
    %157 = vector.load %arg0[%c0_130, %c14, %c0_131, %c0_132] : memref<1x30x16x1xbf16, #tpu.memory_space<vmem>>, vector<1x1x16x1xbf16>
    %158 = vector.shape_cast %157 : vector<1x1x16x1xbf16> to vector<16x1xbf16>
    %cst_133 = arith.constant dense<0.000000e+00> : vector<128x1xf32>
    %159 = tpu.matmul %0, %158, %cst_133 {dimension_numbers = #tpu.dot_dimension_numbers<[1], [0], [0], [1], [0, 0, 1, 1], [], []>} : vector<128x16xbf16>, vector<16x1xbf16>, vector<128x1xf32> -> vector<128x1xf32>
    %160 = arith.addf %159, %1 : vector<128x1xf32>
    %cst_134 = arith.constant 0.000000e+00 : f32
    %161 = vector.broadcast %cst_134 : f32 to vector<128x1xf32>
    %162 = arith.maximumf %160, %161 : vector<128x1xf32>
    %c14_135 = arith.constant 14 : index
    %c0_136 = arith.constant 0 : index
    %c0_137 = arith.constant 0 : index
    %163 = vector.load %arg3[%c14_135, %c0_136, %c0_137] : memref<30x128x128xbf16, #tpu.memory_space<vmem>>, vector<1x128x128xbf16>
    %164 = vector.shape_cast %163 : vector<1x128x128xbf16> to vector<128x128xbf16>
    %165 = arith.truncf %162 : vector<128x1xf32> to vector<128x1xbf16>
    %cst_138 = arith.constant dense<0.000000e+00> : vector<128x1xf32>
    %166 = tpu.matmul %164, %165, %cst_138 {dimension_numbers = #tpu.dot_dimension_numbers<[1], [0], [0], [1], [0, 0, 1, 1], [], []>} : vector<128x128xbf16>, vector<128x1xbf16>, vector<128x1xf32> -> vector<128x1xf32>
    %167 = arith.addf %156, %166 : vector<128x1xf32>
    %c0_139 = arith.constant 0 : index
    %c15 = arith.constant 15 : index
    %c0_140 = arith.constant 0 : index
    %c0_141 = arith.constant 0 : index
    %168 = vector.load %arg0[%c0_139, %c15, %c0_140, %c0_141] : memref<1x30x16x1xbf16, #tpu.memory_space<vmem>>, vector<1x1x16x1xbf16>
    %169 = vector.shape_cast %168 : vector<1x1x16x1xbf16> to vector<16x1xbf16>
    %cst_142 = arith.constant dense<0.000000e+00> : vector<128x1xf32>
    %170 = tpu.matmul %0, %169, %cst_142 {dimension_numbers = #tpu.dot_dimension_numbers<[1], [0], [0], [1], [0, 0, 1, 1], [], []>} : vector<128x16xbf16>, vector<16x1xbf16>, vector<128x1xf32> -> vector<128x1xf32>
    %171 = arith.addf %170, %1 : vector<128x1xf32>
    %cst_143 = arith.constant 0.000000e+00 : f32
    %172 = vector.broadcast %cst_143 : f32 to vector<128x1xf32>
    %173 = arith.maximumf %171, %172 : vector<128x1xf32>
    %c15_144 = arith.constant 15 : index
    %c0_145 = arith.constant 0 : index
    %c0_146 = arith.constant 0 : index
    %174 = vector.load %arg3[%c15_144, %c0_145, %c0_146] : memref<30x128x128xbf16, #tpu.memory_space<vmem>>, vector<1x128x128xbf16>
    %175 = vector.shape_cast %174 : vector<1x128x128xbf16> to vector<128x128xbf16>
    %176 = arith.truncf %173 : vector<128x1xf32> to vector<128x1xbf16>
    %cst_147 = arith.constant dense<0.000000e+00> : vector<128x1xf32>
    %177 = tpu.matmul %175, %176, %cst_147 {dimension_numbers = #tpu.dot_dimension_numbers<[1], [0], [0], [1], [0, 0, 1, 1], [], []>} : vector<128x128xbf16>, vector<128x1xbf16>, vector<128x1xf32> -> vector<128x1xf32>
    %178 = arith.addf %167, %177 : vector<128x1xf32>
    %c0_148 = arith.constant 0 : index
    %c16 = arith.constant 16 : index
    %c0_149 = arith.constant 0 : index
    %c0_150 = arith.constant 0 : index
    %179 = vector.load %arg0[%c0_148, %c16, %c0_149, %c0_150] : memref<1x30x16x1xbf16, #tpu.memory_space<vmem>>, vector<1x1x16x1xbf16>
    %180 = vector.shape_cast %179 : vector<1x1x16x1xbf16> to vector<16x1xbf16>
    %cst_151 = arith.constant dense<0.000000e+00> : vector<128x1xf32>
    %181 = tpu.matmul %0, %180, %cst_151 {dimension_numbers = #tpu.dot_dimension_numbers<[1], [0], [0], [1], [0, 0, 1, 1], [], []>} : vector<128x16xbf16>, vector<16x1xbf16>, vector<128x1xf32> -> vector<128x1xf32>
    %182 = arith.addf %181, %1 : vector<128x1xf32>
    %cst_152 = arith.constant 0.000000e+00 : f32
    %183 = vector.broadcast %cst_152 : f32 to vector<128x1xf32>
    %184 = arith.maximumf %182, %183 : vector<128x1xf32>
    %c16_153 = arith.constant 16 : index
    %c0_154 = arith.constant 0 : index
    %c0_155 = arith.constant 0 : index
    %185 = vector.load %arg3[%c16_153, %c0_154, %c0_155] : memref<30x128x128xbf16, #tpu.memory_space<vmem>>, vector<1x128x128xbf16>
    %186 = vector.shape_cast %185 : vector<1x128x128xbf16> to vector<128x128xbf16>
    %187 = arith.truncf %184 : vector<128x1xf32> to vector<128x1xbf16>
    %cst_156 = arith.constant dense<0.000000e+00> : vector<128x1xf32>
    %188 = tpu.matmul %186, %187, %cst_156 {dimension_numbers = #tpu.dot_dimension_numbers<[1], [0], [0], [1], [0, 0, 1, 1], [], []>} : vector<128x128xbf16>, vector<128x1xbf16>, vector<128x1xf32> -> vector<128x1xf32>
    %189 = arith.addf %178, %188 : vector<128x1xf32>
    %c0_157 = arith.constant 0 : index
    %c17 = arith.constant 17 : index
    %c0_158 = arith.constant 0 : index
    %c0_159 = arith.constant 0 : index
    %190 = vector.load %arg0[%c0_157, %c17, %c0_158, %c0_159] : memref<1x30x16x1xbf16, #tpu.memory_space<vmem>>, vector<1x1x16x1xbf16>
    %191 = vector.shape_cast %190 : vector<1x1x16x1xbf16> to vector<16x1xbf16>
    %cst_160 = arith.constant dense<0.000000e+00> : vector<128x1xf32>
    %192 = tpu.matmul %0, %191, %cst_160 {dimension_numbers = #tpu.dot_dimension_numbers<[1], [0], [0], [1], [0, 0, 1, 1], [], []>} : vector<128x16xbf16>, vector<16x1xbf16>, vector<128x1xf32> -> vector<128x1xf32>
    %193 = arith.addf %192, %1 : vector<128x1xf32>
    %cst_161 = arith.constant 0.000000e+00 : f32
    %194 = vector.broadcast %cst_161 : f32 to vector<128x1xf32>
    %195 = arith.maximumf %193, %194 : vector<128x1xf32>
    %c17_162 = arith.constant 17 : index
    %c0_163 = arith.constant 0 : index
    %c0_164 = arith.constant 0 : index
    %196 = vector.load %arg3[%c17_162, %c0_163, %c0_164] : memref<30x128x128xbf16, #tpu.memory_space<vmem>>, vector<1x128x128xbf16>
    %197 = vector.shape_cast %196 : vector<1x128x128xbf16> to vector<128x128xbf16>
    %198 = arith.truncf %195 : vector<128x1xf32> to vector<128x1xbf16>
    %cst_165 = arith.constant dense<0.000000e+00> : vector<128x1xf32>
    %199 = tpu.matmul %197, %198, %cst_165 {dimension_numbers = #tpu.dot_dimension_numbers<[1], [0], [0], [1], [0, 0, 1, 1], [], []>} : vector<128x128xbf16>, vector<128x1xbf16>, vector<128x1xf32> -> vector<128x1xf32>
    %200 = arith.addf %189, %199 : vector<128x1xf32>
    %c0_166 = arith.constant 0 : index
    %c18 = arith.constant 18 : index
    %c0_167 = arith.constant 0 : index
    %c0_168 = arith.constant 0 : index
    %201 = vector.load %arg0[%c0_166, %c18, %c0_167, %c0_168] : memref<1x30x16x1xbf16, #tpu.memory_space<vmem>>, vector<1x1x16x1xbf16>
    %202 = vector.shape_cast %201 : vector<1x1x16x1xbf16> to vector<16x1xbf16>
    %cst_169 = arith.constant dense<0.000000e+00> : vector<128x1xf32>
    %203 = tpu.matmul %0, %202, %cst_169 {dimension_numbers = #tpu.dot_dimension_numbers<[1], [0], [0], [1], [0, 0, 1, 1], [], []>} : vector<128x16xbf16>, vector<16x1xbf16>, vector<128x1xf32> -> vector<128x1xf32>
    %204 = arith.addf %203, %1 : vector<128x1xf32>
    %cst_170 = arith.constant 0.000000e+00 : f32
    %205 = vector.broadcast %cst_170 : f32 to vector<128x1xf32>
    %206 = arith.maximumf %204, %205 : vector<128x1xf32>
    %c18_171 = arith.constant 18 : index
    %c0_172 = arith.constant 0 : index
    %c0_173 = arith.constant 0 : index
    %207 = vector.load %arg3[%c18_171, %c0_172, %c0_173] : memref<30x128x128xbf16, #tpu.memory_space<vmem>>, vector<1x128x128xbf16>
    %208 = vector.shape_cast %207 : vector<1x128x128xbf16> to vector<128x128xbf16>
    %209 = arith.truncf %206 : vector<128x1xf32> to vector<128x1xbf16>
    %cst_174 = arith.constant dense<0.000000e+00> : vector<128x1xf32>
    %210 = tpu.matmul %208, %209, %cst_174 {dimension_numbers = #tpu.dot_dimension_numbers<[1], [0], [0], [1], [0, 0, 1, 1], [], []>} : vector<128x128xbf16>, vector<128x1xbf16>, vector<128x1xf32> -> vector<128x1xf32>
    %211 = arith.addf %200, %210 : vector<128x1xf32>
    %c0_175 = arith.constant 0 : index
    %c19 = arith.constant 19 : index
    %c0_176 = arith.constant 0 : index
    %c0_177 = arith.constant 0 : index
    %212 = vector.load %arg0[%c0_175, %c19, %c0_176, %c0_177] : memref<1x30x16x1xbf16, #tpu.memory_space<vmem>>, vector<1x1x16x1xbf16>
    %213 = vector.shape_cast %212 : vector<1x1x16x1xbf16> to vector<16x1xbf16>
    %cst_178 = arith.constant dense<0.000000e+00> : vector<128x1xf32>
    %214 = tpu.matmul %0, %213, %cst_178 {dimension_numbers = #tpu.dot_dimension_numbers<[1], [0], [0], [1], [0, 0, 1, 1], [], []>} : vector<128x16xbf16>, vector<16x1xbf16>, vector<128x1xf32> -> vector<128x1xf32>
    %215 = arith.addf %214, %1 : vector<128x1xf32>
    %cst_179 = arith.constant 0.000000e+00 : f32
    %216 = vector.broadcast %cst_179 : f32 to vector<128x1xf32>
    %217 = arith.maximumf %215, %216 : vector<128x1xf32>
    %c19_180 = arith.constant 19 : index
    %c0_181 = arith.constant 0 : index
    %c0_182 = arith.constant 0 : index
    %218 = vector.load %arg3[%c19_180, %c0_181, %c0_182] : memref<30x128x128xbf16, #tpu.memory_space<vmem>>, vector<1x128x128xbf16>
    %219 = vector.shape_cast %218 : vector<1x128x128xbf16> to vector<128x128xbf16>
    %220 = arith.truncf %217 : vector<128x1xf32> to vector<128x1xbf16>
    %cst_183 = arith.constant dense<0.000000e+00> : vector<128x1xf32>
    %221 = tpu.matmul %219, %220, %cst_183 {dimension_numbers = #tpu.dot_dimension_numbers<[1], [0], [0], [1], [0, 0, 1, 1], [], []>} : vector<128x128xbf16>, vector<128x1xbf16>, vector<128x1xf32> -> vector<128x1xf32>
    %222 = arith.addf %211, %221 : vector<128x1xf32>
    %c0_184 = arith.constant 0 : index
    %c20 = arith.constant 20 : index
    %c0_185 = arith.constant 0 : index
    %c0_186 = arith.constant 0 : index
    %223 = vector.load %arg0[%c0_184, %c20, %c0_185, %c0_186] : memref<1x30x16x1xbf16, #tpu.memory_space<vmem>>, vector<1x1x16x1xbf16>
    %224 = vector.shape_cast %223 : vector<1x1x16x1xbf16> to vector<16x1xbf16>
    %cst_187 = arith.constant dense<0.000000e+00> : vector<128x1xf32>
    %225 = tpu.matmul %0, %224, %cst_187 {dimension_numbers = #tpu.dot_dimension_numbers<[1], [0], [0], [1], [0, 0, 1, 1], [], []>} : vector<128x16xbf16>, vector<16x1xbf16>, vector<128x1xf32> -> vector<128x1xf32>
    %226 = arith.addf %225, %1 : vector<128x1xf32>
    %cst_188 = arith.constant 0.000000e+00 : f32
    %227 = vector.broadcast %cst_188 : f32 to vector<128x1xf32>
    %228 = arith.maximumf %226, %227 : vector<128x1xf32>
    %c20_189 = arith.constant 20 : index
    %c0_190 = arith.constant 0 : index
    %c0_191 = arith.constant 0 : index
    %229 = vector.load %arg3[%c20_189, %c0_190, %c0_191] : memref<30x128x128xbf16, #tpu.memory_space<vmem>>, vector<1x128x128xbf16>
    %230 = vector.shape_cast %229 : vector<1x128x128xbf16> to vector<128x128xbf16>
    %231 = arith.truncf %228 : vector<128x1xf32> to vector<128x1xbf16>
    %cst_192 = arith.constant dense<0.000000e+00> : vector<128x1xf32>
    %232 = tpu.matmul %230, %231, %cst_192 {dimension_numbers = #tpu.dot_dimension_numbers<[1], [0], [0], [1], [0, 0, 1, 1], [], []>} : vector<128x128xbf16>, vector<128x1xbf16>, vector<128x1xf32> -> vector<128x1xf32>
    %233 = arith.addf %222, %232 : vector<128x1xf32>
    %c0_193 = arith.constant 0 : index
    %c21 = arith.constant 21 : index
    %c0_194 = arith.constant 0 : index
    %c0_195 = arith.constant 0 : index
    %234 = vector.load %arg0[%c0_193, %c21, %c0_194, %c0_195] : memref<1x30x16x1xbf16, #tpu.memory_space<vmem>>, vector<1x1x16x1xbf16>
    %235 = vector.shape_cast %234 : vector<1x1x16x1xbf16> to vector<16x1xbf16>
    %cst_196 = arith.constant dense<0.000000e+00> : vector<128x1xf32>
    %236 = tpu.matmul %0, %235, %cst_196 {dimension_numbers = #tpu.dot_dimension_numbers<[1], [0], [0], [1], [0, 0, 1, 1], [], []>} : vector<128x16xbf16>, vector<16x1xbf16>, vector<128x1xf32> -> vector<128x1xf32>
    %237 = arith.addf %236, %1 : vector<128x1xf32>
    %cst_197 = arith.constant 0.000000e+00 : f32
    %238 = vector.broadcast %cst_197 : f32 to vector<128x1xf32>
    %239 = arith.maximumf %237, %238 : vector<128x1xf32>
    %c21_198 = arith.constant 21 : index
    %c0_199 = arith.constant 0 : index
    %c0_200 = arith.constant 0 : index
    %240 = vector.load %arg3[%c21_198, %c0_199, %c0_200] : memref<30x128x128xbf16, #tpu.memory_space<vmem>>, vector<1x128x128xbf16>
    %241 = vector.shape_cast %240 : vector<1x128x128xbf16> to vector<128x128xbf16>
    %242 = arith.truncf %239 : vector<128x1xf32> to vector<128x1xbf16>
    %cst_201 = arith.constant dense<0.000000e+00> : vector<128x1xf32>
    %243 = tpu.matmul %241, %242, %cst_201 {dimension_numbers = #tpu.dot_dimension_numbers<[1], [0], [0], [1], [0, 0, 1, 1], [], []>} : vector<128x128xbf16>, vector<128x1xbf16>, vector<128x1xf32> -> vector<128x1xf32>
    %244 = arith.addf %233, %243 : vector<128x1xf32>
    %c0_202 = arith.constant 0 : index
    %c22 = arith.constant 22 : index
    %c0_203 = arith.constant 0 : index
    %c0_204 = arith.constant 0 : index
    %245 = vector.load %arg0[%c0_202, %c22, %c0_203, %c0_204] : memref<1x30x16x1xbf16, #tpu.memory_space<vmem>>, vector<1x1x16x1xbf16>
    %246 = vector.shape_cast %245 : vector<1x1x16x1xbf16> to vector<16x1xbf16>
    %cst_205 = arith.constant dense<0.000000e+00> : vector<128x1xf32>
    %247 = tpu.matmul %0, %246, %cst_205 {dimension_numbers = #tpu.dot_dimension_numbers<[1], [0], [0], [1], [0, 0, 1, 1], [], []>} : vector<128x16xbf16>, vector<16x1xbf16>, vector<128x1xf32> -> vector<128x1xf32>
    %248 = arith.addf %247, %1 : vector<128x1xf32>
    %cst_206 = arith.constant 0.000000e+00 : f32
    %249 = vector.broadcast %cst_206 : f32 to vector<128x1xf32>
    %250 = arith.maximumf %248, %249 : vector<128x1xf32>
    %c22_207 = arith.constant 22 : index
    %c0_208 = arith.constant 0 : index
    %c0_209 = arith.constant 0 : index
    %251 = vector.load %arg3[%c22_207, %c0_208, %c0_209] : memref<30x128x128xbf16, #tpu.memory_space<vmem>>, vector<1x128x128xbf16>
    %252 = vector.shape_cast %251 : vector<1x128x128xbf16> to vector<128x128xbf16>
    %253 = arith.truncf %250 : vector<128x1xf32> to vector<128x1xbf16>
    %cst_210 = arith.constant dense<0.000000e+00> : vector<128x1xf32>
    %254 = tpu.matmul %252, %253, %cst_210 {dimension_numbers = #tpu.dot_dimension_numbers<[1], [0], [0], [1], [0, 0, 1, 1], [], []>} : vector<128x128xbf16>, vector<128x1xbf16>, vector<128x1xf32> -> vector<128x1xf32>
    %255 = arith.addf %244, %254 : vector<128x1xf32>
    %c0_211 = arith.constant 0 : index
    %c23 = arith.constant 23 : index
    %c0_212 = arith.constant 0 : index
    %c0_213 = arith.constant 0 : index
    %256 = vector.load %arg0[%c0_211, %c23, %c0_212, %c0_213] : memref<1x30x16x1xbf16, #tpu.memory_space<vmem>>, vector<1x1x16x1xbf16>
    %257 = vector.shape_cast %256 : vector<1x1x16x1xbf16> to vector<16x1xbf16>
    %cst_214 = arith.constant dense<0.000000e+00> : vector<128x1xf32>
    %258 = tpu.matmul %0, %257, %cst_214 {dimension_numbers = #tpu.dot_dimension_numbers<[1], [0], [0], [1], [0, 0, 1, 1], [], []>} : vector<128x16xbf16>, vector<16x1xbf16>, vector<128x1xf32> -> vector<128x1xf32>
    %259 = arith.addf %258, %1 : vector<128x1xf32>
    %cst_215 = arith.constant 0.000000e+00 : f32
    %260 = vector.broadcast %cst_215 : f32 to vector<128x1xf32>
    %261 = arith.maximumf %259, %260 : vector<128x1xf32>
    %c23_216 = arith.constant 23 : index
    %c0_217 = arith.constant 0 : index
    %c0_218 = arith.constant 0 : index
    %262 = vector.load %arg3[%c23_216, %c0_217, %c0_218] : memref<30x128x128xbf16, #tpu.memory_space<vmem>>, vector<1x128x128xbf16>
    %263 = vector.shape_cast %262 : vector<1x128x128xbf16> to vector<128x128xbf16>
    %264 = arith.truncf %261 : vector<128x1xf32> to vector<128x1xbf16>
    %cst_219 = arith.constant dense<0.000000e+00> : vector<128x1xf32>
    %265 = tpu.matmul %263, %264, %cst_219 {dimension_numbers = #tpu.dot_dimension_numbers<[1], [0], [0], [1], [0, 0, 1, 1], [], []>} : vector<128x128xbf16>, vector<128x1xbf16>, vector<128x1xf32> -> vector<128x1xf32>
    %266 = arith.addf %255, %265 : vector<128x1xf32>
    %c0_220 = arith.constant 0 : index
    %c24 = arith.constant 24 : index
    %c0_221 = arith.constant 0 : index
    %c0_222 = arith.constant 0 : index
    %267 = vector.load %arg0[%c0_220, %c24, %c0_221, %c0_222] : memref<1x30x16x1xbf16, #tpu.memory_space<vmem>>, vector<1x1x16x1xbf16>
    %268 = vector.shape_cast %267 : vector<1x1x16x1xbf16> to vector<16x1xbf16>
    %cst_223 = arith.constant dense<0.000000e+00> : vector<128x1xf32>
    %269 = tpu.matmul %0, %268, %cst_223 {dimension_numbers = #tpu.dot_dimension_numbers<[1], [0], [0], [1], [0, 0, 1, 1], [], []>} : vector<128x16xbf16>, vector<16x1xbf16>, vector<128x1xf32> -> vector<128x1xf32>
    %270 = arith.addf %269, %1 : vector<128x1xf32>
    %cst_224 = arith.constant 0.000000e+00 : f32
    %271 = vector.broadcast %cst_224 : f32 to vector<128x1xf32>
    %272 = arith.maximumf %270, %271 : vector<128x1xf32>
    %c24_225 = arith.constant 24 : index
    %c0_226 = arith.constant 0 : index
    %c0_227 = arith.constant 0 : index
    %273 = vector.load %arg3[%c24_225, %c0_226, %c0_227] : memref<30x128x128xbf16, #tpu.memory_space<vmem>>, vector<1x128x128xbf16>
    %274 = vector.shape_cast %273 : vector<1x128x128xbf16> to vector<128x128xbf16>
    %275 = arith.truncf %272 : vector<128x1xf32> to vector<128x1xbf16>
    %cst_228 = arith.constant dense<0.000000e+00> : vector<128x1xf32>
    %276 = tpu.matmul %274, %275, %cst_228 {dimension_numbers = #tpu.dot_dimension_numbers<[1], [0], [0], [1], [0, 0, 1, 1], [], []>} : vector<128x128xbf16>, vector<128x1xbf16>, vector<128x1xf32> -> vector<128x1xf32>
    %277 = arith.addf %266, %276 : vector<128x1xf32>
    %c0_229 = arith.constant 0 : index
    %c25 = arith.constant 25 : index
    %c0_230 = arith.constant 0 : index
    %c0_231 = arith.constant 0 : index
    %278 = vector.load %arg0[%c0_229, %c25, %c0_230, %c0_231] : memref<1x30x16x1xbf16, #tpu.memory_space<vmem>>, vector<1x1x16x1xbf16>
    %279 = vector.shape_cast %278 : vector<1x1x16x1xbf16> to vector<16x1xbf16>
    %cst_232 = arith.constant dense<0.000000e+00> : vector<128x1xf32>
    %280 = tpu.matmul %0, %279, %cst_232 {dimension_numbers = #tpu.dot_dimension_numbers<[1], [0], [0], [1], [0, 0, 1, 1], [], []>} : vector<128x16xbf16>, vector<16x1xbf16>, vector<128x1xf32> -> vector<128x1xf32>
    %281 = arith.addf %280, %1 : vector<128x1xf32>
    %cst_233 = arith.constant 0.000000e+00 : f32
    %282 = vector.broadcast %cst_233 : f32 to vector<128x1xf32>
    %283 = arith.maximumf %281, %282 : vector<128x1xf32>
    %c25_234 = arith.constant 25 : index
    %c0_235 = arith.constant 0 : index
    %c0_236 = arith.constant 0 : index
    %284 = vector.load %arg3[%c25_234, %c0_235, %c0_236] : memref<30x128x128xbf16, #tpu.memory_space<vmem>>, vector<1x128x128xbf16>
    %285 = vector.shape_cast %284 : vector<1x128x128xbf16> to vector<128x128xbf16>
    %286 = arith.truncf %283 : vector<128x1xf32> to vector<128x1xbf16>
    %cst_237 = arith.constant dense<0.000000e+00> : vector<128x1xf32>
    %287 = tpu.matmul %285, %286, %cst_237 {dimension_numbers = #tpu.dot_dimension_numbers<[1], [0], [0], [1], [0, 0, 1, 1], [], []>} : vector<128x128xbf16>, vector<128x1xbf16>, vector<128x1xf32> -> vector<128x1xf32>
    %288 = arith.addf %277, %287 : vector<128x1xf32>
    %c0_238 = arith.constant 0 : index
    %c26 = arith.constant 26 : index
    %c0_239 = arith.constant 0 : index
    %c0_240 = arith.constant 0 : index
    %289 = vector.load %arg0[%c0_238, %c26, %c0_239, %c0_240] : memref<1x30x16x1xbf16, #tpu.memory_space<vmem>>, vector<1x1x16x1xbf16>
    %290 = vector.shape_cast %289 : vector<1x1x16x1xbf16> to vector<16x1xbf16>
    %cst_241 = arith.constant dense<0.000000e+00> : vector<128x1xf32>
    %291 = tpu.matmul %0, %290, %cst_241 {dimension_numbers = #tpu.dot_dimension_numbers<[1], [0], [0], [1], [0, 0, 1, 1], [], []>} : vector<128x16xbf16>, vector<16x1xbf16>, vector<128x1xf32> -> vector<128x1xf32>
    %292 = arith.addf %291, %1 : vector<128x1xf32>
    %cst_242 = arith.constant 0.000000e+00 : f32
    %293 = vector.broadcast %cst_242 : f32 to vector<128x1xf32>
    %294 = arith.maximumf %292, %293 : vector<128x1xf32>
    %c26_243 = arith.constant 26 : index
    %c0_244 = arith.constant 0 : index
    %c0_245 = arith.constant 0 : index
    %295 = vector.load %arg3[%c26_243, %c0_244, %c0_245] : memref<30x128x128xbf16, #tpu.memory_space<vmem>>, vector<1x128x128xbf16>
    %296 = vector.shape_cast %295 : vector<1x128x128xbf16> to vector<128x128xbf16>
    %297 = arith.truncf %294 : vector<128x1xf32> to vector<128x1xbf16>
    %cst_246 = arith.constant dense<0.000000e+00> : vector<128x1xf32>
    %298 = tpu.matmul %296, %297, %cst_246 {dimension_numbers = #tpu.dot_dimension_numbers<[1], [0], [0], [1], [0, 0, 1, 1], [], []>} : vector<128x128xbf16>, vector<128x1xbf16>, vector<128x1xf32> -> vector<128x1xf32>
    %299 = arith.addf %288, %298 : vector<128x1xf32>
    %c0_247 = arith.constant 0 : index
    %c27 = arith.constant 27 : index
    %c0_248 = arith.constant 0 : index
    %c0_249 = arith.constant 0 : index
    %300 = vector.load %arg0[%c0_247, %c27, %c0_248, %c0_249] : memref<1x30x16x1xbf16, #tpu.memory_space<vmem>>, vector<1x1x16x1xbf16>
    %301 = vector.shape_cast %300 : vector<1x1x16x1xbf16> to vector<16x1xbf16>
    %cst_250 = arith.constant dense<0.000000e+00> : vector<128x1xf32>
    %302 = tpu.matmul %0, %301, %cst_250 {dimension_numbers = #tpu.dot_dimension_numbers<[1], [0], [0], [1], [0, 0, 1, 1], [], []>} : vector<128x16xbf16>, vector<16x1xbf16>, vector<128x1xf32> -> vector<128x1xf32>
    %303 = arith.addf %302, %1 : vector<128x1xf32>
    %cst_251 = arith.constant 0.000000e+00 : f32
    %304 = vector.broadcast %cst_251 : f32 to vector<128x1xf32>
    %305 = arith.maximumf %303, %304 : vector<128x1xf32>
    %c27_252 = arith.constant 27 : index
    %c0_253 = arith.constant 0 : index
    %c0_254 = arith.constant 0 : index
    %306 = vector.load %arg3[%c27_252, %c0_253, %c0_254] : memref<30x128x128xbf16, #tpu.memory_space<vmem>>, vector<1x128x128xbf16>
    %307 = vector.shape_cast %306 : vector<1x128x128xbf16> to vector<128x128xbf16>
    %308 = arith.truncf %305 : vector<128x1xf32> to vector<128x1xbf16>
    %cst_255 = arith.constant dense<0.000000e+00> : vector<128x1xf32>
    %309 = tpu.matmul %307, %308, %cst_255 {dimension_numbers = #tpu.dot_dimension_numbers<[1], [0], [0], [1], [0, 0, 1, 1], [], []>} : vector<128x128xbf16>, vector<128x1xbf16>, vector<128x1xf32> -> vector<128x1xf32>
    %310 = arith.addf %299, %309 : vector<128x1xf32>
    %c0_256 = arith.constant 0 : index
    %c28 = arith.constant 28 : index
    %c0_257 = arith.constant 0 : index
    %c0_258 = arith.constant 0 : index
    %311 = vector.load %arg0[%c0_256, %c28, %c0_257, %c0_258] : memref<1x30x16x1xbf16, #tpu.memory_space<vmem>>, vector<1x1x16x1xbf16>
    %312 = vector.shape_cast %311 : vector<1x1x16x1xbf16> to vector<16x1xbf16>
    %cst_259 = arith.constant dense<0.000000e+00> : vector<128x1xf32>
    %313 = tpu.matmul %0, %312, %cst_259 {dimension_numbers = #tpu.dot_dimension_numbers<[1], [0], [0], [1], [0, 0, 1, 1], [], []>} : vector<128x16xbf16>, vector<16x1xbf16>, vector<128x1xf32> -> vector<128x1xf32>
    %314 = arith.addf %313, %1 : vector<128x1xf32>
    %cst_260 = arith.constant 0.000000e+00 : f32
    %315 = vector.broadcast %cst_260 : f32 to vector<128x1xf32>
    %316 = arith.maximumf %314, %315 : vector<128x1xf32>
    %c28_261 = arith.constant 28 : index
    %c0_262 = arith.constant 0 : index
    %c0_263 = arith.constant 0 : index
    %317 = vector.load %arg3[%c28_261, %c0_262, %c0_263] : memref<30x128x128xbf16, #tpu.memory_space<vmem>>, vector<1x128x128xbf16>
    %318 = vector.shape_cast %317 : vector<1x128x128xbf16> to vector<128x128xbf16>
    %319 = arith.truncf %316 : vector<128x1xf32> to vector<128x1xbf16>
    %cst_264 = arith.constant dense<0.000000e+00> : vector<128x1xf32>
    %320 = tpu.matmul %318, %319, %cst_264 {dimension_numbers = #tpu.dot_dimension_numbers<[1], [0], [0], [1], [0, 0, 1, 1], [], []>} : vector<128x128xbf16>, vector<128x1xbf16>, vector<128x1xf32> -> vector<128x1xf32>
    %321 = arith.addf %310, %320 : vector<128x1xf32>
    %c0_265 = arith.constant 0 : index
    %c29 = arith.constant 29 : index
    %c0_266 = arith.constant 0 : index
    %c0_267 = arith.constant 0 : index
    %322 = vector.load %arg0[%c0_265, %c29, %c0_266, %c0_267] : memref<1x30x16x1xbf16, #tpu.memory_space<vmem>>, vector<1x1x16x1xbf16>
    %323 = vector.shape_cast %322 : vector<1x1x16x1xbf16> to vector<16x1xbf16>
    %cst_268 = arith.constant dense<0.000000e+00> : vector<128x1xf32>
    %324 = tpu.matmul %0, %323, %cst_268 {dimension_numbers = #tpu.dot_dimension_numbers<[1], [0], [0], [1], [0, 0, 1, 1], [], []>} : vector<128x16xbf16>, vector<16x1xbf16>, vector<128x1xf32> -> vector<128x1xf32>
    %325 = arith.addf %324, %1 : vector<128x1xf32>
    %cst_269 = arith.constant 0.000000e+00 : f32
    %326 = vector.broadcast %cst_269 : f32 to vector<128x1xf32>
    %327 = arith.maximumf %325, %326 : vector<128x1xf32>
    %c29_270 = arith.constant 29 : index
    %c0_271 = arith.constant 0 : index
    %c0_272 = arith.constant 0 : index
    %328 = vector.load %arg3[%c29_270, %c0_271, %c0_272] : memref<30x128x128xbf16, #tpu.memory_space<vmem>>, vector<1x128x128xbf16>
    %329 = vector.shape_cast %328 : vector<1x128x128xbf16> to vector<128x128xbf16>
    %330 = arith.truncf %327 : vector<128x1xf32> to vector<128x1xbf16>
    %cst_273 = arith.constant dense<0.000000e+00> : vector<128x1xf32>
    %331 = tpu.matmul %329, %330, %cst_273 {dimension_numbers = #tpu.dot_dimension_numbers<[1], [0], [0], [1], [0, 0, 1, 1], [], []>} : vector<128x128xbf16>, vector<128x1xbf16>, vector<128x1xf32> -> vector<128x1xf32>
    %332 = arith.addf %321, %331 : vector<128x1xf32>
    %c0_274 = arith.constant 0 : index
    %c0_275 = arith.constant 0 : index
    %333 = vector.load %arg4[%c0_274, %c0_275] : memref<128x1xf32, #tpu.memory_space<vmem>>, vector<128x1xf32>
    %334 = arith.addf %332, %333 : vector<128x1xf32>
    %cst_276 = arith.constant 0.000000e+00 : f32
    %335 = vector.broadcast %cst_276 : f32 to vector<128x1xf32>
    %336 = arith.maximumf %334, %335 : vector<128x1xf32>
    %c0_277 = arith.constant 0 : index
    %c0_278 = arith.constant 0 : index
    %337 = vector.load %arg5[%c0_277, %c0_278] : memref<128x128xbf16, #tpu.memory_space<vmem>>, vector<128x128xbf16>
    %338 = arith.truncf %336 : vector<128x1xf32> to vector<128x1xbf16>
    %cst_279 = arith.constant dense<0.000000e+00> : vector<128x1xf32>
    %339 = tpu.matmul %337, %338, %cst_279 {dimension_numbers = #tpu.dot_dimension_numbers<[1], [0], [0], [1], [0, 0, 1, 1], [], []>} : vector<128x128xbf16>, vector<128x1xbf16>, vector<128x1xf32> -> vector<128x1xf32>
    %c0_280 = arith.constant 0 : index
    %c0_281 = arith.constant 0 : index
    %340 = vector.load %arg6[%c0_280, %c0_281] : memref<128x1xf32, #tpu.memory_space<vmem>>, vector<128x1xf32>
    %341 = arith.addf %339, %340 : vector<128x1xf32>
    %cst_282 = arith.constant 0.000000e+00 : f32
    %342 = vector.broadcast %cst_282 : f32 to vector<128x1xf32>
    %343 = arith.maximumf %341, %342 : vector<128x1xf32>
    %c0_283 = arith.constant 0 : index
    %c0_284 = arith.constant 0 : index
    %344 = vector.load %arg7[%c0_283, %c0_284] : memref<128x128xbf16, #tpu.memory_space<vmem>>, vector<128x128xbf16>
    %345 = arith.truncf %343 : vector<128x1xf32> to vector<128x1xbf16>
    %cst_285 = arith.constant dense<0.000000e+00> : vector<128x1xf32>
    %346 = tpu.matmul %344, %345, %cst_285 {dimension_numbers = #tpu.dot_dimension_numbers<[1], [0], [0], [1], [0, 0, 1, 1], [], []>} : vector<128x128xbf16>, vector<128x1xbf16>, vector<128x1xf32> -> vector<128x1xf32>
    %c0_286 = arith.constant 0 : index
    %c0_287 = arith.constant 0 : index
    %347 = vector.load %arg8[%c0_286, %c0_287] : memref<128x1xf32, #tpu.memory_space<vmem>>, vector<128x1xf32>
    %348 = arith.addf %346, %347 : vector<128x1xf32>
    %c0_288 = arith.constant 0 : index
    %c0_289 = arith.constant 0 : index
    %c0_290 = arith.constant 0 : index
    %349 = vector.load %arg9[%c0_288, %c0_289, %c0_290] : memref<1x128x1xf32, #tpu.memory_space<vmem>>, vector<1x128x1xf32>
    %350 = vector.shape_cast %349 : vector<1x128x1xf32> to vector<128x1xf32>
    %351 = vector.shape_cast %348 : vector<128x1xf32> to vector<1x128x1xf32>
    tpu.vector_store %arg9[%c0_288, %c0_289, %c0_290], %351 {strides = array<i32>} : memref<1x128x1xf32, #tpu.memory_space<vmem>>, vector<1x128x1xf32>,
    return
  }
}

</mosaic_0001>

<llo_original>
// kernel: dqn_forward.1
$region0: #{dqn_forward.1}
  #allocation0 [shape = 'u32[]', space=smem, size = 0x4, offset = 0x4, fixed_abs, tag = 'smem constant byte address 0x4 - core index']
  #allocation1 [shape = 'u32[72,128]{1,0:T(1,128)}', space=vmem, size = 0x9000, scoped, tag = 'internal scratch']
  %s0 = inlined_call_operand.vmem [shape: bf16[1,30,16,1], index: 0, kind: input, shape index: {}]
  %s1 = inlined_call_operand.vmem [shape: bf16[128,16], index: 1, kind: input, shape index: {}]
  %s2 = inlined_call_operand.vmem [shape: f32[128,1], index: 2, kind: input, shape index: {}]
  %s3 = inlined_call_operand.vmem [shape: bf16[30,128,128], index: 3, kind: input, shape index: {}]
  %s4 = inlined_call_operand.vmem [shape: f32[128,1], index: 4, kind: input, shape index: {}]
  %s5 = inlined_call_operand.vmem [shape: bf16[128,128], index: 5, kind: input, shape index: {}]
  %s6 = inlined_call_operand.vmem [shape: f32[128,1], index: 6, kind: input, shape index: {}]
  %s7 = inlined_call_operand.vmem [shape: bf16[128,128], index: 7, kind: input, shape index: {}]
  %s8 = inlined_call_operand.vmem [shape: f32[128,1], index: 8, kind: input, shape index: {}]
  %s9 = inlined_call_operand.vmem [shape: f32[1,128,1], index: 9, kind: output, shape index: {}]
  %s10 = sld [smem:[#allocation0]]
  $region46: #{dqn_forward.1} parent=0
    _
  %s12 = ssub.s32 1, %s10
  %s13 = scalar_select 0, %s12, %s10
  // Predicated region
  $region2: #{dqn_forward.1} parent=0 // pred_check
    _
  $region3: #{dqn_forward.1} parent=0 // pred_check_branch
    %15 = sbr.rel (0) target = $region5
  $region4: #{dqn_forward.1} parent=0 // pred_region
    _
  $region5: #{dqn_forward.1} parent=0 // pred_fallthru
    _
  // Predicated region
  $region6: #{dqn_forward.1} parent=0 // pred_check
    _
  $region7: #{dqn_forward.1} parent=0 // pred_check_branch
    %17 = sbr.rel (0) target = $region9
  $region8: #{dqn_forward.1} parent=0 // pred_region
    _
  $region9: #{dqn_forward.1} parent=0 // pred_fallthru
    _
  // Predicated region
  $region10: #{dqn_forward.1} parent=0 // pred_check
    _
  $region11: #{dqn_forward.1} parent=0 // pred_check_branch
    %19 = sbr.rel (0) target = $region13
  $region12: #{dqn_forward.1} parent=0 // pred_region
    _
  $region13: #{dqn_forward.1} parent=0 // pred_fallthru
    _
  // Predicated region
  $region14: #{dqn_forward.1} parent=0 // pred_check
    _
  $region15: #{dqn_forward.1} parent=0 // pred_check_branch
    %21 = sbr.rel (0) target = $region17
  $region16: #{dqn_forward.1} parent=0 // pred_region
    _
  $region17: #{dqn_forward.1} parent=0 // pred_fallthru
    _
  // Predicated region
  $region18: #{dqn_forward.1} parent=0 // pred_check
    _
  $region19: #{dqn_forward.1} parent=0 // pred_check_branch
    %23 = sbr.rel (0) target = $region21
  $region20: #{dqn_forward.1} parent=0 // pred_region
    _
  $region21: #{dqn_forward.1} parent=0 // pred_fallthru
    _
  // Predicated region
  $region22: #{dqn_forward.1} parent=0 // pred_check
    _
  $region23: #{dqn_forward.1} parent=0 // pred_check_branch
    %25 = sbr.rel (0) target = $region25
  $region24: #{dqn_forward.1} parent=0 // pred_region
    _
  $region25: #{dqn_forward.1} parent=0 // pred_fallthru
    _
  // Predicated region
  $region26: #{dqn_forward.1} parent=0 // pred_check
    _
  $region27: #{dqn_forward.1} parent=0 // pred_check_branch
    %27 = sbr.rel (0) target = $region29
  $region28: #{dqn_forward.1} parent=0 // pred_region
    _
  $region29: #{dqn_forward.1} parent=0 // pred_fallthru
    _
  // Predicated region
  $region30: #{dqn_forward.1} parent=0 // pred_check
    _
  $region31: #{dqn_forward.1} parent=0 // pred_check_branch
    %29 = sbr.rel (0) target = $region33
  $region32: #{dqn_forward.1} parent=0 // pred_region
    _
  $region33: #{dqn_forward.1} parent=0 // pred_fallthru
    _
  // Predicated region
  $region34: #{dqn_forward.1} parent=0 // pred_check
    _
  $region35: #{dqn_forward.1} parent=0 // pred_check_branch
    %31 = sbr.rel (0) target = $region37
  $region36: #{dqn_forward.1} parent=0 // pred_region
    _
  $region37: #{dqn_forward.1} parent=0 // pred_fallthru
    _
  %v33 = vld [vmem:[%s1] sm:$0xf]
  %v34 = vld [vmem:[%s1 + $0x4] sm:$0xf]
  %v35 = vld [vmem:[%s1 + $0x8] sm:$0xf]
  %v36 = vld [vmem:[%s1 + $0xc] sm:$0xf]
  %v37 = vld [vmem:[%s1 + $0x10] sm:$0xf]
  %v38 = vld [vmem:[%s1 + $0x14] sm:$0xf]
  %v39 = vld [vmem:[%s1 + $0x18] sm:$0xf]
  %v40 = vld [vmem:[%s1 + $0x1c] sm:$0xf]
  %v41 = vld [vmem:[%s1 + $0x20] sm:$0xf]
  %v42 = vld [vmem:[%s1 + $0x24] sm:$0xf]
  %v43 = vld [vmem:[%s1 + $0x28] sm:$0xf]
  %v44 = vld [vmem:[%s1 + $0x2c] sm:$0xf]
  %v45 = vld [vmem:[%s1 + $0x30] sm:$0xf]
  %v46 = vld [vmem:[%s1 + $0x34] sm:$0xf]
  %v47 = vld [vmem:[%s1 + $0x38] sm:$0xf]
  %v48 = vld [vmem:[%s1 + $0x3c] sm:$0xf]
  %v49 = vld [vmem:[%s2] sm:$0xff]
  %v50 = vld [vmem:[%s2 + $0x8] sm:$0xff]
  %v51 = vld [vmem:[%s2 + $0x10] sm:$0xff]
  %v52 = vld [vmem:[%s2 + $0x18] sm:$0xff]
  %v53 = vld [vmem:[%s2 + $0x20] sm:$0xff]
  %v54 = vld [vmem:[%s2 + $0x28] sm:$0xff]
  %v55 = vld [vmem:[%s2 + $0x30] sm:$0xff]
  %v56 = vld [vmem:[%s2 + $0x38] sm:$0xff]
  %v57 = vld [vmem:[%s2 + $0x40] sm:$0xff]
  %v58 = vld [vmem:[%s2 + $0x48] sm:$0xff]
  %v59 = vld [vmem:[%s2 + $0x50] sm:$0xff]
  %v60 = vld [vmem:[%s2 + $0x58] sm:$0xff]
  %v61 = vld [vmem:[%s2 + $0x60] sm:$0xff]
  %v62 = vld [vmem:[%s2 + $0x68] sm:$0xff]
  %v63 = vld [vmem:[%s2 + $0x70] sm:$0xff]
  %v64 = vld [vmem:[%s2 + $0x78] sm:$0xff]
  %v65 = vld [vmem:[%s0] sm:$0xf]
  %v66 = vld [vmem:[%s0 + $0x4] sm:$0xf]
  %v83 = vunpack.c.l.b16 %v33
  %v84 = vunpack.c.l.b16 %v34
  %v85 = vunpack.c.l.b16 %v35
  %v86 = vunpack.c.l.b16 %v36
  %v87 = vunpack.c.l.b16 %v37
  %v88 = vunpack.c.l.b16 %v38
  %v89 = vunpack.c.l.b16 %v39
  %v90 = vunpack.c.l.b16 %v40
  %v91 = vunpack.c.l.b16 %v41
  %v92 = vunpack.c.l.b16 %v42
  %v93 = vunpack.c.l.b16 %v43
  %v94 = vunpack.c.l.b16 %v44
  %v95 = vunpack.c.l.b16 %v45
  %v96 = vunpack.c.l.b16 %v46
  %v97 = vunpack.c.l.b16 %v47
  %v98 = vunpack.c.l.b16 %v48
  %v99 = vpack.c.b16 %v84, %v83
  %v100 = vpack.c.b16 %v86, %v85
  %v101 = vpack.c.b16 %v88, %v87
  %v102 = vpack.c.b16 %v90, %v89
  %v103 = vpack.c.b16 %v92, %v91
  %v104 = vpack.c.b16 %v94, %v93
  %v105 = vpack.c.b16 %v96, %v95
  %v106 = vpack.c.b16 %v98, %v97
  %v109 = vunpack.c.l.b16 %v65
  %v110 = vunpack.c.l.b16 %v66
  %v111 = vpack.c.b16 %v110, %v109
  %vm113 = vcmask 130048
  %v115 = vsel %vm113, %v99, 0
  %v118 = vsel %vm113, %v100, 0
  %v121 = vsel %vm113, %v101, 0
  %v124 = vsel %vm113, %v102, 0
  %v127 = vsel %vm113, %v103, 0
  %v130 = vsel %vm113, %v104, 0
  %v133 = vsel %vm113, %v105, 0
  %v136 = vsel %vm113, %v106, 0
  %138 = vmatpush.bf16.msra.mxu0 0
  %139 = vmatpush.bf16.msra.mxu0 0
  %140 = vmatpush.bf16.msra.mxu0 0
  %141 = vmatpush.bf16.msra.mxu0 0
  %142 = vmatpush.bf16.msra.mxu0 0
  %143 = vmatpush.bf16.msra.mxu0 0
  %144 = vmatpush.bf16.msra.mxu0 0
  %145 = vmatpush.bf16.msra.mxu0 %v111
  %146 = vmatmul.bf16.gmra.mxu0 %v115
  %v147 = vpop.f32.mrf.mxu0
  %v148 = vadd.f32 %v49, %v147
  %v149 = vpop.f32.mrf.mxu0
  %v150 = vadd.f32 %v50, %v149
  %151 = vmatmul.bf16.gmra.mxu0 %v118
  %v152 = vpop.f32.mrf.mxu0
  %v153 = vadd.f32 %v51, %v152
  %v154 = vpop.f32.mrf.mxu0
  %v155 = vadd.f32 %v52, %v154
  %156 = vmatmul.bf16.gmra.mxu0 %v121
  %v157 = vpop.f32.mrf.mxu0
  %v158 = vadd.f32 %v53, %v157
  %v159 = vpop.f32.mrf.mxu0
  %v160 = vadd.f32 %v54, %v159
  %161 = vmatmul.bf16.gmra.mxu0 %v124
  %v162 = vpop.f32.mrf.mxu0
  %v163 = vadd.f32 %v55, %v162
  %v164 = vpop.f32.mrf.mxu0
  %v165 = vadd.f32 %v56, %v164
  %166 = vmatmul.bf16.gmra.mxu0 %v127
  %v167 = vpop.f32.mrf.mxu0
  %v168 = vadd.f32 %v57, %v167
  %v169 = vpop.f32.mrf.mxu0
  %v170 = vadd.f32 %v58, %v169
  %171 = vmatmul.bf16.gmra.mxu0 %v130
  %v172 = vpop.f32.mrf.mxu0
  %v173 = vadd.f32 %v59, %v172
  %v174 = vpop.f32.mrf.mxu0
  %v175 = vadd.f32 %v60, %v174
  %176 = vmatmul.bf16.gmra.mxu0 %v133
  %v177 = vpop.f32.mrf.mxu0
  %v178 = vadd.f32 %v61, %v177
  %v179 = vpop.f32.mrf.mxu0
  %v180 = vadd.f32 %v62, %v179
  %181 = vmatmul.bf16.gmra.mxu0 %v136
  %v182 = vpop.f32.mrf.mxu0
  %v183 = vadd.f32 %v63, %v182
  %v184 = vpop.f32.mrf.mxu0
  %v185 = vadd.f32 %v64, %v184
  %186 = vdwg.mxu0
  %v187 = vmax.f32 %v148, 0.0
  %v188 = vmax.f32 %v150, 0.0
  %v189 = vmax.f32 %v153, 0.0
  %v190 = vmax.f32 %v155, 0.0
  %v191 = vmax.f32 %v158, 0.0
  %v192 = vmax.f32 %v160, 0.0
  %v193 = vmax.f32 %v163, 0.0
  %v194 = vmax.f32 %v165, 0.0
  %v195 = vmax.f32 %v168, 0.0
  %v196 = vmax.f32 %v170, 0.0
  %v197 = vmax.f32 %v173, 0.0
  %v198 = vmax.f32 %v175, 0.0
  %v199 = vmax.f32 %v178, 0.0
  %v200 = vmax.f32 %v180, 0.0
  %v201 = vmax.f32 %v183, 0.0
  %v202 = vmax.f32 %v185, 0.0
  %v203 = vld [vmem:[%s3] sm:$0xf]
  %v204 = vld [vmem:[%s3 + $0x4] sm:$0xf]
  %v205 = vld [vmem:[%s3 + $0x8] sm:$0xf]
  %v206 = vld [vmem:[%s3 + $0xc] sm:$0xf]
  %v207 = vld [vmem:[%s3 + $0x10] sm:$0xf]
  %v208 = vld [vmem:[%s3 + $0x14] sm:$0xf]
  %v209 = vld [vmem:[%s3 + $0x18] sm:$0xf]
  %v210 = vld [vmem:[%s3 + $0x1c] sm:$0xf]
  %v211 = vld [vmem:[%s3 + $0x20] sm:$0xf]
  %v212 = vld [vmem:[%s3 + $0x24] sm:$0xf]
  %v213 = vld [vmem:[%s3 + $0x28] sm:$0xf]
  %v214 = vld [vmem:[%s3 + $0x2c] sm:$0xf]
  %v215 = vld [vmem:[%s3 + $0x30] sm:$0xf]
  %v216 = vld [vmem:[%s3 + $0x34] sm:$0xf]
  %v217 = vld [vmem:[%s3 + $0x38] sm:$0xf]
  %v218 = vld [vmem:[%s3 + $0x3c] sm:$0xf]
  %v219 = vpack.c.bf16 %v188, %v187
  %v220 = vpack.c.bf16 %v190, %v189
  %v221 = vpack.c.bf16 %v192, %v191
  %v222 = vpack.c.bf16 %v194, %v193
  %v223 = vpack.c.bf16 %v196, %v195
  %v224 = vpack.c.bf16 %v198, %v197
  %v225 = vpack.c.bf16 %v200, %v199
  %v226 = vpack.c.bf16 %v202, %v201
  %s227 = scalar_lea.vmem %s0, 8
  %v228 = vld [vmem:[%s227] sm:$0xf]
  %v229 = vld [vmem:[%s227 + $0x4] sm:$0xf]
  %v232 = vunpack.c.l.b16 %v228
  %v233 = vunpack.c.l.b16 %v229
  %v234 = vpack.c.b16 %v233, %v232
  %236 = vmatpush.bf16.msra.mxu0 0
  %237 = vmatpush.bf16.msra.mxu0 0
  %238 = vmatpush.bf16.msra.mxu0 0
  %239 = vmatpush.bf16.msra.mxu0 0
  %240 = vmatpush.bf16.msra.mxu0 0
  %241 = vmatpush.bf16.msra.mxu0 0
  %242 = vmatpush.bf16.msra.mxu0 0
  %243 = vmatpush.bf16.msra.mxu0 %v234
  %244 = vmatmul.bf16.gmra.mxu0 %v115
  %v245 = vpop.f32.mrf.mxu0
  %v246 = vadd.f32 %v49, %v245
  %v247 = vpop.f32.mrf.mxu0
  %v248 = vadd.f32 %v50, %v247
  %249 = vmatmul.bf16.gmra.mxu0 %v118
  %v250 = vpop.f32.mrf.mxu0
  %v251 = vadd.f32 %v51, %v250
  %v252 = vpop.f32.mrf.mxu0
  %v253 = vadd.f32 %v52, %v252
  %254 = vmatmul.bf16.gmra.mxu0 %v121
  %v255 = vpop.f32.mrf.mxu0
  %v256 = vadd.f32 %v53, %v255
  %v257 = vpop.f32.mrf.mxu0
  %v258 = vadd.f32 %v54, %v257
  %259 = vmatmul.bf16.gmra.mxu0 %v124
  %v260 = vpop.f32.mrf.mxu0
  %v261 = vadd.f32 %v55, %v260
  %v262 = vpop.f32.mrf.mxu0
  %v263 = vadd.f32 %v56, %v262
  %264 = vmatmul.bf16.gmra.mxu0 %v127
  %v265 = vpop.f32.mrf.mxu0
  %v266 = vadd.f32 %v57, %v265
  %v267 = vpop.f32.mrf.mxu0
  %v268 = vadd.f32 %v58, %v267
  %269 = vmatmul.bf16.gmra.mxu0 %v130
  %v270 = vpop.f32.mrf.mxu0
  %v271 = vadd.f32 %v59, %v270
  %v272 = vpop.f32.mrf.mxu0
  %v273 = vadd.f32 %v60, %v272
  %274 = vmatmul.bf16.gmra.mxu0 %v133
  %v275 = vpop.f32.mrf.mxu0
  %v276 = vadd.f32 %v61, %v275
  %v277 = vpop.f32.mrf.mxu0
  %v278 = vadd.f32 %v62, %v277
  %279 = vmatmul.bf16.gmra.mxu0 %v136
  %v280 = vpop.f32.mrf.mxu0
  %v281 = vadd.f32 %v63, %v280
  %v282 = vpop.f32.mrf.mxu0
  %v283 = vadd.f32 %v64, %v282
  %284 = vdwg.mxu0
  %v285 = vmax.f32 %v246, 0.0
  %v286 = vmax.f32 %v248, 0.0
  %v287 = vmax.f32 %v251, 0.0
  %v288 = vmax.f32 %v253, 0.0
  %v289 = vmax.f32 %v256, 0.0
  %v290 = vmax.f32 %v258, 0.0
  %v291 = vmax.f32 %v261, 0.0
  %v292 = vmax.f32 %v263, 0.0
  %v293 = vmax.f32 %v266, 0.0
  %v294 = vmax.f32 %v268, 0.0
  %v295 = vmax.f32 %v271, 0.0
  %v296 = vmax.f32 %v273, 0.0
  %v297 = vmax.f32 %v276, 0.0
  %v298 = vmax.f32 %v278, 0.0
  %v299 = vmax.f32 %v281, 0.0
  %v300 = vmax.f32 %v283, 0.0
  %s301 = scalar_lea.vmem %s3, 64
  %v302 = vld [vmem:[%s301] sm:$0xf]
  %v303 = vld [vmem:[%s301 + $0x4] sm:$0xf]
  %v304 = vld [vmem:[%s301 + $0x8] sm:$0xf]
  %v305 = vld [vmem:[%s301 + $0xc] sm:$0xf]
  %v306 = vld [vmem:[%s301 + $0x10] sm:$0xf]
  %v307 = vld [vmem:[%s301 + $0x14] sm:$0xf]
  %v308 = vld [vmem:[%s301 + $0x18] sm:$0xf]
  %v309 = vld [vmem:[%s301 + $0x1c] sm:$0xf]
  %v310 = vld [vmem:[%s301 + $0x20] sm:$0xf]
  %v311 = vld [vmem:[%s301 + $0x24] sm:$0xf]
  %v312 = vld [vmem:[%s301 + $0x28] sm:$0xf]
  %v313 = vld [vmem:[%s301 + $0x2c] sm:$0xf]
  %v314 = vld [vmem:[%s301 + $0x30] sm:$0xf]
  %v315 = vld [vmem:[%s301 + $0x34] sm:$0xf]
  %v316 = vld [vmem:[%s301 + $0x38] sm:$0xf]
  %v317 = vld [vmem:[%s301 + $0x3c] sm:$0xf]
  %v318 = vpack.c.bf16 %v286, %v285
  %v319 = vpack.c.bf16 %v288, %v287
  %v320 = vpack.c.bf16 %v290, %v289
  %v321 = vpack.c.bf16 %v292, %v291
  %v322 = vpack.c.bf16 %v294, %v293
  %v323 = vpack.c.bf16 %v296, %v295
  %v324 = vpack.c.bf16 %v298, %v297
  %v325 = vpack.c.bf16 %v300, %v299
  %v342 = vunpack.c.l.b16 %v302
  %v343 = vunpack.c.l.b16 %v303
  %v344 = vunpack.c.l.b16 %v304
  %v345 = vunpack.c.l.b16 %v305
  %v346 = vunpack.c.l.b16 %v306
  %v347 = vunpack.c.l.b16 %v307
  %v348 = vunpack.c.l.b16 %v308
  %v349 = vunpack.c.l.b16 %v309
  %v350 = vunpack.c.l.b16 %v310
  %v351 = vunpack.c.l.b16 %v311
  %v352 = vunpack.c.l.b16 %v312
  %v353 = vunpack.c.l.b16 %v313
  %v354 = vunpack.c.l.b16 %v314
  %v355 = vunpack.c.l.b16 %v315
  %v356 = vunpack.c.l.b16 %v316
  %v357 = vunpack.c.l.b16 %v317
  %v358 = vpack.c.b16 %v343, %v342
  %v359 = vpack.c.b16 %v345, %v344
  %v360 = vpack.c.b16 %v347, %v346
  %v361 = vpack.c.b16 %v349, %v348
  %v362 = vpack.c.b16 %v351, %v350
  %v363 = vpack.c.b16 %v353, %v352
  %v364 = vpack.c.b16 %v355, %v354
  %v365 = vpack.c.b16 %v357, %v356
  %374 = vmatpush.bf16.msra.mxu0 %v325
  %375 = vmatpush.bf16.msra.mxu0 %v324
  %376 = vmatpush.bf16.msra.mxu0 %v323
  %377 = vmatpush.bf16.msra.mxu0 %v322
  %378 = vmatpush.bf16.msra.mxu0 %v321
  %379 = vmatpush.bf16.msra.mxu0 %v320
  %380 = vmatpush.bf16.msra.mxu0 %v319
  %381 = vmatpush.bf16.msra.mxu0 %v318
  %382 = vmatmul.bf16.gmra.mxu0 %v358
  %v383 = vpop.f32.mrf.mxu0
  %v384 = vadd.f32 0.0, %v383
  %v385 = vpop.f32.mrf.mxu0
  %v386 = vadd.f32 0.0, %v385
  %387 = vmatmul.bf16.gmra.mxu0 %v359
  %v388 = vpop.f32.mrf.mxu0
  %v389 = vadd.f32 0.0, %v388
  %v390 = vpop.f32.mrf.mxu0
  %v391 = vadd.f32 0.0, %v390
  %392 = vmatmul.bf16.gmra.mxu0 %v360
  %v393 = vpop.f32.mrf.mxu0
  %v394 = vadd.f32 0.0, %v393
  %v395 = vpop.f32.mrf.mxu0
  %v396 = vadd.f32 0.0, %v395
  %397 = vmatmul.bf16.gmra.mxu0 %v361
  %v398 = vpop.f32.mrf.mxu0
  %v399 = vadd.f32 0.0, %v398
  %v400 = vpop.f32.mrf.mxu0
  %v401 = vadd.f32 0.0, %v400
  %402 = vmatmul.bf16.gmra.mxu0 %v362
  %v403 = vpop.f32.mrf.mxu0
  %v404 = vadd.f32 0.0, %v403
  %v405 = vpop.f32.mrf.mxu0
  %v406 = vadd.f32 0.0, %v405
  %407 = vmatmul.bf16.gmra.mxu0 %v363
  %v408 = vpop.f32.mrf.mxu0
  %v409 = vadd.f32 0.0, %v408
  %v410 = vpop.f32.mrf.mxu0
  %v411 = vadd.f32 0.0, %v410
  %412 = vmatmul.bf16.gmra.mxu0 %v364
  %v413 = vpop.f32.mrf.mxu0
  %v414 = vadd.f32 0.0, %v413
  %v415 = vpop.f32.mrf.mxu0
  %v416 = vadd.f32 0.0, %v415
  %417 = vmatmul.bf16.gmra.mxu0 %v365
  %v418 = vpop.f32.mrf.mxu0
  %v419 = vadd.f32 0.0, %v418
  %v420 = vpop.f32.mrf.mxu0
  %v421 = vadd.f32 0.0, %v420
  %422 = vdwg.mxu0
  %v439 = vunpack.c.l.b16 %v203
  %v440 = vunpack.c.l.b16 %v204
  %v441 = vunpack.c.l.b16 %v205
  %v442 = vunpack.c.l.b16 %v206
  %v443 = vunpack.c.l.b16 %v207
  %v444 = vunpack.c.l.b16 %v208
  %v445 = vunpack.c.l.b16 %v209
  %v446 = vunpack.c.l.b16 %v210
  %v447 = vunpack.c.l.b16 %v211
  %v448 = vunpack.c.l.b16 %v212
  %v449 = vunpack.c.l.b16 %v213
  %v450 = vunpack.c.l.b16 %v214
  %v451 = vunpack.c.l.b16 %v215
  %v452 = vunpack.c.l.b16 %v216
  %v453 = vunpack.c.l.b16 %v217
  %v454 = vunpack.c.l.b16 %v218
  %v455 = vpack.c.b16 %v440, %v439
  %v456 = vpack.c.b16 %v442, %v441
  %v457 = vpack.c.b16 %v444, %v443
  %v458 = vpack.c.b16 %v446, %v445
  %v459 = vpack.c.b16 %v448, %v447
  %v460 = vpack.c.b16 %v450, %v449
  %v461 = vpack.c.b16 %v452, %v451
  %v462 = vpack.c.b16 %v454, %v453
  %471 = vmatpush.bf16.msra.mxu0 %v226
  %472 = vmatpush.bf16.msra.mxu0 %v225
  %473 = vmatpush.bf16.msra.mxu0 %v224
  %474 = vmatpush.bf16.msra.mxu0 %v223
  %475 = vmatpush.bf16.msra.mxu0 %v222
  %476 = vmatpush.bf16.msra.mxu0 %v221
  %477 = vmatpush.bf16.msra.mxu0 %v220
  %478 = vmatpush.bf16.msra.mxu0 %v219
  %479 = vmatmul.bf16.gmra.mxu0 %v455
  %v480 = vpop.f32.mrf.mxu0
  %v481 = vadd.f32 %v384, %v480
  %v482 = vpop.f32.mrf.mxu0
  %v483 = vadd.f32 %v386, %v482
  %484 = vmatmul.bf16.gmra.mxu0 %v456
  %v485 = vpop.f32.mrf.mxu0
  %v486 = vadd.f32 %v389, %v485
  %v487 = vpop.f32.mrf.mxu0
  %v488 = vadd.f32 %v391, %v487
  %489 = vmatmul.bf16.gmra.mxu0 %v457
  %v490 = vpop.f32.mrf.mxu0
  %v491 = vadd.f32 %v394, %v490
  %v492 = vpop.f32.mrf.mxu0
  %v493 = vadd.f32 %v396, %v492
  %494 = vmatmul.bf16.gmra.mxu0 %v458
  %v495 = vpop.f32.mrf.mxu0
  %v496 = vadd.f32 %v399, %v495
  %v497 = vpop.f32.mrf.mxu0
  %v498 = vadd.f32 %v401, %v497
  %499 = vmatmul.bf16.gmra.mxu0 %v459
  %v500 = vpop.f32.mrf.mxu0
  %v501 = vadd.f32 %v404, %v500
  %v502 = vpop.f32.mrf.mxu0
  %v503 = vadd.f32 %v406, %v502
  %504 = vmatmul.bf16.gmra.mxu0 %v460
  %v505 = vpop.f32.mrf.mxu0
  %v506 = vadd.f32 %v409, %v505
  %v507 = vpop.f32.mrf.mxu0
  %v508 = vadd.f32 %v411, %v507
  %509 = vmatmul.bf16.gmra.mxu0 %v461
  %v510 = vpop.f32.mrf.mxu0
  %v511 = vadd.f32 %v414, %v510
  %v512 = vpop.f32.mrf.mxu0
  %v513 = vadd.f32 %v416, %v512
  %514 = vmatmul.bf16.gmra.mxu0 %v462
  %v515 = vpop.f32.mrf.mxu0
  %v516 = vadd.f32 %v419, %v515
  %v517 = vpop.f32.mrf.mxu0
  %v518 = vadd.f32 %v421, %v517
  %519 = vdwg.mxu0
  %s520 = scalar_lea.vmem %s0, 16
  %v521 = vld [vmem:[%s520] sm:$0xf]
  %v522 = vld [vmem:[%s520 + $0x4] sm:$0xf]
  %v525 = vunpack.c.l.b16 %v521
  %v526 = vunpack.c.l.b16 %v522
  %v527 = vpack.c.b16 %v526, %v525
  %529 = vmatpush.bf16.msra.mxu0 0
  %530 = vmatpush.bf16.msra.mxu0 0
  %531 = vmatpush.bf16.msra.mxu0 0
  %532 = vmatpush.bf16.msra.mxu0 0
  %533 = vmatpush.bf16.msra.mxu0 0
  %534 = vmatpush.bf16.msra.mxu0 0
  %535 = vmatpush.bf16.msra.mxu0 0
  %536 = vmatpush.bf16.msra.mxu0 %v527
  %537 = vmatmul.bf16.gmra.mxu0 %v115
  %v538 = vpop.f32.mrf.mxu0
  %v539 = vadd.f32 %v49, %v538
  %v540 = vpop.f32.mrf.mxu0
  %v541 = vadd.f32 %v50, %v540
  %542 = vmatmul.bf16.gmra.mxu0 %v118
  %v543 = vpop.f32.mrf.mxu0
  %v544 = vadd.f32 %v51, %v543
  %v545 = vpop.f32.mrf.mxu0
  %v546 = vadd.f32 %v52, %v545
  %547 = vmatmul.bf16.gmra.mxu0 %v121
  %v548 = vpop.f32.mrf.mxu0
  %v549 = vadd.f32 %v53, %v548
  %v550 = vpop.f32.mrf.mxu0
  %v551 = vadd.f32 %v54, %v550
  %552 = vmatmul.bf16.gmra.mxu0 %v124
  %v553 = vpop.f32.mrf.mxu0
  %v554 = vadd.f32 %v55, %v553
  %v555 = vpop.f32.mrf.mxu0
  %v556 = vadd.f32 %v56, %v555
  %557 = vmatmul.bf16.gmra.mxu0 %v127
  %v558 = vpop.f32.mrf.mxu0
  %v559 = vadd.f32 %v57, %v558
  %v560 = vpop.f32.mrf.mxu0
  %v561 = vadd.f32 %v58, %v560
  %562 = vmatmul.bf16.gmra.mxu0 %v130
  %v563 = vpop.f32.mrf.mxu0
  %v564 = vadd.f32 %v59, %v563
  %v565 = vpop.f32.mrf.mxu0
  %v566 = vadd.f32 %v60, %v565
  %567 = vmatmul.bf16.gmra.mxu0 %v133
  %v568 = vpop.f32.mrf.mxu0
  %v569 = vadd.f32 %v61, %v568
  %v570 = vpop.f32.mrf.mxu0
  %v571 = vadd.f32 %v62, %v570
  %572 = vmatmul.bf16.gmra.mxu0 %v136
  %v573 = vpop.f32.mrf.mxu0
  %v574 = vadd.f32 %v63, %v573
  %v575 = vpop.f32.mrf.mxu0
  %v576 = vadd.f32 %v64, %v575
  %577 = vdwg.mxu0
  %v578 = vmax.f32 %v539, 0.0
  %v579 = vmax.f32 %v541, 0.0
  %v580 = vmax.f32 %v544, 0.0
  %v581 = vmax.f32 %v546, 0.0
  %v582 = vmax.f32 %v549, 0.0
  %v583 = vmax.f32 %v551, 0.0
  %v584 = vmax.f32 %v554, 0.0
  %v585 = vmax.f32 %v556, 0.0
  %v586 = vmax.f32 %v559, 0.0
  %v587 = vmax.f32 %v561, 0.0
  %v588 = vmax.f32 %v564, 0.0
  %v589 = vmax.f32 %v566, 0.0
  %v590 = vmax.f32 %v569, 0.0
  %v591 = vmax.f32 %v571, 0.0
  %v592 = vmax.f32 %v574, 0.0
  %v593 = vmax.f32 %v576, 0.0
  %s594 = scalar_lea.vmem %s3, 128
  %v595 = vld [vmem:[%s594] sm:$0xf]
  %v596 = vld [vmem:[%s594 + $0x4] sm:$0xf]
  %v597 = vld [vmem:[%s594 + $0x8] sm:$0xf]
  %v598 = vld [vmem:[%s594 + $0xc] sm:$0xf]
  %v599 = vld [vmem:[%s594 + $0x10] sm:$0xf]
  %v600 = vld [vmem:[%s594 + $0x14] sm:$0xf]
  %v601 = vld [vmem:[%s594 + $0x18] sm:$0xf]
  %v602 = vld [vmem:[%s594 + $0x1c] sm:$0xf]
  %v603 = vld [vmem:[%s594 + $0x20] sm:$0xf]
  %v604 = vld [vmem:[%s594 + $0x24] sm:$0xf]
  %v605 = vld [vmem:[%s594 + $0x28] sm:$0xf]
  %v606 = vld [vmem:[%s594 + $0x2c] sm:$0xf]
  %v607 = vld [vmem:[%s594 + $0x30] sm:$0xf]
  %v608 = vld [vmem:[%s594 + $0x34] sm:$0xf]
  %v609 = vld [vmem:[%s594 + $0x38] sm:$0xf]
  %v610 = vld [vmem:[%s594 + $0x3c] sm:$0xf]
  %v611 = vpack.c.bf16 %v579, %v578
  %v612 = vpack.c.bf16 %v581, %v580
  %v613 = vpack.c.bf16 %v583, %v582
  %v614 = vpack.c.bf16 %v585, %v584
  %v615 = vpack.c.bf16 %v587, %v586
  %v616 = vpack.c.bf16 %v589, %v588
  %v617 = vpack.c.bf16 %v591, %v590
  %v618 = vpack.c.bf16 %v593, %v592
  %v635 = vunpack.c.l.b16 %v595
  %v636 = vunpack.c.l.b16 %v596
  %v637 = vunpack.c.l.b16 %v597
  %v638 = vunpack.c.l.b16 %v598
  %v639 = vunpack.c.l.b16 %v599
  %v640 = vunpack.c.l.b16 %v600
  %v641 = vunpack.c.l.b16 %v601
  %v642 = vunpack.c.l.b16 %v602
  %v643 = vunpack.c.l.b16 %v603
  %v644 = vunpack.c.l.b16 %v604
  %v645 = vunpack.c.l.b16 %v605
  %v646 = vunpack.c.l.b16 %v606
  %v647 = vunpack.c.l.b16 %v607
  %v648 = vunpack.c.l.b16 %v608
  %v649 = vunpack.c.l.b16 %v609
  %v650 = vunpack.c.l.b16 %v610
  %v651 = vpack.c.b16 %v636, %v635
  %v652 = vpack.c.b16 %v638, %v637
  %v653 = vpack.c.b16 %v640, %v639
  %v654 = vpack.c.b16 %v642, %v641
  %v655 = vpack.c.b16 %v644, %v643
  %v656 = vpack.c.b16 %v646, %v645
  %v657 = vpack.c.b16 %v648, %v647
  %v658 = vpack.c.b16 %v650, %v649
  %667 = vmatpush.bf16.msra.mxu0 %v618
  %668 = vmatpush.bf16.msra.mxu0 %v617
  %669 = vmatpush.bf16.msra.mxu0 %v616
  %670 = vmatpush.bf16.msra.mxu0 %v615
  %671 = vmatpush.bf16.msra.mxu0 %v614
  %672 = vmatpush.bf16.msra.mxu0 %v613
  %673 = vmatpush.bf16.msra.mxu0 %v612
  %674 = vmatpush.bf16.msra.mxu0 %v611
  %675 = vmatmul.bf16.gmra.mxu0 %v651
  %v676 = vpop.f32.mrf.mxu0
  %v677 = vadd.f32 0.0, %v676
  %v678 = vpop.f32.mrf.mxu0
  %v679 = vadd.f32 0.0, %v678
  %680 = vmatmul.bf16.gmra.mxu0 %v652
  %v681 = vpop.f32.mrf.mxu0
  %v682 = vadd.f32 0.0, %v681
  %v683 = vpop.f32.mrf.mxu0
  %v684 = vadd.f32 0.0, %v683
  %685 = vmatmul.bf16.gmra.mxu0 %v653
  %v686 = vpop.f32.mrf.mxu0
  %v687 = vadd.f32 0.0, %v686
  %v688 = vpop.f32.mrf.mxu0
  %v689 = vadd.f32 0.0, %v688
  %690 = vmatmul.bf16.gmra.mxu0 %v654
  %v691 = vpop.f32.mrf.mxu0
  %v692 = vadd.f32 0.0, %v691
  %v693 = vpop.f32.mrf.mxu0
  %v694 = vadd.f32 0.0, %v693
  %695 = vmatmul.bf16.gmra.mxu0 %v655
  %v696 = vpop.f32.mrf.mxu0
  %v697 = vadd.f32 0.0, %v696
  %v698 = vpop.f32.mrf.mxu0
  %v699 = vadd.f32 0.0, %v698
  %700 = vmatmul.bf16.gmra.mxu0 %v656
  %v701 = vpop.f32.mrf.mxu0
  %v702 = vadd.f32 0.0, %v701
  %v703 = vpop.f32.mrf.mxu0
  %v704 = vadd.f32 0.0, %v703
  %705 = vmatmul.bf16.gmra.mxu0 %v657
  %v706 = vpop.f32.mrf.mxu0
  %v707 = vadd.f32 0.0, %v706
  %v708 = vpop.f32.mrf.mxu0
  %v709 = vadd.f32 0.0, %v708
  %710 = vmatmul.bf16.gmra.mxu0 %v658
  %v711 = vpop.f32.mrf.mxu0
  %v712 = vadd.f32 0.0, %v711
  %v713 = vpop.f32.mrf.mxu0
  %v714 = vadd.f32 0.0, %v713
  %715 = vdwg.mxu0
  %v716 = vadd.f32 %v481, %v677
  %v717 = vadd.f32 %v483, %v679
  %v718 = vadd.f32 %v486, %v682
  %v719 = vadd.f32 %v488, %v684
  %v720 = vadd.f32 %v491, %v687
  %v721 = vadd.f32 %v493, %v689
  %v722 = vadd.f32 %v496, %v692
  %v723 = vadd.f32 %v498, %v694
  %v724 = vadd.f32 %v501, %v697
  %v725 = vadd.f32 %v503, %v699
  %v726 = vadd.f32 %v506, %v702
  %v727 = vadd.f32 %v508, %v704
  %v728 = vadd.f32 %v511, %v707
  %v729 = vadd.f32 %v513, %v709
  %v730 = vadd.f32 %v516, %v712
  %v731 = vadd.f32 %v518, %v714
  %s732 = scalar_lea.vmem %s0, 24
  %v733 = vld [vmem:[%s732] sm:$0xf]
  %v734 = vld [vmem:[%s732 + $0x4] sm:$0xf]
  %v737 = vunpack.c.l.b16 %v733
  %v738 = vunpack.c.l.b16 %v734
  %v739 = vpack.c.b16 %v738, %v737
  %741 = vmatpush.bf16.msra.mxu0 0
  %742 = vmatpush.bf16.msra.mxu0 0
  %743 = vmatpush.bf16.msra.mxu0 0
  %744 = vmatpush.bf16.msra.mxu0 0
  %745 = vmatpush.bf16.msra.mxu0 0
  %746 = vmatpush.bf16.msra.mxu0 0
  %747 = vmatpush.bf16.msra.mxu0 0
  %748 = vmatpush.bf16.msra.mxu0 %v739
  %749 = vmatmul.bf16.gmra.mxu0 %v115
  %v750 = vpop.f32.mrf.mxu0
  %v751 = vadd.f32 %v49, %v750
  %v752 = vpop.f32.mrf.mxu0
  %v753 = vadd.f32 %v50, %v752
  %754 = vmatmul.bf16.gmra.mxu0 %v118
  %v755 = vpop.f32.mrf.mxu0
  %v756 = vadd.f32 %v51, %v755
  %v757 = vpop.f32.mrf.mxu0
  %v758 = vadd.f32 %v52, %v757
  %759 = vmatmul.bf16.gmra.mxu0 %v121
  %v760 = vpop.f32.mrf.mxu0
  %v761 = vadd.f32 %v53, %v760
  %v762 = vpop.f32.mrf.mxu0
  %v763 = vadd.f32 %v54, %v762
  %764 = vmatmul.bf16.gmra.mxu0 %v124
  %v765 = vpop.f32.mrf.mxu0
  %v766 = vadd.f32 %v55, %v765
  %v767 = vpop.f32.mrf.mxu0
  %v768 = vadd.f32 %v56, %v767
  %769 = vmatmul.bf16.gmra.mxu0 %v127
  %v770 = vpop.f32.mrf.mxu0
  %v771 = vadd.f32 %v57, %v770
  %v772 = vpop.f32.mrf.mxu0
  %v773 = vadd.f32 %v58, %v772
  %774 = vmatmul.bf16.gmra.mxu0 %v130
  %v775 = vpop.f32.mrf.mxu0
  %v776 = vadd.f32 %v59, %v775
  %v777 = vpop.f32.mrf.mxu0
  %v778 = vadd.f32 %v60, %v777
  %779 = vmatmul.bf16.gmra.mxu0 %v133
  %v780 = vpop.f32.mrf.mxu0
  %v781 = vadd.f32 %v61, %v780
  %v782 = vpop.f32.mrf.mxu0
  %v783 = vadd.f32 %v62, %v782
  %784 = vmatmul.bf16.gmra.mxu0 %v136
  %v785 = vpop.f32.mrf.mxu0
  %v786 = vadd.f32 %v63, %v785
  %v787 = vpop.f32.mrf.mxu0
  %v788 = vadd.f32 %v64, %v787
  %789 = vdwg.mxu0
  %v790 = vmax.f32 %v751, 0.0
  %v791 = vmax.f32 %v753, 0.0
  %v792 = vmax.f32 %v756, 0.0
  %v793 = vmax.f32 %v758, 0.0
  %v794 = vmax.f32 %v761, 0.0
  %v795 = vmax.f32 %v763, 0.0
  %v796 = vmax.f32 %v766, 0.0
  %v797 = vmax.f32 %v768, 0.0
  %v798 = vmax.f32 %v771, 0.0
  %v799 = vmax.f32 %v773, 0.0
  %v800 = vmax.f32 %v776, 0.0
  %v801 = vmax.f32 %v778, 0.0
  %v802 = vmax.f32 %v781, 0.0
  %v803 = vmax.f32 %v783, 0.0
  %v804 = vmax.f32 %v786, 0.0
  %v805 = vmax.f32 %v788, 0.0
  %s806 = scalar_lea.vmem %s3, 192
  %v807 = vld [vmem:[%s806] sm:$0xf]
  %v808 = vld [vmem:[%s806 + $0x4] sm:$0xf]
  %v809 = vld [vmem:[%s806 + $0x8] sm:$0xf]
  %v810 = vld [vmem:[%s806 + $0xc] sm:$0xf]
  %v811 = vld [vmem:[%s806 + $0x10] sm:$0xf]
  %v812 = vld [vmem:[%s806 + $0x14] sm:$0xf]
  %v813 = vld [vmem:[%s806 + $0x18] sm:$0xf]
  %v814 = vld [vmem:[%s806 + $0x1c] sm:$0xf]
  %v815 = vld [vmem:[%s806 + $0x20] sm:$0xf]
  %v816 = vld [vmem:[%s806 + $0x24] sm:$0xf]
  %v817 = vld [vmem:[%s806 + $0x28] sm:$0xf]
  %v818 = vld [vmem:[%s806 + $0x2c] sm:$0xf]
  %v819 = vld [vmem:[%s806 + $0x30] sm:$0xf]
  %v820 = vld [vmem:[%s806 + $0x34] sm:$0xf]
  %v821 = vld [vmem:[%s806 + $0x38] sm:$0xf]
  %v822 = vld [vmem:[%s806 + $0x3c] sm:$0xf]
  %v823 = vpack.c.bf16 %v791, %v790
  %v824 = vpack.c.bf16 %v793, %v792
  %v825 = vpack.c.bf16 %v795, %v794
  %v826 = vpack.c.bf16 %v797, %v796
  %v827 = vpack.c.bf16 %v799, %v798
  %v828 = vpack.c.bf16 %v801, %v800
  %v829 = vpack.c.bf16 %v803, %v802
  %v830 = vpack.c.bf16 %v805, %v804
  %v847 = vunpack.c.l.b16 %v807
  %v848 = vunpack.c.l.b16 %v808
  %v849 = vunpack.c.l.b16 %v809
  %v850 = vunpack.c.l.b16 %v810
  %v851 = vunpack.c.l.b16 %v811
  %v852 = vunpack.c.l.b16 %v812
  %v853 = vunpack.c.l.b16 %v813
  %v854 = vunpack.c.l.b16 %v814
  %v855 = vunpack.c.l.b16 %v815
  %v856 = vunpack.c.l.b16 %v816
  %v857 = vunpack.c.l.b16 %v817
  %v858 = vunpack.c.l.b16 %v818
  %v859 = vunpack.c.l.b16 %v819
  %v860 = vunpack.c.l.b16 %v820
  %v861 = vunpack.c.l.b16 %v821
  %v862 = vunpack.c.l.b16 %v822
  %v863 = vpack.c.b16 %v848, %v847
  %v864 = vpack.c.b16 %v850, %v849
  %v865 = vpack.c.b16 %v852, %v851
  %v866 = vpack.c.b16 %v854, %v853
  %v867 = vpack.c.b16 %v856, %v855
  %v868 = vpack.c.b16 %v858, %v857
  %v869 = vpack.c.b16 %v860, %v859
  %v870 = vpack.c.b16 %v862, %v861
  %879 = vmatpush.bf16.msra.mxu0 %v830
  %880 = vmatpush.bf16.msra.mxu0 %v829
  %881 = vmatpush.bf16.msra.mxu0 %v828
  %882 = vmatpush.bf16.msra.mxu0 %v827
  %883 = vmatpush.bf16.msra.mxu0 %v826
  %884 = vmatpush.bf16.msra.mxu0 %v825
  %885 = vmatpush.bf16.msra.mxu0 %v824
  %886 = vmatpush.bf16.msra.mxu0 %v823
  %887 = vmatmul.bf16.gmra.mxu0 %v863
  %v888 = vpop.f32.mrf.mxu0
  %v889 = vadd.f32 0.0, %v888
  %v890 = vpop.f32.mrf.mxu0
  %v891 = vadd.f32 0.0, %v890
  %892 = vmatmul.bf16.gmra.mxu0 %v864
  %v893 = vpop.f32.mrf.mxu0
  %v894 = vadd.f32 0.0, %v893
  %v895 = vpop.f32.mrf.mxu0
  %v896 = vadd.f32 0.0, %v895
  %897 = vmatmul.bf16.gmra.mxu0 %v865
  %v898 = vpop.f32.mrf.mxu0
  %v899 = vadd.f32 0.0, %v898
  %v900 = vpop.f32.mrf.mxu0
  %v901 = vadd.f32 0.0, %v900
  %902 = vmatmul.bf16.gmra.mxu0 %v866
  %v903 = vpop.f32.mrf.mxu0
  %v904 = vadd.f32 0.0, %v903
  %v905 = vpop.f32.mrf.mxu0
  %v906 = vadd.f32 0.0, %v905
  %907 = vmatmul.bf16.gmra.mxu0 %v867
  %v908 = vpop.f32.mrf.mxu0
  %v909 = vadd.f32 0.0, %v908
  %v910 = vpop.f32.mrf.mxu0
  %v911 = vadd.f32 0.0, %v910
  %912 = vmatmul.bf16.gmra.mxu0 %v868
  %v913 = vpop.f32.mrf.mxu0
  %v914 = vadd.f32 0.0, %v913
  %v915 = vpop.f32.mrf.mxu0
  %v916 = vadd.f32 0.0, %v915
  %917 = vmatmul.bf16.gmra.mxu0 %v869
  %v918 = vpop.f32.mrf.mxu0
  %v919 = vadd.f32 0.0, %v918
  %v920 = vpop.f32.mrf.mxu0
  %v921 = vadd.f32 0.0, %v920
  %922 = vmatmul.bf16.gmra.mxu0 %v870
  %v923 = vpop.f32.mrf.mxu0
  %v924 = vadd.f32 0.0, %v923
  %v925 = vpop.f32.mrf.mxu0
  %v926 = vadd.f32 0.0, %v925
  %927 = vdwg.mxu0
  %v928 = vadd.f32 %v716, %v889
  %v929 = vadd.f32 %v717, %v891
  %v930 = vadd.f32 %v718, %v894
  %v931 = vadd.f32 %v719, %v896
  %v932 = vadd.f32 %v720, %v899
  %v933 = vadd.f32 %v721, %v901
  %v934 = vadd.f32 %v722, %v904
  %v935 = vadd.f32 %v723, %v906
  %v936 = vadd.f32 %v724, %v909
  %v937 = vadd.f32 %v725, %v911
  %v938 = vadd.f32 %v726, %v914
  %v939 = vadd.f32 %v727, %v916
  %v940 = vadd.f32 %v728, %v919
  %v941 = vadd.f32 %v729, %v921
  %v942 = vadd.f32 %v730, %v924
  %v943 = vadd.f32 %v731, %v926
  %s944 = scalar_lea.vmem %s0, 32
  %v945 = vld [vmem:[%s944] sm:$0xf]
  %v946 = vld [vmem:[%s944 + $0x4] sm:$0xf]
  %v949 = vunpack.c.l.b16 %v945
  %v950 = vunpack.c.l.b16 %v946
  %v951 = vpack.c.b16 %v950, %v949
  %953 = vmatpush.bf16.msra.mxu0 0
  %954 = vmatpush.bf16.msra.mxu0 0
  %955 = vmatpush.bf16.msra.mxu0 0
  %956 = vmatpush.bf16.msra.mxu0 0
  %957 = vmatpush.bf16.msra.mxu0 0
  %958 = vmatpush.bf16.msra.mxu0 0
  %959 = vmatpush.bf16.msra.mxu0 0
  %960 = vmatpush.bf16.msra.mxu0 %v951
  %961 = vmatmul.bf16.gmra.mxu0 %v115
  %v962 = vpop.f32.mrf.mxu0
  %v963 = vadd.f32 %v49, %v962
  %v964 = vpop.f32.mrf.mxu0
  %v965 = vadd.f32 %v50, %v964
  %966 = vmatmul.bf16.gmra.mxu0 %v118
  %v967 = vpop.f32.mrf.mxu0
  %v968 = vadd.f32 %v51, %v967
  %v969 = vpop.f32.mrf.mxu0
  %v970 = vadd.f32 %v52, %v969
  %971 = vmatmul.bf16.gmra.mxu0 %v121
  %v972 = vpop.f32.mrf.mxu0
  %v973 = vadd.f32 %v53, %v972
  %v974 = vpop.f32.mrf.mxu0
  %v975 = vadd.f32 %v54, %v974
  %976 = vmatmul.bf16.gmra.mxu0 %v124
  %v977 = vpop.f32.mrf.mxu0
  %v978 = vadd.f32 %v55, %v977
  %v979 = vpop.f32.mrf.mxu0
  %v980 = vadd.f32 %v56, %v979
  %981 = vmatmul.bf16.gmra.mxu0 %v127
  %v982 = vpop.f32.mrf.mxu0
  %v983 = vadd.f32 %v57, %v982
  %v984 = vpop.f32.mrf.mxu0
  %v985 = vadd.f32 %v58, %v984
  %986 = vmatmul.bf16.gmra.mxu0 %v130
  %v987 = vpop.f32.mrf.mxu0
  %v988 = vadd.f32 %v59, %v987
  %v989 = vpop.f32.mrf.mxu0
  %v990 = vadd.f32 %v60, %v989
  %991 = vmatmul.bf16.gmra.mxu0 %v133
  %v992 = vpop.f32.mrf.mxu0
  %v993 = vadd.f32 %v61, %v992
  %v994 = vpop.f32.mrf.mxu0
  %v995 = vadd.f32 %v62, %v994
  %996 = vmatmul.bf16.gmra.mxu0 %v136
  %v997 = vpop.f32.mrf.mxu0
  %v998 = vadd.f32 %v63, %v997
  %v999 = vpop.f32.mrf.mxu0
  %v1000 = vadd.f32 %v64, %v999
  %1001 = vdwg.mxu0
  %v1002 = vmax.f32 %v963, 0.0
  %v1003 = vmax.f32 %v965, 0.0
  %v1004 = vmax.f32 %v968, 0.0
  %v1005 = vmax.f32 %v970, 0.0
  %v1006 = vmax.f32 %v973, 0.0
  %v1007 = vmax.f32 %v975, 0.0
  %v1008 = vmax.f32 %v978, 0.0
  %v1009 = vmax.f32 %v980, 0.0
  %v1010 = vmax.f32 %v983, 0.0
  %v1011 = vmax.f32 %v985, 0.0
  %v1012 = vmax.f32 %v988, 0.0
  %v1013 = vmax.f32 %v990, 0.0
  %v1014 = vmax.f32 %v993, 0.0
  %v1015 = vmax.f32 %v995, 0.0
  %v1016 = vmax.f32 %v998, 0.0
  %v1017 = vmax.f32 %v1000, 0.0
  %s1018 = scalar_lea.vmem %s3, 256
  %v1019 = vld [vmem:[%s1018] sm:$0xf]
  %v1020 = vld [vmem:[%s1018 + $0x4] sm:$0xf]
  %v1021 = vld [vmem:[%s1018 + $0x8] sm:$0xf]
  %v1022 = vld [vmem:[%s1018 + $0xc] sm:$0xf]
  %v1023 = vld [vmem:[%s1018 + $0x10] sm:$0xf]
  %v1024 = vld [vmem:[%s1018 + $0x14] sm:$0xf]
  %v1025 = vld [vmem:[%s1018 + $0x18] sm:$0xf]
  %v1026 = vld [vmem:[%s1018 + $0x1c] sm:$0xf]
  %v1027 = vld [vmem:[%s1018 + $0x20] sm:$0xf]
  %v1028 = vld [vmem:[%s1018 + $0x24] sm:$0xf]
  %v1029 = vld [vmem:[%s1018 + $0x28] sm:$0xf]
  %v1030 = vld [vmem:[%s1018 + $0x2c] sm:$0xf]
  %v1031 = vld [vmem:[%s1018 + $0x30] sm:$0xf]
  %v1032 = vld [vmem:[%s1018 + $0x34] sm:$0xf]
  %v1033 = vld [vmem:[%s1018 + $0x38] sm:$0xf]
  %v1034 = vld [vmem:[%s1018 + $0x3c] sm:$0xf]
  %v1035 = vpack.c.bf16 %v1003, %v1002
  %v1036 = vpack.c.bf16 %v1005, %v1004
  %v1037 = vpack.c.bf16 %v1007, %v1006
  %v1038 = vpack.c.bf16 %v1009, %v1008
  %v1039 = vpack.c.bf16 %v1011, %v1010
  %v1040 = vpack.c.bf16 %v1013, %v1012
  %v1041 = vpack.c.bf16 %v1015, %v1014
  %v1042 = vpack.c.bf16 %v1017, %v1016
  %v1059 = vunpack.c.l.b16 %v1019
  %v1060 = vunpack.c.l.b16 %v1020
  %v1061 = vunpack.c.l.b16 %v1021
  %v1062 = vunpack.c.l.b16 %v1022
  %v1063 = vunpack.c.l.b16 %v1023
  %v1064 = vunpack.c.l.b16 %v1024
  %v1065 = vunpack.c.l.b16 %v1025
  %v1066 = vunpack.c.l.b16 %v1026
  %v1067 = vunpack.c.l.b16 %v1027
  %v1068 = vunpack.c.l.b16 %v1028
  %v1069 = vunpack.c.l.b16 %v1029
  %v1070 = vunpack.c.l.b16 %v1030
  %v1071 = vunpack.c.l.b16 %v1031
  %v1072 = vunpack.c.l.b16 %v1032
  %v1073 = vunpack.c.l.b16 %v1033
  %v1074 = vunpack.c.l.b16 %v1034
  %v1075 = vpack.c.b16 %v1060, %v1059
  %v1076 = vpack.c.b16 %v1062, %v1061
  %v1077 = vpack.c.b16 %v1064, %v1063
  %v1078 = vpack.c.b16 %v1066, %v1065
  %v1079 = vpack.c.b16 %v1068, %v1067
  %v1080 = vpack.c.b16 %v1070, %v1069
  %v1081 = vpack.c.b16 %v1072, %v1071
  %v1082 = vpack.c.b16 %v1074, %v1073
  %1091 = vmatpush.bf16.msra.mxu0 %v1042
  %1092 = vmatpush.bf16.msra.mxu0 %v1041
  %1093 = vmatpush.bf16.msra.mxu0 %v1040
  %1094 = vmatpush.bf16.msra.mxu0 %v1039
  %1095 = vmatpush.bf16.msra.mxu0 %v1038
  %1096 = vmatpush.bf16.msra.mxu0 %v1037
  %1097 = vmatpush.bf16.msra.mxu0 %v1036
  %1098 = vmatpush.bf16.msra.mxu0 %v1035
  %1099 = vmatmul.bf16.gmra.mxu0 %v1075
  %v1100 = vpop.f32.mrf.mxu0
  %v1101 = vadd.f32 0.0, %v1100
  %v1102 = vpop.f32.mrf.mxu0
  %v1103 = vadd.f32 0.0, %v1102
  %1104 = vmatmul.bf16.gmra.mxu0 %v1076
  %v1105 = vpop.f32.mrf.mxu0
  %v1106 = vadd.f32 0.0, %v1105
  %v1107 = vpop.f32.mrf.mxu0
  %v1108 = vadd.f32 0.0, %v1107
  %1109 = vmatmul.bf16.gmra.mxu0 %v1077
  %v1110 = vpop.f32.mrf.mxu0
  %v1111 = vadd.f32 0.0, %v1110
  %v1112 = vpop.f32.mrf.mxu0
  %v1113 = vadd.f32 0.0, %v1112
  %1114 = vmatmul.bf16.gmra.mxu0 %v1078
  %v1115 = vpop.f32.mrf.mxu0
  %v1116 = vadd.f32 0.0, %v1115
  %v1117 = vpop.f32.mrf.mxu0
  %v1118 = vadd.f32 0.0, %v1117
  %1119 = vmatmul.bf16.gmra.mxu0 %v1079
  %v1120 = vpop.f32.mrf.mxu0
  %v1121 = vadd.f32 0.0, %v1120
  %v1122 = vpop.f32.mrf.mxu0
  %v1123 = vadd.f32 0.0, %v1122
  %1124 = vmatmul.bf16.gmra.mxu0 %v1080
  %v1125 = vpop.f32.mrf.mxu0
  %v1126 = vadd.f32 0.0, %v1125
  %v1127 = vpop.f32.mrf.mxu0
  %v1128 = vadd.f32 0.0, %v1127
  %1129 = vmatmul.bf16.gmra.mxu0 %v1081
  %v1130 = vpop.f32.mrf.mxu0
  %v1131 = vadd.f32 0.0, %v1130
  %v1132 = vpop.f32.mrf.mxu0
  %v1133 = vadd.f32 0.0, %v1132
  %1134 = vmatmul.bf16.gmra.mxu0 %v1082
  %v1135 = vpop.f32.mrf.mxu0
  %v1136 = vadd.f32 0.0, %v1135
  %v1137 = vpop.f32.mrf.mxu0
  %v1138 = vadd.f32 0.0, %v1137
  %1139 = vdwg.mxu0
  %v1140 = vadd.f32 %v928, %v1101
  %v1141 = vadd.f32 %v929, %v1103
  %v1142 = vadd.f32 %v930, %v1106
  %v1143 = vadd.f32 %v931, %v1108
  %v1144 = vadd.f32 %v932, %v1111
  %v1145 = vadd.f32 %v933, %v1113
  %v1146 = vadd.f32 %v934, %v1116
  %v1147 = vadd.f32 %v935, %v1118
  %v1148 = vadd.f32 %v936, %v1121
  %v1149 = vadd.f32 %v937, %v1123
  %v1150 = vadd.f32 %v938, %v1126
  %v1151 = vadd.f32 %v939, %v1128
  %v1152 = vadd.f32 %v940, %v1131
  %v1153 = vadd.f32 %v941, %v1133
  %v1154 = vadd.f32 %v942, %v1136
  %v1155 = vadd.f32 %v943, %v1138
  %s1156 = scalar_lea.vmem %s0, 40
  %v1157 = vld [vmem:[%s1156] sm:$0xf]
  %v1158 = vld [vmem:[%s1156 + $0x4] sm:$0xf]
  %v1161 = vunpack.c.l.b16 %v1157
  %v1162 = vunpack.c.l.b16 %v1158
  %v1163 = vpack.c.b16 %v1162, %v1161
  %1165 = vmatpush.bf16.msra.mxu0 0
  %1166 = vmatpush.bf16.msra.mxu0 0
  %1167 = vmatpush.bf16.msra.mxu0 0
  %1168 = vmatpush.bf16.msra.mxu0 0
  %1169 = vmatpush.bf16.msra.mxu0 0
  %1170 = vmatpush.bf16.msra.mxu0 0
  %1171 = vmatpush.bf16.msra.mxu0 0
  %1172 = vmatpush.bf16.msra.mxu0 %v1163
  %1173 = vmatmul.bf16.gmra.mxu0 %v115
  %v1174 = vpop.f32.mrf.mxu0
  %v1175 = vadd.f32 %v49, %v1174
  %v1176 = vpop.f32.mrf.mxu0
  %v1177 = vadd.f32 %v50, %v1176
  %1178 = vmatmul.bf16.gmra.mxu0 %v118
  %v1179 = vpop.f32.mrf.mxu0
  %v1180 = vadd.f32 %v51, %v1179
  %v1181 = vpop.f32.mrf.mxu0
  %v1182 = vadd.f32 %v52, %v1181
  %1183 = vmatmul.bf16.gmra.mxu0 %v121
  %v1184 = vpop.f32.mrf.mxu0
  %v1185 = vadd.f32 %v53, %v1184
  %v1186 = vpop.f32.mrf.mxu0
  %v1187 = vadd.f32 %v54, %v1186
  %1188 = vmatmul.bf16.gmra.mxu0 %v124
  %v1189 = vpop.f32.mrf.mxu0
  %v1190 = vadd.f32 %v55, %v1189
  %v1191 = vpop.f32.mrf.mxu0
  %v1192 = vadd.f32 %v56, %v1191
  %1193 = vmatmul.bf16.gmra.mxu0 %v127
  %v1194 = vpop.f32.mrf.mxu0
  %v1195 = vadd.f32 %v57, %v1194
  %v1196 = vpop.f32.mrf.mxu0
  %v1197 = vadd.f32 %v58, %v1196
  %1198 = vmatmul.bf16.gmra.mxu0 %v130
  %v1199 = vpop.f32.mrf.mxu0
  %v1200 = vadd.f32 %v59, %v1199
  %v1201 = vpop.f32.mrf.mxu0
  %v1202 = vadd.f32 %v60, %v1201
  %1203 = vmatmul.bf16.gmra.mxu0 %v133
  %v1204 = vpop.f32.mrf.mxu0
  %v1205 = vadd.f32 %v61, %v1204
  %v1206 = vpop.f32.mrf.mxu0
  %v1207 = vadd.f32 %v62, %v1206
  %1208 = vmatmul.bf16.gmra.mxu0 %v136
  %v1209 = vpop.f32.mrf.mxu0
  %v1210 = vadd.f32 %v63, %v1209
  %v1211 = vpop.f32.mrf.mxu0
  %v1212 = vadd.f32 %v64, %v1211
  %1213 = vdwg.mxu0
  %v1214 = vmax.f32 %v1175, 0.0
  %v1215 = vmax.f32 %v1177, 0.0
  %v1216 = vmax.f32 %v1180, 0.0
  %v1217 = vmax.f32 %v1182, 0.0
  %v1218 = vmax.f32 %v1185, 0.0
  %v1219 = vmax.f32 %v1187, 0.0
  %v1220 = vmax.f32 %v1190, 0.0
  %v1221 = vmax.f32 %v1192, 0.0
  %v1222 = vmax.f32 %v1195, 0.0
  %v1223 = vmax.f32 %v1197, 0.0
  %v1224 = vmax.f32 %v1200, 0.0
  %v1225 = vmax.f32 %v1202, 0.0
  %v1226 = vmax.f32 %v1205, 0.0
  %v1227 = vmax.f32 %v1207, 0.0
  %v1228 = vmax.f32 %v1210, 0.0
  %v1229 = vmax.f32 %v1212, 0.0
  %s1230 = scalar_lea.vmem %s3, 320
  %v1231 = vld [vmem:[%s1230] sm:$0xf]
  %v1232 = vld [vmem:[%s1230 + $0x4] sm:$0xf]
  %v1233 = vld [vmem:[%s1230 + $0x8] sm:$0xf]
  %v1234 = vld [vmem:[%s1230 + $0xc] sm:$0xf]
  %v1235 = vld [vmem:[%s1230 + $0x10] sm:$0xf]
  %v1236 = vld [vmem:[%s1230 + $0x14] sm:$0xf]
  %v1237 = vld [vmem:[%s1230 + $0x18] sm:$0xf]
  %v1238 = vld [vmem:[%s1230 + $0x1c] sm:$0xf]
  %v1239 = vld [vmem:[%s1230 + $0x20] sm:$0xf]
  %v1240 = vld [vmem:[%s1230 + $0x24] sm:$0xf]
  %v1241 = vld [vmem:[%s1230 + $0x28] sm:$0xf]
  %v1242 = vld [vmem:[%s1230 + $0x2c] sm:$0xf]
  %v1243 = vld [vmem:[%s1230 + $0x30] sm:$0xf]
  %v1244 = vld [vmem:[%s1230 + $0x34] sm:$0xf]
  %v1245 = vld [vmem:[%s1230 + $0x38] sm:$0xf]
  %v1246 = vld [vmem:[%s1230 + $0x3c] sm:$0xf]
  %v1247 = vpack.c.bf16 %v1215, %v1214
  %v1248 = vpack.c.bf16 %v1217, %v1216
  %v1249 = vpack.c.bf16 %v1219, %v1218
  %v1250 = vpack.c.bf16 %v1221, %v1220
  %v1251 = vpack.c.bf16 %v1223, %v1222
  %v1252 = vpack.c.bf16 %v1225, %v1224
  %v1253 = vpack.c.bf16 %v1227, %v1226
  %v1254 = vpack.c.bf16 %v1229, %v1228
  %v1271 = vunpack.c.l.b16 %v1231
  %v1272 = vunpack.c.l.b16 %v1232
  %v1273 = vunpack.c.l.b16 %v1233
  %v1274 = vunpack.c.l.b16 %v1234
  %v1275 = vunpack.c.l.b16 %v1235
  %v1276 = vunpack.c.l.b16 %v1236
  %v1277 = vunpack.c.l.b16 %v1237
  %v1278 = vunpack.c.l.b16 %v1238
  %v1279 = vunpack.c.l.b16 %v1239
  %v1280 = vunpack.c.l.b16 %v1240
  %v1281 = vunpack.c.l.b16 %v1241
  %v1282 = vunpack.c.l.b16 %v1242
  %v1283 = vunpack.c.l.b16 %v1243
  %v1284 = vunpack.c.l.b16 %v1244
  %v1285 = vunpack.c.l.b16 %v1245
  %v1286 = vunpack.c.l.b16 %v1246
  %v1287 = vpack.c.b16 %v1272, %v1271
  %v1288 = vpack.c.b16 %v1274, %v1273
  %v1289 = vpack.c.b16 %v1276, %v1275
  %v1290 = vpack.c.b16 %v1278, %v1277
  %v1291 = vpack.c.b16 %v1280, %v1279
  %v1292 = vpack.c.b16 %v1282, %v1281
  %v1293 = vpack.c.b16 %v1284, %v1283
  %v1294 = vpack.c.b16 %v1286, %v1285
  %1303 = vmatpush.bf16.msra.mxu0 %v1254
  %1304 = vmatpush.bf16.msra.mxu0 %v1253
  %1305 = vmatpush.bf16.msra.mxu0 %v1252
  %1306 = vmatpush.bf16.msra.mxu0 %v1251
  %1307 = vmatpush.bf16.msra.mxu0 %v1250
  %1308 = vmatpush.bf16.msra.mxu0 %v1249
  %1309 = vmatpush.bf16.msra.mxu0 %v1248
  %1310 = vmatpush.bf16.msra.mxu0 %v1247
  %1311 = vmatmul.bf16.gmra.mxu0 %v1287
  %v1312 = vpop.f32.mrf.mxu0
  %v1313 = vadd.f32 0.0, %v1312
  %v1314 = vpop.f32.mrf.mxu0
  %v1315 = vadd.f32 0.0, %v1314
  %1316 = vmatmul.bf16.gmra.mxu0 %v1288
  %v1317 = vpop.f32.mrf.mxu0
  %v1318 = vadd.f32 0.0, %v1317
  %v1319 = vpop.f32.mrf.mxu0
  %v1320 = vadd.f32 0.0, %v1319
  %1321 = vmatmul.bf16.gmra.mxu0 %v1289
  %v1322 = vpop.f32.mrf.mxu0
  %v1323 = vadd.f32 0.0, %v1322
  %v1324 = vpop.f32.mrf.mxu0
  %v1325 = vadd.f32 0.0, %v1324
  %1326 = vmatmul.bf16.gmra.mxu0 %v1290
  %v1327 = vpop.f32.mrf.mxu0
  %v1328 = vadd.f32 0.0, %v1327
  %v1329 = vpop.f32.mrf.mxu0
  %v1330 = vadd.f32 0.0, %v1329
  %1331 = vmatmul.bf16.gmra.mxu0 %v1291
  %v1332 = vpop.f32.mrf.mxu0
  %v1333 = vadd.f32 0.0, %v1332
  %v1334 = vpop.f32.mrf.mxu0
  %v1335 = vadd.f32 0.0, %v1334
  %1336 = vmatmul.bf16.gmra.mxu0 %v1292
  %v1337 = vpop.f32.mrf.mxu0
  %v1338 = vadd.f32 0.0, %v1337
  %v1339 = vpop.f32.mrf.mxu0
  %v1340 = vadd.f32 0.0, %v1339
  %1341 = vmatmul.bf16.gmra.mxu0 %v1293
  %v1342 = vpop.f32.mrf.mxu0
  %v1343 = vadd.f32 0.0, %v1342
  %v1344 = vpop.f32.mrf.mxu0
  %v1345 = vadd.f32 0.0, %v1344
  %1346 = vmatmul.bf16.gmra.mxu0 %v1294
  %v1347 = vpop.f32.mrf.mxu0
  %v1348 = vadd.f32 0.0, %v1347
  %v1349 = vpop.f32.mrf.mxu0
  %v1350 = vadd.f32 0.0, %v1349
  %1351 = vdwg.mxu0
  %v1352 = vadd.f32 %v1140, %v1313
  %v1353 = vadd.f32 %v1141, %v1315
  %v1354 = vadd.f32 %v1142, %v1318
  %v1355 = vadd.f32 %v1143, %v1320
  %v1356 = vadd.f32 %v1144, %v1323
  %v1357 = vadd.f32 %v1145, %v1325
  %v1358 = vadd.f32 %v1146, %v1328
  %v1359 = vadd.f32 %v1147, %v1330
  %v1360 = vadd.f32 %v1148, %v1333
  %v1361 = vadd.f32 %v1149, %v1335
  %v1362 = vadd.f32 %v1150, %v1338
  %v1363 = vadd.f32 %v1151, %v1340
  %v1364 = vadd.f32 %v1152, %v1343
  %v1365 = vadd.f32 %v1153, %v1345
  %v1366 = vadd.f32 %v1154, %v1348
  %v1367 = vadd.f32 %v1155, %v1350
  %s1368 = scalar_lea.vmem %s0, 48
  %v1369 = vld [vmem:[%s1368] sm:$0xf]
  %v1370 = vld [vmem:[%s1368 + $0x4] sm:$0xf]
  %v1373 = vunpack.c.l.b16 %v1369
  %v1374 = vunpack.c.l.b16 %v1370
  %v1375 = vpack.c.b16 %v1374, %v1373
  %1377 = vmatpush.bf16.msra.mxu0 0
  %1378 = vmatpush.bf16.msra.mxu0 0
  %1379 = vmatpush.bf16.msra.mxu0 0
  %1380 = vmatpush.bf16.msra.mxu0 0
  %1381 = vmatpush.bf16.msra.mxu0 0
  %1382 = vmatpush.bf16.msra.mxu0 0
  %1383 = vmatpush.bf16.msra.mxu0 0
  %1384 = vmatpush.bf16.msra.mxu0 %v1375
  %1385 = vmatmul.bf16.gmra.mxu0 %v115
  %v1386 = vpop.f32.mrf.mxu0
  %v1387 = vadd.f32 %v49, %v1386
  %v1388 = vpop.f32.mrf.mxu0
  %v1389 = vadd.f32 %v50, %v1388
  %1390 = vmatmul.bf16.gmra.mxu0 %v118
  %v1391 = vpop.f32.mrf.mxu0
  %v1392 = vadd.f32 %v51, %v1391
  %v1393 = vpop.f32.mrf.mxu0
  %v1394 = vadd.f32 %v52, %v1393
  %1395 = vmatmul.bf16.gmra.mxu0 %v121
  %v1396 = vpop.f32.mrf.mxu0
  %v1397 = vadd.f32 %v53, %v1396
  %v1398 = vpop.f32.mrf.mxu0
  %v1399 = vadd.f32 %v54, %v1398
  %1400 = vmatmul.bf16.gmra.mxu0 %v124
  %v1401 = vpop.f32.mrf.mxu0
  %v1402 = vadd.f32 %v55, %v1401
  %v1403 = vpop.f32.mrf.mxu0
  %v1404 = vadd.f32 %v56, %v1403
  %1405 = vmatmul.bf16.gmra.mxu0 %v127
  %v1406 = vpop.f32.mrf.mxu0
  %v1407 = vadd.f32 %v57, %v1406
  %v1408 = vpop.f32.mrf.mxu0
  %v1409 = vadd.f32 %v58, %v1408
  %1410 = vmatmul.bf16.gmra.mxu0 %v130
  %v1411 = vpop.f32.mrf.mxu0
  %v1412 = vadd.f32 %v59, %v1411
  %v1413 = vpop.f32.mrf.mxu0
  %v1414 = vadd.f32 %v60, %v1413
  %1415 = vmatmul.bf16.gmra.mxu0 %v133
  %v1416 = vpop.f32.mrf.mxu0
  %v1417 = vadd.f32 %v61, %v1416
  %v1418 = vpop.f32.mrf.mxu0
  %v1419 = vadd.f32 %v62, %v1418
  %1420 = vmatmul.bf16.gmra.mxu0 %v136
  %v1421 = vpop.f32.mrf.mxu0
  %v1422 = vadd.f32 %v63, %v1421
  %v1423 = vpop.f32.mrf.mxu0
  %v1424 = vadd.f32 %v64, %v1423
  %1425 = vdwg.mxu0
  %v1426 = vmax.f32 %v1387, 0.0
  %v1427 = vmax.f32 %v1389, 0.0
  %v1428 = vmax.f32 %v1392, 0.0
  %v1429 = vmax.f32 %v1394, 0.0
  %v1430 = vmax.f32 %v1397, 0.0
  %v1431 = vmax.f32 %v1399, 0.0
  %v1432 = vmax.f32 %v1402, 0.0
  %v1433 = vmax.f32 %v1404, 0.0
  %v1434 = vmax.f32 %v1407, 0.0
  %v1435 = vmax.f32 %v1409, 0.0
  %v1436 = vmax.f32 %v1412, 0.0
  %v1437 = vmax.f32 %v1414, 0.0
  %v1438 = vmax.f32 %v1417, 0.0
  %v1439 = vmax.f32 %v1419, 0.0
  %v1440 = vmax.f32 %v1422, 0.0
  %v1441 = vmax.f32 %v1424, 0.0
  %s1442 = scalar_lea.vmem %s3, 384
  %v1443 = vld [vmem:[%s1442] sm:$0xf]
  %v1444 = vld [vmem:[%s1442 + $0x4] sm:$0xf]
  %v1445 = vld [vmem:[%s1442 + $0x8] sm:$0xf]
  %v1446 = vld [vmem:[%s1442 + $0xc] sm:$0xf]
  %v1447 = vld [vmem:[%s1442 + $0x10] sm:$0xf]
  %v1448 = vld [vmem:[%s1442 + $0x14] sm:$0xf]
  %v1449 = vld [vmem:[%s1442 + $0x18] sm:$0xf]
  %v1450 = vld [vmem:[%s1442 + $0x1c] sm:$0xf]
  %v1451 = vld [vmem:[%s1442 + $0x20] sm:$0xf]
  %v1452 = vld [vmem:[%s1442 + $0x24] sm:$0xf]
  %v1453 = vld [vmem:[%s1442 + $0x28] sm:$0xf]
  %v1454 = vld [vmem:[%s1442 + $0x2c] sm:$0xf]
  %v1455 = vld [vmem:[%s1442 + $0x30] sm:$0xf]
  %v1456 = vld [vmem:[%s1442 + $0x34] sm:$0xf]
  %v1457 = vld [vmem:[%s1442 + $0x38] sm:$0xf]
  %v1458 = vld [vmem:[%s1442 + $0x3c] sm:$0xf]
  %v1459 = vpack.c.bf16 %v1427, %v1426
  %v1460 = vpack.c.bf16 %v1429, %v1428
  %v1461 = vpack.c.bf16 %v1431, %v1430
  %v1462 = vpack.c.bf16 %v1433, %v1432
  %v1463 = vpack.c.bf16 %v1435, %v1434
  %v1464 = vpack.c.bf16 %v1437, %v1436
  %v1465 = vpack.c.bf16 %v1439, %v1438
  %v1466 = vpack.c.bf16 %v1441, %v1440
  %v1483 = vunpack.c.l.b16 %v1443
  %v1484 = vunpack.c.l.b16 %v1444
  %v1485 = vunpack.c.l.b16 %v1445
  %v1486 = vunpack.c.l.b16 %v1446
  %v1487 = vunpack.c.l.b16 %v1447
  %v1488 = vunpack.c.l.b16 %v1448
  %v1489 = vunpack.c.l.b16 %v1449
  %v1490 = vunpack.c.l.b16 %v1450
  %v1491 = vunpack.c.l.b16 %v1451
  %v1492 = vunpack.c.l.b16 %v1452
  %v1493 = vunpack.c.l.b16 %v1453
  %v1494 = vunpack.c.l.b16 %v1454
  %v1495 = vunpack.c.l.b16 %v1455
  %v1496 = vunpack.c.l.b16 %v1456
  %v1497 = vunpack.c.l.b16 %v1457
  %v1498 = vunpack.c.l.b16 %v1458
  %v1499 = vpack.c.b16 %v1484, %v1483
  %v1500 = vpack.c.b16 %v1486, %v1485
  %v1501 = vpack.c.b16 %v1488, %v1487
  %v1502 = vpack.c.b16 %v1490, %v1489
  %v1503 = vpack.c.b16 %v1492, %v1491
  %v1504 = vpack.c.b16 %v1494, %v1493
  %v1505 = vpack.c.b16 %v1496, %v1495
  %v1506 = vpack.c.b16 %v1498, %v1497
  %1515 = vmatpush.bf16.msra.mxu0 %v1466
  %1516 = vmatpush.bf16.msra.mxu0 %v1465
  %1517 = vmatpush.bf16.msra.mxu0 %v1464
  %1518 = vmatpush.bf16.msra.mxu0 %v1463
  %1519 = vmatpush.bf16.msra.mxu0 %v1462
  %1520 = vmatpush.bf16.msra.mxu0 %v1461
  %1521 = vmatpush.bf16.msra.mxu0 %v1460
  %1522 = vmatpush.bf16.msra.mxu0 %v1459
  %1523 = vmatmul.bf16.gmra.mxu0 %v1499
  %v1524 = vpop.f32.mrf.mxu0
  %v1525 = vadd.f32 0.0, %v1524
  %v1526 = vpop.f32.mrf.mxu0
  %v1527 = vadd.f32 0.0, %v1526
  %1528 = vmatmul.bf16.gmra.mxu0 %v1500
  %v1529 = vpop.f32.mrf.mxu0
  %v1530 = vadd.f32 0.0, %v1529
  %v1531 = vpop.f32.mrf.mxu0
  %v1532 = vadd.f32 0.0, %v1531
  %1533 = vmatmul.bf16.gmra.mxu0 %v1501
  %v1534 = vpop.f32.mrf.mxu0
  %v1535 = vadd.f32 0.0, %v1534
  %v1536 = vpop.f32.mrf.mxu0
  %v1537 = vadd.f32 0.0, %v1536
  %1538 = vmatmul.bf16.gmra.mxu0 %v1502
  %v1539 = vpop.f32.mrf.mxu0
  %v1540 = vadd.f32 0.0, %v1539
  %v1541 = vpop.f32.mrf.mxu0
  %v1542 = vadd.f32 0.0, %v1541
  %1543 = vmatmul.bf16.gmra.mxu0 %v1503
  %v1544 = vpop.f32.mrf.mxu0
  %v1545 = vadd.f32 0.0, %v1544
  %v1546 = vpop.f32.mrf.mxu0
  %v1547 = vadd.f32 0.0, %v1546
  %1548 = vmatmul.bf16.gmra.mxu0 %v1504
  %v1549 = vpop.f32.mrf.mxu0
  %v1550 = vadd.f32 0.0, %v1549
  %v1551 = vpop.f32.mrf.mxu0
  %v1552 = vadd.f32 0.0, %v1551
  %1553 = vmatmul.bf16.gmra.mxu0 %v1505
  %v1554 = vpop.f32.mrf.mxu0
  %v1555 = vadd.f32 0.0, %v1554
  %v1556 = vpop.f32.mrf.mxu0
  %v1557 = vadd.f32 0.0, %v1556
  %1558 = vmatmul.bf16.gmra.mxu0 %v1506
  %v1559 = vpop.f32.mrf.mxu0
  %v1560 = vadd.f32 0.0, %v1559
  %v1561 = vpop.f32.mrf.mxu0
  %v1562 = vadd.f32 0.0, %v1561
  %1563 = vdwg.mxu0
  %v1564 = vadd.f32 %v1352, %v1525
  %v1565 = vadd.f32 %v1353, %v1527
  %v1566 = vadd.f32 %v1354, %v1530
  %v1567 = vadd.f32 %v1355, %v1532
  %v1568 = vadd.f32 %v1356, %v1535
  %v1569 = vadd.f32 %v1357, %v1537
  %v1570 = vadd.f32 %v1358, %v1540
  %v1571 = vadd.f32 %v1359, %v1542
  %v1572 = vadd.f32 %v1360, %v1545
  %v1573 = vadd.f32 %v1361, %v1547
  %v1574 = vadd.f32 %v1362, %v1550
  %v1575 = vadd.f32 %v1363, %v1552
  %v1576 = vadd.f32 %v1364, %v1555
  %v1577 = vadd.f32 %v1365, %v1557
  %v1578 = vadd.f32 %v1366, %v1560
  %v1579 = vadd.f32 %v1367, %v1562
  %s1580 = scalar_lea.vmem %s0, 56
  %v1581 = vld [vmem:[%s1580] sm:$0xf]
  %v1582 = vld [vmem:[%s1580 + $0x4] sm:$0xf]
  %v1585 = vunpack.c.l.b16 %v1581
  %v1586 = vunpack.c.l.b16 %v1582
  %v1587 = vpack.c.b16 %v1586, %v1585
  %1589 = vmatpush.bf16.msra.mxu0 0
  %1590 = vmatpush.bf16.msra.mxu0 0
  %1591 = vmatpush.bf16.msra.mxu0 0
  %1592 = vmatpush.bf16.msra.mxu0 0
  %1593 = vmatpush.bf16.msra.mxu0 0
  %1594 = vmatpush.bf16.msra.mxu0 0
  %1595 = vmatpush.bf16.msra.mxu0 0
  %1596 = vmatpush.bf16.msra.mxu0 %v1587
  %1597 = vmatmul.bf16.gmra.mxu0 %v115
  %v1598 = vpop.f32.mrf.mxu0
  %v1599 = vadd.f32 %v49, %v1598
  %v1600 = vpop.f32.mrf.mxu0
  %v1601 = vadd.f32 %v50, %v1600
  %1602 = vmatmul.bf16.gmra.mxu0 %v118
  %v1603 = vpop.f32.mrf.mxu0
  %v1604 = vadd.f32 %v51, %v1603
  %v1605 = vpop.f32.mrf.mxu0
  %v1606 = vadd.f32 %v52, %v1605
  %1607 = vmatmul.bf16.gmra.mxu0 %v121
  %v1608 = vpop.f32.mrf.mxu0
  %v1609 = vadd.f32 %v53, %v1608
  %v1610 = vpop.f32.mrf.mxu0
  %v1611 = vadd.f32 %v54, %v1610
  %1612 = vmatmul.bf16.gmra.mxu0 %v124
  %v1613 = vpop.f32.mrf.mxu0
  %v1614 = vadd.f32 %v55, %v1613
  %v1615 = vpop.f32.mrf.mxu0
  %v1616 = vadd.f32 %v56, %v1615
  %1617 = vmatmul.bf16.gmra.mxu0 %v127
  %v1618 = vpop.f32.mrf.mxu0
  %v1619 = vadd.f32 %v57, %v1618
  %v1620 = vpop.f32.mrf.mxu0
  %v1621 = vadd.f32 %v58, %v1620
  %1622 = vmatmul.bf16.gmra.mxu0 %v130
  %v1623 = vpop.f32.mrf.mxu0
  %v1624 = vadd.f32 %v59, %v1623
  %v1625 = vpop.f32.mrf.mxu0
  %v1626 = vadd.f32 %v60, %v1625
  %1627 = vmatmul.bf16.gmra.mxu0 %v133
  %v1628 = vpop.f32.mrf.mxu0
  %v1629 = vadd.f32 %v61, %v1628
  %v1630 = vpop.f32.mrf.mxu0
  %v1631 = vadd.f32 %v62, %v1630
  %1632 = vmatmul.bf16.gmra.mxu0 %v136
  %v1633 = vpop.f32.mrf.mxu0
  %v1634 = vadd.f32 %v63, %v1633
  %v1635 = vpop.f32.mrf.mxu0
  %v1636 = vadd.f32 %v64, %v1635
  %1637 = vdwg.mxu0
  %v1638 = vmax.f32 %v1599, 0.0
  %v1639 = vmax.f32 %v1601, 0.0
  %v1640 = vmax.f32 %v1604, 0.0
  %v1641 = vmax.f32 %v1606, 0.0
  %v1642 = vmax.f32 %v1609, 0.0
  %v1643 = vmax.f32 %v1611, 0.0
  %v1644 = vmax.f32 %v1614, 0.0
  %v1645 = vmax.f32 %v1616, 0.0
  %v1646 = vmax.f32 %v1619, 0.0
  %v1647 = vmax.f32 %v1621, 0.0
  %v1648 = vmax.f32 %v1624, 0.0
  %v1649 = vmax.f32 %v1626, 0.0
  %v1650 = vmax.f32 %v1629, 0.0
  %v1651 = vmax.f32 %v1631, 0.0
  %v1652 = vmax.f32 %v1634, 0.0
  %v1653 = vmax.f32 %v1636, 0.0
  %s1654 = scalar_lea.vmem %s3, 448
  %v1655 = vld [vmem:[%s1654] sm:$0xf]
  %v1656 = vld [vmem:[%s1654 + $0x4] sm:$0xf]
  %v1657 = vld [vmem:[%s1654 + $0x8] sm:$0xf]
  %v1658 = vld [vmem:[%s1654 + $0xc] sm:$0xf]
  %v1659 = vld [vmem:[%s1654 + $0x10] sm:$0xf]
  %v1660 = vld [vmem:[%s1654 + $0x14] sm:$0xf]
  %v1661 = vld [vmem:[%s1654 + $0x18] sm:$0xf]
  %v1662 = vld [vmem:[%s1654 + $0x1c] sm:$0xf]
  %v1663 = vld [vmem:[%s1654 + $0x20] sm:$0xf]
  %v1664 = vld [vmem:[%s1654 + $0x24] sm:$0xf]
  %v1665 = vld [vmem:[%s1654 + $0x28] sm:$0xf]
  %v1666 = vld [vmem:[%s1654 + $0x2c] sm:$0xf]
  %v1667 = vld [vmem:[%s1654 + $0x30] sm:$0xf]
  %v1668 = vld [vmem:[%s1654 + $0x34] sm:$0xf]
  %v1669 = vld [vmem:[%s1654 + $0x38] sm:$0xf]
  %v1670 = vld [vmem:[%s1654 + $0x3c] sm:$0xf]
  %v1671 = vpack.c.bf16 %v1639, %v1638
  %v1672 = vpack.c.bf16 %v1641, %v1640
  %v1673 = vpack.c.bf16 %v1643, %v1642
  %v1674 = vpack.c.bf16 %v1645, %v1644
  %v1675 = vpack.c.bf16 %v1647, %v1646
  %v1676 = vpack.c.bf16 %v1649, %v1648
  %v1677 = vpack.c.bf16 %v1651, %v1650
  %v1678 = vpack.c.bf16 %v1653, %v1652
  %v1695 = vunpack.c.l.b16 %v1655
  %v1696 = vunpack.c.l.b16 %v1656
  %v1697 = vunpack.c.l.b16 %v1657
  %v1698 = vunpack.c.l.b16 %v1658
  %v1699 = vunpack.c.l.b16 %v1659
  %v1700 = vunpack.c.l.b16 %v1660
  %v1701 = vunpack.c.l.b16 %v1661
  %v1702 = vunpack.c.l.b16 %v1662
  %v1703 = vunpack.c.l.b16 %v1663
  %v1704 = vunpack.c.l.b16 %v1664
  %v1705 = vunpack.c.l.b16 %v1665
  %v1706 = vunpack.c.l.b16 %v1666
  %v1707 = vunpack.c.l.b16 %v1667
  %v1708 = vunpack.c.l.b16 %v1668
  %v1709 = vunpack.c.l.b16 %v1669
  %v1710 = vunpack.c.l.b16 %v1670
  %v1711 = vpack.c.b16 %v1696, %v1695
  %v1712 = vpack.c.b16 %v1698, %v1697
  %v1713 = vpack.c.b16 %v1700, %v1699
  %v1714 = vpack.c.b16 %v1702, %v1701
  %v1715 = vpack.c.b16 %v1704, %v1703
  %v1716 = vpack.c.b16 %v1706, %v1705
  %v1717 = vpack.c.b16 %v1708, %v1707
  %v1718 = vpack.c.b16 %v1710, %v1709
  %1727 = vmatpush.bf16.msra.mxu0 %v1678
  %1728 = vmatpush.bf16.msra.mxu0 %v1677
  %1729 = vmatpush.bf16.msra.mxu0 %v1676
  %1730 = vmatpush.bf16.msra.mxu0 %v1675
  %1731 = vmatpush.bf16.msra.mxu0 %v1674
  %1732 = vmatpush.bf16.msra.mxu0 %v1673
  %1733 = vmatpush.bf16.msra.mxu0 %v1672
  %1734 = vmatpush.bf16.msra.mxu0 %v1671
  %1735 = vmatmul.bf16.gmra.mxu0 %v1711
  %v1736 = vpop.f32.mrf.mxu0
  %v1737 = vadd.f32 0.0, %v1736
  %v1738 = vpop.f32.mrf.mxu0
  %v1739 = vadd.f32 0.0, %v1738
  %1740 = vmatmul.bf16.gmra.mxu0 %v1712
  %v1741 = vpop.f32.mrf.mxu0
  %v1742 = vadd.f32 0.0, %v1741
  %v1743 = vpop.f32.mrf.mxu0
  %v1744 = vadd.f32 0.0, %v1743
  %1745 = vmatmul.bf16.gmra.mxu0 %v1713
  %v1746 = vpop.f32.mrf.mxu0
  %v1747 = vadd.f32 0.0, %v1746
  %v1748 = vpop.f32.mrf.mxu0
  %v1749 = vadd.f32 0.0, %v1748
  %1750 = vmatmul.bf16.gmra.mxu0 %v1714
  %v1751 = vpop.f32.mrf.mxu0
  %v1752 = vadd.f32 0.0, %v1751
  %v1753 = vpop.f32.mrf.mxu0
  %v1754 = vadd.f32 0.0, %v1753
  %1755 = vmatmul.bf16.gmra.mxu0 %v1715
  %v1756 = vpop.f32.mrf.mxu0
  %v1757 = vadd.f32 0.0, %v1756
  %v1758 = vpop.f32.mrf.mxu0
  %v1759 = vadd.f32 0.0, %v1758
  %1760 = vmatmul.bf16.gmra.mxu0 %v1716
  %v1761 = vpop.f32.mrf.mxu0
  %v1762 = vadd.f32 0.0, %v1761
  %v1763 = vpop.f32.mrf.mxu0
  %v1764 = vadd.f32 0.0, %v1763
  %1765 = vmatmul.bf16.gmra.mxu0 %v1717
  %v1766 = vpop.f32.mrf.mxu0
  %v1767 = vadd.f32 0.0, %v1766
  %v1768 = vpop.f32.mrf.mxu0
  %v1769 = vadd.f32 0.0, %v1768
  %1770 = vmatmul.bf16.gmra.mxu0 %v1718
  %v1771 = vpop.f32.mrf.mxu0
  %v1772 = vadd.f32 0.0, %v1771
  %v1773 = vpop.f32.mrf.mxu0
  %v1774 = vadd.f32 0.0, %v1773
  %1775 = vdwg.mxu0
  %v1776 = vadd.f32 %v1564, %v1737
  %v1777 = vadd.f32 %v1565, %v1739
  %v1778 = vadd.f32 %v1566, %v1742
  %v1779 = vadd.f32 %v1567, %v1744
  %v1780 = vadd.f32 %v1568, %v1747
  %v1781 = vadd.f32 %v1569, %v1749
  %v1782 = vadd.f32 %v1570, %v1752
  %v1783 = vadd.f32 %v1571, %v1754
  %v1784 = vadd.f32 %v1572, %v1757
  %v1785 = vadd.f32 %v1573, %v1759
  %v1786 = vadd.f32 %v1574, %v1762
  %v1787 = vadd.f32 %v1575, %v1764
  %v1788 = vadd.f32 %v1576, %v1767
  %v1789 = vadd.f32 %v1577, %v1769
  %v1790 = vadd.f32 %v1578, %v1772
  %v1791 = vadd.f32 %v1579, %v1774
  %s1792 = scalar_lea.vmem %s0, 64
  %v1793 = vld [vmem:[%s1792] sm:$0xf]
  %v1794 = vld [vmem:[%s1792 + $0x4] sm:$0xf]
  %v1797 = vunpack.c.l.b16 %v1793
  %v1798 = vunpack.c.l.b16 %v1794
  %v1799 = vpack.c.b16 %v1798, %v1797
  %1801 = vmatpush.bf16.msra.mxu0 0
  %1802 = vmatpush.bf16.msra.mxu0 0
  %1803 = vmatpush.bf16.msra.mxu0 0
  %1804 = vmatpush.bf16.msra.mxu0 0
  %1805 = vmatpush.bf16.msra.mxu0 0
  %1806 = vmatpush.bf16.msra.mxu0 0
  %1807 = vmatpush.bf16.msra.mxu0 0
  %1808 = vmatpush.bf16.msra.mxu0 %v1799
  %1809 = vmatmul.bf16.gmra.mxu0 %v115
  %v1810 = vpop.f32.mrf.mxu0
  %v1811 = vadd.f32 %v49, %v1810
  %v1812 = vpop.f32.mrf.mxu0
  %v1813 = vadd.f32 %v50, %v1812
  %1814 = vmatmul.bf16.gmra.mxu0 %v118
  %v1815 = vpop.f32.mrf.mxu0
  %v1816 = vadd.f32 %v51, %v1815
  %v1817 = vpop.f32.mrf.mxu0
  %v1818 = vadd.f32 %v52, %v1817
  %1819 = vmatmul.bf16.gmra.mxu0 %v121
  %v1820 = vpop.f32.mrf.mxu0
  %v1821 = vadd.f32 %v53, %v1820
  %v1822 = vpop.f32.mrf.mxu0
  %v1823 = vadd.f32 %v54, %v1822
  %1824 = vmatmul.bf16.gmra.mxu0 %v124
  %v1825 = vpop.f32.mrf.mxu0
  %v1826 = vadd.f32 %v55, %v1825
  %v1827 = vpop.f32.mrf.mxu0
  %v1828 = vadd.f32 %v56, %v1827
  %1829 = vmatmul.bf16.gmra.mxu0 %v127
  %v1830 = vpop.f32.mrf.mxu0
  %v1831 = vadd.f32 %v57, %v1830
  %v1832 = vpop.f32.mrf.mxu0
  %v1833 = vadd.f32 %v58, %v1832
  %1834 = vmatmul.bf16.gmra.mxu0 %v130
  %v1835 = vpop.f32.mrf.mxu0
  %v1836 = vadd.f32 %v59, %v1835
  %v1837 = vpop.f32.mrf.mxu0
  %v1838 = vadd.f32 %v60, %v1837
  %1839 = vmatmul.bf16.gmra.mxu0 %v133
  %v1840 = vpop.f32.mrf.mxu0
  %v1841 = vadd.f32 %v61, %v1840
  %v1842 = vpop.f32.mrf.mxu0
  %v1843 = vadd.f32 %v62, %v1842
  %1844 = vmatmul.bf16.gmra.mxu0 %v136
  %v1845 = vpop.f32.mrf.mxu0
  %v1846 = vadd.f32 %v63, %v1845
  %v1847 = vpop.f32.mrf.mxu0
  %v1848 = vadd.f32 %v64, %v1847
  %1849 = vdwg.mxu0
  %v1850 = vmax.f32 %v1811, 0.0
  %v1851 = vmax.f32 %v1813, 0.0
  %v1852 = vmax.f32 %v1816, 0.0
  %v1853 = vmax.f32 %v1818, 0.0
  %v1854 = vmax.f32 %v1821, 0.0
  %v1855 = vmax.f32 %v1823, 0.0
  %v1856 = vmax.f32 %v1826, 0.0
  %v1857 = vmax.f32 %v1828, 0.0
  %v1858 = vmax.f32 %v1831, 0.0
  %v1859 = vmax.f32 %v1833, 0.0
  %v1860 = vmax.f32 %v1836, 0.0
  %v1861 = vmax.f32 %v1838, 0.0
  %v1862 = vmax.f32 %v1841, 0.0
  %v1863 = vmax.f32 %v1843, 0.0
  %v1864 = vmax.f32 %v1846, 0.0
  %v1865 = vmax.f32 %v1848, 0.0
  %s1866 = scalar_lea.vmem %s3, 512
  %v1867 = vld [vmem:[%s1866] sm:$0xf]
  %v1868 = vld [vmem:[%s1866 + $0x4] sm:$0xf]
  %v1869 = vld [vmem:[%s1866 + $0x8] sm:$0xf]
  %v1870 = vld [vmem:[%s1866 + $0xc] sm:$0xf]
  %v1871 = vld [vmem:[%s1866 + $0x10] sm:$0xf]
  %v1872 = vld [vmem:[%s1866 + $0x14] sm:$0xf]
  %v1873 = vld [vmem:[%s1866 + $0x18] sm:$0xf]
  %v1874 = vld [vmem:[%s1866 + $0x1c] sm:$0xf]
  %v1875 = vld [vmem:[%s1866 + $0x20] sm:$0xf]
  %v1876 = vld [vmem:[%s1866 + $0x24] sm:$0xf]
  %v1877 = vld [vmem:[%s1866 + $0x28] sm:$0xf]
  %v1878 = vld [vmem:[%s1866 + $0x2c] sm:$0xf]
  %v1879 = vld [vmem:[%s1866 + $0x30] sm:$0xf]
  %v1880 = vld [vmem:[%s1866 + $0x34] sm:$0xf]
  %v1881 = vld [vmem:[%s1866 + $0x38] sm:$0xf]
  %v1882 = vld [vmem:[%s1866 + $0x3c] sm:$0xf]
  %v1883 = vpack.c.bf16 %v1851, %v1850
  %v1884 = vpack.c.bf16 %v1853, %v1852
  %v1885 = vpack.c.bf16 %v1855, %v1854
  %v1886 = vpack.c.bf16 %v1857, %v1856
  %v1887 = vpack.c.bf16 %v1859, %v1858
  %v1888 = vpack.c.bf16 %v1861, %v1860
  %v1889 = vpack.c.bf16 %v1863, %v1862
  %v1890 = vpack.c.bf16 %v1865, %v1864
  %v1907 = vunpack.c.l.b16 %v1867
  %v1908 = vunpack.c.l.b16 %v1868
  %v1909 = vunpack.c.l.b16 %v1869
  %v1910 = vunpack.c.l.b16 %v1870
  %v1911 = vunpack.c.l.b16 %v1871
  %v1912 = vunpack.c.l.b16 %v1872
  %v1913 = vunpack.c.l.b16 %v1873
  %v1914 = vunpack.c.l.b16 %v1874
  %v1915 = vunpack.c.l.b16 %v1875
  %v1916 = vunpack.c.l.b16 %v1876
  %v1917 = vunpack.c.l.b16 %v1877
  %v1918 = vunpack.c.l.b16 %v1878
  %v1919 = vunpack.c.l.b16 %v1879
  %v1920 = vunpack.c.l.b16 %v1880
  %v1921 = vunpack.c.l.b16 %v1881
  %v1922 = vunpack.c.l.b16 %v1882
  %v1923 = vpack.c.b16 %v1908, %v1907
  %v1924 = vpack.c.b16 %v1910, %v1909
  %v1925 = vpack.c.b16 %v1912, %v1911
  %v1926 = vpack.c.b16 %v1914, %v1913
  %v1927 = vpack.c.b16 %v1916, %v1915
  %v1928 = vpack.c.b16 %v1918, %v1917
  %v1929 = vpack.c.b16 %v1920, %v1919
  %v1930 = vpack.c.b16 %v1922, %v1921
  %1939 = vmatpush.bf16.msra.mxu0 %v1890
  %1940 = vmatpush.bf16.msra.mxu0 %v1889
  %1941 = vmatpush.bf16.msra.mxu0 %v1888
  %1942 = vmatpush.bf16.msra.mxu0 %v1887
  %1943 = vmatpush.bf16.msra.mxu0 %v1886
  %1944 = vmatpush.bf16.msra.mxu0 %v1885
  %1945 = vmatpush.bf16.msra.mxu0 %v1884
  %1946 = vmatpush.bf16.msra.mxu0 %v1883
  %1947 = vmatmul.bf16.gmra.mxu0 %v1923
  %v1948 = vpop.f32.mrf.mxu0
  %v1949 = vadd.f32 0.0, %v1948
  %v1950 = vpop.f32.mrf.mxu0
  %v1951 = vadd.f32 0.0, %v1950
  %1952 = vmatmul.bf16.gmra.mxu0 %v1924
  %v1953 = vpop.f32.mrf.mxu0
  %v1954 = vadd.f32 0.0, %v1953
  %v1955 = vpop.f32.mrf.mxu0
  %v1956 = vadd.f32 0.0, %v1955
  %1957 = vmatmul.bf16.gmra.mxu0 %v1925
  %v1958 = vpop.f32.mrf.mxu0
  %v1959 = vadd.f32 0.0, %v1958
  %v1960 = vpop.f32.mrf.mxu0
  %v1961 = vadd.f32 0.0, %v1960
  %1962 = vmatmul.bf16.gmra.mxu0 %v1926
  %v1963 = vpop.f32.mrf.mxu0
  %v1964 = vadd.f32 0.0, %v1963
  %v1965 = vpop.f32.mrf.mxu0
  %v1966 = vadd.f32 0.0, %v1965
  %1967 = vmatmul.bf16.gmra.mxu0 %v1927
  %v1968 = vpop.f32.mrf.mxu0
  %v1969 = vadd.f32 0.0, %v1968
  %v1970 = vpop.f32.mrf.mxu0
  %v1971 = vadd.f32 0.0, %v1970
  %1972 = vmatmul.bf16.gmra.mxu0 %v1928
  %v1973 = vpop.f32.mrf.mxu0
  %v1974 = vadd.f32 0.0, %v1973
  %v1975 = vpop.f32.mrf.mxu0
  %v1976 = vadd.f32 0.0, %v1975
  %1977 = vmatmul.bf16.gmra.mxu0 %v1929
  %v1978 = vpop.f32.mrf.mxu0
  %v1979 = vadd.f32 0.0, %v1978
  %v1980 = vpop.f32.mrf.mxu0
  %v1981 = vadd.f32 0.0, %v1980
  %1982 = vmatmul.bf16.gmra.mxu0 %v1930
  %v1983 = vpop.f32.mrf.mxu0
  %v1984 = vadd.f32 0.0, %v1983
  %v1985 = vpop.f32.mrf.mxu0
  %v1986 = vadd.f32 0.0, %v1985
  %1987 = vdwg.mxu0
  %v1988 = vadd.f32 %v1776, %v1949
  %v1989 = vadd.f32 %v1777, %v1951
  %v1990 = vadd.f32 %v1778, %v1954
  %v1991 = vadd.f32 %v1779, %v1956
  %v1992 = vadd.f32 %v1780, %v1959
  %v1993 = vadd.f32 %v1781, %v1961
  %v1994 = vadd.f32 %v1782, %v1964
  %v1995 = vadd.f32 %v1783, %v1966
  %v1996 = vadd.f32 %v1784, %v1969
  %v1997 = vadd.f32 %v1785, %v1971
  %v1998 = vadd.f32 %v1786, %v1974
  %v1999 = vadd.f32 %v1787, %v1976
  %v2000 = vadd.f32 %v1788, %v1979
  %v2001 = vadd.f32 %v1789, %v1981
  %v2002 = vadd.f32 %v1790, %v1984
  %v2003 = vadd.f32 %v1791, %v1986
  %s2004 = scalar_lea.vmem %s0, 72
  %v2005 = vld [vmem:[%s2004] sm:$0xf]
  %v2006 = vld [vmem:[%s2004 + $0x4] sm:$0xf]
  %v2009 = vunpack.c.l.b16 %v2005
  %v2010 = vunpack.c.l.b16 %v2006
  %v2011 = vpack.c.b16 %v2010, %v2009
  %2013 = vmatpush.bf16.msra.mxu0 0
  %2014 = vmatpush.bf16.msra.mxu0 0
  %2015 = vmatpush.bf16.msra.mxu0 0
  %2016 = vmatpush.bf16.msra.mxu0 0
  %2017 = vmatpush.bf16.msra.mxu0 0
  %2018 = vmatpush.bf16.msra.mxu0 0
  %2019 = vmatpush.bf16.msra.mxu0 0
  %2020 = vmatpush.bf16.msra.mxu0 %v2011
  %2021 = vmatmul.bf16.gmra.mxu0 %v115
  %v2022 = vpop.f32.mrf.mxu0
  %v2023 = vadd.f32 %v49, %v2022
  %v2024 = vpop.f32.mrf.mxu0
  %v2025 = vadd.f32 %v50, %v2024
  %2026 = vmatmul.bf16.gmra.mxu0 %v118
  %v2027 = vpop.f32.mrf.mxu0
  %v2028 = vadd.f32 %v51, %v2027
  %v2029 = vpop.f32.mrf.mxu0
  %v2030 = vadd.f32 %v52, %v2029
  %2031 = vmatmul.bf16.gmra.mxu0 %v121
  %v2032 = vpop.f32.mrf.mxu0
  %v2033 = vadd.f32 %v53, %v2032
  %v2034 = vpop.f32.mrf.mxu0
  %v2035 = vadd.f32 %v54, %v2034
  %2036 = vmatmul.bf16.gmra.mxu0 %v124
  %v2037 = vpop.f32.mrf.mxu0
  %v2038 = vadd.f32 %v55, %v2037
  %v2039 = vpop.f32.mrf.mxu0
  %v2040 = vadd.f32 %v56, %v2039
  %2041 = vmatmul.bf16.gmra.mxu0 %v127
  %v2042 = vpop.f32.mrf.mxu0
  %v2043 = vadd.f32 %v57, %v2042
  %v2044 = vpop.f32.mrf.mxu0
  %v2045 = vadd.f32 %v58, %v2044
  %2046 = vmatmul.bf16.gmra.mxu0 %v130
  %v2047 = vpop.f32.mrf.mxu0
  %v2048 = vadd.f32 %v59, %v2047
  %v2049 = vpop.f32.mrf.mxu0
  %v2050 = vadd.f32 %v60, %v2049
  %2051 = vmatmul.bf16.gmra.mxu0 %v133
  %v2052 = vpop.f32.mrf.mxu0
  %v2053 = vadd.f32 %v61, %v2052
  %v2054 = vpop.f32.mrf.mxu0
  %v2055 = vadd.f32 %v62, %v2054
  %2056 = vmatmul.bf16.gmra.mxu0 %v136
  %v2057 = vpop.f32.mrf.mxu0
  %v2058 = vadd.f32 %v63, %v2057
  %v2059 = vpop.f32.mrf.mxu0
  %v2060 = vadd.f32 %v64, %v2059
  %2061 = vdwg.mxu0
  %v2062 = vmax.f32 %v2023, 0.0
  %v2063 = vmax.f32 %v2025, 0.0
  %v2064 = vmax.f32 %v2028, 0.0
  %v2065 = vmax.f32 %v2030, 0.0
  %v2066 = vmax.f32 %v2033, 0.0
  %v2067 = vmax.f32 %v2035, 0.0
  %v2068 = vmax.f32 %v2038, 0.0
  %v2069 = vmax.f32 %v2040, 0.0
  %v2070 = vmax.f32 %v2043, 0.0
  %v2071 = vmax.f32 %v2045, 0.0
  %v2072 = vmax.f32 %v2048, 0.0
  %v2073 = vmax.f32 %v2050, 0.0
  %v2074 = vmax.f32 %v2053, 0.0
  %v2075 = vmax.f32 %v2055, 0.0
  %v2076 = vmax.f32 %v2058, 0.0
  %v2077 = vmax.f32 %v2060, 0.0
  %s2078 = scalar_lea.vmem %s3, 576
  %v2079 = vld [vmem:[%s2078] sm:$0xf]
  %v2080 = vld [vmem:[%s2078 + $0x4] sm:$0xf]
  %v2081 = vld [vmem:[%s2078 + $0x8] sm:$0xf]
  %v2082 = vld [vmem:[%s2078 + $0xc] sm:$0xf]
  %v2083 = vld [vmem:[%s2078 + $0x10] sm:$0xf]
  %v2084 = vld [vmem:[%s2078 + $0x14] sm:$0xf]
  %v2085 = vld [vmem:[%s2078 + $0x18] sm:$0xf]
  %v2086 = vld [vmem:[%s2078 + $0x1c] sm:$0xf]
  %v2087 = vld [vmem:[%s2078 + $0x20] sm:$0xf]
  %v2088 = vld [vmem:[%s2078 + $0x24] sm:$0xf]
  %v2089 = vld [vmem:[%s2078 + $0x28] sm:$0xf]
  %v2090 = vld [vmem:[%s2078 + $0x2c] sm:$0xf]
  %v2091 = vld [vmem:[%s2078 + $0x30] sm:$0xf]
  %v2092 = vld [vmem:[%s2078 + $0x34] sm:$0xf]
  %v2093 = vld [vmem:[%s2078 + $0x38] sm:$0xf]
  %v2094 = vld [vmem:[%s2078 + $0x3c] sm:$0xf]
  %v2095 = vpack.c.bf16 %v2063, %v2062
  %v2096 = vpack.c.bf16 %v2065, %v2064
  %v2097 = vpack.c.bf16 %v2067, %v2066
  %v2098 = vpack.c.bf16 %v2069, %v2068
  %v2099 = vpack.c.bf16 %v2071, %v2070
  %v2100 = vpack.c.bf16 %v2073, %v2072
  %v2101 = vpack.c.bf16 %v2075, %v2074
  %v2102 = vpack.c.bf16 %v2077, %v2076
  %v2119 = vunpack.c.l.b16 %v2079
  %v2120 = vunpack.c.l.b16 %v2080
  %v2121 = vunpack.c.l.b16 %v2081
  %v2122 = vunpack.c.l.b16 %v2082
  %v2123 = vunpack.c.l.b16 %v2083
  %v2124 = vunpack.c.l.b16 %v2084
  %v2125 = vunpack.c.l.b16 %v2085
  %v2126 = vunpack.c.l.b16 %v2086
  %v2127 = vunpack.c.l.b16 %v2087
  %v2128 = vunpack.c.l.b16 %v2088
  %v2129 = vunpack.c.l.b16 %v2089
  %v2130 = vunpack.c.l.b16 %v2090
  %v2131 = vunpack.c.l.b16 %v2091
  %v2132 = vunpack.c.l.b16 %v2092
  %v2133 = vunpack.c.l.b16 %v2093
  %v2134 = vunpack.c.l.b16 %v2094
  %v2135 = vpack.c.b16 %v2120, %v2119
  %v2136 = vpack.c.b16 %v2122, %v2121
  %v2137 = vpack.c.b16 %v2124, %v2123
  %v2138 = vpack.c.b16 %v2126, %v2125
  %v2139 = vpack.c.b16 %v2128, %v2127
  %v2140 = vpack.c.b16 %v2130, %v2129
  %v2141 = vpack.c.b16 %v2132, %v2131
  %v2142 = vpack.c.b16 %v2134, %v2133
  %2151 = vmatpush.bf16.msra.mxu0 %v2102
  %2152 = vmatpush.bf16.msra.mxu0 %v2101
  %2153 = vmatpush.bf16.msra.mxu0 %v2100
  %2154 = vmatpush.bf16.msra.mxu0 %v2099
  %2155 = vmatpush.bf16.msra.mxu0 %v2098
  %2156 = vmatpush.bf16.msra.mxu0 %v2097
  %2157 = vmatpush.bf16.msra.mxu0 %v2096
  %2158 = vmatpush.bf16.msra.mxu0 %v2095
  %2159 = vmatmul.bf16.gmra.mxu0 %v2135
  %v2160 = vpop.f32.mrf.mxu0
  %v2161 = vadd.f32 0.0, %v2160
  %v2162 = vpop.f32.mrf.mxu0
  %v2163 = vadd.f32 0.0, %v2162
  %2164 = vmatmul.bf16.gmra.mxu0 %v2136
  %v2165 = vpop.f32.mrf.mxu0
  %v2166 = vadd.f32 0.0, %v2165
  %v2167 = vpop.f32.mrf.mxu0
  %v2168 = vadd.f32 0.0, %v2167
  %2169 = vmatmul.bf16.gmra.mxu0 %v2137
  %v2170 = vpop.f32.mrf.mxu0
  %v2171 = vadd.f32 0.0, %v2170
  %v2172 = vpop.f32.mrf.mxu0
  %v2173 = vadd.f32 0.0, %v2172
  %2174 = vmatmul.bf16.gmra.mxu0 %v2138
  %v2175 = vpop.f32.mrf.mxu0
  %v2176 = vadd.f32 0.0, %v2175
  %v2177 = vpop.f32.mrf.mxu0
  %v2178 = vadd.f32 0.0, %v2177
  %2179 = vmatmul.bf16.gmra.mxu0 %v2139
  %v2180 = vpop.f32.mrf.mxu0
  %v2181 = vadd.f32 0.0, %v2180
  %v2182 = vpop.f32.mrf.mxu0
  %v2183 = vadd.f32 0.0, %v2182
  %2184 = vmatmul.bf16.gmra.mxu0 %v2140
  %v2185 = vpop.f32.mrf.mxu0
  %v2186 = vadd.f32 0.0, %v2185
  %v2187 = vpop.f32.mrf.mxu0
  %v2188 = vadd.f32 0.0, %v2187
  %2189 = vmatmul.bf16.gmra.mxu0 %v2141
  %v2190 = vpop.f32.mrf.mxu0
  %v2191 = vadd.f32 0.0, %v2190
  %v2192 = vpop.f32.mrf.mxu0
  %v2193 = vadd.f32 0.0, %v2192
  %2194 = vmatmul.bf16.gmra.mxu0 %v2142
  %v2195 = vpop.f32.mrf.mxu0
  %v2196 = vadd.f32 0.0, %v2195
  %v2197 = vpop.f32.mrf.mxu0
  %v2198 = vadd.f32 0.0, %v2197
  %2199 = vdwg.mxu0
  %v2200 = vadd.f32 %v1988, %v2161
  %v2201 = vadd.f32 %v1989, %v2163
  %v2202 = vadd.f32 %v1990, %v2166
  %v2203 = vadd.f32 %v1991, %v2168
  %v2204 = vadd.f32 %v1992, %v2171
  %v2205 = vadd.f32 %v1993, %v2173
  %v2206 = vadd.f32 %v1994, %v2176
  %v2207 = vadd.f32 %v1995, %v2178
  %v2208 = vadd.f32 %v1996, %v2181
  %v2209 = vadd.f32 %v1997, %v2183
  %v2210 = vadd.f32 %v1998, %v2186
  %v2211 = vadd.f32 %v1999, %v2188
  %v2212 = vadd.f32 %v2000, %v2191
  %v2213 = vadd.f32 %v2001, %v2193
  %v2214 = vadd.f32 %v2002, %v2196
  %v2215 = vadd.f32 %v2003, %v2198
  %s2216 = scalar_lea.vmem %s0, 80
  %v2217 = vld [vmem:[%s2216] sm:$0xf]
  %v2218 = vld [vmem:[%s2216 + $0x4] sm:$0xf]
  %v2221 = vunpack.c.l.b16 %v2217
  %v2222 = vunpack.c.l.b16 %v2218
  %v2223 = vpack.c.b16 %v2222, %v2221
  %2225 = vmatpush.bf16.msra.mxu0 0
  %2226 = vmatpush.bf16.msra.mxu0 0
  %2227 = vmatpush.bf16.msra.mxu0 0
  %2228 = vmatpush.bf16.msra.mxu0 0
  %2229 = vmatpush.bf16.msra.mxu0 0
  %2230 = vmatpush.bf16.msra.mxu0 0
  %2231 = vmatpush.bf16.msra.mxu0 0
  %2232 = vmatpush.bf16.msra.mxu0 %v2223
  %2233 = vmatmul.bf16.gmra.mxu0 %v115
  %v2234 = vpop.f32.mrf.mxu0
  %v2235 = vadd.f32 %v49, %v2234
  %v2236 = vpop.f32.mrf.mxu0
  %v2237 = vadd.f32 %v50, %v2236
  %2238 = vmatmul.bf16.gmra.mxu0 %v118
  %v2239 = vpop.f32.mrf.mxu0
  %v2240 = vadd.f32 %v51, %v2239
  %v2241 = vpop.f32.mrf.mxu0
  %v2242 = vadd.f32 %v52, %v2241
  %2243 = vmatmul.bf16.gmra.mxu0 %v121
  %v2244 = vpop.f32.mrf.mxu0
  %v2245 = vadd.f32 %v53, %v2244
  %v2246 = vpop.f32.mrf.mxu0
  %v2247 = vadd.f32 %v54, %v2246
  %2248 = vmatmul.bf16.gmra.mxu0 %v124
  %v2249 = vpop.f32.mrf.mxu0
  %v2250 = vadd.f32 %v55, %v2249
  %v2251 = vpop.f32.mrf.mxu0
  %v2252 = vadd.f32 %v56, %v2251
  %2253 = vmatmul.bf16.gmra.mxu0 %v127
  %v2254 = vpop.f32.mrf.mxu0
  %v2255 = vadd.f32 %v57, %v2254
  %v2256 = vpop.f32.mrf.mxu0
  %v2257 = vadd.f32 %v58, %v2256
  %2258 = vmatmul.bf16.gmra.mxu0 %v130
  %v2259 = vpop.f32.mrf.mxu0
  %v2260 = vadd.f32 %v59, %v2259
  %v2261 = vpop.f32.mrf.mxu0
  %v2262 = vadd.f32 %v60, %v2261
  %2263 = vmatmul.bf16.gmra.mxu0 %v133
  %v2264 = vpop.f32.mrf.mxu0
  %v2265 = vadd.f32 %v61, %v2264
  %v2266 = vpop.f32.mrf.mxu0
  %v2267 = vadd.f32 %v62, %v2266
  %2268 = vmatmul.bf16.gmra.mxu0 %v136
  %v2269 = vpop.f32.mrf.mxu0
  %v2270 = vadd.f32 %v63, %v2269
  %v2271 = vpop.f32.mrf.mxu0
  %v2272 = vadd.f32 %v64, %v2271
  %2273 = vdwg.mxu0
  %v2274 = vmax.f32 %v2235, 0.0
  %v2275 = vmax.f32 %v2237, 0.0
  %v2276 = vmax.f32 %v2240, 0.0
  %v2277 = vmax.f32 %v2242, 0.0
  %v2278 = vmax.f32 %v2245, 0.0
  %v2279 = vmax.f32 %v2247, 0.0
  %v2280 = vmax.f32 %v2250, 0.0
  %v2281 = vmax.f32 %v2252, 0.0
  %v2282 = vmax.f32 %v2255, 0.0
  %v2283 = vmax.f32 %v2257, 0.0
  %v2284 = vmax.f32 %v2260, 0.0
  %v2285 = vmax.f32 %v2262, 0.0
  %v2286 = vmax.f32 %v2265, 0.0
  %v2287 = vmax.f32 %v2267, 0.0
  %v2288 = vmax.f32 %v2270, 0.0
  %v2289 = vmax.f32 %v2272, 0.0
  %s2290 = scalar_lea.vmem %s3, 640
  %v2291 = vld [vmem:[%s2290] sm:$0xf]
  %v2292 = vld [vmem:[%s2290 + $0x4] sm:$0xf]
  %v2293 = vld [vmem:[%s2290 + $0x8] sm:$0xf]
  %v2294 = vld [vmem:[%s2290 + $0xc] sm:$0xf]
  %v2295 = vld [vmem:[%s2290 + $0x10] sm:$0xf]
  %v2296 = vld [vmem:[%s2290 + $0x14] sm:$0xf]
  %v2297 = vld [vmem:[%s2290 + $0x18] sm:$0xf]
  %v2298 = vld [vmem:[%s2290 + $0x1c] sm:$0xf]
  %v2299 = vld [vmem:[%s2290 + $0x20] sm:$0xf]
  %v2300 = vld [vmem:[%s2290 + $0x24] sm:$0xf]
  %v2301 = vld [vmem:[%s2290 + $0x28] sm:$0xf]
  %v2302 = vld [vmem:[%s2290 + $0x2c] sm:$0xf]
  %v2303 = vld [vmem:[%s2290 + $0x30] sm:$0xf]
  %v2304 = vld [vmem:[%s2290 + $0x34] sm:$0xf]
  %v2305 = vld [vmem:[%s2290 + $0x38] sm:$0xf]
  %v2306 = vld [vmem:[%s2290 + $0x3c] sm:$0xf]
  %v2307 = vpack.c.bf16 %v2275, %v2274
  %v2308 = vpack.c.bf16 %v2277, %v2276
  %v2309 = vpack.c.bf16 %v2279, %v2278
  %v2310 = vpack.c.bf16 %v2281, %v2280
  %v2311 = vpack.c.bf16 %v2283, %v2282
  %v2312 = vpack.c.bf16 %v2285, %v2284
  %v2313 = vpack.c.bf16 %v2287, %v2286
  %v2314 = vpack.c.bf16 %v2289, %v2288
  %v2331 = vunpack.c.l.b16 %v2291
  %v2332 = vunpack.c.l.b16 %v2292
  %v2333 = vunpack.c.l.b16 %v2293
  %v2334 = vunpack.c.l.b16 %v2294
  %v2335 = vunpack.c.l.b16 %v2295
  %v2336 = vunpack.c.l.b16 %v2296
  %v2337 = vunpack.c.l.b16 %v2297
  %v2338 = vunpack.c.l.b16 %v2298
  %v2339 = vunpack.c.l.b16 %v2299
  %v2340 = vunpack.c.l.b16 %v2300
  %v2341 = vunpack.c.l.b16 %v2301
  %v2342 = vunpack.c.l.b16 %v2302
  %v2343 = vunpack.c.l.b16 %v2303
  %v2344 = vunpack.c.l.b16 %v2304
  %v2345 = vunpack.c.l.b16 %v2305
  %v2346 = vunpack.c.l.b16 %v2306
  %v2347 = vpack.c.b16 %v2332, %v2331
  %v2348 = vpack.c.b16 %v2334, %v2333
  %v2349 = vpack.c.b16 %v2336, %v2335
  %v2350 = vpack.c.b16 %v2338, %v2337
  %v2351 = vpack.c.b16 %v2340, %v2339
  %v2352 = vpack.c.b16 %v2342, %v2341
  %v2353 = vpack.c.b16 %v2344, %v2343
  %v2354 = vpack.c.b16 %v2346, %v2345
  %2363 = vmatpush.bf16.msra.mxu0 %v2314
  %2364 = vmatpush.bf16.msra.mxu0 %v2313
  %2365 = vmatpush.bf16.msra.mxu0 %v2312
  %2366 = vmatpush.bf16.msra.mxu0 %v2311
  %2367 = vmatpush.bf16.msra.mxu0 %v2310
  %2368 = vmatpush.bf16.msra.mxu0 %v2309
  %2369 = vmatpush.bf16.msra.mxu0 %v2308
  %2370 = vmatpush.bf16.msra.mxu0 %v2307
  %2371 = vmatmul.bf16.gmra.mxu0 %v2347
  %v2372 = vpop.f32.mrf.mxu0
  %v2373 = vadd.f32 0.0, %v2372
  %v2374 = vpop.f32.mrf.mxu0
  %v2375 = vadd.f32 0.0, %v2374
  %2376 = vmatmul.bf16.gmra.mxu0 %v2348
  %v2377 = vpop.f32.mrf.mxu0
  %v2378 = vadd.f32 0.0, %v2377
  %v2379 = vpop.f32.mrf.mxu0
  %v2380 = vadd.f32 0.0, %v2379
  %2381 = vmatmul.bf16.gmra.mxu0 %v2349
  %v2382 = vpop.f32.mrf.mxu0
  %v2383 = vadd.f32 0.0, %v2382
  %v2384 = vpop.f32.mrf.mxu0
  %v2385 = vadd.f32 0.0, %v2384
  %2386 = vmatmul.bf16.gmra.mxu0 %v2350
  %v2387 = vpop.f32.mrf.mxu0
  %v2388 = vadd.f32 0.0, %v2387
  %v2389 = vpop.f32.mrf.mxu0
  %v2390 = vadd.f32 0.0, %v2389
  %2391 = vmatmul.bf16.gmra.mxu0 %v2351
  %v2392 = vpop.f32.mrf.mxu0
  %v2393 = vadd.f32 0.0, %v2392
  %v2394 = vpop.f32.mrf.mxu0
  %v2395 = vadd.f32 0.0, %v2394
  %2396 = vmatmul.bf16.gmra.mxu0 %v2352
  %v2397 = vpop.f32.mrf.mxu0
  %v2398 = vadd.f32 0.0, %v2397
  %v2399 = vpop.f32.mrf.mxu0
  %v2400 = vadd.f32 0.0, %v2399
  %2401 = vmatmul.bf16.gmra.mxu0 %v2353
  %v2402 = vpop.f32.mrf.mxu0
  %v2403 = vadd.f32 0.0, %v2402
  %v2404 = vpop.f32.mrf.mxu0
  %v2405 = vadd.f32 0.0, %v2404
  %2406 = vmatmul.bf16.gmra.mxu0 %v2354
  %v2407 = vpop.f32.mrf.mxu0
  %v2408 = vadd.f32 0.0, %v2407
  %v2409 = vpop.f32.mrf.mxu0
  %v2410 = vadd.f32 0.0, %v2409
  %2411 = vdwg.mxu0
  %v2412 = vadd.f32 %v2200, %v2373
  %v2413 = vadd.f32 %v2201, %v2375
  %v2414 = vadd.f32 %v2202, %v2378
  %v2415 = vadd.f32 %v2203, %v2380
  %v2416 = vadd.f32 %v2204, %v2383
  %v2417 = vadd.f32 %v2205, %v2385
  %v2418 = vadd.f32 %v2206, %v2388
  %v2419 = vadd.f32 %v2207, %v2390
  %v2420 = vadd.f32 %v2208, %v2393
  %v2421 = vadd.f32 %v2209, %v2395
  %v2422 = vadd.f32 %v2210, %v2398
  %v2423 = vadd.f32 %v2211, %v2400
  %v2424 = vadd.f32 %v2212, %v2403
  %v2425 = vadd.f32 %v2213, %v2405
  %v2426 = vadd.f32 %v2214, %v2408
  %v2427 = vadd.f32 %v2215, %v2410
  %s2428 = scalar_lea.vmem %s0, 88
  %v2429 = vld [vmem:[%s2428] sm:$0xf]
  %v2430 = vld [vmem:[%s2428 + $0x4] sm:$0xf]
  %v2433 = vunpack.c.l.b16 %v2429
  %v2434 = vunpack.c.l.b16 %v2430
  %v2435 = vpack.c.b16 %v2434, %v2433
  %2437 = vmatpush.bf16.msra.mxu0 0
  %2438 = vmatpush.bf16.msra.mxu0 0
  %2439 = vmatpush.bf16.msra.mxu0 0
  %2440 = vmatpush.bf16.msra.mxu0 0
  %2441 = vmatpush.bf16.msra.mxu0 0
  %2442 = vmatpush.bf16.msra.mxu0 0
  %2443 = vmatpush.bf16.msra.mxu0 0
  %2444 = vmatpush.bf16.msra.mxu0 %v2435
  %2445 = vmatmul.bf16.gmra.mxu0 %v115
  %v2446 = vpop.f32.mrf.mxu0
  %v2447 = vadd.f32 %v49, %v2446
  %v2448 = vpop.f32.mrf.mxu0
  %v2449 = vadd.f32 %v50, %v2448
  %2450 = vmatmul.bf16.gmra.mxu0 %v118
  %v2451 = vpop.f32.mrf.mxu0
  %v2452 = vadd.f32 %v51, %v2451
  %v2453 = vpop.f32.mrf.mxu0
  %v2454 = vadd.f32 %v52, %v2453
  %2455 = vmatmul.bf16.gmra.mxu0 %v121
  %v2456 = vpop.f32.mrf.mxu0
  %v2457 = vadd.f32 %v53, %v2456
  %v2458 = vpop.f32.mrf.mxu0
  %v2459 = vadd.f32 %v54, %v2458
  %2460 = vmatmul.bf16.gmra.mxu0 %v124
  %v2461 = vpop.f32.mrf.mxu0
  %v2462 = vadd.f32 %v55, %v2461
  %v2463 = vpop.f32.mrf.mxu0
  %v2464 = vadd.f32 %v56, %v2463
  %2465 = vmatmul.bf16.gmra.mxu0 %v127
  %v2466 = vpop.f32.mrf.mxu0
  %v2467 = vadd.f32 %v57, %v2466
  %v2468 = vpop.f32.mrf.mxu0
  %v2469 = vadd.f32 %v58, %v2468
  %2470 = vmatmul.bf16.gmra.mxu0 %v130
  %v2471 = vpop.f32.mrf.mxu0
  %v2472 = vadd.f32 %v59, %v2471
  %v2473 = vpop.f32.mrf.mxu0
  %v2474 = vadd.f32 %v60, %v2473
  %2475 = vmatmul.bf16.gmra.mxu0 %v133
  %v2476 = vpop.f32.mrf.mxu0
  %v2477 = vadd.f32 %v61, %v2476
  %v2478 = vpop.f32.mrf.mxu0
  %v2479 = vadd.f32 %v62, %v2478
  %2480 = vmatmul.bf16.gmra.mxu0 %v136
  %v2481 = vpop.f32.mrf.mxu0
  %v2482 = vadd.f32 %v63, %v2481
  %v2483 = vpop.f32.mrf.mxu0
  %v2484 = vadd.f32 %v64, %v2483
  %2485 = vdwg.mxu0
  %v2486 = vmax.f32 %v2447, 0.0
  %v2487 = vmax.f32 %v2449, 0.0
  %v2488 = vmax.f32 %v2452, 0.0
  %v2489 = vmax.f32 %v2454, 0.0
  %v2490 = vmax.f32 %v2457, 0.0
  %v2491 = vmax.f32 %v2459, 0.0
  %v2492 = vmax.f32 %v2462, 0.0
  %v2493 = vmax.f32 %v2464, 0.0
  %v2494 = vmax.f32 %v2467, 0.0
  %v2495 = vmax.f32 %v2469, 0.0
  %v2496 = vmax.f32 %v2472, 0.0
  %v2497 = vmax.f32 %v2474, 0.0
  %v2498 = vmax.f32 %v2477, 0.0
  %v2499 = vmax.f32 %v2479, 0.0
  %v2500 = vmax.f32 %v2482, 0.0
  %v2501 = vmax.f32 %v2484, 0.0
  %s2502 = scalar_lea.vmem %s3, 704
  %v2503 = vld [vmem:[%s2502] sm:$0xf]
  %v2504 = vld [vmem:[%s2502 + $0x4] sm:$0xf]
  %v2505 = vld [vmem:[%s2502 + $0x8] sm:$0xf]
  %v2506 = vld [vmem:[%s2502 + $0xc] sm:$0xf]
  %v2507 = vld [vmem:[%s2502 + $0x10] sm:$0xf]
  %v2508 = vld [vmem:[%s2502 + $0x14] sm:$0xf]
  %v2509 = vld [vmem:[%s2502 + $0x18] sm:$0xf]
  %v2510 = vld [vmem:[%s2502 + $0x1c] sm:$0xf]
  %v2511 = vld [vmem:[%s2502 + $0x20] sm:$0xf]
  %v2512 = vld [vmem:[%s2502 + $0x24] sm:$0xf]
  %v2513 = vld [vmem:[%s2502 + $0x28] sm:$0xf]
  %v2514 = vld [vmem:[%s2502 + $0x2c] sm:$0xf]
  %v2515 = vld [vmem:[%s2502 + $0x30] sm:$0xf]
  %v2516 = vld [vmem:[%s2502 + $0x34] sm:$0xf]
  %v2517 = vld [vmem:[%s2502 + $0x38] sm:$0xf]
  %v2518 = vld [vmem:[%s2502 + $0x3c] sm:$0xf]
  %v2519 = vpack.c.bf16 %v2487, %v2486
  %v2520 = vpack.c.bf16 %v2489, %v2488
  %v2521 = vpack.c.bf16 %v2491, %v2490
  %v2522 = vpack.c.bf16 %v2493, %v2492
  %v2523 = vpack.c.bf16 %v2495, %v2494
  %v2524 = vpack.c.bf16 %v2497, %v2496
  %v2525 = vpack.c.bf16 %v2499, %v2498
  %v2526 = vpack.c.bf16 %v2501, %v2500
  %v2543 = vunpack.c.l.b16 %v2503
  %v2544 = vunpack.c.l.b16 %v2504
  %v2545 = vunpack.c.l.b16 %v2505
  %v2546 = vunpack.c.l.b16 %v2506
  %v2547 = vunpack.c.l.b16 %v2507
  %v2548 = vunpack.c.l.b16 %v2508
  %v2549 = vunpack.c.l.b16 %v2509
  %v2550 = vunpack.c.l.b16 %v2510
  %v2551 = vunpack.c.l.b16 %v2511
  %v2552 = vunpack.c.l.b16 %v2512
  %v2553 = vunpack.c.l.b16 %v2513
  %v2554 = vunpack.c.l.b16 %v2514
  %v2555 = vunpack.c.l.b16 %v2515
  %v2556 = vunpack.c.l.b16 %v2516
  %v2557 = vunpack.c.l.b16 %v2517
  %v2558 = vunpack.c.l.b16 %v2518
  %v2559 = vpack.c.b16 %v2544, %v2543
  %v2560 = vpack.c.b16 %v2546, %v2545
  %v2561 = vpack.c.b16 %v2548, %v2547
  %v2562 = vpack.c.b16 %v2550, %v2549
  %v2563 = vpack.c.b16 %v2552, %v2551
  %v2564 = vpack.c.b16 %v2554, %v2553
  %v2565 = vpack.c.b16 %v2556, %v2555
  %v2566 = vpack.c.b16 %v2558, %v2557
  %2575 = vmatpush.bf16.msra.mxu0 %v2526
  %2576 = vmatpush.bf16.msra.mxu0 %v2525
  %2577 = vmatpush.bf16.msra.mxu0 %v2524
  %2578 = vmatpush.bf16.msra.mxu0 %v2523
  %2579 = vmatpush.bf16.msra.mxu0 %v2522
  %2580 = vmatpush.bf16.msra.mxu0 %v2521
  %2581 = vmatpush.bf16.msra.mxu0 %v2520
  %2582 = vmatpush.bf16.msra.mxu0 %v2519
  %2583 = vmatmul.bf16.gmra.mxu0 %v2559
  %v2584 = vpop.f32.mrf.mxu0
  %v2585 = vadd.f32 0.0, %v2584
  %v2586 = vpop.f32.mrf.mxu0
  %v2587 = vadd.f32 0.0, %v2586
  %2588 = vmatmul.bf16.gmra.mxu0 %v2560
  %v2589 = vpop.f32.mrf.mxu0
  %v2590 = vadd.f32 0.0, %v2589
  %v2591 = vpop.f32.mrf.mxu0
  %v2592 = vadd.f32 0.0, %v2591
  %2593 = vmatmul.bf16.gmra.mxu0 %v2561
  %v2594 = vpop.f32.mrf.mxu0
  %v2595 = vadd.f32 0.0, %v2594
  %v2596 = vpop.f32.mrf.mxu0
  %v2597 = vadd.f32 0.0, %v2596
  %2598 = vmatmul.bf16.gmra.mxu0 %v2562
  %v2599 = vpop.f32.mrf.mxu0
  %v2600 = vadd.f32 0.0, %v2599
  %v2601 = vpop.f32.mrf.mxu0
  %v2602 = vadd.f32 0.0, %v2601
  %2603 = vmatmul.bf16.gmra.mxu0 %v2563
  %v2604 = vpop.f32.mrf.mxu0
  %v2605 = vadd.f32 0.0, %v2604
  %v2606 = vpop.f32.mrf.mxu0
  %v2607 = vadd.f32 0.0, %v2606
  %2608 = vmatmul.bf16.gmra.mxu0 %v2564
  %v2609 = vpop.f32.mrf.mxu0
  %v2610 = vadd.f32 0.0, %v2609
  %v2611 = vpop.f32.mrf.mxu0
  %v2612 = vadd.f32 0.0, %v2611
  %2613 = vmatmul.bf16.gmra.mxu0 %v2565
  %v2614 = vpop.f32.mrf.mxu0
  %v2615 = vadd.f32 0.0, %v2614
  %v2616 = vpop.f32.mrf.mxu0
  %v2617 = vadd.f32 0.0, %v2616
  %2618 = vmatmul.bf16.gmra.mxu0 %v2566
  %v2619 = vpop.f32.mrf.mxu0
  %v2620 = vadd.f32 0.0, %v2619
  %v2621 = vpop.f32.mrf.mxu0
  %v2622 = vadd.f32 0.0, %v2621
  %2623 = vdwg.mxu0
  %v2624 = vadd.f32 %v2412, %v2585
  %v2625 = vadd.f32 %v2413, %v2587
  %v2626 = vadd.f32 %v2414, %v2590
  %v2627 = vadd.f32 %v2415, %v2592
  %v2628 = vadd.f32 %v2416, %v2595
  %v2629 = vadd.f32 %v2417, %v2597
  %v2630 = vadd.f32 %v2418, %v2600
  %v2631 = vadd.f32 %v2419, %v2602
  %v2632 = vadd.f32 %v2420, %v2605
  %v2633 = vadd.f32 %v2421, %v2607
  %v2634 = vadd.f32 %v2422, %v2610
  %v2635 = vadd.f32 %v2423, %v2612
  %v2636 = vadd.f32 %v2424, %v2615
  %v2637 = vadd.f32 %v2425, %v2617
  %v2638 = vadd.f32 %v2426, %v2620
  %v2639 = vadd.f32 %v2427, %v2622
  %s2640 = scalar_lea.vmem %s0, 96
  %v2641 = vld [vmem:[%s2640] sm:$0xf]
  %v2642 = vld [vmem:[%s2640 + $0x4] sm:$0xf]
  %v2645 = vunpack.c.l.b16 %v2641
  %v2646 = vunpack.c.l.b16 %v2642
  %v2647 = vpack.c.b16 %v2646, %v2645
  %2649 = vmatpush.bf16.msra.mxu0 0
  %2650 = vmatpush.bf16.msra.mxu0 0
  %2651 = vmatpush.bf16.msra.mxu0 0
  %2652 = vmatpush.bf16.msra.mxu0 0
  %2653 = vmatpush.bf16.msra.mxu0 0
  %2654 = vmatpush.bf16.msra.mxu0 0
  %2655 = vmatpush.bf16.msra.mxu0 0
  %2656 = vmatpush.bf16.msra.mxu0 %v2647
  %2657 = vmatmul.bf16.gmra.mxu0 %v115
  %v2658 = vpop.f32.mrf.mxu0
  %v2659 = vadd.f32 %v49, %v2658
  %v2660 = vpop.f32.mrf.mxu0
  %v2661 = vadd.f32 %v50, %v2660
  %2662 = vmatmul.bf16.gmra.mxu0 %v118
  %v2663 = vpop.f32.mrf.mxu0
  %v2664 = vadd.f32 %v51, %v2663
  %v2665 = vpop.f32.mrf.mxu0
  %v2666 = vadd.f32 %v52, %v2665
  %2667 = vmatmul.bf16.gmra.mxu0 %v121
  %v2668 = vpop.f32.mrf.mxu0
  %v2669 = vadd.f32 %v53, %v2668
  %v2670 = vpop.f32.mrf.mxu0
  %v2671 = vadd.f32 %v54, %v2670
  %2672 = vmatmul.bf16.gmra.mxu0 %v124
  %v2673 = vpop.f32.mrf.mxu0
  %v2674 = vadd.f32 %v55, %v2673
  %v2675 = vpop.f32.mrf.mxu0
  %v2676 = vadd.f32 %v56, %v2675
  %2677 = vmatmul.bf16.gmra.mxu0 %v127
  %v2678 = vpop.f32.mrf.mxu0
  %v2679 = vadd.f32 %v57, %v2678
  %v2680 = vpop.f32.mrf.mxu0
  %v2681 = vadd.f32 %v58, %v2680
  %2682 = vmatmul.bf16.gmra.mxu0 %v130
  %v2683 = vpop.f32.mrf.mxu0
  %v2684 = vadd.f32 %v59, %v2683
  %v2685 = vpop.f32.mrf.mxu0
  %v2686 = vadd.f32 %v60, %v2685
  %2687 = vmatmul.bf16.gmra.mxu0 %v133
  %v2688 = vpop.f32.mrf.mxu0
  %v2689 = vadd.f32 %v61, %v2688
  %v2690 = vpop.f32.mrf.mxu0
  %v2691 = vadd.f32 %v62, %v2690
  %2692 = vmatmul.bf16.gmra.mxu0 %v136
  %v2693 = vpop.f32.mrf.mxu0
  %v2694 = vadd.f32 %v63, %v2693
  %v2695 = vpop.f32.mrf.mxu0
  %v2696 = vadd.f32 %v64, %v2695
  %2697 = vdwg.mxu0
  %v2698 = vmax.f32 %v2659, 0.0
  %v2699 = vmax.f32 %v2661, 0.0
  %v2700 = vmax.f32 %v2664, 0.0
  %v2701 = vmax.f32 %v2666, 0.0
  %v2702 = vmax.f32 %v2669, 0.0
  %v2703 = vmax.f32 %v2671, 0.0
  %v2704 = vmax.f32 %v2674, 0.0
  %v2705 = vmax.f32 %v2676, 0.0
  %v2706 = vmax.f32 %v2679, 0.0
  %v2707 = vmax.f32 %v2681, 0.0
  %v2708 = vmax.f32 %v2684, 0.0
  %v2709 = vmax.f32 %v2686, 0.0
  %v2710 = vmax.f32 %v2689, 0.0
  %v2711 = vmax.f32 %v2691, 0.0
  %v2712 = vmax.f32 %v2694, 0.0
  %v2713 = vmax.f32 %v2696, 0.0
  %s2714 = scalar_lea.vmem %s3, 768
  %v2715 = vld [vmem:[%s2714] sm:$0xf]
  %v2716 = vld [vmem:[%s2714 + $0x4] sm:$0xf]
  %v2717 = vld [vmem:[%s2714 + $0x8] sm:$0xf]
  %v2718 = vld [vmem:[%s2714 + $0xc] sm:$0xf]
  %v2719 = vld [vmem:[%s2714 + $0x10] sm:$0xf]
  %v2720 = vld [vmem:[%s2714 + $0x14] sm:$0xf]
  %v2721 = vld [vmem:[%s2714 + $0x18] sm:$0xf]
  %v2722 = vld [vmem:[%s2714 + $0x1c] sm:$0xf]
  %v2723 = vld [vmem:[%s2714 + $0x20] sm:$0xf]
  %v2724 = vld [vmem:[%s2714 + $0x24] sm:$0xf]
  %v2725 = vld [vmem:[%s2714 + $0x28] sm:$0xf]
  %v2726 = vld [vmem:[%s2714 + $0x2c] sm:$0xf]
  %v2727 = vld [vmem:[%s2714 + $0x30] sm:$0xf]
  %v2728 = vld [vmem:[%s2714 + $0x34] sm:$0xf]
  %v2729 = vld [vmem:[%s2714 + $0x38] sm:$0xf]
  %v2730 = vld [vmem:[%s2714 + $0x3c] sm:$0xf]
  %v2731 = vpack.c.bf16 %v2699, %v2698
  %v2732 = vpack.c.bf16 %v2701, %v2700
  %v2733 = vpack.c.bf16 %v2703, %v2702
  %v2734 = vpack.c.bf16 %v2705, %v2704
  %v2735 = vpack.c.bf16 %v2707, %v2706
  %v2736 = vpack.c.bf16 %v2709, %v2708
  %v2737 = vpack.c.bf16 %v2711, %v2710
  %v2738 = vpack.c.bf16 %v2713, %v2712
  %v2755 = vunpack.c.l.b16 %v2715
  %v2756 = vunpack.c.l.b16 %v2716
  %v2757 = vunpack.c.l.b16 %v2717
  %v2758 = vunpack.c.l.b16 %v2718
  %v2759 = vunpack.c.l.b16 %v2719
  %v2760 = vunpack.c.l.b16 %v2720
  %v2761 = vunpack.c.l.b16 %v2721
  %v2762 = vunpack.c.l.b16 %v2722
  %v2763 = vunpack.c.l.b16 %v2723
  %v2764 = vunpack.c.l.b16 %v2724
  %v2765 = vunpack.c.l.b16 %v2725
  %v2766 = vunpack.c.l.b16 %v2726
  %v2767 = vunpack.c.l.b16 %v2727
  %v2768 = vunpack.c.l.b16 %v2728
  %v2769 = vunpack.c.l.b16 %v2729
  %v2770 = vunpack.c.l.b16 %v2730
  %v2771 = vpack.c.b16 %v2756, %v2755
  %v2772 = vpack.c.b16 %v2758, %v2757
  %v2773 = vpack.c.b16 %v2760, %v2759
  %v2774 = vpack.c.b16 %v2762, %v2761
  %v2775 = vpack.c.b16 %v2764, %v2763
  %v2776 = vpack.c.b16 %v2766, %v2765
  %v2777 = vpack.c.b16 %v2768, %v2767
  %v2778 = vpack.c.b16 %v2770, %v2769
  %2787 = vmatpush.bf16.msra.mxu0 %v2738
  %2788 = vmatpush.bf16.msra.mxu0 %v2737
  %2789 = vmatpush.bf16.msra.mxu0 %v2736
  %2790 = vmatpush.bf16.msra.mxu0 %v2735
  %2791 = vmatpush.bf16.msra.mxu0 %v2734
  %2792 = vmatpush.bf16.msra.mxu0 %v2733
  %2793 = vmatpush.bf16.msra.mxu0 %v2732
  %2794 = vmatpush.bf16.msra.mxu0 %v2731
  %2795 = vmatmul.bf16.gmra.mxu0 %v2771
  %v2796 = vpop.f32.mrf.mxu0
  %v2797 = vadd.f32 0.0, %v2796
  %v2798 = vpop.f32.mrf.mxu0
  %v2799 = vadd.f32 0.0, %v2798
  %2800 = vmatmul.bf16.gmra.mxu0 %v2772
  %v2801 = vpop.f32.mrf.mxu0
  %v2802 = vadd.f32 0.0, %v2801
  %v2803 = vpop.f32.mrf.mxu0
  %v2804 = vadd.f32 0.0, %v2803
  %2805 = vmatmul.bf16.gmra.mxu0 %v2773
  %v2806 = vpop.f32.mrf.mxu0
  %v2807 = vadd.f32 0.0, %v2806
  %v2808 = vpop.f32.mrf.mxu0
  %v2809 = vadd.f32 0.0, %v2808
  %2810 = vmatmul.bf16.gmra.mxu0 %v2774
  %v2811 = vpop.f32.mrf.mxu0
  %v2812 = vadd.f32 0.0, %v2811
  %v2813 = vpop.f32.mrf.mxu0
  %v2814 = vadd.f32 0.0, %v2813
  %2815 = vmatmul.bf16.gmra.mxu0 %v2775
  %v2816 = vpop.f32.mrf.mxu0
  %v2817 = vadd.f32 0.0, %v2816
  %v2818 = vpop.f32.mrf.mxu0
  %v2819 = vadd.f32 0.0, %v2818
  %2820 = vmatmul.bf16.gmra.mxu0 %v2776
  %v2821 = vpop.f32.mrf.mxu0
  %v2822 = vadd.f32 0.0, %v2821
  %v2823 = vpop.f32.mrf.mxu0
  %v2824 = vadd.f32 0.0, %v2823
  %2825 = vmatmul.bf16.gmra.mxu0 %v2777
  %v2826 = vpop.f32.mrf.mxu0
  %v2827 = vadd.f32 0.0, %v2826
  %v2828 = vpop.f32.mrf.mxu0
  %v2829 = vadd.f32 0.0, %v2828
  %2830 = vmatmul.bf16.gmra.mxu0 %v2778
  %v2831 = vpop.f32.mrf.mxu0
  %v2832 = vadd.f32 0.0, %v2831
  %v2833 = vpop.f32.mrf.mxu0
  %v2834 = vadd.f32 0.0, %v2833
  %2835 = vdwg.mxu0
  %v2836 = vadd.f32 %v2624, %v2797
  %v2837 = vadd.f32 %v2625, %v2799
  %v2838 = vadd.f32 %v2626, %v2802
  %v2839 = vadd.f32 %v2627, %v2804
  %v2840 = vadd.f32 %v2628, %v2807
  %v2841 = vadd.f32 %v2629, %v2809
  %v2842 = vadd.f32 %v2630, %v2812
  %v2843 = vadd.f32 %v2631, %v2814
  %v2844 = vadd.f32 %v2632, %v2817
  %v2845 = vadd.f32 %v2633, %v2819
  %v2846 = vadd.f32 %v2634, %v2822
  %v2847 = vadd.f32 %v2635, %v2824
  %v2848 = vadd.f32 %v2636, %v2827
  %v2849 = vadd.f32 %v2637, %v2829
  %v2850 = vadd.f32 %v2638, %v2832
  %v2851 = vadd.f32 %v2639, %v2834
  %s2852 = scalar_lea.vmem %s0, 104
  %v2853 = vld [vmem:[%s2852] sm:$0xf]
  %v2854 = vld [vmem:[%s2852 + $0x4] sm:$0xf]
  %v2857 = vunpack.c.l.b16 %v2853
  %v2858 = vunpack.c.l.b16 %v2854
  %v2859 = vpack.c.b16 %v2858, %v2857
  %2861 = vmatpush.bf16.msra.mxu0 0
  %2862 = vmatpush.bf16.msra.mxu0 0
  %2863 = vmatpush.bf16.msra.mxu0 0
  %2864 = vmatpush.bf16.msra.mxu0 0
  %2865 = vmatpush.bf16.msra.mxu0 0
  %2866 = vmatpush.bf16.msra.mxu0 0
  %2867 = vmatpush.bf16.msra.mxu0 0
  %2868 = vmatpush.bf16.msra.mxu0 %v2859
  %2869 = vmatmul.bf16.gmra.mxu0 %v115
  %v2870 = vpop.f32.mrf.mxu0
  %v2871 = vadd.f32 %v49, %v2870
  %v2872 = vpop.f32.mrf.mxu0
  %v2873 = vadd.f32 %v50, %v2872
  %2874 = vmatmul.bf16.gmra.mxu0 %v118
  %v2875 = vpop.f32.mrf.mxu0
  %v2876 = vadd.f32 %v51, %v2875
  %v2877 = vpop.f32.mrf.mxu0
  %v2878 = vadd.f32 %v52, %v2877
  %2879 = vmatmul.bf16.gmra.mxu0 %v121
  %v2880 = vpop.f32.mrf.mxu0
  %v2881 = vadd.f32 %v53, %v2880
  %v2882 = vpop.f32.mrf.mxu0
  %v2883 = vadd.f32 %v54, %v2882
  %2884 = vmatmul.bf16.gmra.mxu0 %v124
  %v2885 = vpop.f32.mrf.mxu0
  %v2886 = vadd.f32 %v55, %v2885
  %v2887 = vpop.f32.mrf.mxu0
  %v2888 = vadd.f32 %v56, %v2887
  %2889 = vmatmul.bf16.gmra.mxu0 %v127
  %v2890 = vpop.f32.mrf.mxu0
  %v2891 = vadd.f32 %v57, %v2890
  %v2892 = vpop.f32.mrf.mxu0
  %v2893 = vadd.f32 %v58, %v2892
  %2894 = vmatmul.bf16.gmra.mxu0 %v130
  %v2895 = vpop.f32.mrf.mxu0
  %v2896 = vadd.f32 %v59, %v2895
  %v2897 = vpop.f32.mrf.mxu0
  %v2898 = vadd.f32 %v60, %v2897
  %2899 = vmatmul.bf16.gmra.mxu0 %v133
  %v2900 = vpop.f32.mrf.mxu0
  %v2901 = vadd.f32 %v61, %v2900
  %v2902 = vpop.f32.mrf.mxu0
  %v2903 = vadd.f32 %v62, %v2902
  %2904 = vmatmul.bf16.gmra.mxu0 %v136
  %v2905 = vpop.f32.mrf.mxu0
  %v2906 = vadd.f32 %v63, %v2905
  %v2907 = vpop.f32.mrf.mxu0
  %v2908 = vadd.f32 %v64, %v2907
  %2909 = vdwg.mxu0
  %v2910 = vmax.f32 %v2871, 0.0
  %v2911 = vmax.f32 %v2873, 0.0
  %v2912 = vmax.f32 %v2876, 0.0
  %v2913 = vmax.f32 %v2878, 0.0
  %v2914 = vmax.f32 %v2881, 0.0
  %v2915 = vmax.f32 %v2883, 0.0
  %v2916 = vmax.f32 %v2886, 0.0
  %v2917 = vmax.f32 %v2888, 0.0
  %v2918 = vmax.f32 %v2891, 0.0
  %v2919 = vmax.f32 %v2893, 0.0
  %v2920 = vmax.f32 %v2896, 0.0
  %v2921 = vmax.f32 %v2898, 0.0
  %v2922 = vmax.f32 %v2901, 0.0
  %v2923 = vmax.f32 %v2903, 0.0
  %v2924 = vmax.f32 %v2906, 0.0
  %v2925 = vmax.f32 %v2908, 0.0
  %s2926 = scalar_lea.vmem %s3, 832
  %v2927 = vld [vmem:[%s2926] sm:$0xf]
  %v2928 = vld [vmem:[%s2926 + $0x4] sm:$0xf]
  %v2929 = vld [vmem:[%s2926 + $0x8] sm:$0xf]
  %v2930 = vld [vmem:[%s2926 + $0xc] sm:$0xf]
  %v2931 = vld [vmem:[%s2926 + $0x10] sm:$0xf]
  %v2932 = vld [vmem:[%s2926 + $0x14] sm:$0xf]
  %v2933 = vld [vmem:[%s2926 + $0x18] sm:$0xf]
  %v2934 = vld [vmem:[%s2926 + $0x1c] sm:$0xf]
  %v2935 = vld [vmem:[%s2926 + $0x20] sm:$0xf]
  %v2936 = vld [vmem:[%s2926 + $0x24] sm:$0xf]
  %v2937 = vld [vmem:[%s2926 + $0x28] sm:$0xf]
  %v2938 = vld [vmem:[%s2926 + $0x2c] sm:$0xf]
  %v2939 = vld [vmem:[%s2926 + $0x30] sm:$0xf]
  %v2940 = vld [vmem:[%s2926 + $0x34] sm:$0xf]
  %v2941 = vld [vmem:[%s2926 + $0x38] sm:$0xf]
  %v2942 = vld [vmem:[%s2926 + $0x3c] sm:$0xf]
  %v2943 = vpack.c.bf16 %v2911, %v2910
  %v2944 = vpack.c.bf16 %v2913, %v2912
  %v2945 = vpack.c.bf16 %v2915, %v2914
  %v2946 = vpack.c.bf16 %v2917, %v2916
  %v2947 = vpack.c.bf16 %v2919, %v2918
  %v2948 = vpack.c.bf16 %v2921, %v2920
  %v2949 = vpack.c.bf16 %v2923, %v2922
  %v2950 = vpack.c.bf16 %v2925, %v2924
  %v2967 = vunpack.c.l.b16 %v2927
  %v2968 = vunpack.c.l.b16 %v2928
  %v2969 = vunpack.c.l.b16 %v2929
  %v2970 = vunpack.c.l.b16 %v2930
  %v2971 = vunpack.c.l.b16 %v2931
  %v2972 = vunpack.c.l.b16 %v2932
  %v2973 = vunpack.c.l.b16 %v2933
  %v2974 = vunpack.c.l.b16 %v2934
  %v2975 = vunpack.c.l.b16 %v2935
  %v2976 = vunpack.c.l.b16 %v2936
  %v2977 = vunpack.c.l.b16 %v2937
  %v2978 = vunpack.c.l.b16 %v2938
  %v2979 = vunpack.c.l.b16 %v2939
  %v2980 = vunpack.c.l.b16 %v2940
  %v2981 = vunpack.c.l.b16 %v2941
  %v2982 = vunpack.c.l.b16 %v2942
  %v2983 = vpack.c.b16 %v2968, %v2967
  %v2984 = vpack.c.b16 %v2970, %v2969
  %v2985 = vpack.c.b16 %v2972, %v2971
  %v2986 = vpack.c.b16 %v2974, %v2973
  %v2987 = vpack.c.b16 %v2976, %v2975
  %v2988 = vpack.c.b16 %v2978, %v2977
  %v2989 = vpack.c.b16 %v2980, %v2979
  %v2990 = vpack.c.b16 %v2982, %v2981
  %2999 = vmatpush.bf16.msra.mxu0 %v2950
  %3000 = vmatpush.bf16.msra.mxu0 %v2949
  %3001 = vmatpush.bf16.msra.mxu0 %v2948
  %3002 = vmatpush.bf16.msra.mxu0 %v2947
  %3003 = vmatpush.bf16.msra.mxu0 %v2946
  %3004 = vmatpush.bf16.msra.mxu0 %v2945
  %3005 = vmatpush.bf16.msra.mxu0 %v2944
  %3006 = vmatpush.bf16.msra.mxu0 %v2943
  %3007 = vmatmul.bf16.gmra.mxu0 %v2983
  %v3008 = vpop.f32.mrf.mxu0
  %v3009 = vadd.f32 0.0, %v3008
  %v3010 = vpop.f32.mrf.mxu0
  %v3011 = vadd.f32 0.0, %v3010
  %3012 = vmatmul.bf16.gmra.mxu0 %v2984
  %v3013 = vpop.f32.mrf.mxu0
  %v3014 = vadd.f32 0.0, %v3013
  %v3015 = vpop.f32.mrf.mxu0
  %v3016 = vadd.f32 0.0, %v3015
  %3017 = vmatmul.bf16.gmra.mxu0 %v2985
  %v3018 = vpop.f32.mrf.mxu0
  %v3019 = vadd.f32 0.0, %v3018
  %v3020 = vpop.f32.mrf.mxu0
  %v3021 = vadd.f32 0.0, %v3020
  %3022 = vmatmul.bf16.gmra.mxu0 %v2986
  %v3023 = vpop.f32.mrf.mxu0
  %v3024 = vadd.f32 0.0, %v3023
  %v3025 = vpop.f32.mrf.mxu0
  %v3026 = vadd.f32 0.0, %v3025
  %3027 = vmatmul.bf16.gmra.mxu0 %v2987
  %v3028 = vpop.f32.mrf.mxu0
  %v3029 = vadd.f32 0.0, %v3028
  %v3030 = vpop.f32.mrf.mxu0
  %v3031 = vadd.f32 0.0, %v3030
  %3032 = vmatmul.bf16.gmra.mxu0 %v2988
  %v3033 = vpop.f32.mrf.mxu0
  %v3034 = vadd.f32 0.0, %v3033
  %v3035 = vpop.f32.mrf.mxu0
  %v3036 = vadd.f32 0.0, %v3035
  %3037 = vmatmul.bf16.gmra.mxu0 %v2989
  %v3038 = vpop.f32.mrf.mxu0
  %v3039 = vadd.f32 0.0, %v3038
  %v3040 = vpop.f32.mrf.mxu0
  %v3041 = vadd.f32 0.0, %v3040
  %3042 = vmatmul.bf16.gmra.mxu0 %v2990
  %v3043 = vpop.f32.mrf.mxu0
  %v3044 = vadd.f32 0.0, %v3043
  %v3045 = vpop.f32.mrf.mxu0
  %v3046 = vadd.f32 0.0, %v3045
  %3047 = vdwg.mxu0
  %v3048 = vadd.f32 %v2836, %v3009
  %v3049 = vadd.f32 %v2837, %v3011
  %v3050 = vadd.f32 %v2838, %v3014
  %v3051 = vadd.f32 %v2839, %v3016
  %v3052 = vadd.f32 %v2840, %v3019
  %v3053 = vadd.f32 %v2841, %v3021
  %v3054 = vadd.f32 %v2842, %v3024
  %v3055 = vadd.f32 %v2843, %v3026
  %v3056 = vadd.f32 %v2844, %v3029
  %v3057 = vadd.f32 %v2845, %v3031
  %v3058 = vadd.f32 %v2846, %v3034
  %v3059 = vadd.f32 %v2847, %v3036
  %v3060 = vadd.f32 %v2848, %v3039
  %v3061 = vadd.f32 %v2849, %v3041
  %v3062 = vadd.f32 %v2850, %v3044
  %v3063 = vadd.f32 %v2851, %v3046
  %s3064 = scalar_lea.vmem %s0, 112
  %v3065 = vld [vmem:[%s3064] sm:$0xf]
  %v3066 = vld [vmem:[%s3064 + $0x4] sm:$0xf]
  %v3069 = vunpack.c.l.b16 %v3065
  %v3070 = vunpack.c.l.b16 %v3066
  %v3071 = vpack.c.b16 %v3070, %v3069
  %3073 = vmatpush.bf16.msra.mxu0 0
  %3074 = vmatpush.bf16.msra.mxu0 0
  %3075 = vmatpush.bf16.msra.mxu0 0
  %3076 = vmatpush.bf16.msra.mxu0 0
  %3077 = vmatpush.bf16.msra.mxu0 0
  %3078 = vmatpush.bf16.msra.mxu0 0
  %3079 = vmatpush.bf16.msra.mxu0 0
  %3080 = vmatpush.bf16.msra.mxu0 %v3071
  %3081 = vmatmul.bf16.gmra.mxu0 %v115
  %v3082 = vpop.f32.mrf.mxu0
  %v3083 = vadd.f32 %v49, %v3082
  %v3084 = vpop.f32.mrf.mxu0
  %v3085 = vadd.f32 %v50, %v3084
  %3086 = vmatmul.bf16.gmra.mxu0 %v118
  %v3087 = vpop.f32.mrf.mxu0
  %v3088 = vadd.f32 %v51, %v3087
  %v3089 = vpop.f32.mrf.mxu0
  %v3090 = vadd.f32 %v52, %v3089
  %3091 = vmatmul.bf16.gmra.mxu0 %v121
  %v3092 = vpop.f32.mrf.mxu0
  %v3093 = vadd.f32 %v53, %v3092
  %v3094 = vpop.f32.mrf.mxu0
  %v3095 = vadd.f32 %v54, %v3094
  %3096 = vmatmul.bf16.gmra.mxu0 %v124
  %v3097 = vpop.f32.mrf.mxu0
  %v3098 = vadd.f32 %v55, %v3097
  %v3099 = vpop.f32.mrf.mxu0
  %v3100 = vadd.f32 %v56, %v3099
  %3101 = vmatmul.bf16.gmra.mxu0 %v127
  %v3102 = vpop.f32.mrf.mxu0
  %v3103 = vadd.f32 %v57, %v3102
  %v3104 = vpop.f32.mrf.mxu0
  %v3105 = vadd.f32 %v58, %v3104
  %3106 = vmatmul.bf16.gmra.mxu0 %v130
  %v3107 = vpop.f32.mrf.mxu0
  %v3108 = vadd.f32 %v59, %v3107
  %v3109 = vpop.f32.mrf.mxu0
  %v3110 = vadd.f32 %v60, %v3109
  %3111 = vmatmul.bf16.gmra.mxu0 %v133
  %v3112 = vpop.f32.mrf.mxu0
  %v3113 = vadd.f32 %v61, %v3112
  %v3114 = vpop.f32.mrf.mxu0
  %v3115 = vadd.f32 %v62, %v3114
  %3116 = vmatmul.bf16.gmra.mxu0 %v136
  %v3117 = vpop.f32.mrf.mxu0
  %v3118 = vadd.f32 %v63, %v3117
  %v3119 = vpop.f32.mrf.mxu0
  %v3120 = vadd.f32 %v64, %v3119
  %3121 = vdwg.mxu0
  %v3122 = vmax.f32 %v3083, 0.0
  %v3123 = vmax.f32 %v3085, 0.0
  %v3124 = vmax.f32 %v3088, 0.0
  %v3125 = vmax.f32 %v3090, 0.0
  %v3126 = vmax.f32 %v3093, 0.0
  %v3127 = vmax.f32 %v3095, 0.0
  %v3128 = vmax.f32 %v3098, 0.0
  %v3129 = vmax.f32 %v3100, 0.0
  %v3130 = vmax.f32 %v3103, 0.0
  %v3131 = vmax.f32 %v3105, 0.0
  %v3132 = vmax.f32 %v3108, 0.0
  %v3133 = vmax.f32 %v3110, 0.0
  %v3134 = vmax.f32 %v3113, 0.0
  %v3135 = vmax.f32 %v3115, 0.0
  %v3136 = vmax.f32 %v3118, 0.0
  %v3137 = vmax.f32 %v3120, 0.0
  %s3138 = scalar_lea.vmem %s3, 896
  %v3139 = vld [vmem:[%s3138] sm:$0xf]
  %v3140 = vld [vmem:[%s3138 + $0x4] sm:$0xf]
  %v3141 = vld [vmem:[%s3138 + $0x8] sm:$0xf]
  %v3142 = vld [vmem:[%s3138 + $0xc] sm:$0xf]
  %v3143 = vld [vmem:[%s3138 + $0x10] sm:$0xf]
  %v3144 = vld [vmem:[%s3138 + $0x14] sm:$0xf]
  %v3145 = vld [vmem:[%s3138 + $0x18] sm:$0xf]
  %v3146 = vld [vmem:[%s3138 + $0x1c] sm:$0xf]
  %v3147 = vld [vmem:[%s3138 + $0x20] sm:$0xf]
  %v3148 = vld [vmem:[%s3138 + $0x24] sm:$0xf]
  %v3149 = vld [vmem:[%s3138 + $0x28] sm:$0xf]
  %v3150 = vld [vmem:[%s3138 + $0x2c] sm:$0xf]
  %v3151 = vld [vmem:[%s3138 + $0x30] sm:$0xf]
  %v3152 = vld [vmem:[%s3138 + $0x34] sm:$0xf]
  %v3153 = vld [vmem:[%s3138 + $0x38] sm:$0xf]
  %v3154 = vld [vmem:[%s3138 + $0x3c] sm:$0xf]
  %v3155 = vpack.c.bf16 %v3123, %v3122
  %v3156 = vpack.c.bf16 %v3125, %v3124
  %v3157 = vpack.c.bf16 %v3127, %v3126
  %v3158 = vpack.c.bf16 %v3129, %v3128
  %v3159 = vpack.c.bf16 %v3131, %v3130
  %v3160 = vpack.c.bf16 %v3133, %v3132
  %v3161 = vpack.c.bf16 %v3135, %v3134
  %v3162 = vpack.c.bf16 %v3137, %v3136
  %v3179 = vunpack.c.l.b16 %v3139
  %v3180 = vunpack.c.l.b16 %v3140
  %v3181 = vunpack.c.l.b16 %v3141
  %v3182 = vunpack.c.l.b16 %v3142
  %v3183 = vunpack.c.l.b16 %v3143
  %v3184 = vunpack.c.l.b16 %v3144
  %v3185 = vunpack.c.l.b16 %v3145
  %v3186 = vunpack.c.l.b16 %v3146
  %v3187 = vunpack.c.l.b16 %v3147
  %v3188 = vunpack.c.l.b16 %v3148
  %v3189 = vunpack.c.l.b16 %v3149
  %v3190 = vunpack.c.l.b16 %v3150
  %v3191 = vunpack.c.l.b16 %v3151
  %v3192 = vunpack.c.l.b16 %v3152
  %v3193 = vunpack.c.l.b16 %v3153
  %v3194 = vunpack.c.l.b16 %v3154
  %v3195 = vpack.c.b16 %v3180, %v3179
  %v3196 = vpack.c.b16 %v3182, %v3181
  %v3197 = vpack.c.b16 %v3184, %v3183
  %v3198 = vpack.c.b16 %v3186, %v3185
  %v3199 = vpack.c.b16 %v3188, %v3187
  %v3200 = vpack.c.b16 %v3190, %v3189
  %v3201 = vpack.c.b16 %v3192, %v3191
  %v3202 = vpack.c.b16 %v3194, %v3193
  %3211 = vmatpush.bf16.msra.mxu0 %v3162
  %3212 = vmatpush.bf16.msra.mxu0 %v3161
  %3213 = vmatpush.bf16.msra.mxu0 %v3160
  %3214 = vmatpush.bf16.msra.mxu0 %v3159
  %3215 = vmatpush.bf16.msra.mxu0 %v3158
  %3216 = vmatpush.bf16.msra.mxu0 %v3157
  %3217 = vmatpush.bf16.msra.mxu0 %v3156
  %3218 = vmatpush.bf16.msra.mxu0 %v3155
  %3219 = vmatmul.bf16.gmra.mxu0 %v3195
  %v3220 = vpop.f32.mrf.mxu0
  %v3221 = vadd.f32 0.0, %v3220
  %v3222 = vpop.f32.mrf.mxu0
  %v3223 = vadd.f32 0.0, %v3222
  %3224 = vmatmul.bf16.gmra.mxu0 %v3196
  %v3225 = vpop.f32.mrf.mxu0
  %v3226 = vadd.f32 0.0, %v3225
  %v3227 = vpop.f32.mrf.mxu0
  %v3228 = vadd.f32 0.0, %v3227
  %3229 = vmatmul.bf16.gmra.mxu0 %v3197
  %v3230 = vpop.f32.mrf.mxu0
  %v3231 = vadd.f32 0.0, %v3230
  %v3232 = vpop.f32.mrf.mxu0
  %v3233 = vadd.f32 0.0, %v3232
  %3234 = vmatmul.bf16.gmra.mxu0 %v3198
  %v3235 = vpop.f32.mrf.mxu0
  %v3236 = vadd.f32 0.0, %v3235
  %v3237 = vpop.f32.mrf.mxu0
  %v3238 = vadd.f32 0.0, %v3237
  %3239 = vmatmul.bf16.gmra.mxu0 %v3199
  %v3240 = vpop.f32.mrf.mxu0
  %v3241 = vadd.f32 0.0, %v3240
  %v3242 = vpop.f32.mrf.mxu0
  %v3243 = vadd.f32 0.0, %v3242
  %3244 = vmatmul.bf16.gmra.mxu0 %v3200
  %v3245 = vpop.f32.mrf.mxu0
  %v3246 = vadd.f32 0.0, %v3245
  %v3247 = vpop.f32.mrf.mxu0
  %v3248 = vadd.f32 0.0, %v3247
  %3249 = vmatmul.bf16.gmra.mxu0 %v3201
  %v3250 = vpop.f32.mrf.mxu0
  %v3251 = vadd.f32 0.0, %v3250
  %v3252 = vpop.f32.mrf.mxu0
  %v3253 = vadd.f32 0.0, %v3252
  %3254 = vmatmul.bf16.gmra.mxu0 %v3202
  %v3255 = vpop.f32.mrf.mxu0
  %v3256 = vadd.f32 0.0, %v3255
  %v3257 = vpop.f32.mrf.mxu0
  %v3258 = vadd.f32 0.0, %v3257
  %3259 = vdwg.mxu0
  %v3260 = vadd.f32 %v3048, %v3221
  %v3261 = vadd.f32 %v3049, %v3223
  %v3262 = vadd.f32 %v3050, %v3226
  %v3263 = vadd.f32 %v3051, %v3228
  %v3264 = vadd.f32 %v3052, %v3231
  %v3265 = vadd.f32 %v3053, %v3233
  %v3266 = vadd.f32 %v3054, %v3236
  %v3267 = vadd.f32 %v3055, %v3238
  %v3268 = vadd.f32 %v3056, %v3241
  %v3269 = vadd.f32 %v3057, %v3243
  %v3270 = vadd.f32 %v3058, %v3246
  %v3271 = vadd.f32 %v3059, %v3248
  %v3272 = vadd.f32 %v3060, %v3251
  %v3273 = vadd.f32 %v3061, %v3253
  %v3274 = vadd.f32 %v3062, %v3256
  %v3275 = vadd.f32 %v3063, %v3258
  %s3276 = scalar_lea.vmem %s0, 120
  %v3277 = vld [vmem:[%s3276] sm:$0xf]
  %v3278 = vld [vmem:[%s3276 + $0x4] sm:$0xf]
  %v3281 = vunpack.c.l.b16 %v3277
  %v3282 = vunpack.c.l.b16 %v3278
  %v3283 = vpack.c.b16 %v3282, %v3281
  %3285 = vmatpush.bf16.msra.mxu0 0
  %3286 = vmatpush.bf16.msra.mxu0 0
  %3287 = vmatpush.bf16.msra.mxu0 0
  %3288 = vmatpush.bf16.msra.mxu0 0
  %3289 = vmatpush.bf16.msra.mxu0 0
  %3290 = vmatpush.bf16.msra.mxu0 0
  %3291 = vmatpush.bf16.msra.mxu0 0
  %3292 = vmatpush.bf16.msra.mxu0 %v3283
  %3293 = vmatmul.bf16.gmra.mxu0 %v115
  %v3294 = vpop.f32.mrf.mxu0
  %v3295 = vadd.f32 %v49, %v3294
  %v3296 = vpop.f32.mrf.mxu0
  %v3297 = vadd.f32 %v50, %v3296
  %3298 = vmatmul.bf16.gmra.mxu0 %v118
  %v3299 = vpop.f32.mrf.mxu0
  %v3300 = vadd.f32 %v51, %v3299
  %v3301 = vpop.f32.mrf.mxu0
  %v3302 = vadd.f32 %v52, %v3301
  %3303 = vmatmul.bf16.gmra.mxu0 %v121
  %v3304 = vpop.f32.mrf.mxu0
  %v3305 = vadd.f32 %v53, %v3304
  %v3306 = vpop.f32.mrf.mxu0
  %v3307 = vadd.f32 %v54, %v3306
  %3308 = vmatmul.bf16.gmra.mxu0 %v124
  %v3309 = vpop.f32.mrf.mxu0
  %v3310 = vadd.f32 %v55, %v3309
  %v3311 = vpop.f32.mrf.mxu0
  %v3312 = vadd.f32 %v56, %v3311
  %3313 = vmatmul.bf16.gmra.mxu0 %v127
  %v3314 = vpop.f32.mrf.mxu0
  %v3315 = vadd.f32 %v57, %v3314
  %v3316 = vpop.f32.mrf.mxu0
  %v3317 = vadd.f32 %v58, %v3316
  %3318 = vmatmul.bf16.gmra.mxu0 %v130
  %v3319 = vpop.f32.mrf.mxu0
  %v3320 = vadd.f32 %v59, %v3319
  %v3321 = vpop.f32.mrf.mxu0
  %v3322 = vadd.f32 %v60, %v3321
  %3323 = vmatmul.bf16.gmra.mxu0 %v133
  %v3324 = vpop.f32.mrf.mxu0
  %v3325 = vadd.f32 %v61, %v3324
  %v3326 = vpop.f32.mrf.mxu0
  %v3327 = vadd.f32 %v62, %v3326
  %3328 = vmatmul.bf16.gmra.mxu0 %v136
  %v3329 = vpop.f32.mrf.mxu0
  %v3330 = vadd.f32 %v63, %v3329
  %v3331 = vpop.f32.mrf.mxu0
  %v3332 = vadd.f32 %v64, %v3331
  %3333 = vdwg.mxu0
  %v3334 = vmax.f32 %v3295, 0.0
  %v3335 = vmax.f32 %v3297, 0.0
  %v3336 = vmax.f32 %v3300, 0.0
  %v3337 = vmax.f32 %v3302, 0.0
  %v3338 = vmax.f32 %v3305, 0.0
  %v3339 = vmax.f32 %v3307, 0.0
  %v3340 = vmax.f32 %v3310, 0.0
  %v3341 = vmax.f32 %v3312, 0.0
  %v3342 = vmax.f32 %v3315, 0.0
  %v3343 = vmax.f32 %v3317, 0.0
  %v3344 = vmax.f32 %v3320, 0.0
  %v3345 = vmax.f32 %v3322, 0.0
  %v3346 = vmax.f32 %v3325, 0.0
  %v3347 = vmax.f32 %v3327, 0.0
  %v3348 = vmax.f32 %v3330, 0.0
  %v3349 = vmax.f32 %v3332, 0.0
  %s3350 = scalar_lea.vmem %s3, 960
  %v3351 = vld [vmem:[%s3350] sm:$0xf]
  %v3352 = vld [vmem:[%s3350 + $0x4] sm:$0xf]
  %v3353 = vld [vmem:[%s3350 + $0x8] sm:$0xf]
  %v3354 = vld [vmem:[%s3350 + $0xc] sm:$0xf]
  %v3355 = vld [vmem:[%s3350 + $0x10] sm:$0xf]
  %v3356 = vld [vmem:[%s3350 + $0x14] sm:$0xf]
  %v3357 = vld [vmem:[%s3350 + $0x18] sm:$0xf]
  %v3358 = vld [vmem:[%s3350 + $0x1c] sm:$0xf]
  %v3359 = vld [vmem:[%s3350 + $0x20] sm:$0xf]
  %v3360 = vld [vmem:[%s3350 + $0x24] sm:$0xf]
  %v3361 = vld [vmem:[%s3350 + $0x28] sm:$0xf]
  %v3362 = vld [vmem:[%s3350 + $0x2c] sm:$0xf]
  %v3363 = vld [vmem:[%s3350 + $0x30] sm:$0xf]
  %v3364 = vld [vmem:[%s3350 + $0x34] sm:$0xf]
  %v3365 = vld [vmem:[%s3350 + $0x38] sm:$0xf]
  %v3366 = vld [vmem:[%s3350 + $0x3c] sm:$0xf]
  %v3367 = vpack.c.bf16 %v3335, %v3334
  %v3368 = vpack.c.bf16 %v3337, %v3336
  %v3369 = vpack.c.bf16 %v3339, %v3338
  %v3370 = vpack.c.bf16 %v3341, %v3340
  %v3371 = vpack.c.bf16 %v3343, %v3342
  %v3372 = vpack.c.bf16 %v3345, %v3344
  %v3373 = vpack.c.bf16 %v3347, %v3346
  %v3374 = vpack.c.bf16 %v3349, %v3348
  %v3391 = vunpack.c.l.b16 %v3351
  %v3392 = vunpack.c.l.b16 %v3352
  %v3393 = vunpack.c.l.b16 %v3353
  %v3394 = vunpack.c.l.b16 %v3354
  %v3395 = vunpack.c.l.b16 %v3355
  %v3396 = vunpack.c.l.b16 %v3356
  %v3397 = vunpack.c.l.b16 %v3357
  %v3398 = vunpack.c.l.b16 %v3358
  %v3399 = vunpack.c.l.b16 %v3359
  %v3400 = vunpack.c.l.b16 %v3360
  %v3401 = vunpack.c.l.b16 %v3361
  %v3402 = vunpack.c.l.b16 %v3362
  %v3403 = vunpack.c.l.b16 %v3363
  %v3404 = vunpack.c.l.b16 %v3364
  %v3405 = vunpack.c.l.b16 %v3365
  %v3406 = vunpack.c.l.b16 %v3366
  %v3407 = vpack.c.b16 %v3392, %v3391
  %v3408 = vpack.c.b16 %v3394, %v3393
  %v3409 = vpack.c.b16 %v3396, %v3395
  %v3410 = vpack.c.b16 %v3398, %v3397
  %v3411 = vpack.c.b16 %v3400, %v3399
  %v3412 = vpack.c.b16 %v3402, %v3401
  %v3413 = vpack.c.b16 %v3404, %v3403
  %v3414 = vpack.c.b16 %v3406, %v3405
  %3423 = vmatpush.bf16.msra.mxu0 %v3374
  %3424 = vmatpush.bf16.msra.mxu0 %v3373
  %3425 = vmatpush.bf16.msra.mxu0 %v3372
  %3426 = vmatpush.bf16.msra.mxu0 %v3371
  %3427 = vmatpush.bf16.msra.mxu0 %v3370
  %3428 = vmatpush.bf16.msra.mxu0 %v3369
  %3429 = vmatpush.bf16.msra.mxu0 %v3368
  %3430 = vmatpush.bf16.msra.mxu0 %v3367
  %3431 = vmatmul.bf16.gmra.mxu0 %v3407
  %v3432 = vpop.f32.mrf.mxu0
  %v3433 = vadd.f32 0.0, %v3432
  %v3434 = vpop.f32.mrf.mxu0
  %v3435 = vadd.f32 0.0, %v3434
  %3436 = vmatmul.bf16.gmra.mxu0 %v3408
  %v3437 = vpop.f32.mrf.mxu0
  %v3438 = vadd.f32 0.0, %v3437
  %v3439 = vpop.f32.mrf.mxu0
  %v3440 = vadd.f32 0.0, %v3439
  %3441 = vmatmul.bf16.gmra.mxu0 %v3409
  %v3442 = vpop.f32.mrf.mxu0
  %v3443 = vadd.f32 0.0, %v3442
  %v3444 = vpop.f32.mrf.mxu0
  %v3445 = vadd.f32 0.0, %v3444
  %3446 = vmatmul.bf16.gmra.mxu0 %v3410
  %v3447 = vpop.f32.mrf.mxu0
  %v3448 = vadd.f32 0.0, %v3447
  %v3449 = vpop.f32.mrf.mxu0
  %v3450 = vadd.f32 0.0, %v3449
  %3451 = vmatmul.bf16.gmra.mxu0 %v3411
  %v3452 = vpop.f32.mrf.mxu0
  %v3453 = vadd.f32 0.0, %v3452
  %v3454 = vpop.f32.mrf.mxu0
  %v3455 = vadd.f32 0.0, %v3454
  %3456 = vmatmul.bf16.gmra.mxu0 %v3412
  %v3457 = vpop.f32.mrf.mxu0
  %v3458 = vadd.f32 0.0, %v3457
  %v3459 = vpop.f32.mrf.mxu0
  %v3460 = vadd.f32 0.0, %v3459
  %3461 = vmatmul.bf16.gmra.mxu0 %v3413
  %v3462 = vpop.f32.mrf.mxu0
  %v3463 = vadd.f32 0.0, %v3462
  %v3464 = vpop.f32.mrf.mxu0
  %v3465 = vadd.f32 0.0, %v3464
  %3466 = vmatmul.bf16.gmra.mxu0 %v3414
  %v3467 = vpop.f32.mrf.mxu0
  %v3468 = vadd.f32 0.0, %v3467
  %v3469 = vpop.f32.mrf.mxu0
  %v3470 = vadd.f32 0.0, %v3469
  %3471 = vdwg.mxu0
  %v3472 = vadd.f32 %v3260, %v3433
  %v3473 = vadd.f32 %v3261, %v3435
  %v3474 = vadd.f32 %v3262, %v3438
  %v3475 = vadd.f32 %v3263, %v3440
  %v3476 = vadd.f32 %v3264, %v3443
  %v3477 = vadd.f32 %v3265, %v3445
  %v3478 = vadd.f32 %v3266, %v3448
  %v3479 = vadd.f32 %v3267, %v3450
  %v3480 = vadd.f32 %v3268, %v3453
  %v3481 = vadd.f32 %v3269, %v3455
  %v3482 = vadd.f32 %v3270, %v3458
  %v3483 = vadd.f32 %v3271, %v3460
  %v3484 = vadd.f32 %v3272, %v3463
  %v3485 = vadd.f32 %v3273, %v3465
  %v3486 = vadd.f32 %v3274, %v3468
  %v3487 = vadd.f32 %v3275, %v3470
  %s3488 = scalar_lea.vmem %s0, 128
  %v3489 = vld [vmem:[%s3488] sm:$0xf]
  %v3490 = vld [vmem:[%s3488 + $0x4] sm:$0xf]
  %v3493 = vunpack.c.l.b16 %v3489
  %v3494 = vunpack.c.l.b16 %v3490
  %v3495 = vpack.c.b16 %v3494, %v3493
  %3497 = vmatpush.bf16.msra.mxu0 0
  %3498 = vmatpush.bf16.msra.mxu0 0
  %3499 = vmatpush.bf16.msra.mxu0 0
  %3500 = vmatpush.bf16.msra.mxu0 0
  %3501 = vmatpush.bf16.msra.mxu0 0
  %3502 = vmatpush.bf16.msra.mxu0 0
  %3503 = vmatpush.bf16.msra.mxu0 0
  %3504 = vmatpush.bf16.msra.mxu0 %v3495
  %3505 = vmatmul.bf16.gmra.mxu0 %v115
  %v3506 = vpop.f32.mrf.mxu0
  %v3507 = vadd.f32 %v49, %v3506
  %v3508 = vpop.f32.mrf.mxu0
  %v3509 = vadd.f32 %v50, %v3508
  %3510 = vmatmul.bf16.gmra.mxu0 %v118
  %v3511 = vpop.f32.mrf.mxu0
  %v3512 = vadd.f32 %v51, %v3511
  %v3513 = vpop.f32.mrf.mxu0
  %v3514 = vadd.f32 %v52, %v3513
  %3515 = vmatmul.bf16.gmra.mxu0 %v121
  %v3516 = vpop.f32.mrf.mxu0
  %v3517 = vadd.f32 %v53, %v3516
  %v3518 = vpop.f32.mrf.mxu0
  %v3519 = vadd.f32 %v54, %v3518
  %3520 = vmatmul.bf16.gmra.mxu0 %v124
  %v3521 = vpop.f32.mrf.mxu0
  %v3522 = vadd.f32 %v55, %v3521
  %v3523 = vpop.f32.mrf.mxu0
  %v3524 = vadd.f32 %v56, %v3523
  %3525 = vmatmul.bf16.gmra.mxu0 %v127
  %v3526 = vpop.f32.mrf.mxu0
  %v3527 = vadd.f32 %v57, %v3526
  %v3528 = vpop.f32.mrf.mxu0
  %v3529 = vadd.f32 %v58, %v3528
  %3530 = vmatmul.bf16.gmra.mxu0 %v130
  %v3531 = vpop.f32.mrf.mxu0
  %v3532 = vadd.f32 %v59, %v3531
  %v3533 = vpop.f32.mrf.mxu0
  %v3534 = vadd.f32 %v60, %v3533
  %3535 = vmatmul.bf16.gmra.mxu0 %v133
  %v3536 = vpop.f32.mrf.mxu0
  %v3537 = vadd.f32 %v61, %v3536
  %v3538 = vpop.f32.mrf.mxu0
  %v3539 = vadd.f32 %v62, %v3538
  %3540 = vmatmul.bf16.gmra.mxu0 %v136
  %v3541 = vpop.f32.mrf.mxu0
  %v3542 = vadd.f32 %v63, %v3541
  %v3543 = vpop.f32.mrf.mxu0
  %v3544 = vadd.f32 %v64, %v3543
  %3545 = vdwg.mxu0
  %v3546 = vmax.f32 %v3507, 0.0
  %v3547 = vmax.f32 %v3509, 0.0
  %v3548 = vmax.f32 %v3512, 0.0
  %v3549 = vmax.f32 %v3514, 0.0
  %v3550 = vmax.f32 %v3517, 0.0
  %v3551 = vmax.f32 %v3519, 0.0
  %v3552 = vmax.f32 %v3522, 0.0
  %v3553 = vmax.f32 %v3524, 0.0
  %v3554 = vmax.f32 %v3527, 0.0
  %v3555 = vmax.f32 %v3529, 0.0
  %v3556 = vmax.f32 %v3532, 0.0
  %v3557 = vmax.f32 %v3534, 0.0
  %v3558 = vmax.f32 %v3537, 0.0
  %v3559 = vmax.f32 %v3539, 0.0
  %v3560 = vmax.f32 %v3542, 0.0
  %v3561 = vmax.f32 %v3544, 0.0
  %s3562 = scalar_lea.vmem %s3, 1024
  %v3563 = vld [vmem:[%s3562] sm:$0xf]
  %v3564 = vld [vmem:[%s3562 + $0x4] sm:$0xf]
  %v3565 = vld [vmem:[%s3562 + $0x8] sm:$0xf]
  %v3566 = vld [vmem:[%s3562 + $0xc] sm:$0xf]
  %v3567 = vld [vmem:[%s3562 + $0x10] sm:$0xf]
  %v3568 = vld [vmem:[%s3562 + $0x14] sm:$0xf]
  %v3569 = vld [vmem:[%s3562 + $0x18] sm:$0xf]
  %v3570 = vld [vmem:[%s3562 + $0x1c] sm:$0xf]
  %v3571 = vld [vmem:[%s3562 + $0x20] sm:$0xf]
  %v3572 = vld [vmem:[%s3562 + $0x24] sm:$0xf]
  %v3573 = vld [vmem:[%s3562 + $0x28] sm:$0xf]
  %v3574 = vld [vmem:[%s3562 + $0x2c] sm:$0xf]
  %v3575 = vld [vmem:[%s3562 + $0x30] sm:$0xf]
  %v3576 = vld [vmem:[%s3562 + $0x34] sm:$0xf]
  %v3577 = vld [vmem:[%s3562 + $0x38] sm:$0xf]
  %v3578 = vld [vmem:[%s3562 + $0x3c] sm:$0xf]
  %v3579 = vpack.c.bf16 %v3547, %v3546
  %v3580 = vpack.c.bf16 %v3549, %v3548
  %v3581 = vpack.c.bf16 %v3551, %v3550
  %v3582 = vpack.c.bf16 %v3553, %v3552
  %v3583 = vpack.c.bf16 %v3555, %v3554
  %v3584 = vpack.c.bf16 %v3557, %v3556
  %v3585 = vpack.c.bf16 %v3559, %v3558
  %v3586 = vpack.c.bf16 %v3561, %v3560
  %v3603 = vunpack.c.l.b16 %v3563
  %v3604 = vunpack.c.l.b16 %v3564
  %v3605 = vunpack.c.l.b16 %v3565
  %v3606 = vunpack.c.l.b16 %v3566
  %v3607 = vunpack.c.l.b16 %v3567
  %v3608 = vunpack.c.l.b16 %v3568
  %v3609 = vunpack.c.l.b16 %v3569
  %v3610 = vunpack.c.l.b16 %v3570
  %v3611 = vunpack.c.l.b16 %v3571
  %v3612 = vunpack.c.l.b16 %v3572
  %v3613 = vunpack.c.l.b16 %v3573
  %v3614 = vunpack.c.l.b16 %v3574
  %v3615 = vunpack.c.l.b16 %v3575
  %v3616 = vunpack.c.l.b16 %v3576
  %v3617 = vunpack.c.l.b16 %v3577
  %v3618 = vunpack.c.l.b16 %v3578
  %v3619 = vpack.c.b16 %v3604, %v3603
  %v3620 = vpack.c.b16 %v3606, %v3605
  %v3621 = vpack.c.b16 %v3608, %v3607
  %v3622 = vpack.c.b16 %v3610, %v3609
  %v3623 = vpack.c.b16 %v3612, %v3611
  %v3624 = vpack.c.b16 %v3614, %v3613
  %v3625 = vpack.c.b16 %v3616, %v3615
  %v3626 = vpack.c.b16 %v3618, %v3617
  %3635 = vmatpush.bf16.msra.mxu0 %v3586
  %3636 = vmatpush.bf16.msra.mxu0 %v3585
  %3637 = vmatpush.bf16.msra.mxu0 %v3584
  %3638 = vmatpush.bf16.msra.mxu0 %v3583
  %3639 = vmatpush.bf16.msra.mxu0 %v3582
  %3640 = vmatpush.bf16.msra.mxu0 %v3581
  %3641 = vmatpush.bf16.msra.mxu0 %v3580
  %3642 = vmatpush.bf16.msra.mxu0 %v3579
  %3643 = vmatmul.bf16.gmra.mxu0 %v3619
  %v3644 = vpop.f32.mrf.mxu0
  %v3645 = vadd.f32 0.0, %v3644
  %v3646 = vpop.f32.mrf.mxu0
  %v3647 = vadd.f32 0.0, %v3646
  %3648 = vmatmul.bf16.gmra.mxu0 %v3620
  %v3649 = vpop.f32.mrf.mxu0
  %v3650 = vadd.f32 0.0, %v3649
  %v3651 = vpop.f32.mrf.mxu0
  %v3652 = vadd.f32 0.0, %v3651
  %3653 = vmatmul.bf16.gmra.mxu0 %v3621
  %v3654 = vpop.f32.mrf.mxu0
  %v3655 = vadd.f32 0.0, %v3654
  %v3656 = vpop.f32.mrf.mxu0
  %v3657 = vadd.f32 0.0, %v3656
  %3658 = vmatmul.bf16.gmra.mxu0 %v3622
  %v3659 = vpop.f32.mrf.mxu0
  %v3660 = vadd.f32 0.0, %v3659
  %v3661 = vpop.f32.mrf.mxu0
  %v3662 = vadd.f32 0.0, %v3661
  %3663 = vmatmul.bf16.gmra.mxu0 %v3623
  %v3664 = vpop.f32.mrf.mxu0
  %v3665 = vadd.f32 0.0, %v3664
  %v3666 = vpop.f32.mrf.mxu0
  %v3667 = vadd.f32 0.0, %v3666
  %3668 = vmatmul.bf16.gmra.mxu0 %v3624
  %v3669 = vpop.f32.mrf.mxu0
  %v3670 = vadd.f32 0.0, %v3669
  %v3671 = vpop.f32.mrf.mxu0
  %v3672 = vadd.f32 0.0, %v3671
  %3673 = vmatmul.bf16.gmra.mxu0 %v3625
  %v3674 = vpop.f32.mrf.mxu0
  %v3675 = vadd.f32 0.0, %v3674
  %v3676 = vpop.f32.mrf.mxu0
  %v3677 = vadd.f32 0.0, %v3676
  %3678 = vmatmul.bf16.gmra.mxu0 %v3626
  %v3679 = vpop.f32.mrf.mxu0
  %v3680 = vadd.f32 0.0, %v3679
  %v3681 = vpop.f32.mrf.mxu0
  %v3682 = vadd.f32 0.0, %v3681
  %3683 = vdwg.mxu0
  %v3684 = vadd.f32 %v3472, %v3645
  %v3685 = vadd.f32 %v3473, %v3647
  %v3686 = vadd.f32 %v3474, %v3650
  %v3687 = vadd.f32 %v3475, %v3652
  %v3688 = vadd.f32 %v3476, %v3655
  %v3689 = vadd.f32 %v3477, %v3657
  %v3690 = vadd.f32 %v3478, %v3660
  %v3691 = vadd.f32 %v3479, %v3662
  %v3692 = vadd.f32 %v3480, %v3665
  %v3693 = vadd.f32 %v3481, %v3667
  %v3694 = vadd.f32 %v3482, %v3670
  %v3695 = vadd.f32 %v3483, %v3672
  %v3696 = vadd.f32 %v3484, %v3675
  %v3697 = vadd.f32 %v3485, %v3677
  %v3698 = vadd.f32 %v3486, %v3680
  %v3699 = vadd.f32 %v3487, %v3682
  %s3700 = scalar_lea.vmem %s0, 136
  %v3701 = vld [vmem:[%s3700] sm:$0xf]
  %v3702 = vld [vmem:[%s3700 + $0x4] sm:$0xf]
  %v3705 = vunpack.c.l.b16 %v3701
  %v3706 = vunpack.c.l.b16 %v3702
  %v3707 = vpack.c.b16 %v3706, %v3705
  %3709 = vmatpush.bf16.msra.mxu0 0
  %3710 = vmatpush.bf16.msra.mxu0 0
  %3711 = vmatpush.bf16.msra.mxu0 0
  %3712 = vmatpush.bf16.msra.mxu0 0
  %3713 = vmatpush.bf16.msra.mxu0 0
  %3714 = vmatpush.bf16.msra.mxu0 0
  %3715 = vmatpush.bf16.msra.mxu0 0
  %3716 = vmatpush.bf16.msra.mxu0 %v3707
  %3717 = vmatmul.bf16.gmra.mxu0 %v115
  %v3718 = vpop.f32.mrf.mxu0
  %v3719 = vadd.f32 %v49, %v3718
  %v3720 = vpop.f32.mrf.mxu0
  %v3721 = vadd.f32 %v50, %v3720
  %3722 = vmatmul.bf16.gmra.mxu0 %v118
  %v3723 = vpop.f32.mrf.mxu0
  %v3724 = vadd.f32 %v51, %v3723
  %v3725 = vpop.f32.mrf.mxu0
  %v3726 = vadd.f32 %v52, %v3725
  %3727 = vmatmul.bf16.gmra.mxu0 %v121
  %v3728 = vpop.f32.mrf.mxu0
  %v3729 = vadd.f32 %v53, %v3728
  %v3730 = vpop.f32.mrf.mxu0
  %v3731 = vadd.f32 %v54, %v3730
  %3732 = vmatmul.bf16.gmra.mxu0 %v124
  %v3733 = vpop.f32.mrf.mxu0
  %v3734 = vadd.f32 %v55, %v3733
  %v3735 = vpop.f32.mrf.mxu0
  %v3736 = vadd.f32 %v56, %v3735
  %3737 = vmatmul.bf16.gmra.mxu0 %v127
  %v3738 = vpop.f32.mrf.mxu0
  %v3739 = vadd.f32 %v57, %v3738
  %v3740 = vpop.f32.mrf.mxu0
  %v3741 = vadd.f32 %v58, %v3740
  %3742 = vmatmul.bf16.gmra.mxu0 %v130
  %v3743 = vpop.f32.mrf.mxu0
  %v3744 = vadd.f32 %v59, %v3743
  %v3745 = vpop.f32.mrf.mxu0
  %v3746 = vadd.f32 %v60, %v3745
  %3747 = vmatmul.bf16.gmra.mxu0 %v133
  %v3748 = vpop.f32.mrf.mxu0
  %v3749 = vadd.f32 %v61, %v3748
  %v3750 = vpop.f32.mrf.mxu0
  %v3751 = vadd.f32 %v62, %v3750
  %3752 = vmatmul.bf16.gmra.mxu0 %v136
  %v3753 = vpop.f32.mrf.mxu0
  %v3754 = vadd.f32 %v63, %v3753
  %v3755 = vpop.f32.mrf.mxu0
  %v3756 = vadd.f32 %v64, %v3755
  %3757 = vdwg.mxu0
  %v3758 = vmax.f32 %v3719, 0.0
  %v3759 = vmax.f32 %v3721, 0.0
  %v3760 = vmax.f32 %v3724, 0.0
  %v3761 = vmax.f32 %v3726, 0.0
  %v3762 = vmax.f32 %v3729, 0.0
  %v3763 = vmax.f32 %v3731, 0.0
  %v3764 = vmax.f32 %v3734, 0.0
  %v3765 = vmax.f32 %v3736, 0.0
  %v3766 = vmax.f32 %v3739, 0.0
  %v3767 = vmax.f32 %v3741, 0.0
  %v3768 = vmax.f32 %v3744, 0.0
  %v3769 = vmax.f32 %v3746, 0.0
  %v3770 = vmax.f32 %v3749, 0.0
  %v3771 = vmax.f32 %v3751, 0.0
  %v3772 = vmax.f32 %v3754, 0.0
  %v3773 = vmax.f32 %v3756, 0.0
  %s3774 = scalar_lea.vmem %s3, 1088
  %v3775 = vld [vmem:[%s3774] sm:$0xf]
  %v3776 = vld [vmem:[%s3774 + $0x4] sm:$0xf]
  %v3777 = vld [vmem:[%s3774 + $0x8] sm:$0xf]
  %v3778 = vld [vmem:[%s3774 + $0xc] sm:$0xf]
  %v3779 = vld [vmem:[%s3774 + $0x10] sm:$0xf]
  %v3780 = vld [vmem:[%s3774 + $0x14] sm:$0xf]
  %v3781 = vld [vmem:[%s3774 + $0x18] sm:$0xf]
  %v3782 = vld [vmem:[%s3774 + $0x1c] sm:$0xf]
  %v3783 = vld [vmem:[%s3774 + $0x20] sm:$0xf]
  %v3784 = vld [vmem:[%s3774 + $0x24] sm:$0xf]
  %v3785 = vld [vmem:[%s3774 + $0x28] sm:$0xf]
  %v3786 = vld [vmem:[%s3774 + $0x2c] sm:$0xf]
  %v3787 = vld [vmem:[%s3774 + $0x30] sm:$0xf]
  %v3788 = vld [vmem:[%s3774 + $0x34] sm:$0xf]
  %v3789 = vld [vmem:[%s3774 + $0x38] sm:$0xf]
  %v3790 = vld [vmem:[%s3774 + $0x3c] sm:$0xf]
  %v3791 = vpack.c.bf16 %v3759, %v3758
  %v3792 = vpack.c.bf16 %v3761, %v3760
  %v3793 = vpack.c.bf16 %v3763, %v3762
  %v3794 = vpack.c.bf16 %v3765, %v3764
  %v3795 = vpack.c.bf16 %v3767, %v3766
  %v3796 = vpack.c.bf16 %v3769, %v3768
  %v3797 = vpack.c.bf16 %v3771, %v3770
  %v3798 = vpack.c.bf16 %v3773, %v3772
  %v3815 = vunpack.c.l.b16 %v3775
  %v3816 = vunpack.c.l.b16 %v3776
  %v3817 = vunpack.c.l.b16 %v3777
  %v3818 = vunpack.c.l.b16 %v3778
  %v3819 = vunpack.c.l.b16 %v3779
  %v3820 = vunpack.c.l.b16 %v3780
  %v3821 = vunpack.c.l.b16 %v3781
  %v3822 = vunpack.c.l.b16 %v3782
  %v3823 = vunpack.c.l.b16 %v3783
  %v3824 = vunpack.c.l.b16 %v3784
  %v3825 = vunpack.c.l.b16 %v3785
  %v3826 = vunpack.c.l.b16 %v3786
  %v3827 = vunpack.c.l.b16 %v3787
  %v3828 = vunpack.c.l.b16 %v3788
  %v3829 = vunpack.c.l.b16 %v3789
  %v3830 = vunpack.c.l.b16 %v3790
  %v3831 = vpack.c.b16 %v3816, %v3815
  %v3832 = vpack.c.b16 %v3818, %v3817
  %v3833 = vpack.c.b16 %v3820, %v3819
  %v3834 = vpack.c.b16 %v3822, %v3821
  %v3835 = vpack.c.b16 %v3824, %v3823
  %v3836 = vpack.c.b16 %v3826, %v3825
  %v3837 = vpack.c.b16 %v3828, %v3827
  %v3838 = vpack.c.b16 %v3830, %v3829
  %3847 = vmatpush.bf16.msra.mxu0 %v3798
  %3848 = vmatpush.bf16.msra.mxu0 %v3797
  %3849 = vmatpush.bf16.msra.mxu0 %v3796
  %3850 = vmatpush.bf16.msra.mxu0 %v3795
  %3851 = vmatpush.bf16.msra.mxu0 %v3794
  %3852 = vmatpush.bf16.msra.mxu0 %v3793
  %3853 = vmatpush.bf16.msra.mxu0 %v3792
  %3854 = vmatpush.bf16.msra.mxu0 %v3791
  %3855 = vmatmul.bf16.gmra.mxu0 %v3831
  %v3856 = vpop.f32.mrf.mxu0
  %v3857 = vadd.f32 0.0, %v3856
  %v3858 = vpop.f32.mrf.mxu0
  %v3859 = vadd.f32 0.0, %v3858
  %3860 = vmatmul.bf16.gmra.mxu0 %v3832
  %v3861 = vpop.f32.mrf.mxu0
  %v3862 = vadd.f32 0.0, %v3861
  %v3863 = vpop.f32.mrf.mxu0
  %v3864 = vadd.f32 0.0, %v3863
  %3865 = vmatmul.bf16.gmra.mxu0 %v3833
  %v3866 = vpop.f32.mrf.mxu0
  %v3867 = vadd.f32 0.0, %v3866
  %v3868 = vpop.f32.mrf.mxu0
  %v3869 = vadd.f32 0.0, %v3868
  %3870 = vmatmul.bf16.gmra.mxu0 %v3834
  %v3871 = vpop.f32.mrf.mxu0
  %v3872 = vadd.f32 0.0, %v3871
  %v3873 = vpop.f32.mrf.mxu0
  %v3874 = vadd.f32 0.0, %v3873
  %3875 = vmatmul.bf16.gmra.mxu0 %v3835
  %v3876 = vpop.f32.mrf.mxu0
  %v3877 = vadd.f32 0.0, %v3876
  %v3878 = vpop.f32.mrf.mxu0
  %v3879 = vadd.f32 0.0, %v3878
  %3880 = vmatmul.bf16.gmra.mxu0 %v3836
  %v3881 = vpop.f32.mrf.mxu0
  %v3882 = vadd.f32 0.0, %v3881
  %v3883 = vpop.f32.mrf.mxu0
  %v3884 = vadd.f32 0.0, %v3883
  %3885 = vmatmul.bf16.gmra.mxu0 %v3837
  %v3886 = vpop.f32.mrf.mxu0
  %v3887 = vadd.f32 0.0, %v3886
  %v3888 = vpop.f32.mrf.mxu0
  %v3889 = vadd.f32 0.0, %v3888
  %3890 = vmatmul.bf16.gmra.mxu0 %v3838
  %v3891 = vpop.f32.mrf.mxu0
  %v3892 = vadd.f32 0.0, %v3891
  %v3893 = vpop.f32.mrf.mxu0
  %v3894 = vadd.f32 0.0, %v3893
  %3895 = vdwg.mxu0
  %v3896 = vadd.f32 %v3684, %v3857
  %v3897 = vadd.f32 %v3685, %v3859
  %v3898 = vadd.f32 %v3686, %v3862
  %v3899 = vadd.f32 %v3687, %v3864
  %v3900 = vadd.f32 %v3688, %v3867
  %v3901 = vadd.f32 %v3689, %v3869
  %v3902 = vadd.f32 %v3690, %v3872
  %v3903 = vadd.f32 %v3691, %v3874
  %v3904 = vadd.f32 %v3692, %v3877
  %v3905 = vadd.f32 %v3693, %v3879
  %v3906 = vadd.f32 %v3694, %v3882
  %v3907 = vadd.f32 %v3695, %v3884
  %v3908 = vadd.f32 %v3696, %v3887
  %v3909 = vadd.f32 %v3697, %v3889
  %v3910 = vadd.f32 %v3698, %v3892
  %v3911 = vadd.f32 %v3699, %v3894
  %s3912 = scalar_lea.vmem %s0, 144
  %v3913 = vld [vmem:[%s3912] sm:$0xf]
  %v3914 = vld [vmem:[%s3912 + $0x4] sm:$0xf]
  %v3917 = vunpack.c.l.b16 %v3913
  %v3918 = vunpack.c.l.b16 %v3914
  %v3919 = vpack.c.b16 %v3918, %v3917
  %3921 = vmatpush.bf16.msra.mxu0 0
  %3922 = vmatpush.bf16.msra.mxu0 0
  %3923 = vmatpush.bf16.msra.mxu0 0
  %3924 = vmatpush.bf16.msra.mxu0 0
  %3925 = vmatpush.bf16.msra.mxu0 0
  %3926 = vmatpush.bf16.msra.mxu0 0
  %3927 = vmatpush.bf16.msra.mxu0 0
  %3928 = vmatpush.bf16.msra.mxu0 %v3919
  %3929 = vmatmul.bf16.gmra.mxu0 %v115
  %v3930 = vpop.f32.mrf.mxu0
  %v3931 = vadd.f32 %v49, %v3930
  %v3932 = vpop.f32.mrf.mxu0
  %v3933 = vadd.f32 %v50, %v3932
  %3934 = vmatmul.bf16.gmra.mxu0 %v118
  %v3935 = vpop.f32.mrf.mxu0
  %v3936 = vadd.f32 %v51, %v3935
  %v3937 = vpop.f32.mrf.mxu0
  %v3938 = vadd.f32 %v52, %v3937
  %3939 = vmatmul.bf16.gmra.mxu0 %v121
  %v3940 = vpop.f32.mrf.mxu0
  %v3941 = vadd.f32 %v53, %v3940
  %v3942 = vpop.f32.mrf.mxu0
  %v3943 = vadd.f32 %v54, %v3942
  %3944 = vmatmul.bf16.gmra.mxu0 %v124
  %v3945 = vpop.f32.mrf.mxu0
  %v3946 = vadd.f32 %v55, %v3945
  %v3947 = vpop.f32.mrf.mxu0
  %v3948 = vadd.f32 %v56, %v3947
  %3949 = vmatmul.bf16.gmra.mxu0 %v127
  %v3950 = vpop.f32.mrf.mxu0
  %v3951 = vadd.f32 %v57, %v3950
  %v3952 = vpop.f32.mrf.mxu0
  %v3953 = vadd.f32 %v58, %v3952
  %3954 = vmatmul.bf16.gmra.mxu0 %v130
  %v3955 = vpop.f32.mrf.mxu0
  %v3956 = vadd.f32 %v59, %v3955
  %v3957 = vpop.f32.mrf.mxu0
  %v3958 = vadd.f32 %v60, %v3957
  %3959 = vmatmul.bf16.gmra.mxu0 %v133
  %v3960 = vpop.f32.mrf.mxu0
  %v3961 = vadd.f32 %v61, %v3960
  %v3962 = vpop.f32.mrf.mxu0
  %v3963 = vadd.f32 %v62, %v3962
  %3964 = vmatmul.bf16.gmra.mxu0 %v136
  %v3965 = vpop.f32.mrf.mxu0
  %v3966 = vadd.f32 %v63, %v3965
  %v3967 = vpop.f32.mrf.mxu0
  %v3968 = vadd.f32 %v64, %v3967
  %3969 = vdwg.mxu0
  %v3970 = vmax.f32 %v3931, 0.0
  %v3971 = vmax.f32 %v3933, 0.0
  %v3972 = vmax.f32 %v3936, 0.0
  %v3973 = vmax.f32 %v3938, 0.0
  %v3974 = vmax.f32 %v3941, 0.0
  %v3975 = vmax.f32 %v3943, 0.0
  %v3976 = vmax.f32 %v3946, 0.0
  %v3977 = vmax.f32 %v3948, 0.0
  %v3978 = vmax.f32 %v3951, 0.0
  %v3979 = vmax.f32 %v3953, 0.0
  %v3980 = vmax.f32 %v3956, 0.0
  %v3981 = vmax.f32 %v3958, 0.0
  %v3982 = vmax.f32 %v3961, 0.0
  %v3983 = vmax.f32 %v3963, 0.0
  %v3984 = vmax.f32 %v3966, 0.0
  %v3985 = vmax.f32 %v3968, 0.0
  %s3986 = scalar_lea.vmem %s3, 1152
  %v3987 = vld [vmem:[%s3986] sm:$0xf]
  %v3988 = vld [vmem:[%s3986 + $0x4] sm:$0xf]
  %v3989 = vld [vmem:[%s3986 + $0x8] sm:$0xf]
  %v3990 = vld [vmem:[%s3986 + $0xc] sm:$0xf]
  %v3991 = vld [vmem:[%s3986 + $0x10] sm:$0xf]
  %v3992 = vld [vmem:[%s3986 + $0x14] sm:$0xf]
  %v3993 = vld [vmem:[%s3986 + $0x18] sm:$0xf]
  %v3994 = vld [vmem:[%s3986 + $0x1c] sm:$0xf]
  %v3995 = vld [vmem:[%s3986 + $0x20] sm:$0xf]
  %v3996 = vld [vmem:[%s3986 + $0x24] sm:$0xf]
  %v3997 = vld [vmem:[%s3986 + $0x28] sm:$0xf]
  %v3998 = vld [vmem:[%s3986 + $0x2c] sm:$0xf]
  %v3999 = vld [vmem:[%s3986 + $0x30] sm:$0xf]
  %v4000 = vld [vmem:[%s3986 + $0x34] sm:$0xf]
  %v4001 = vld [vmem:[%s3986 + $0x38] sm:$0xf]
  %v4002 = vld [vmem:[%s3986 + $0x3c] sm:$0xf]
  %v4003 = vpack.c.bf16 %v3971, %v3970
  %v4004 = vpack.c.bf16 %v3973, %v3972
  %v4005 = vpack.c.bf16 %v3975, %v3974
  %v4006 = vpack.c.bf16 %v3977, %v3976
  %v4007 = vpack.c.bf16 %v3979, %v3978
  %v4008 = vpack.c.bf16 %v3981, %v3980
  %v4009 = vpack.c.bf16 %v3983, %v3982
  %v4010 = vpack.c.bf16 %v3985, %v3984
  %v4027 = vunpack.c.l.b16 %v3987
  %v4028 = vunpack.c.l.b16 %v3988
  %v4029 = vunpack.c.l.b16 %v3989
  %v4030 = vunpack.c.l.b16 %v3990
  %v4031 = vunpack.c.l.b16 %v3991
  %v4032 = vunpack.c.l.b16 %v3992
  %v4033 = vunpack.c.l.b16 %v3993
  %v4034 = vunpack.c.l.b16 %v3994
  %v4035 = vunpack.c.l.b16 %v3995
  %v4036 = vunpack.c.l.b16 %v3996
  %v4037 = vunpack.c.l.b16 %v3997
  %v4038 = vunpack.c.l.b16 %v3998
  %v4039 = vunpack.c.l.b16 %v3999
  %v4040 = vunpack.c.l.b16 %v4000
  %v4041 = vunpack.c.l.b16 %v4001
  %v4042 = vunpack.c.l.b16 %v4002
  %v4043 = vpack.c.b16 %v4028, %v4027
  %v4044 = vpack.c.b16 %v4030, %v4029
  %v4045 = vpack.c.b16 %v4032, %v4031
  %v4046 = vpack.c.b16 %v4034, %v4033
  %v4047 = vpack.c.b16 %v4036, %v4035
  %v4048 = vpack.c.b16 %v4038, %v4037
  %v4049 = vpack.c.b16 %v4040, %v4039
  %v4050 = vpack.c.b16 %v4042, %v4041
  %4059 = vmatpush.bf16.msra.mxu0 %v4010
  %4060 = vmatpush.bf16.msra.mxu0 %v4009
  %4061 = vmatpush.bf16.msra.mxu0 %v4008
  %4062 = vmatpush.bf16.msra.mxu0 %v4007
  %4063 = vmatpush.bf16.msra.mxu0 %v4006
  %4064 = vmatpush.bf16.msra.mxu0 %v4005
  %4065 = vmatpush.bf16.msra.mxu0 %v4004
  %4066 = vmatpush.bf16.msra.mxu0 %v4003
  %4067 = vmatmul.bf16.gmra.mxu0 %v4043
  %v4068 = vpop.f32.mrf.mxu0
  %v4069 = vadd.f32 0.0, %v4068
  %v4070 = vpop.f32.mrf.mxu0
  %v4071 = vadd.f32 0.0, %v4070
  %4072 = vmatmul.bf16.gmra.mxu0 %v4044
  %v4073 = vpop.f32.mrf.mxu0
  %v4074 = vadd.f32 0.0, %v4073
  %v4075 = vpop.f32.mrf.mxu0
  %v4076 = vadd.f32 0.0, %v4075
  %4077 = vmatmul.bf16.gmra.mxu0 %v4045
  %v4078 = vpop.f32.mrf.mxu0
  %v4079 = vadd.f32 0.0, %v4078
  %v4080 = vpop.f32.mrf.mxu0
  %v4081 = vadd.f32 0.0, %v4080
  %4082 = vmatmul.bf16.gmra.mxu0 %v4046
  %v4083 = vpop.f32.mrf.mxu0
  %v4084 = vadd.f32 0.0, %v4083
  %v4085 = vpop.f32.mrf.mxu0
  %v4086 = vadd.f32 0.0, %v4085
  %4087 = vmatmul.bf16.gmra.mxu0 %v4047
  %v4088 = vpop.f32.mrf.mxu0
  %v4089 = vadd.f32 0.0, %v4088
  %v4090 = vpop.f32.mrf.mxu0
  %v4091 = vadd.f32 0.0, %v4090
  %4092 = vmatmul.bf16.gmra.mxu0 %v4048
  %v4093 = vpop.f32.mrf.mxu0
  %v4094 = vadd.f32 0.0, %v4093
  %v4095 = vpop.f32.mrf.mxu0
  %v4096 = vadd.f32 0.0, %v4095
  %4097 = vmatmul.bf16.gmra.mxu0 %v4049
  %v4098 = vpop.f32.mrf.mxu0
  %v4099 = vadd.f32 0.0, %v4098
  %v4100 = vpop.f32.mrf.mxu0
  %v4101 = vadd.f32 0.0, %v4100
  %4102 = vmatmul.bf16.gmra.mxu0 %v4050
  %v4103 = vpop.f32.mrf.mxu0
  %v4104 = vadd.f32 0.0, %v4103
  %v4105 = vpop.f32.mrf.mxu0
  %v4106 = vadd.f32 0.0, %v4105
  %4107 = vdwg.mxu0
  %v4108 = vadd.f32 %v3896, %v4069
  %v4109 = vadd.f32 %v3897, %v4071
  %v4110 = vadd.f32 %v3898, %v4074
  %v4111 = vadd.f32 %v3899, %v4076
  %v4112 = vadd.f32 %v3900, %v4079
  %v4113 = vadd.f32 %v3901, %v4081
  %v4114 = vadd.f32 %v3902, %v4084
  %v4115 = vadd.f32 %v3903, %v4086
  %v4116 = vadd.f32 %v3904, %v4089
  %v4117 = vadd.f32 %v3905, %v4091
  %v4118 = vadd.f32 %v3906, %v4094
  %v4119 = vadd.f32 %v3907, %v4096
  %v4120 = vadd.f32 %v3908, %v4099
  %v4121 = vadd.f32 %v3909, %v4101
  %v4122 = vadd.f32 %v3910, %v4104
  %v4123 = vadd.f32 %v3911, %v4106
  %s4124 = scalar_lea.vmem %s0, 152
  %v4125 = vld [vmem:[%s4124] sm:$0xf]
  %v4126 = vld [vmem:[%s4124 + $0x4] sm:$0xf]
  %v4129 = vunpack.c.l.b16 %v4125
  %v4130 = vunpack.c.l.b16 %v4126
  %v4131 = vpack.c.b16 %v4130, %v4129
  %4133 = vmatpush.bf16.msra.mxu0 0
  %4134 = vmatpush.bf16.msra.mxu0 0
  %4135 = vmatpush.bf16.msra.mxu0 0
  %4136 = vmatpush.bf16.msra.mxu0 0
  %4137 = vmatpush.bf16.msra.mxu0 0
  %4138 = vmatpush.bf16.msra.mxu0 0
  %4139 = vmatpush.bf16.msra.mxu0 0
  %4140 = vmatpush.bf16.msra.mxu0 %v4131
  %4141 = vmatmul.bf16.gmra.mxu0 %v115
  %v4142 = vpop.f32.mrf.mxu0
  %v4143 = vadd.f32 %v49, %v4142
  %v4144 = vpop.f32.mrf.mxu0
  %v4145 = vadd.f32 %v50, %v4144
  %4146 = vmatmul.bf16.gmra.mxu0 %v118
  %v4147 = vpop.f32.mrf.mxu0
  %v4148 = vadd.f32 %v51, %v4147
  %v4149 = vpop.f32.mrf.mxu0
  %v4150 = vadd.f32 %v52, %v4149
  %4151 = vmatmul.bf16.gmra.mxu0 %v121
  %v4152 = vpop.f32.mrf.mxu0
  %v4153 = vadd.f32 %v53, %v4152
  %v4154 = vpop.f32.mrf.mxu0
  %v4155 = vadd.f32 %v54, %v4154
  %4156 = vmatmul.bf16.gmra.mxu0 %v124
  %v4157 = vpop.f32.mrf.mxu0
  %v4158 = vadd.f32 %v55, %v4157
  %v4159 = vpop.f32.mrf.mxu0
  %v4160 = vadd.f32 %v56, %v4159
  %4161 = vmatmul.bf16.gmra.mxu0 %v127
  %v4162 = vpop.f32.mrf.mxu0
  %v4163 = vadd.f32 %v57, %v4162
  %v4164 = vpop.f32.mrf.mxu0
  %v4165 = vadd.f32 %v58, %v4164
  %4166 = vmatmul.bf16.gmra.mxu0 %v130
  %v4167 = vpop.f32.mrf.mxu0
  %v4168 = vadd.f32 %v59, %v4167
  %v4169 = vpop.f32.mrf.mxu0
  %v4170 = vadd.f32 %v60, %v4169
  %4171 = vmatmul.bf16.gmra.mxu0 %v133
  %v4172 = vpop.f32.mrf.mxu0
  %v4173 = vadd.f32 %v61, %v4172
  %v4174 = vpop.f32.mrf.mxu0
  %v4175 = vadd.f32 %v62, %v4174
  %4176 = vmatmul.bf16.gmra.mxu0 %v136
  %v4177 = vpop.f32.mrf.mxu0
  %v4178 = vadd.f32 %v63, %v4177
  %v4179 = vpop.f32.mrf.mxu0
  %v4180 = vadd.f32 %v64, %v4179
  %4181 = vdwg.mxu0
  %v4182 = vmax.f32 %v4143, 0.0
  %v4183 = vmax.f32 %v4145, 0.0
  %v4184 = vmax.f32 %v4148, 0.0
  %v4185 = vmax.f32 %v4150, 0.0
  %v4186 = vmax.f32 %v4153, 0.0
  %v4187 = vmax.f32 %v4155, 0.0
  %v4188 = vmax.f32 %v4158, 0.0
  %v4189 = vmax.f32 %v4160, 0.0
  %v4190 = vmax.f32 %v4163, 0.0
  %v4191 = vmax.f32 %v4165, 0.0
  %v4192 = vmax.f32 %v4168, 0.0
  %v4193 = vmax.f32 %v4170, 0.0
  %v4194 = vmax.f32 %v4173, 0.0
  %v4195 = vmax.f32 %v4175, 0.0
  %v4196 = vmax.f32 %v4178, 0.0
  %v4197 = vmax.f32 %v4180, 0.0
  %s4198 = scalar_lea.vmem %s3, 1216
  %v4199 = vld [vmem:[%s4198] sm:$0xf]
  %v4200 = vld [vmem:[%s4198 + $0x4] sm:$0xf]
  %v4201 = vld [vmem:[%s4198 + $0x8] sm:$0xf]
  %v4202 = vld [vmem:[%s4198 + $0xc] sm:$0xf]
  %v4203 = vld [vmem:[%s4198 + $0x10] sm:$0xf]
  %v4204 = vld [vmem:[%s4198 + $0x14] sm:$0xf]
  %v4205 = vld [vmem:[%s4198 + $0x18] sm:$0xf]
  %v4206 = vld [vmem:[%s4198 + $0x1c] sm:$0xf]
  %v4207 = vld [vmem:[%s4198 + $0x20] sm:$0xf]
  %v4208 = vld [vmem:[%s4198 + $0x24] sm:$0xf]
  %v4209 = vld [vmem:[%s4198 + $0x28] sm:$0xf]
  %v4210 = vld [vmem:[%s4198 + $0x2c] sm:$0xf]
  %v4211 = vld [vmem:[%s4198 + $0x30] sm:$0xf]
  %v4212 = vld [vmem:[%s4198 + $0x34] sm:$0xf]
  %v4213 = vld [vmem:[%s4198 + $0x38] sm:$0xf]
  %v4214 = vld [vmem:[%s4198 + $0x3c] sm:$0xf]
  %v4215 = vpack.c.bf16 %v4183, %v4182
  %v4216 = vpack.c.bf16 %v4185, %v4184
  %v4217 = vpack.c.bf16 %v4187, %v4186
  %v4218 = vpack.c.bf16 %v4189, %v4188
  %v4219 = vpack.c.bf16 %v4191, %v4190
  %v4220 = vpack.c.bf16 %v4193, %v4192
  %v4221 = vpack.c.bf16 %v4195, %v4194
  %v4222 = vpack.c.bf16 %v4197, %v4196
  %v4239 = vunpack.c.l.b16 %v4199
  %v4240 = vunpack.c.l.b16 %v4200
  %v4241 = vunpack.c.l.b16 %v4201
  %v4242 = vunpack.c.l.b16 %v4202
  %v4243 = vunpack.c.l.b16 %v4203
  %v4244 = vunpack.c.l.b16 %v4204
  %v4245 = vunpack.c.l.b16 %v4205
  %v4246 = vunpack.c.l.b16 %v4206
  %v4247 = vunpack.c.l.b16 %v4207
  %v4248 = vunpack.c.l.b16 %v4208
  %v4249 = vunpack.c.l.b16 %v4209
  %v4250 = vunpack.c.l.b16 %v4210
  %v4251 = vunpack.c.l.b16 %v4211
  %v4252 = vunpack.c.l.b16 %v4212
  %v4253 = vunpack.c.l.b16 %v4213
  %v4254 = vunpack.c.l.b16 %v4214
  %v4255 = vpack.c.b16 %v4240, %v4239
  %v4256 = vpack.c.b16 %v4242, %v4241
  %v4257 = vpack.c.b16 %v4244, %v4243
  %v4258 = vpack.c.b16 %v4246, %v4245
  %v4259 = vpack.c.b16 %v4248, %v4247
  %v4260 = vpack.c.b16 %v4250, %v4249
  %v4261 = vpack.c.b16 %v4252, %v4251
  %v4262 = vpack.c.b16 %v4254, %v4253
  %4271 = vmatpush.bf16.msra.mxu0 %v4222
  %4272 = vmatpush.bf16.msra.mxu0 %v4221
  %4273 = vmatpush.bf16.msra.mxu0 %v4220
  %4274 = vmatpush.bf16.msra.mxu0 %v4219
  %4275 = vmatpush.bf16.msra.mxu0 %v4218
  %4276 = vmatpush.bf16.msra.mxu0 %v4217
  %4277 = vmatpush.bf16.msra.mxu0 %v4216
  %4278 = vmatpush.bf16.msra.mxu0 %v4215
  %4279 = vmatmul.bf16.gmra.mxu0 %v4255
  %v4280 = vpop.f32.mrf.mxu0
  %v4281 = vadd.f32 0.0, %v4280
  %v4282 = vpop.f32.mrf.mxu0
  %v4283 = vadd.f32 0.0, %v4282
  %4284 = vmatmul.bf16.gmra.mxu0 %v4256
  %v4285 = vpop.f32.mrf.mxu0
  %v4286 = vadd.f32 0.0, %v4285
  %v4287 = vpop.f32.mrf.mxu0
  %v4288 = vadd.f32 0.0, %v4287
  %4289 = vmatmul.bf16.gmra.mxu0 %v4257
  %v4290 = vpop.f32.mrf.mxu0
  %v4291 = vadd.f32 0.0, %v4290
  %v4292 = vpop.f32.mrf.mxu0
  %v4293 = vadd.f32 0.0, %v4292
  %4294 = vmatmul.bf16.gmra.mxu0 %v4258
  %v4295 = vpop.f32.mrf.mxu0
  %v4296 = vadd.f32 0.0, %v4295
  %v4297 = vpop.f32.mrf.mxu0
  %v4298 = vadd.f32 0.0, %v4297
  %4299 = vmatmul.bf16.gmra.mxu0 %v4259
  %v4300 = vpop.f32.mrf.mxu0
  %v4301 = vadd.f32 0.0, %v4300
  %v4302 = vpop.f32.mrf.mxu0
  %v4303 = vadd.f32 0.0, %v4302
  %4304 = vmatmul.bf16.gmra.mxu0 %v4260
  %v4305 = vpop.f32.mrf.mxu0
  %v4306 = vadd.f32 0.0, %v4305
  %v4307 = vpop.f32.mrf.mxu0
  %v4308 = vadd.f32 0.0, %v4307
  %4309 = vmatmul.bf16.gmra.mxu0 %v4261
  %v4310 = vpop.f32.mrf.mxu0
  %v4311 = vadd.f32 0.0, %v4310
  %v4312 = vpop.f32.mrf.mxu0
  %v4313 = vadd.f32 0.0, %v4312
  %4314 = vmatmul.bf16.gmra.mxu0 %v4262
  %v4315 = vpop.f32.mrf.mxu0
  %v4316 = vadd.f32 0.0, %v4315
  %v4317 = vpop.f32.mrf.mxu0
  %v4318 = vadd.f32 0.0, %v4317
  %4319 = vdwg.mxu0
  %v4320 = vadd.f32 %v4108, %v4281
  %v4321 = vadd.f32 %v4109, %v4283
  %v4322 = vadd.f32 %v4110, %v4286
  %v4323 = vadd.f32 %v4111, %v4288
  %v4324 = vadd.f32 %v4112, %v4291
  %v4325 = vadd.f32 %v4113, %v4293
  %v4326 = vadd.f32 %v4114, %v4296
  %v4327 = vadd.f32 %v4115, %v4298
  %v4328 = vadd.f32 %v4116, %v4301
  %v4329 = vadd.f32 %v4117, %v4303
  %v4330 = vadd.f32 %v4118, %v4306
  %v4331 = vadd.f32 %v4119, %v4308
  %v4332 = vadd.f32 %v4120, %v4311
  %v4333 = vadd.f32 %v4121, %v4313
  %v4334 = vadd.f32 %v4122, %v4316
  %v4335 = vadd.f32 %v4123, %v4318
  %s4336 = scalar_lea.vmem %s0, 160
  %v4337 = vld [vmem:[%s4336] sm:$0xf]
  %v4338 = vld [vmem:[%s4336 + $0x4] sm:$0xf]
  %v4341 = vunpack.c.l.b16 %v4337
  %v4342 = vunpack.c.l.b16 %v4338
  %v4343 = vpack.c.b16 %v4342, %v4341
  %4345 = vmatpush.bf16.msra.mxu0 0
  %4346 = vmatpush.bf16.msra.mxu0 0
  %4347 = vmatpush.bf16.msra.mxu0 0
  %4348 = vmatpush.bf16.msra.mxu0 0
  %4349 = vmatpush.bf16.msra.mxu0 0
  %4350 = vmatpush.bf16.msra.mxu0 0
  %4351 = vmatpush.bf16.msra.mxu0 0
  %4352 = vmatpush.bf16.msra.mxu0 %v4343
  %4353 = vmatmul.bf16.gmra.mxu0 %v115
  %v4354 = vpop.f32.mrf.mxu0
  %v4355 = vadd.f32 %v49, %v4354
  %v4356 = vpop.f32.mrf.mxu0
  %v4357 = vadd.f32 %v50, %v4356
  %4358 = vmatmul.bf16.gmra.mxu0 %v118
  %v4359 = vpop.f32.mrf.mxu0
  %v4360 = vadd.f32 %v51, %v4359
  %v4361 = vpop.f32.mrf.mxu0
  %v4362 = vadd.f32 %v52, %v4361
  %4363 = vmatmul.bf16.gmra.mxu0 %v121
  %v4364 = vpop.f32.mrf.mxu0
  %v4365 = vadd.f32 %v53, %v4364
  %v4366 = vpop.f32.mrf.mxu0
  %v4367 = vadd.f32 %v54, %v4366
  %4368 = vmatmul.bf16.gmra.mxu0 %v124
  %v4369 = vpop.f32.mrf.mxu0
  %v4370 = vadd.f32 %v55, %v4369
  %v4371 = vpop.f32.mrf.mxu0
  %v4372 = vadd.f32 %v56, %v4371
  %4373 = vmatmul.bf16.gmra.mxu0 %v127
  %v4374 = vpop.f32.mrf.mxu0
  %v4375 = vadd.f32 %v57, %v4374
  %v4376 = vpop.f32.mrf.mxu0
  %v4377 = vadd.f32 %v58, %v4376
  %4378 = vmatmul.bf16.gmra.mxu0 %v130
  %v4379 = vpop.f32.mrf.mxu0
  %v4380 = vadd.f32 %v59, %v4379
  %v4381 = vpop.f32.mrf.mxu0
  %v4382 = vadd.f32 %v60, %v4381
  %4383 = vmatmul.bf16.gmra.mxu0 %v133
  %v4384 = vpop.f32.mrf.mxu0
  %v4385 = vadd.f32 %v61, %v4384
  %v4386 = vpop.f32.mrf.mxu0
  %v4387 = vadd.f32 %v62, %v4386
  %4388 = vmatmul.bf16.gmra.mxu0 %v136
  %v4389 = vpop.f32.mrf.mxu0
  %v4390 = vadd.f32 %v63, %v4389
  %v4391 = vpop.f32.mrf.mxu0
  %v4392 = vadd.f32 %v64, %v4391
  %4393 = vdwg.mxu0
  %v4394 = vmax.f32 %v4355, 0.0
  %v4395 = vmax.f32 %v4357, 0.0
  %v4396 = vmax.f32 %v4360, 0.0
  %v4397 = vmax.f32 %v4362, 0.0
  %v4398 = vmax.f32 %v4365, 0.0
  %v4399 = vmax.f32 %v4367, 0.0
  %v4400 = vmax.f32 %v4370, 0.0
  %v4401 = vmax.f32 %v4372, 0.0
  %v4402 = vmax.f32 %v4375, 0.0
  %v4403 = vmax.f32 %v4377, 0.0
  %v4404 = vmax.f32 %v4380, 0.0
  %v4405 = vmax.f32 %v4382, 0.0
  %v4406 = vmax.f32 %v4385, 0.0
  %v4407 = vmax.f32 %v4387, 0.0
  %v4408 = vmax.f32 %v4390, 0.0
  %v4409 = vmax.f32 %v4392, 0.0
  %s4410 = scalar_lea.vmem %s3, 1280
  %v4411 = vld [vmem:[%s4410] sm:$0xf]
  %v4412 = vld [vmem:[%s4410 + $0x4] sm:$0xf]
  %v4413 = vld [vmem:[%s4410 + $0x8] sm:$0xf]
  %v4414 = vld [vmem:[%s4410 + $0xc] sm:$0xf]
  %v4415 = vld [vmem:[%s4410 + $0x10] sm:$0xf]
  %v4416 = vld [vmem:[%s4410 + $0x14] sm:$0xf]
  %v4417 = vld [vmem:[%s4410 + $0x18] sm:$0xf]
  %v4418 = vld [vmem:[%s4410 + $0x1c] sm:$0xf]
  %v4419 = vld [vmem:[%s4410 + $0x20] sm:$0xf]
  %v4420 = vld [vmem:[%s4410 + $0x24] sm:$0xf]
  %v4421 = vld [vmem:[%s4410 + $0x28] sm:$0xf]
  %v4422 = vld [vmem:[%s4410 + $0x2c] sm:$0xf]
  %v4423 = vld [vmem:[%s4410 + $0x30] sm:$0xf]
  %v4424 = vld [vmem:[%s4410 + $0x34] sm:$0xf]
  %v4425 = vld [vmem:[%s4410 + $0x38] sm:$0xf]
  %v4426 = vld [vmem:[%s4410 + $0x3c] sm:$0xf]
  %v4427 = vpack.c.bf16 %v4395, %v4394
  %v4428 = vpack.c.bf16 %v4397, %v4396
  %v4429 = vpack.c.bf16 %v4399, %v4398
  %v4430 = vpack.c.bf16 %v4401, %v4400
  %v4431 = vpack.c.bf16 %v4403, %v4402
  %v4432 = vpack.c.bf16 %v4405, %v4404
  %v4433 = vpack.c.bf16 %v4407, %v4406
  %v4434 = vpack.c.bf16 %v4409, %v4408
  %v4451 = vunpack.c.l.b16 %v4411
  %v4452 = vunpack.c.l.b16 %v4412
  %v4453 = vunpack.c.l.b16 %v4413
  %v4454 = vunpack.c.l.b16 %v4414
  %v4455 = vunpack.c.l.b16 %v4415
  %v4456 = vunpack.c.l.b16 %v4416
  %v4457 = vunpack.c.l.b16 %v4417
  %v4458 = vunpack.c.l.b16 %v4418
  %v4459 = vunpack.c.l.b16 %v4419
  %v4460 = vunpack.c.l.b16 %v4420
  %v4461 = vunpack.c.l.b16 %v4421
  %v4462 = vunpack.c.l.b16 %v4422
  %v4463 = vunpack.c.l.b16 %v4423
  %v4464 = vunpack.c.l.b16 %v4424
  %v4465 = vunpack.c.l.b16 %v4425
  %v4466 = vunpack.c.l.b16 %v4426
  %v4467 = vpack.c.b16 %v4452, %v4451
  %v4468 = vpack.c.b16 %v4454, %v4453
  %v4469 = vpack.c.b16 %v4456, %v4455
  %v4470 = vpack.c.b16 %v4458, %v4457
  %v4471 = vpack.c.b16 %v4460, %v4459
  %v4472 = vpack.c.b16 %v4462, %v4461
  %v4473 = vpack.c.b16 %v4464, %v4463
  %v4474 = vpack.c.b16 %v4466, %v4465
  %4483 = vmatpush.bf16.msra.mxu0 %v4434
  %4484 = vmatpush.bf16.msra.mxu0 %v4433
  %4485 = vmatpush.bf16.msra.mxu0 %v4432
  %4486 = vmatpush.bf16.msra.mxu0 %v4431
  %4487 = vmatpush.bf16.msra.mxu0 %v4430
  %4488 = vmatpush.bf16.msra.mxu0 %v4429
  %4489 = vmatpush.bf16.msra.mxu0 %v4428
  %4490 = vmatpush.bf16.msra.mxu0 %v4427
  %4491 = vmatmul.bf16.gmra.mxu0 %v4467
  %v4492 = vpop.f32.mrf.mxu0
  %v4493 = vadd.f32 0.0, %v4492
  %v4494 = vpop.f32.mrf.mxu0
  %v4495 = vadd.f32 0.0, %v4494
  %4496 = vmatmul.bf16.gmra.mxu0 %v4468
  %v4497 = vpop.f32.mrf.mxu0
  %v4498 = vadd.f32 0.0, %v4497
  %v4499 = vpop.f32.mrf.mxu0
  %v4500 = vadd.f32 0.0, %v4499
  %4501 = vmatmul.bf16.gmra.mxu0 %v4469
  %v4502 = vpop.f32.mrf.mxu0
  %v4503 = vadd.f32 0.0, %v4502
  %v4504 = vpop.f32.mrf.mxu0
  %v4505 = vadd.f32 0.0, %v4504
  %4506 = vmatmul.bf16.gmra.mxu0 %v4470
  %v4507 = vpop.f32.mrf.mxu0
  %v4508 = vadd.f32 0.0, %v4507
  %v4509 = vpop.f32.mrf.mxu0
  %v4510 = vadd.f32 0.0, %v4509
  %4511 = vmatmul.bf16.gmra.mxu0 %v4471
  %v4512 = vpop.f32.mrf.mxu0
  %v4513 = vadd.f32 0.0, %v4512
  %v4514 = vpop.f32.mrf.mxu0
  %v4515 = vadd.f32 0.0, %v4514
  %4516 = vmatmul.bf16.gmra.mxu0 %v4472
  %v4517 = vpop.f32.mrf.mxu0
  %v4518 = vadd.f32 0.0, %v4517
  %v4519 = vpop.f32.mrf.mxu0
  %v4520 = vadd.f32 0.0, %v4519
  %4521 = vmatmul.bf16.gmra.mxu0 %v4473
  %v4522 = vpop.f32.mrf.mxu0
  %v4523 = vadd.f32 0.0, %v4522
  %v4524 = vpop.f32.mrf.mxu0
  %v4525 = vadd.f32 0.0, %v4524
  %4526 = vmatmul.bf16.gmra.mxu0 %v4474
  %v4527 = vpop.f32.mrf.mxu0
  %v4528 = vadd.f32 0.0, %v4527
  %v4529 = vpop.f32.mrf.mxu0
  %v4530 = vadd.f32 0.0, %v4529
  %4531 = vdwg.mxu0
  %v4532 = vadd.f32 %v4320, %v4493
  %v4533 = vadd.f32 %v4321, %v4495
  %v4534 = vadd.f32 %v4322, %v4498
  %v4535 = vadd.f32 %v4323, %v4500
  %v4536 = vadd.f32 %v4324, %v4503
  %v4537 = vadd.f32 %v4325, %v4505
  %v4538 = vadd.f32 %v4326, %v4508
  %v4539 = vadd.f32 %v4327, %v4510
  %v4540 = vadd.f32 %v4328, %v4513
  %v4541 = vadd.f32 %v4329, %v4515
  %v4542 = vadd.f32 %v4330, %v4518
  %v4543 = vadd.f32 %v4331, %v4520
  %v4544 = vadd.f32 %v4332, %v4523
  %v4545 = vadd.f32 %v4333, %v4525
  %v4546 = vadd.f32 %v4334, %v4528
  %v4547 = vadd.f32 %v4335, %v4530
  %s4548 = scalar_lea.vmem %s0, 168
  %v4549 = vld [vmem:[%s4548] sm:$0xf]
  %v4550 = vld [vmem:[%s4548 + $0x4] sm:$0xf]
  %v4553 = vunpack.c.l.b16 %v4549
  %v4554 = vunpack.c.l.b16 %v4550
  %v4555 = vpack.c.b16 %v4554, %v4553
  %4557 = vmatpush.bf16.msra.mxu0 0
  %4558 = vmatpush.bf16.msra.mxu0 0
  %4559 = vmatpush.bf16.msra.mxu0 0
  %4560 = vmatpush.bf16.msra.mxu0 0
  %4561 = vmatpush.bf16.msra.mxu0 0
  %4562 = vmatpush.bf16.msra.mxu0 0
  %4563 = vmatpush.bf16.msra.mxu0 0
  %4564 = vmatpush.bf16.msra.mxu0 %v4555
  %4565 = vmatmul.bf16.gmra.mxu0 %v115
  %v4566 = vpop.f32.mrf.mxu0
  %v4567 = vadd.f32 %v49, %v4566
  %v4568 = vpop.f32.mrf.mxu0
  %v4569 = vadd.f32 %v50, %v4568
  %4570 = vmatmul.bf16.gmra.mxu0 %v118
  %v4571 = vpop.f32.mrf.mxu0
  %v4572 = vadd.f32 %v51, %v4571
  %v4573 = vpop.f32.mrf.mxu0
  %v4574 = vadd.f32 %v52, %v4573
  %4575 = vmatmul.bf16.gmra.mxu0 %v121
  %v4576 = vpop.f32.mrf.mxu0
  %v4577 = vadd.f32 %v53, %v4576
  %v4578 = vpop.f32.mrf.mxu0
  %v4579 = vadd.f32 %v54, %v4578
  %4580 = vmatmul.bf16.gmra.mxu0 %v124
  %v4581 = vpop.f32.mrf.mxu0
  %v4582 = vadd.f32 %v55, %v4581
  %v4583 = vpop.f32.mrf.mxu0
  %v4584 = vadd.f32 %v56, %v4583
  %4585 = vmatmul.bf16.gmra.mxu0 %v127
  %v4586 = vpop.f32.mrf.mxu0
  %v4587 = vadd.f32 %v57, %v4586
  %v4588 = vpop.f32.mrf.mxu0
  %v4589 = vadd.f32 %v58, %v4588
  %4590 = vmatmul.bf16.gmra.mxu0 %v130
  %v4591 = vpop.f32.mrf.mxu0
  %v4592 = vadd.f32 %v59, %v4591
  %v4593 = vpop.f32.mrf.mxu0
  %v4594 = vadd.f32 %v60, %v4593
  %4595 = vmatmul.bf16.gmra.mxu0 %v133
  %v4596 = vpop.f32.mrf.mxu0
  %v4597 = vadd.f32 %v61, %v4596
  %v4598 = vpop.f32.mrf.mxu0
  %v4599 = vadd.f32 %v62, %v4598
  %4600 = vmatmul.bf16.gmra.mxu0 %v136
  %v4601 = vpop.f32.mrf.mxu0
  %v4602 = vadd.f32 %v63, %v4601
  %v4603 = vpop.f32.mrf.mxu0
  %v4604 = vadd.f32 %v64, %v4603
  %4605 = vdwg.mxu0
  %v4606 = vmax.f32 %v4567, 0.0
  %v4607 = vmax.f32 %v4569, 0.0
  %v4608 = vmax.f32 %v4572, 0.0
  %v4609 = vmax.f32 %v4574, 0.0
  %v4610 = vmax.f32 %v4577, 0.0
  %v4611 = vmax.f32 %v4579, 0.0
  %v4612 = vmax.f32 %v4582, 0.0
  %v4613 = vmax.f32 %v4584, 0.0
  %v4614 = vmax.f32 %v4587, 0.0
  %v4615 = vmax.f32 %v4589, 0.0
  %v4616 = vmax.f32 %v4592, 0.0
  %v4617 = vmax.f32 %v4594, 0.0
  %v4618 = vmax.f32 %v4597, 0.0
  %v4619 = vmax.f32 %v4599, 0.0
  %v4620 = vmax.f32 %v4602, 0.0
  %v4621 = vmax.f32 %v4604, 0.0
  %s4622 = scalar_lea.vmem %s3, 1344
  %v4623 = vld [vmem:[%s4622] sm:$0xf]
  %v4624 = vld [vmem:[%s4622 + $0x4] sm:$0xf]
  %v4625 = vld [vmem:[%s4622 + $0x8] sm:$0xf]
  %v4626 = vld [vmem:[%s4622 + $0xc] sm:$0xf]
  %v4627 = vld [vmem:[%s4622 + $0x10] sm:$0xf]
  %v4628 = vld [vmem:[%s4622 + $0x14] sm:$0xf]
  %v4629 = vld [vmem:[%s4622 + $0x18] sm:$0xf]
  %v4630 = vld [vmem:[%s4622 + $0x1c] sm:$0xf]
  %v4631 = vld [vmem:[%s4622 + $0x20] sm:$0xf]
  %v4632 = vld [vmem:[%s4622 + $0x24] sm:$0xf]
  %v4633 = vld [vmem:[%s4622 + $0x28] sm:$0xf]
  %v4634 = vld [vmem:[%s4622 + $0x2c] sm:$0xf]
  %v4635 = vld [vmem:[%s4622 + $0x30] sm:$0xf]
  %v4636 = vld [vmem:[%s4622 + $0x34] sm:$0xf]
  %v4637 = vld [vmem:[%s4622 + $0x38] sm:$0xf]
  %v4638 = vld [vmem:[%s4622 + $0x3c] sm:$0xf]
  %v4639 = vpack.c.bf16 %v4607, %v4606
  %v4640 = vpack.c.bf16 %v4609, %v4608
  %v4641 = vpack.c.bf16 %v4611, %v4610
  %v4642 = vpack.c.bf16 %v4613, %v4612
  %v4643 = vpack.c.bf16 %v4615, %v4614
  %v4644 = vpack.c.bf16 %v4617, %v4616
  %v4645 = vpack.c.bf16 %v4619, %v4618
  %v4646 = vpack.c.bf16 %v4621, %v4620
  %v4663 = vunpack.c.l.b16 %v4623
  %v4664 = vunpack.c.l.b16 %v4624
  %v4665 = vunpack.c.l.b16 %v4625
  %v4666 = vunpack.c.l.b16 %v4626
  %v4667 = vunpack.c.l.b16 %v4627
  %v4668 = vunpack.c.l.b16 %v4628
  %v4669 = vunpack.c.l.b16 %v4629
  %v4670 = vunpack.c.l.b16 %v4630
  %v4671 = vunpack.c.l.b16 %v4631
  %v4672 = vunpack.c.l.b16 %v4632
  %v4673 = vunpack.c.l.b16 %v4633
  %v4674 = vunpack.c.l.b16 %v4634
  %v4675 = vunpack.c.l.b16 %v4635
  %v4676 = vunpack.c.l.b16 %v4636
  %v4677 = vunpack.c.l.b16 %v4637
  %v4678 = vunpack.c.l.b16 %v4638
  %v4679 = vpack.c.b16 %v4664, %v4663
  %v4680 = vpack.c.b16 %v4666, %v4665
  %v4681 = vpack.c.b16 %v4668, %v4667
  %v4682 = vpack.c.b16 %v4670, %v4669
  %v4683 = vpack.c.b16 %v4672, %v4671
  %v4684 = vpack.c.b16 %v4674, %v4673
  %v4685 = vpack.c.b16 %v4676, %v4675
  %v4686 = vpack.c.b16 %v4678, %v4677
  %4695 = vmatpush.bf16.msra.mxu0 %v4646
  %4696 = vmatpush.bf16.msra.mxu0 %v4645
  %4697 = vmatpush.bf16.msra.mxu0 %v4644
  %4698 = vmatpush.bf16.msra.mxu0 %v4643
  %4699 = vmatpush.bf16.msra.mxu0 %v4642
  %4700 = vmatpush.bf16.msra.mxu0 %v4641
  %4701 = vmatpush.bf16.msra.mxu0 %v4640
  %4702 = vmatpush.bf16.msra.mxu0 %v4639
  %4703 = vmatmul.bf16.gmra.mxu0 %v4679
  %v4704 = vpop.f32.mrf.mxu0
  %v4705 = vadd.f32 0.0, %v4704
  %v4706 = vpop.f32.mrf.mxu0
  %v4707 = vadd.f32 0.0, %v4706
  %4708 = vmatmul.bf16.gmra.mxu0 %v4680
  %v4709 = vpop.f32.mrf.mxu0
  %v4710 = vadd.f32 0.0, %v4709
  %v4711 = vpop.f32.mrf.mxu0
  %v4712 = vadd.f32 0.0, %v4711
  %4713 = vmatmul.bf16.gmra.mxu0 %v4681
  %v4714 = vpop.f32.mrf.mxu0
  %v4715 = vadd.f32 0.0, %v4714
  %v4716 = vpop.f32.mrf.mxu0
  %v4717 = vadd.f32 0.0, %v4716
  %4718 = vmatmul.bf16.gmra.mxu0 %v4682
  %v4719 = vpop.f32.mrf.mxu0
  %v4720 = vadd.f32 0.0, %v4719
  %v4721 = vpop.f32.mrf.mxu0
  %v4722 = vadd.f32 0.0, %v4721
  %4723 = vmatmul.bf16.gmra.mxu0 %v4683
  %v4724 = vpop.f32.mrf.mxu0
  %v4725 = vadd.f32 0.0, %v4724
  %v4726 = vpop.f32.mrf.mxu0
  %v4727 = vadd.f32 0.0, %v4726
  %4728 = vmatmul.bf16.gmra.mxu0 %v4684
  %v4729 = vpop.f32.mrf.mxu0
  %v4730 = vadd.f32 0.0, %v4729
  %v4731 = vpop.f32.mrf.mxu0
  %v4732 = vadd.f32 0.0, %v4731
  %4733 = vmatmul.bf16.gmra.mxu0 %v4685
  %v4734 = vpop.f32.mrf.mxu0
  %v4735 = vadd.f32 0.0, %v4734
  %v4736 = vpop.f32.mrf.mxu0
  %v4737 = vadd.f32 0.0, %v4736
  %4738 = vmatmul.bf16.gmra.mxu0 %v4686
  %v4739 = vpop.f32.mrf.mxu0
  %v4740 = vadd.f32 0.0, %v4739
  %v4741 = vpop.f32.mrf.mxu0
  %v4742 = vadd.f32 0.0, %v4741
  %4743 = vdwg.mxu0
  %v4744 = vadd.f32 %v4532, %v4705
  %v4745 = vadd.f32 %v4533, %v4707
  %v4746 = vadd.f32 %v4534, %v4710
  %v4747 = vadd.f32 %v4535, %v4712
  %v4748 = vadd.f32 %v4536, %v4715
  %v4749 = vadd.f32 %v4537, %v4717
  %v4750 = vadd.f32 %v4538, %v4720
  %v4751 = vadd.f32 %v4539, %v4722
  %v4752 = vadd.f32 %v4540, %v4725
  %v4753 = vadd.f32 %v4541, %v4727
  %v4754 = vadd.f32 %v4542, %v4730
  %v4755 = vadd.f32 %v4543, %v4732
  %v4756 = vadd.f32 %v4544, %v4735
  %v4757 = vadd.f32 %v4545, %v4737
  %v4758 = vadd.f32 %v4546, %v4740
  %v4759 = vadd.f32 %v4547, %v4742
  %s4760 = scalar_lea.vmem %s0, 176
  %v4761 = vld [vmem:[%s4760] sm:$0xf]
  %v4762 = vld [vmem:[%s4760 + $0x4] sm:$0xf]
  %v4765 = vunpack.c.l.b16 %v4761
  %v4766 = vunpack.c.l.b16 %v4762
  %v4767 = vpack.c.b16 %v4766, %v4765
  %4769 = vmatpush.bf16.msra.mxu0 0
  %4770 = vmatpush.bf16.msra.mxu0 0
  %4771 = vmatpush.bf16.msra.mxu0 0
  %4772 = vmatpush.bf16.msra.mxu0 0
  %4773 = vmatpush.bf16.msra.mxu0 0
  %4774 = vmatpush.bf16.msra.mxu0 0
  %4775 = vmatpush.bf16.msra.mxu0 0
  %4776 = vmatpush.bf16.msra.mxu0 %v4767
  %4777 = vmatmul.bf16.gmra.mxu0 %v115
  %v4778 = vpop.f32.mrf.mxu0
  %v4779 = vadd.f32 %v49, %v4778
  %v4780 = vpop.f32.mrf.mxu0
  %v4781 = vadd.f32 %v50, %v4780
  %4782 = vmatmul.bf16.gmra.mxu0 %v118
  %v4783 = vpop.f32.mrf.mxu0
  %v4784 = vadd.f32 %v51, %v4783
  %v4785 = vpop.f32.mrf.mxu0
  %v4786 = vadd.f32 %v52, %v4785
  %4787 = vmatmul.bf16.gmra.mxu0 %v121
  %v4788 = vpop.f32.mrf.mxu0
  %v4789 = vadd.f32 %v53, %v4788
  %v4790 = vpop.f32.mrf.mxu0
  %v4791 = vadd.f32 %v54, %v4790
  %4792 = vmatmul.bf16.gmra.mxu0 %v124
  %v4793 = vpop.f32.mrf.mxu0
  %v4794 = vadd.f32 %v55, %v4793
  %v4795 = vpop.f32.mrf.mxu0
  %v4796 = vadd.f32 %v56, %v4795
  %4797 = vmatmul.bf16.gmra.mxu0 %v127
  %v4798 = vpop.f32.mrf.mxu0
  %v4799 = vadd.f32 %v57, %v4798
  %v4800 = vpop.f32.mrf.mxu0
  %v4801 = vadd.f32 %v58, %v4800
  %4802 = vmatmul.bf16.gmra.mxu0 %v130
  %v4803 = vpop.f32.mrf.mxu0
  %v4804 = vadd.f32 %v59, %v4803
  %v4805 = vpop.f32.mrf.mxu0
  %v4806 = vadd.f32 %v60, %v4805
  %4807 = vmatmul.bf16.gmra.mxu0 %v133
  %v4808 = vpop.f32.mrf.mxu0
  %v4809 = vadd.f32 %v61, %v4808
  %v4810 = vpop.f32.mrf.mxu0
  %v4811 = vadd.f32 %v62, %v4810
  %4812 = vmatmul.bf16.gmra.mxu0 %v136
  %v4813 = vpop.f32.mrf.mxu0
  %v4814 = vadd.f32 %v63, %v4813
  %v4815 = vpop.f32.mrf.mxu0
  %v4816 = vadd.f32 %v64, %v4815
  %4817 = vdwg.mxu0
  %v4818 = vmax.f32 %v4779, 0.0
  %v4819 = vmax.f32 %v4781, 0.0
  %v4820 = vmax.f32 %v4784, 0.0
  %v4821 = vmax.f32 %v4786, 0.0
  %v4822 = vmax.f32 %v4789, 0.0
  %v4823 = vmax.f32 %v4791, 0.0
  %v4824 = vmax.f32 %v4794, 0.0
  %v4825 = vmax.f32 %v4796, 0.0
  %v4826 = vmax.f32 %v4799, 0.0
  %v4827 = vmax.f32 %v4801, 0.0
  %v4828 = vmax.f32 %v4804, 0.0
  %v4829 = vmax.f32 %v4806, 0.0
  %v4830 = vmax.f32 %v4809, 0.0
  %v4831 = vmax.f32 %v4811, 0.0
  %v4832 = vmax.f32 %v4814, 0.0
  %v4833 = vmax.f32 %v4816, 0.0
  %s4834 = scalar_lea.vmem %s3, 1408
  %v4835 = vld [vmem:[%s4834] sm:$0xf]
  %v4836 = vld [vmem:[%s4834 + $0x4] sm:$0xf]
  %v4837 = vld [vmem:[%s4834 + $0x8] sm:$0xf]
  %v4838 = vld [vmem:[%s4834 + $0xc] sm:$0xf]
  %v4839 = vld [vmem:[%s4834 + $0x10] sm:$0xf]
  %v4840 = vld [vmem:[%s4834 + $0x14] sm:$0xf]
  %v4841 = vld [vmem:[%s4834 + $0x18] sm:$0xf]
  %v4842 = vld [vmem:[%s4834 + $0x1c] sm:$0xf]
  %v4843 = vld [vmem:[%s4834 + $0x20] sm:$0xf]
  %v4844 = vld [vmem:[%s4834 + $0x24] sm:$0xf]
  %v4845 = vld [vmem:[%s4834 + $0x28] sm:$0xf]
  %v4846 = vld [vmem:[%s4834 + $0x2c] sm:$0xf]
  %v4847 = vld [vmem:[%s4834 + $0x30] sm:$0xf]
  %v4848 = vld [vmem:[%s4834 + $0x34] sm:$0xf]
  %v4849 = vld [vmem:[%s4834 + $0x38] sm:$0xf]
  %v4850 = vld [vmem:[%s4834 + $0x3c] sm:$0xf]
  %v4851 = vpack.c.bf16 %v4819, %v4818
  %v4852 = vpack.c.bf16 %v4821, %v4820
  %v4853 = vpack.c.bf16 %v4823, %v4822
  %v4854 = vpack.c.bf16 %v4825, %v4824
  %v4855 = vpack.c.bf16 %v4827, %v4826
  %v4856 = vpack.c.bf16 %v4829, %v4828
  %v4857 = vpack.c.bf16 %v4831, %v4830
  %v4858 = vpack.c.bf16 %v4833, %v4832
  %v4875 = vunpack.c.l.b16 %v4835
  %v4876 = vunpack.c.l.b16 %v4836
  %v4877 = vunpack.c.l.b16 %v4837
  %v4878 = vunpack.c.l.b16 %v4838
  %v4879 = vunpack.c.l.b16 %v4839
  %v4880 = vunpack.c.l.b16 %v4840
  %v4881 = vunpack.c.l.b16 %v4841
  %v4882 = vunpack.c.l.b16 %v4842
  %v4883 = vunpack.c.l.b16 %v4843
  %v4884 = vunpack.c.l.b16 %v4844
  %v4885 = vunpack.c.l.b16 %v4845
  %v4886 = vunpack.c.l.b16 %v4846
  %v4887 = vunpack.c.l.b16 %v4847
  %v4888 = vunpack.c.l.b16 %v4848
  %v4889 = vunpack.c.l.b16 %v4849
  %v4890 = vunpack.c.l.b16 %v4850
  %v4891 = vpack.c.b16 %v4876, %v4875
  %v4892 = vpack.c.b16 %v4878, %v4877
  %v4893 = vpack.c.b16 %v4880, %v4879
  %v4894 = vpack.c.b16 %v4882, %v4881
  %v4895 = vpack.c.b16 %v4884, %v4883
  %v4896 = vpack.c.b16 %v4886, %v4885
  %v4897 = vpack.c.b16 %v4888, %v4887
  %v4898 = vpack.c.b16 %v4890, %v4889
  %4907 = vmatpush.bf16.msra.mxu0 %v4858
  %4908 = vmatpush.bf16.msra.mxu0 %v4857
  %4909 = vmatpush.bf16.msra.mxu0 %v4856
  %4910 = vmatpush.bf16.msra.mxu0 %v4855
  %4911 = vmatpush.bf16.msra.mxu0 %v4854
  %4912 = vmatpush.bf16.msra.mxu0 %v4853
  %4913 = vmatpush.bf16.msra.mxu0 %v4852
  %4914 = vmatpush.bf16.msra.mxu0 %v4851
  %4915 = vmatmul.bf16.gmra.mxu0 %v4891
  %v4916 = vpop.f32.mrf.mxu0
  %v4917 = vadd.f32 0.0, %v4916
  %v4918 = vpop.f32.mrf.mxu0
  %v4919 = vadd.f32 0.0, %v4918
  %4920 = vmatmul.bf16.gmra.mxu0 %v4892
  %v4921 = vpop.f32.mrf.mxu0
  %v4922 = vadd.f32 0.0, %v4921
  %v4923 = vpop.f32.mrf.mxu0
  %v4924 = vadd.f32 0.0, %v4923
  %4925 = vmatmul.bf16.gmra.mxu0 %v4893
  %v4926 = vpop.f32.mrf.mxu0
  %v4927 = vadd.f32 0.0, %v4926
  %v4928 = vpop.f32.mrf.mxu0
  %v4929 = vadd.f32 0.0, %v4928
  %4930 = vmatmul.bf16.gmra.mxu0 %v4894
  %v4931 = vpop.f32.mrf.mxu0
  %v4932 = vadd.f32 0.0, %v4931
  %v4933 = vpop.f32.mrf.mxu0
  %v4934 = vadd.f32 0.0, %v4933
  %4935 = vmatmul.bf16.gmra.mxu0 %v4895
  %v4936 = vpop.f32.mrf.mxu0
  %v4937 = vadd.f32 0.0, %v4936
  %v4938 = vpop.f32.mrf.mxu0
  %v4939 = vadd.f32 0.0, %v4938
  %4940 = vmatmul.bf16.gmra.mxu0 %v4896
  %v4941 = vpop.f32.mrf.mxu0
  %v4942 = vadd.f32 0.0, %v4941
  %v4943 = vpop.f32.mrf.mxu0
  %v4944 = vadd.f32 0.0, %v4943
  %4945 = vmatmul.bf16.gmra.mxu0 %v4897
  %v4946 = vpop.f32.mrf.mxu0
  %v4947 = vadd.f32 0.0, %v4946
  %v4948 = vpop.f32.mrf.mxu0
  %v4949 = vadd.f32 0.0, %v4948
  %4950 = vmatmul.bf16.gmra.mxu0 %v4898
  %v4951 = vpop.f32.mrf.mxu0
  %v4952 = vadd.f32 0.0, %v4951
  %v4953 = vpop.f32.mrf.mxu0
  %v4954 = vadd.f32 0.0, %v4953
  %4955 = vdwg.mxu0
  %v4956 = vadd.f32 %v4744, %v4917
  %v4957 = vadd.f32 %v4745, %v4919
  %v4958 = vadd.f32 %v4746, %v4922
  %v4959 = vadd.f32 %v4747, %v4924
  %v4960 = vadd.f32 %v4748, %v4927
  %v4961 = vadd.f32 %v4749, %v4929
  %v4962 = vadd.f32 %v4750, %v4932
  %v4963 = vadd.f32 %v4751, %v4934
  %v4964 = vadd.f32 %v4752, %v4937
  %v4965 = vadd.f32 %v4753, %v4939
  %v4966 = vadd.f32 %v4754, %v4942
  %v4967 = vadd.f32 %v4755, %v4944
  %v4968 = vadd.f32 %v4756, %v4947
  %v4969 = vadd.f32 %v4757, %v4949
  %v4970 = vadd.f32 %v4758, %v4952
  %v4971 = vadd.f32 %v4759, %v4954
  %s4972 = scalar_lea.vmem %s0, 184
  %v4973 = vld [vmem:[%s4972] sm:$0xf]
  %v4974 = vld [vmem:[%s4972 + $0x4] sm:$0xf]
  %v4977 = vunpack.c.l.b16 %v4973
  %v4978 = vunpack.c.l.b16 %v4974
  %v4979 = vpack.c.b16 %v4978, %v4977
  %4981 = vmatpush.bf16.msra.mxu0 0
  %4982 = vmatpush.bf16.msra.mxu0 0
  %4983 = vmatpush.bf16.msra.mxu0 0
  %4984 = vmatpush.bf16.msra.mxu0 0
  %4985 = vmatpush.bf16.msra.mxu0 0
  %4986 = vmatpush.bf16.msra.mxu0 0
  %4987 = vmatpush.bf16.msra.mxu0 0
  %4988 = vmatpush.bf16.msra.mxu0 %v4979
  %4989 = vmatmul.bf16.gmra.mxu0 %v115
  %v4990 = vpop.f32.mrf.mxu0
  %v4991 = vadd.f32 %v49, %v4990
  %v4992 = vpop.f32.mrf.mxu0
  %v4993 = vadd.f32 %v50, %v4992
  %4994 = vmatmul.bf16.gmra.mxu0 %v118
  %v4995 = vpop.f32.mrf.mxu0
  %v4996 = vadd.f32 %v51, %v4995
  %v4997 = vpop.f32.mrf.mxu0
  %v4998 = vadd.f32 %v52, %v4997
  %4999 = vmatmul.bf16.gmra.mxu0 %v121
  %v5000 = vpop.f32.mrf.mxu0
  %v5001 = vadd.f32 %v53, %v5000
  %v5002 = vpop.f32.mrf.mxu0
  %v5003 = vadd.f32 %v54, %v5002
  %5004 = vmatmul.bf16.gmra.mxu0 %v124
  %v5005 = vpop.f32.mrf.mxu0
  %v5006 = vadd.f32 %v55, %v5005
  %v5007 = vpop.f32.mrf.mxu0
  %v5008 = vadd.f32 %v56, %v5007
  %5009 = vmatmul.bf16.gmra.mxu0 %v127
  %v5010 = vpop.f32.mrf.mxu0
  %v5011 = vadd.f32 %v57, %v5010
  %v5012 = vpop.f32.mrf.mxu0
  %v5013 = vadd.f32 %v58, %v5012
  %5014 = vmatmul.bf16.gmra.mxu0 %v130
  %v5015 = vpop.f32.mrf.mxu0
  %v5016 = vadd.f32 %v59, %v5015
  %v5017 = vpop.f32.mrf.mxu0
  %v5018 = vadd.f32 %v60, %v5017
  %5019 = vmatmul.bf16.gmra.mxu0 %v133
  %v5020 = vpop.f32.mrf.mxu0
  %v5021 = vadd.f32 %v61, %v5020
  %v5022 = vpop.f32.mrf.mxu0
  %v5023 = vadd.f32 %v62, %v5022
  %5024 = vmatmul.bf16.gmra.mxu0 %v136
  %v5025 = vpop.f32.mrf.mxu0
  %v5026 = vadd.f32 %v63, %v5025
  %v5027 = vpop.f32.mrf.mxu0
  %v5028 = vadd.f32 %v64, %v5027
  %5029 = vdwg.mxu0
  %v5030 = vmax.f32 %v4991, 0.0
  %v5031 = vmax.f32 %v4993, 0.0
  %v5032 = vmax.f32 %v4996, 0.0
  %v5033 = vmax.f32 %v4998, 0.0
  %v5034 = vmax.f32 %v5001, 0.0
  %v5035 = vmax.f32 %v5003, 0.0
  %v5036 = vmax.f32 %v5006, 0.0
  %v5037 = vmax.f32 %v5008, 0.0
  %v5038 = vmax.f32 %v5011, 0.0
  %v5039 = vmax.f32 %v5013, 0.0
  %v5040 = vmax.f32 %v5016, 0.0
  %v5041 = vmax.f32 %v5018, 0.0
  %v5042 = vmax.f32 %v5021, 0.0
  %v5043 = vmax.f32 %v5023, 0.0
  %v5044 = vmax.f32 %v5026, 0.0
  %v5045 = vmax.f32 %v5028, 0.0
  %s5046 = scalar_lea.vmem %s3, 1472
  %v5047 = vld [vmem:[%s5046] sm:$0xf]
  %v5048 = vld [vmem:[%s5046 + $0x4] sm:$0xf]
  %v5049 = vld [vmem:[%s5046 + $0x8] sm:$0xf]
  %v5050 = vld [vmem:[%s5046 + $0xc] sm:$0xf]
  %v5051 = vld [vmem:[%s5046 + $0x10] sm:$0xf]
  %v5052 = vld [vmem:[%s5046 + $0x14] sm:$0xf]
  %v5053 = vld [vmem:[%s5046 + $0x18] sm:$0xf]
  %v5054 = vld [vmem:[%s5046 + $0x1c] sm:$0xf]
  %v5055 = vld [vmem:[%s5046 + $0x20] sm:$0xf]
  %v5056 = vld [vmem:[%s5046 + $0x24] sm:$0xf]
  %v5057 = vld [vmem:[%s5046 + $0x28] sm:$0xf]
  %v5058 = vld [vmem:[%s5046 + $0x2c] sm:$0xf]
  %v5059 = vld [vmem:[%s5046 + $0x30] sm:$0xf]
  %v5060 = vld [vmem:[%s5046 + $0x34] sm:$0xf]
  %v5061 = vld [vmem:[%s5046 + $0x38] sm:$0xf]
  %v5062 = vld [vmem:[%s5046 + $0x3c] sm:$0xf]
  %v5063 = vpack.c.bf16 %v5031, %v5030
  %v5064 = vpack.c.bf16 %v5033, %v5032
  %v5065 = vpack.c.bf16 %v5035, %v5034
  %v5066 = vpack.c.bf16 %v5037, %v5036
  %v5067 = vpack.c.bf16 %v5039, %v5038
  %v5068 = vpack.c.bf16 %v5041, %v5040
  %v5069 = vpack.c.bf16 %v5043, %v5042
  %v5070 = vpack.c.bf16 %v5045, %v5044
  %v5087 = vunpack.c.l.b16 %v5047
  %v5088 = vunpack.c.l.b16 %v5048
  %v5089 = vunpack.c.l.b16 %v5049
  %v5090 = vunpack.c.l.b16 %v5050
  %v5091 = vunpack.c.l.b16 %v5051
  %v5092 = vunpack.c.l.b16 %v5052
  %v5093 = vunpack.c.l.b16 %v5053
  %v5094 = vunpack.c.l.b16 %v5054
  %v5095 = vunpack.c.l.b16 %v5055
  %v5096 = vunpack.c.l.b16 %v5056
  %v5097 = vunpack.c.l.b16 %v5057
  %v5098 = vunpack.c.l.b16 %v5058
  %v5099 = vunpack.c.l.b16 %v5059
  %v5100 = vunpack.c.l.b16 %v5060
  %v5101 = vunpack.c.l.b16 %v5061
  %v5102 = vunpack.c.l.b16 %v5062
  %v5103 = vpack.c.b16 %v5088, %v5087
  %v5104 = vpack.c.b16 %v5090, %v5089
  %v5105 = vpack.c.b16 %v5092, %v5091
  %v5106 = vpack.c.b16 %v5094, %v5093
  %v5107 = vpack.c.b16 %v5096, %v5095
  %v5108 = vpack.c.b16 %v5098, %v5097
  %v5109 = vpack.c.b16 %v5100, %v5099
  %v5110 = vpack.c.b16 %v5102, %v5101
  %5119 = vmatpush.bf16.msra.mxu0 %v5070
  %5120 = vmatpush.bf16.msra.mxu0 %v5069
  %5121 = vmatpush.bf16.msra.mxu0 %v5068
  %5122 = vmatpush.bf16.msra.mxu0 %v5067
  %5123 = vmatpush.bf16.msra.mxu0 %v5066
  %5124 = vmatpush.bf16.msra.mxu0 %v5065
  %5125 = vmatpush.bf16.msra.mxu0 %v5064
  %5126 = vmatpush.bf16.msra.mxu0 %v5063
  %5127 = vmatmul.bf16.gmra.mxu0 %v5103
  %v5128 = vpop.f32.mrf.mxu0
  %v5129 = vadd.f32 0.0, %v5128
  %v5130 = vpop.f32.mrf.mxu0
  %v5131 = vadd.f32 0.0, %v5130
  %5132 = vmatmul.bf16.gmra.mxu0 %v5104
  %v5133 = vpop.f32.mrf.mxu0
  %v5134 = vadd.f32 0.0, %v5133
  %v5135 = vpop.f32.mrf.mxu0
  %v5136 = vadd.f32 0.0, %v5135
  %5137 = vmatmul.bf16.gmra.mxu0 %v5105
  %v5138 = vpop.f32.mrf.mxu0
  %v5139 = vadd.f32 0.0, %v5138
  %v5140 = vpop.f32.mrf.mxu0
  %v5141 = vadd.f32 0.0, %v5140
  %5142 = vmatmul.bf16.gmra.mxu0 %v5106
  %v5143 = vpop.f32.mrf.mxu0
  %v5144 = vadd.f32 0.0, %v5143
  %v5145 = vpop.f32.mrf.mxu0
  %v5146 = vadd.f32 0.0, %v5145
  %5147 = vmatmul.bf16.gmra.mxu0 %v5107
  %v5148 = vpop.f32.mrf.mxu0
  %v5149 = vadd.f32 0.0, %v5148
  %v5150 = vpop.f32.mrf.mxu0
  %v5151 = vadd.f32 0.0, %v5150
  %5152 = vmatmul.bf16.gmra.mxu0 %v5108
  %v5153 = vpop.f32.mrf.mxu0
  %v5154 = vadd.f32 0.0, %v5153
  %v5155 = vpop.f32.mrf.mxu0
  %v5156 = vadd.f32 0.0, %v5155
  %5157 = vmatmul.bf16.gmra.mxu0 %v5109
  %v5158 = vpop.f32.mrf.mxu0
  %v5159 = vadd.f32 0.0, %v5158
  %v5160 = vpop.f32.mrf.mxu0
  %v5161 = vadd.f32 0.0, %v5160
  %5162 = vmatmul.bf16.gmra.mxu0 %v5110
  %v5163 = vpop.f32.mrf.mxu0
  %v5164 = vadd.f32 0.0, %v5163
  %v5165 = vpop.f32.mrf.mxu0
  %v5166 = vadd.f32 0.0, %v5165
  %5167 = vdwg.mxu0
  %v5168 = vadd.f32 %v4956, %v5129
  %v5169 = vadd.f32 %v4957, %v5131
  %v5170 = vadd.f32 %v4958, %v5134
  %v5171 = vadd.f32 %v4959, %v5136
  %v5172 = vadd.f32 %v4960, %v5139
  %v5173 = vadd.f32 %v4961, %v5141
  %v5174 = vadd.f32 %v4962, %v5144
  %v5175 = vadd.f32 %v4963, %v5146
  %v5176 = vadd.f32 %v4964, %v5149
  %v5177 = vadd.f32 %v4965, %v5151
  %v5178 = vadd.f32 %v4966, %v5154
  %v5179 = vadd.f32 %v4967, %v5156
  %v5180 = vadd.f32 %v4968, %v5159
  %v5181 = vadd.f32 %v4969, %v5161
  %v5182 = vadd.f32 %v4970, %v5164
  %v5183 = vadd.f32 %v4971, %v5166
  %s5184 = scalar_lea.vmem %s0, 192
  %v5185 = vld [vmem:[%s5184] sm:$0xf]
  %v5186 = vld [vmem:[%s5184 + $0x4] sm:$0xf]
  %v5189 = vunpack.c.l.b16 %v5185
  %v5190 = vunpack.c.l.b16 %v5186
  %v5191 = vpack.c.b16 %v5190, %v5189
  %5193 = vmatpush.bf16.msra.mxu0 0
  %5194 = vmatpush.bf16.msra.mxu0 0
  %5195 = vmatpush.bf16.msra.mxu0 0
  %5196 = vmatpush.bf16.msra.mxu0 0
  %5197 = vmatpush.bf16.msra.mxu0 0
  %5198 = vmatpush.bf16.msra.mxu0 0
  %5199 = vmatpush.bf16.msra.mxu0 0
  %5200 = vmatpush.bf16.msra.mxu0 %v5191
  %5201 = vmatmul.bf16.gmra.mxu0 %v115
  %v5202 = vpop.f32.mrf.mxu0
  %v5203 = vadd.f32 %v49, %v5202
  %v5204 = vpop.f32.mrf.mxu0
  %v5205 = vadd.f32 %v50, %v5204
  %5206 = vmatmul.bf16.gmra.mxu0 %v118
  %v5207 = vpop.f32.mrf.mxu0
  %v5208 = vadd.f32 %v51, %v5207
  %v5209 = vpop.f32.mrf.mxu0
  %v5210 = vadd.f32 %v52, %v5209
  %5211 = vmatmul.bf16.gmra.mxu0 %v121
  %v5212 = vpop.f32.mrf.mxu0
  %v5213 = vadd.f32 %v53, %v5212
  %v5214 = vpop.f32.mrf.mxu0
  %v5215 = vadd.f32 %v54, %v5214
  %5216 = vmatmul.bf16.gmra.mxu0 %v124
  %v5217 = vpop.f32.mrf.mxu0
  %v5218 = vadd.f32 %v55, %v5217
  %v5219 = vpop.f32.mrf.mxu0
  %v5220 = vadd.f32 %v56, %v5219
  %5221 = vmatmul.bf16.gmra.mxu0 %v127
  %v5222 = vpop.f32.mrf.mxu0
  %v5223 = vadd.f32 %v57, %v5222
  %v5224 = vpop.f32.mrf.mxu0
  %v5225 = vadd.f32 %v58, %v5224
  %5226 = vmatmul.bf16.gmra.mxu0 %v130
  %v5227 = vpop.f32.mrf.mxu0
  %v5228 = vadd.f32 %v59, %v5227
  %v5229 = vpop.f32.mrf.mxu0
  %v5230 = vadd.f32 %v60, %v5229
  %5231 = vmatmul.bf16.gmra.mxu0 %v133
  %v5232 = vpop.f32.mrf.mxu0
  %v5233 = vadd.f32 %v61, %v5232
  %v5234 = vpop.f32.mrf.mxu0
  %v5235 = vadd.f32 %v62, %v5234
  %5236 = vmatmul.bf16.gmra.mxu0 %v136
  %v5237 = vpop.f32.mrf.mxu0
  %v5238 = vadd.f32 %v63, %v5237
  %v5239 = vpop.f32.mrf.mxu0
  %v5240 = vadd.f32 %v64, %v5239
  %5241 = vdwg.mxu0
  %v5242 = vmax.f32 %v5203, 0.0
  %v5243 = vmax.f32 %v5205, 0.0
  %v5244 = vmax.f32 %v5208, 0.0
  %v5245 = vmax.f32 %v5210, 0.0
  %v5246 = vmax.f32 %v5213, 0.0
  %v5247 = vmax.f32 %v5215, 0.0
  %v5248 = vmax.f32 %v5218, 0.0
  %v5249 = vmax.f32 %v5220, 0.0
  %v5250 = vmax.f32 %v5223, 0.0
  %v5251 = vmax.f32 %v5225, 0.0
  %v5252 = vmax.f32 %v5228, 0.0
  %v5253 = vmax.f32 %v5230, 0.0
  %v5254 = vmax.f32 %v5233, 0.0
  %v5255 = vmax.f32 %v5235, 0.0
  %v5256 = vmax.f32 %v5238, 0.0
  %v5257 = vmax.f32 %v5240, 0.0
  %s5258 = scalar_lea.vmem %s3, 1536
  %v5259 = vld [vmem:[%s5258] sm:$0xf]
  %v5260 = vld [vmem:[%s5258 + $0x4] sm:$0xf]
  %v5261 = vld [vmem:[%s5258 + $0x8] sm:$0xf]
  %v5262 = vld [vmem:[%s5258 + $0xc] sm:$0xf]
  %v5263 = vld [vmem:[%s5258 + $0x10] sm:$0xf]
  %v5264 = vld [vmem:[%s5258 + $0x14] sm:$0xf]
  %v5265 = vld [vmem:[%s5258 + $0x18] sm:$0xf]
  %v5266 = vld [vmem:[%s5258 + $0x1c] sm:$0xf]
  %v5267 = vld [vmem:[%s5258 + $0x20] sm:$0xf]
  %v5268 = vld [vmem:[%s5258 + $0x24] sm:$0xf]
  %v5269 = vld [vmem:[%s5258 + $0x28] sm:$0xf]
  %v5270 = vld [vmem:[%s5258 + $0x2c] sm:$0xf]
  %v5271 = vld [vmem:[%s5258 + $0x30] sm:$0xf]
  %v5272 = vld [vmem:[%s5258 + $0x34] sm:$0xf]
  %v5273 = vld [vmem:[%s5258 + $0x38] sm:$0xf]
  %v5274 = vld [vmem:[%s5258 + $0x3c] sm:$0xf]
  %v5275 = vpack.c.bf16 %v5243, %v5242
  %v5276 = vpack.c.bf16 %v5245, %v5244
  %v5277 = vpack.c.bf16 %v5247, %v5246
  %v5278 = vpack.c.bf16 %v5249, %v5248
  %v5279 = vpack.c.bf16 %v5251, %v5250
  %v5280 = vpack.c.bf16 %v5253, %v5252
  %v5281 = vpack.c.bf16 %v5255, %v5254
  %v5282 = vpack.c.bf16 %v5257, %v5256
  %v5299 = vunpack.c.l.b16 %v5259
  %v5300 = vunpack.c.l.b16 %v5260
  %v5301 = vunpack.c.l.b16 %v5261
  %v5302 = vunpack.c.l.b16 %v5262
  %v5303 = vunpack.c.l.b16 %v5263
  %v5304 = vunpack.c.l.b16 %v5264
  %v5305 = vunpack.c.l.b16 %v5265
  %v5306 = vunpack.c.l.b16 %v5266
  %v5307 = vunpack.c.l.b16 %v5267
  %v5308 = vunpack.c.l.b16 %v5268
  %v5309 = vunpack.c.l.b16 %v5269
  %v5310 = vunpack.c.l.b16 %v5270
  %v5311 = vunpack.c.l.b16 %v5271
  %v5312 = vunpack.c.l.b16 %v5272
  %v5313 = vunpack.c.l.b16 %v5273
  %v5314 = vunpack.c.l.b16 %v5274
  %v5315 = vpack.c.b16 %v5300, %v5299
  %v5316 = vpack.c.b16 %v5302, %v5301
  %v5317 = vpack.c.b16 %v5304, %v5303
  %v5318 = vpack.c.b16 %v5306, %v5305
  %v5319 = vpack.c.b16 %v5308, %v5307
  %v5320 = vpack.c.b16 %v5310, %v5309
  %v5321 = vpack.c.b16 %v5312, %v5311
  %v5322 = vpack.c.b16 %v5314, %v5313
  %5331 = vmatpush.bf16.msra.mxu0 %v5282
  %5332 = vmatpush.bf16.msra.mxu0 %v5281
  %5333 = vmatpush.bf16.msra.mxu0 %v5280
  %5334 = vmatpush.bf16.msra.mxu0 %v5279
  %5335 = vmatpush.bf16.msra.mxu0 %v5278
  %5336 = vmatpush.bf16.msra.mxu0 %v5277
  %5337 = vmatpush.bf16.msra.mxu0 %v5276
  %5338 = vmatpush.bf16.msra.mxu0 %v5275
  %5339 = vmatmul.bf16.gmra.mxu0 %v5315
  %v5340 = vpop.f32.mrf.mxu0
  %v5341 = vadd.f32 0.0, %v5340
  %v5342 = vpop.f32.mrf.mxu0
  %v5343 = vadd.f32 0.0, %v5342
  %5344 = vmatmul.bf16.gmra.mxu0 %v5316
  %v5345 = vpop.f32.mrf.mxu0
  %v5346 = vadd.f32 0.0, %v5345
  %v5347 = vpop.f32.mrf.mxu0
  %v5348 = vadd.f32 0.0, %v5347
  %5349 = vmatmul.bf16.gmra.mxu0 %v5317
  %v5350 = vpop.f32.mrf.mxu0
  %v5351 = vadd.f32 0.0, %v5350
  %v5352 = vpop.f32.mrf.mxu0
  %v5353 = vadd.f32 0.0, %v5352
  %5354 = vmatmul.bf16.gmra.mxu0 %v5318
  %v5355 = vpop.f32.mrf.mxu0
  %v5356 = vadd.f32 0.0, %v5355
  %v5357 = vpop.f32.mrf.mxu0
  %v5358 = vadd.f32 0.0, %v5357
  %5359 = vmatmul.bf16.gmra.mxu0 %v5319
  %v5360 = vpop.f32.mrf.mxu0
  %v5361 = vadd.f32 0.0, %v5360
  %v5362 = vpop.f32.mrf.mxu0
  %v5363 = vadd.f32 0.0, %v5362
  %5364 = vmatmul.bf16.gmra.mxu0 %v5320
  %v5365 = vpop.f32.mrf.mxu0
  %v5366 = vadd.f32 0.0, %v5365
  %v5367 = vpop.f32.mrf.mxu0
  %v5368 = vadd.f32 0.0, %v5367
  %5369 = vmatmul.bf16.gmra.mxu0 %v5321
  %v5370 = vpop.f32.mrf.mxu0
  %v5371 = vadd.f32 0.0, %v5370
  %v5372 = vpop.f32.mrf.mxu0
  %v5373 = vadd.f32 0.0, %v5372
  %5374 = vmatmul.bf16.gmra.mxu0 %v5322
  %v5375 = vpop.f32.mrf.mxu0
  %v5376 = vadd.f32 0.0, %v5375
  %v5377 = vpop.f32.mrf.mxu0
  %v5378 = vadd.f32 0.0, %v5377
  %5379 = vdwg.mxu0
  %v5380 = vadd.f32 %v5168, %v5341
  %v5381 = vadd.f32 %v5169, %v5343
  %v5382 = vadd.f32 %v5170, %v5346
  %v5383 = vadd.f32 %v5171, %v5348
  %v5384 = vadd.f32 %v5172, %v5351
  %v5385 = vadd.f32 %v5173, %v5353
  %v5386 = vadd.f32 %v5174, %v5356
  %v5387 = vadd.f32 %v5175, %v5358
  %v5388 = vadd.f32 %v5176, %v5361
  %v5389 = vadd.f32 %v5177, %v5363
  %v5390 = vadd.f32 %v5178, %v5366
  %v5391 = vadd.f32 %v5179, %v5368
  %v5392 = vadd.f32 %v5180, %v5371
  %v5393 = vadd.f32 %v5181, %v5373
  %v5394 = vadd.f32 %v5182, %v5376
  %v5395 = vadd.f32 %v5183, %v5378
  %s5396 = scalar_lea.vmem %s0, 200
  %v5397 = vld [vmem:[%s5396] sm:$0xf]
  %v5398 = vld [vmem:[%s5396 + $0x4] sm:$0xf]
  %v5401 = vunpack.c.l.b16 %v5397
  %v5402 = vunpack.c.l.b16 %v5398
  %v5403 = vpack.c.b16 %v5402, %v5401
  %5405 = vmatpush.bf16.msra.mxu0 0
  %5406 = vmatpush.bf16.msra.mxu0 0
  %5407 = vmatpush.bf16.msra.mxu0 0
  %5408 = vmatpush.bf16.msra.mxu0 0
  %5409 = vmatpush.bf16.msra.mxu0 0
  %5410 = vmatpush.bf16.msra.mxu0 0
  %5411 = vmatpush.bf16.msra.mxu0 0
  %5412 = vmatpush.bf16.msra.mxu0 %v5403
  %5413 = vmatmul.bf16.gmra.mxu0 %v115
  %v5414 = vpop.f32.mrf.mxu0
  %v5415 = vadd.f32 %v49, %v5414
  %v5416 = vpop.f32.mrf.mxu0
  %v5417 = vadd.f32 %v50, %v5416
  %5418 = vmatmul.bf16.gmra.mxu0 %v118
  %v5419 = vpop.f32.mrf.mxu0
  %v5420 = vadd.f32 %v51, %v5419
  %v5421 = vpop.f32.mrf.mxu0
  %v5422 = vadd.f32 %v52, %v5421
  %5423 = vmatmul.bf16.gmra.mxu0 %v121
  %v5424 = vpop.f32.mrf.mxu0
  %v5425 = vadd.f32 %v53, %v5424
  %v5426 = vpop.f32.mrf.mxu0
  %v5427 = vadd.f32 %v54, %v5426
  %5428 = vmatmul.bf16.gmra.mxu0 %v124
  %v5429 = vpop.f32.mrf.mxu0
  %v5430 = vadd.f32 %v55, %v5429
  %v5431 = vpop.f32.mrf.mxu0
  %v5432 = vadd.f32 %v56, %v5431
  %5433 = vmatmul.bf16.gmra.mxu0 %v127
  %v5434 = vpop.f32.mrf.mxu0
  %v5435 = vadd.f32 %v57, %v5434
  %v5436 = vpop.f32.mrf.mxu0
  %v5437 = vadd.f32 %v58, %v5436
  %5438 = vmatmul.bf16.gmra.mxu0 %v130
  %v5439 = vpop.f32.mrf.mxu0
  %v5440 = vadd.f32 %v59, %v5439
  %v5441 = vpop.f32.mrf.mxu0
  %v5442 = vadd.f32 %v60, %v5441
  %5443 = vmatmul.bf16.gmra.mxu0 %v133
  %v5444 = vpop.f32.mrf.mxu0
  %v5445 = vadd.f32 %v61, %v5444
  %v5446 = vpop.f32.mrf.mxu0
  %v5447 = vadd.f32 %v62, %v5446
  %5448 = vmatmul.bf16.gmra.mxu0 %v136
  %v5449 = vpop.f32.mrf.mxu0
  %v5450 = vadd.f32 %v63, %v5449
  %v5451 = vpop.f32.mrf.mxu0
  %v5452 = vadd.f32 %v64, %v5451
  %5453 = vdwg.mxu0
  %v5454 = vmax.f32 %v5415, 0.0
  %v5455 = vmax.f32 %v5417, 0.0
  %v5456 = vmax.f32 %v5420, 0.0
  %v5457 = vmax.f32 %v5422, 0.0
  %v5458 = vmax.f32 %v5425, 0.0
  %v5459 = vmax.f32 %v5427, 0.0
  %v5460 = vmax.f32 %v5430, 0.0
  %v5461 = vmax.f32 %v5432, 0.0
  %v5462 = vmax.f32 %v5435, 0.0
  %v5463 = vmax.f32 %v5437, 0.0
  %v5464 = vmax.f32 %v5440, 0.0
  %v5465 = vmax.f32 %v5442, 0.0
  %v5466 = vmax.f32 %v5445, 0.0
  %v5467 = vmax.f32 %v5447, 0.0
  %v5468 = vmax.f32 %v5450, 0.0
  %v5469 = vmax.f32 %v5452, 0.0
  %s5470 = scalar_lea.vmem %s3, 1600
  %v5471 = vld [vmem:[%s5470] sm:$0xf]
  %v5472 = vld [vmem:[%s5470 + $0x4] sm:$0xf]
  %v5473 = vld [vmem:[%s5470 + $0x8] sm:$0xf]
  %v5474 = vld [vmem:[%s5470 + $0xc] sm:$0xf]
  %v5475 = vld [vmem:[%s5470 + $0x10] sm:$0xf]
  %v5476 = vld [vmem:[%s5470 + $0x14] sm:$0xf]
  %v5477 = vld [vmem:[%s5470 + $0x18] sm:$0xf]
  %v5478 = vld [vmem:[%s5470 + $0x1c] sm:$0xf]
  %v5479 = vld [vmem:[%s5470 + $0x20] sm:$0xf]
  %v5480 = vld [vmem:[%s5470 + $0x24] sm:$0xf]
  %v5481 = vld [vmem:[%s5470 + $0x28] sm:$0xf]
  %v5482 = vld [vmem:[%s5470 + $0x2c] sm:$0xf]
  %v5483 = vld [vmem:[%s5470 + $0x30] sm:$0xf]
  %v5484 = vld [vmem:[%s5470 + $0x34] sm:$0xf]
  %v5485 = vld [vmem:[%s5470 + $0x38] sm:$0xf]
  %v5486 = vld [vmem:[%s5470 + $0x3c] sm:$0xf]
  %v5487 = vpack.c.bf16 %v5455, %v5454
  %v5488 = vpack.c.bf16 %v5457, %v5456
  %v5489 = vpack.c.bf16 %v5459, %v5458
  %v5490 = vpack.c.bf16 %v5461, %v5460
  %v5491 = vpack.c.bf16 %v5463, %v5462
  %v5492 = vpack.c.bf16 %v5465, %v5464
  %v5493 = vpack.c.bf16 %v5467, %v5466
  %v5494 = vpack.c.bf16 %v5469, %v5468
  %v5511 = vunpack.c.l.b16 %v5471
  %v5512 = vunpack.c.l.b16 %v5472
  %v5513 = vunpack.c.l.b16 %v5473
  %v5514 = vunpack.c.l.b16 %v5474
  %v5515 = vunpack.c.l.b16 %v5475
  %v5516 = vunpack.c.l.b16 %v5476
  %v5517 = vunpack.c.l.b16 %v5477
  %v5518 = vunpack.c.l.b16 %v5478
  %v5519 = vunpack.c.l.b16 %v5479
  %v5520 = vunpack.c.l.b16 %v5480
  %v5521 = vunpack.c.l.b16 %v5481
  %v5522 = vunpack.c.l.b16 %v5482
  %v5523 = vunpack.c.l.b16 %v5483
  %v5524 = vunpack.c.l.b16 %v5484
  %v5525 = vunpack.c.l.b16 %v5485
  %v5526 = vunpack.c.l.b16 %v5486
  %v5527 = vpack.c.b16 %v5512, %v5511
  %v5528 = vpack.c.b16 %v5514, %v5513
  %v5529 = vpack.c.b16 %v5516, %v5515
  %v5530 = vpack.c.b16 %v5518, %v5517
  %v5531 = vpack.c.b16 %v5520, %v5519
  %v5532 = vpack.c.b16 %v5522, %v5521
  %v5533 = vpack.c.b16 %v5524, %v5523
  %v5534 = vpack.c.b16 %v5526, %v5525
  %5543 = vmatpush.bf16.msra.mxu0 %v5494
  %5544 = vmatpush.bf16.msra.mxu0 %v5493
  %5545 = vmatpush.bf16.msra.mxu0 %v5492
  %5546 = vmatpush.bf16.msra.mxu0 %v5491
  %5547 = vmatpush.bf16.msra.mxu0 %v5490
  %5548 = vmatpush.bf16.msra.mxu0 %v5489
  %5549 = vmatpush.bf16.msra.mxu0 %v5488
  %5550 = vmatpush.bf16.msra.mxu0 %v5487
  %5551 = vmatmul.bf16.gmra.mxu0 %v5527
  %v5552 = vpop.f32.mrf.mxu0
  %v5553 = vadd.f32 0.0, %v5552
  %v5554 = vpop.f32.mrf.mxu0
  %v5555 = vadd.f32 0.0, %v5554
  %5556 = vmatmul.bf16.gmra.mxu0 %v5528
  %v5557 = vpop.f32.mrf.mxu0
  %v5558 = vadd.f32 0.0, %v5557
  %v5559 = vpop.f32.mrf.mxu0
  %v5560 = vadd.f32 0.0, %v5559
  %5561 = vmatmul.bf16.gmra.mxu0 %v5529
  %v5562 = vpop.f32.mrf.mxu0
  %v5563 = vadd.f32 0.0, %v5562
  %v5564 = vpop.f32.mrf.mxu0
  %v5565 = vadd.f32 0.0, %v5564
  %5566 = vmatmul.bf16.gmra.mxu0 %v5530
  %v5567 = vpop.f32.mrf.mxu0
  %v5568 = vadd.f32 0.0, %v5567
  %v5569 = vpop.f32.mrf.mxu0
  %v5570 = vadd.f32 0.0, %v5569
  %5571 = vmatmul.bf16.gmra.mxu0 %v5531
  %v5572 = vpop.f32.mrf.mxu0
  %v5573 = vadd.f32 0.0, %v5572
  %v5574 = vpop.f32.mrf.mxu0
  %v5575 = vadd.f32 0.0, %v5574
  %5576 = vmatmul.bf16.gmra.mxu0 %v5532
  %v5577 = vpop.f32.mrf.mxu0
  %v5578 = vadd.f32 0.0, %v5577
  %v5579 = vpop.f32.mrf.mxu0
  %v5580 = vadd.f32 0.0, %v5579
  %5581 = vmatmul.bf16.gmra.mxu0 %v5533
  %v5582 = vpop.f32.mrf.mxu0
  %v5583 = vadd.f32 0.0, %v5582
  %v5584 = vpop.f32.mrf.mxu0
  %v5585 = vadd.f32 0.0, %v5584
  %5586 = vmatmul.bf16.gmra.mxu0 %v5534
  %v5587 = vpop.f32.mrf.mxu0
  %v5588 = vadd.f32 0.0, %v5587
  %v5589 = vpop.f32.mrf.mxu0
  %v5590 = vadd.f32 0.0, %v5589
  %5591 = vdwg.mxu0
  %v5592 = vadd.f32 %v5380, %v5553
  %v5593 = vadd.f32 %v5381, %v5555
  %v5594 = vadd.f32 %v5382, %v5558
  %v5595 = vadd.f32 %v5383, %v5560
  %v5596 = vadd.f32 %v5384, %v5563
  %v5597 = vadd.f32 %v5385, %v5565
  %v5598 = vadd.f32 %v5386, %v5568
  %v5599 = vadd.f32 %v5387, %v5570
  %v5600 = vadd.f32 %v5388, %v5573
  %v5601 = vadd.f32 %v5389, %v5575
  %v5602 = vadd.f32 %v5390, %v5578
  %v5603 = vadd.f32 %v5391, %v5580
  %v5604 = vadd.f32 %v5392, %v5583
  %v5605 = vadd.f32 %v5393, %v5585
  %v5606 = vadd.f32 %v5394, %v5588
  %v5607 = vadd.f32 %v5395, %v5590
  %s5608 = scalar_lea.vmem %s0, 208
  %v5609 = vld [vmem:[%s5608] sm:$0xf]
  %v5610 = vld [vmem:[%s5608 + $0x4] sm:$0xf]
  %v5613 = vunpack.c.l.b16 %v5609
  %v5614 = vunpack.c.l.b16 %v5610
  %v5615 = vpack.c.b16 %v5614, %v5613
  %5617 = vmatpush.bf16.msra.mxu0 0
  %5618 = vmatpush.bf16.msra.mxu0 0
  %5619 = vmatpush.bf16.msra.mxu0 0
  %5620 = vmatpush.bf16.msra.mxu0 0
  %5621 = vmatpush.bf16.msra.mxu0 0
  %5622 = vmatpush.bf16.msra.mxu0 0
  %5623 = vmatpush.bf16.msra.mxu0 0
  %5624 = vmatpush.bf16.msra.mxu0 %v5615
  %5625 = vmatmul.bf16.gmra.mxu0 %v115
  %v5626 = vpop.f32.mrf.mxu0
  %v5627 = vadd.f32 %v49, %v5626
  %v5628 = vpop.f32.mrf.mxu0
  %v5629 = vadd.f32 %v50, %v5628
  %5630 = vmatmul.bf16.gmra.mxu0 %v118
  %v5631 = vpop.f32.mrf.mxu0
  %v5632 = vadd.f32 %v51, %v5631
  %v5633 = vpop.f32.mrf.mxu0
  %v5634 = vadd.f32 %v52, %v5633
  %5635 = vmatmul.bf16.gmra.mxu0 %v121
  %v5636 = vpop.f32.mrf.mxu0
  %v5637 = vadd.f32 %v53, %v5636
  %v5638 = vpop.f32.mrf.mxu0
  %v5639 = vadd.f32 %v54, %v5638
  %5640 = vmatmul.bf16.gmra.mxu0 %v124
  %v5641 = vpop.f32.mrf.mxu0
  %v5642 = vadd.f32 %v55, %v5641
  %v5643 = vpop.f32.mrf.mxu0
  %v5644 = vadd.f32 %v56, %v5643
  %5645 = vmatmul.bf16.gmra.mxu0 %v127
  %v5646 = vpop.f32.mrf.mxu0
  %v5647 = vadd.f32 %v57, %v5646
  %v5648 = vpop.f32.mrf.mxu0
  %v5649 = vadd.f32 %v58, %v5648
  %5650 = vmatmul.bf16.gmra.mxu0 %v130
  %v5651 = vpop.f32.mrf.mxu0
  %v5652 = vadd.f32 %v59, %v5651
  %v5653 = vpop.f32.mrf.mxu0
  %v5654 = vadd.f32 %v60, %v5653
  %5655 = vmatmul.bf16.gmra.mxu0 %v133
  %v5656 = vpop.f32.mrf.mxu0
  %v5657 = vadd.f32 %v61, %v5656
  %v5658 = vpop.f32.mrf.mxu0
  %v5659 = vadd.f32 %v62, %v5658
  %5660 = vmatmul.bf16.gmra.mxu0 %v136
  %v5661 = vpop.f32.mrf.mxu0
  %v5662 = vadd.f32 %v63, %v5661
  %v5663 = vpop.f32.mrf.mxu0
  %v5664 = vadd.f32 %v64, %v5663
  %5665 = vdwg.mxu0
  %v5666 = vmax.f32 %v5627, 0.0
  %v5667 = vmax.f32 %v5629, 0.0
  %v5668 = vmax.f32 %v5632, 0.0
  %v5669 = vmax.f32 %v5634, 0.0
  %v5670 = vmax.f32 %v5637, 0.0
  %v5671 = vmax.f32 %v5639, 0.0
  %v5672 = vmax.f32 %v5642, 0.0
  %v5673 = vmax.f32 %v5644, 0.0
  %v5674 = vmax.f32 %v5647, 0.0
  %v5675 = vmax.f32 %v5649, 0.0
  %v5676 = vmax.f32 %v5652, 0.0
  %v5677 = vmax.f32 %v5654, 0.0
  %v5678 = vmax.f32 %v5657, 0.0
  %v5679 = vmax.f32 %v5659, 0.0
  %v5680 = vmax.f32 %v5662, 0.0
  %v5681 = vmax.f32 %v5664, 0.0
  %s5682 = scalar_lea.vmem %s3, 1664
  %v5683 = vld [vmem:[%s5682] sm:$0xf]
  %v5684 = vld [vmem:[%s5682 + $0x4] sm:$0xf]
  %v5685 = vld [vmem:[%s5682 + $0x8] sm:$0xf]
  %v5686 = vld [vmem:[%s5682 + $0xc] sm:$0xf]
  %v5687 = vld [vmem:[%s5682 + $0x10] sm:$0xf]
  %v5688 = vld [vmem:[%s5682 + $0x14] sm:$0xf]
  %v5689 = vld [vmem:[%s5682 + $0x18] sm:$0xf]
  %v5690 = vld [vmem:[%s5682 + $0x1c] sm:$0xf]
  %v5691 = vld [vmem:[%s5682 + $0x20] sm:$0xf]
  %v5692 = vld [vmem:[%s5682 + $0x24] sm:$0xf]
  %v5693 = vld [vmem:[%s5682 + $0x28] sm:$0xf]
  %v5694 = vld [vmem:[%s5682 + $0x2c] sm:$0xf]
  %v5695 = vld [vmem:[%s5682 + $0x30] sm:$0xf]
  %v5696 = vld [vmem:[%s5682 + $0x34] sm:$0xf]
  %v5697 = vld [vmem:[%s5682 + $0x38] sm:$0xf]
  %v5698 = vld [vmem:[%s5682 + $0x3c] sm:$0xf]
  %v5699 = vpack.c.bf16 %v5667, %v5666
  %v5700 = vpack.c.bf16 %v5669, %v5668
  %v5701 = vpack.c.bf16 %v5671, %v5670
  %v5702 = vpack.c.bf16 %v5673, %v5672
  %v5703 = vpack.c.bf16 %v5675, %v5674
  %v5704 = vpack.c.bf16 %v5677, %v5676
  %v5705 = vpack.c.bf16 %v5679, %v5678
  %v5706 = vpack.c.bf16 %v5681, %v5680
  %v5723 = vunpack.c.l.b16 %v5683
  %v5724 = vunpack.c.l.b16 %v5684
  %v5725 = vunpack.c.l.b16 %v5685
  %v5726 = vunpack.c.l.b16 %v5686
  %v5727 = vunpack.c.l.b16 %v5687
  %v5728 = vunpack.c.l.b16 %v5688
  %v5729 = vunpack.c.l.b16 %v5689
  %v5730 = vunpack.c.l.b16 %v5690
  %v5731 = vunpack.c.l.b16 %v5691
  %v5732 = vunpack.c.l.b16 %v5692
  %v5733 = vunpack.c.l.b16 %v5693
  %v5734 = vunpack.c.l.b16 %v5694
  %v5735 = vunpack.c.l.b16 %v5695
  %v5736 = vunpack.c.l.b16 %v5696
  %v5737 = vunpack.c.l.b16 %v5697
  %v5738 = vunpack.c.l.b16 %v5698
  %v5739 = vpack.c.b16 %v5724, %v5723
  %v5740 = vpack.c.b16 %v5726, %v5725
  %v5741 = vpack.c.b16 %v5728, %v5727
  %v5742 = vpack.c.b16 %v5730, %v5729
  %v5743 = vpack.c.b16 %v5732, %v5731
  %v5744 = vpack.c.b16 %v5734, %v5733
  %v5745 = vpack.c.b16 %v5736, %v5735
  %v5746 = vpack.c.b16 %v5738, %v5737
  %5755 = vmatpush.bf16.msra.mxu0 %v5706
  %5756 = vmatpush.bf16.msra.mxu0 %v5705
  %5757 = vmatpush.bf16.msra.mxu0 %v5704
  %5758 = vmatpush.bf16.msra.mxu0 %v5703
  %5759 = vmatpush.bf16.msra.mxu0 %v5702
  %5760 = vmatpush.bf16.msra.mxu0 %v5701
  %5761 = vmatpush.bf16.msra.mxu0 %v5700
  %5762 = vmatpush.bf16.msra.mxu0 %v5699
  %5763 = vmatmul.bf16.gmra.mxu0 %v5739
  %v5764 = vpop.f32.mrf.mxu0
  %v5765 = vadd.f32 0.0, %v5764
  %v5766 = vpop.f32.mrf.mxu0
  %v5767 = vadd.f32 0.0, %v5766
  %5768 = vmatmul.bf16.gmra.mxu0 %v5740
  %v5769 = vpop.f32.mrf.mxu0
  %v5770 = vadd.f32 0.0, %v5769
  %v5771 = vpop.f32.mrf.mxu0
  %v5772 = vadd.f32 0.0, %v5771
  %5773 = vmatmul.bf16.gmra.mxu0 %v5741
  %v5774 = vpop.f32.mrf.mxu0
  %v5775 = vadd.f32 0.0, %v5774
  %v5776 = vpop.f32.mrf.mxu0
  %v5777 = vadd.f32 0.0, %v5776
  %5778 = vmatmul.bf16.gmra.mxu0 %v5742
  %v5779 = vpop.f32.mrf.mxu0
  %v5780 = vadd.f32 0.0, %v5779
  %v5781 = vpop.f32.mrf.mxu0
  %v5782 = vadd.f32 0.0, %v5781
  %5783 = vmatmul.bf16.gmra.mxu0 %v5743
  %v5784 = vpop.f32.mrf.mxu0
  %v5785 = vadd.f32 0.0, %v5784
  %v5786 = vpop.f32.mrf.mxu0
  %v5787 = vadd.f32 0.0, %v5786
  %5788 = vmatmul.bf16.gmra.mxu0 %v5744
  %v5789 = vpop.f32.mrf.mxu0
  %v5790 = vadd.f32 0.0, %v5789
  %v5791 = vpop.f32.mrf.mxu0
  %v5792 = vadd.f32 0.0, %v5791
  %5793 = vmatmul.bf16.gmra.mxu0 %v5745
  %v5794 = vpop.f32.mrf.mxu0
  %v5795 = vadd.f32 0.0, %v5794
  %v5796 = vpop.f32.mrf.mxu0
  %v5797 = vadd.f32 0.0, %v5796
  %5798 = vmatmul.bf16.gmra.mxu0 %v5746
  %v5799 = vpop.f32.mrf.mxu0
  %v5800 = vadd.f32 0.0, %v5799
  %v5801 = vpop.f32.mrf.mxu0
  %v5802 = vadd.f32 0.0, %v5801
  %5803 = vdwg.mxu0
  %v5804 = vadd.f32 %v5592, %v5765
  %v5805 = vadd.f32 %v5593, %v5767
  %v5806 = vadd.f32 %v5594, %v5770
  %v5807 = vadd.f32 %v5595, %v5772
  %v5808 = vadd.f32 %v5596, %v5775
  %v5809 = vadd.f32 %v5597, %v5777
  %v5810 = vadd.f32 %v5598, %v5780
  %v5811 = vadd.f32 %v5599, %v5782
  %v5812 = vadd.f32 %v5600, %v5785
  %v5813 = vadd.f32 %v5601, %v5787
  %v5814 = vadd.f32 %v5602, %v5790
  %v5815 = vadd.f32 %v5603, %v5792
  %v5816 = vadd.f32 %v5604, %v5795
  %v5817 = vadd.f32 %v5605, %v5797
  %v5818 = vadd.f32 %v5606, %v5800
  %v5819 = vadd.f32 %v5607, %v5802
  %s5820 = scalar_lea.vmem %s0, 216
  %v5821 = vld [vmem:[%s5820] sm:$0xf]
  %v5822 = vld [vmem:[%s5820 + $0x4] sm:$0xf]
  %v5825 = vunpack.c.l.b16 %v5821
  %v5826 = vunpack.c.l.b16 %v5822
  %v5827 = vpack.c.b16 %v5826, %v5825
  %5829 = vmatpush.bf16.msra.mxu0 0
  %5830 = vmatpush.bf16.msra.mxu0 0
  %5831 = vmatpush.bf16.msra.mxu0 0
  %5832 = vmatpush.bf16.msra.mxu0 0
  %5833 = vmatpush.bf16.msra.mxu0 0
  %5834 = vmatpush.bf16.msra.mxu0 0
  %5835 = vmatpush.bf16.msra.mxu0 0
  %5836 = vmatpush.bf16.msra.mxu0 %v5827
  %5837 = vmatmul.bf16.gmra.mxu0 %v115
  %v5838 = vpop.f32.mrf.mxu0
  %v5839 = vadd.f32 %v49, %v5838
  %v5840 = vpop.f32.mrf.mxu0
  %v5841 = vadd.f32 %v50, %v5840
  %5842 = vmatmul.bf16.gmra.mxu0 %v118
  %v5843 = vpop.f32.mrf.mxu0
  %v5844 = vadd.f32 %v51, %v5843
  %v5845 = vpop.f32.mrf.mxu0
  %v5846 = vadd.f32 %v52, %v5845
  %5847 = vmatmul.bf16.gmra.mxu0 %v121
  %v5848 = vpop.f32.mrf.mxu0
  %v5849 = vadd.f32 %v53, %v5848
  %v5850 = vpop.f32.mrf.mxu0
  %v5851 = vadd.f32 %v54, %v5850
  %5852 = vmatmul.bf16.gmra.mxu0 %v124
  %v5853 = vpop.f32.mrf.mxu0
  %v5854 = vadd.f32 %v55, %v5853
  %v5855 = vpop.f32.mrf.mxu0
  %v5856 = vadd.f32 %v56, %v5855
  %5857 = vmatmul.bf16.gmra.mxu0 %v127
  %v5858 = vpop.f32.mrf.mxu0
  %v5859 = vadd.f32 %v57, %v5858
  %v5860 = vpop.f32.mrf.mxu0
  %v5861 = vadd.f32 %v58, %v5860
  %5862 = vmatmul.bf16.gmra.mxu0 %v130
  %v5863 = vpop.f32.mrf.mxu0
  %v5864 = vadd.f32 %v59, %v5863
  %v5865 = vpop.f32.mrf.mxu0
  %v5866 = vadd.f32 %v60, %v5865
  %5867 = vmatmul.bf16.gmra.mxu0 %v133
  %v5868 = vpop.f32.mrf.mxu0
  %v5869 = vadd.f32 %v61, %v5868
  %v5870 = vpop.f32.mrf.mxu0
  %v5871 = vadd.f32 %v62, %v5870
  %5872 = vmatmul.bf16.gmra.mxu0 %v136
  %v5873 = vpop.f32.mrf.mxu0
  %v5874 = vadd.f32 %v63, %v5873
  %v5875 = vpop.f32.mrf.mxu0
  %v5876 = vadd.f32 %v64, %v5875
  %5877 = vdwg.mxu0
  %v5878 = vmax.f32 %v5839, 0.0
  %v5879 = vmax.f32 %v5841, 0.0
  %v5880 = vmax.f32 %v5844, 0.0
  %v5881 = vmax.f32 %v5846, 0.0
  %v5882 = vmax.f32 %v5849, 0.0
  %v5883 = vmax.f32 %v5851, 0.0
  %v5884 = vmax.f32 %v5854, 0.0
  %v5885 = vmax.f32 %v5856, 0.0
  %v5886 = vmax.f32 %v5859, 0.0
  %v5887 = vmax.f32 %v5861, 0.0
  %v5888 = vmax.f32 %v5864, 0.0
  %v5889 = vmax.f32 %v5866, 0.0
  %v5890 = vmax.f32 %v5869, 0.0
  %v5891 = vmax.f32 %v5871, 0.0
  %v5892 = vmax.f32 %v5874, 0.0
  %v5893 = vmax.f32 %v5876, 0.0
  %s5894 = scalar_lea.vmem %s3, 1728
  %v5895 = vld [vmem:[%s5894] sm:$0xf]
  %v5896 = vld [vmem:[%s5894 + $0x4] sm:$0xf]
  %v5897 = vld [vmem:[%s5894 + $0x8] sm:$0xf]
  %v5898 = vld [vmem:[%s5894 + $0xc] sm:$0xf]
  %v5899 = vld [vmem:[%s5894 + $0x10] sm:$0xf]
  %v5900 = vld [vmem:[%s5894 + $0x14] sm:$0xf]
  %v5901 = vld [vmem:[%s5894 + $0x18] sm:$0xf]
  %v5902 = vld [vmem:[%s5894 + $0x1c] sm:$0xf]
  %v5903 = vld [vmem:[%s5894 + $0x20] sm:$0xf]
  %v5904 = vld [vmem:[%s5894 + $0x24] sm:$0xf]
  %v5905 = vld [vmem:[%s5894 + $0x28] sm:$0xf]
  %v5906 = vld [vmem:[%s5894 + $0x2c] sm:$0xf]
  %v5907 = vld [vmem:[%s5894 + $0x30] sm:$0xf]
  %v5908 = vld [vmem:[%s5894 + $0x34] sm:$0xf]
  %v5909 = vld [vmem:[%s5894 + $0x38] sm:$0xf]
  %v5910 = vld [vmem:[%s5894 + $0x3c] sm:$0xf]
  %v5911 = vpack.c.bf16 %v5879, %v5878
  %v5912 = vpack.c.bf16 %v5881, %v5880
  %v5913 = vpack.c.bf16 %v5883, %v5882
  %v5914 = vpack.c.bf16 %v5885, %v5884
  %v5915 = vpack.c.bf16 %v5887, %v5886
  %v5916 = vpack.c.bf16 %v5889, %v5888
  %v5917 = vpack.c.bf16 %v5891, %v5890
  %v5918 = vpack.c.bf16 %v5893, %v5892
  %v5935 = vunpack.c.l.b16 %v5895
  %v5936 = vunpack.c.l.b16 %v5896
  %v5937 = vunpack.c.l.b16 %v5897
  %v5938 = vunpack.c.l.b16 %v5898
  %v5939 = vunpack.c.l.b16 %v5899
  %v5940 = vunpack.c.l.b16 %v5900
  %v5941 = vunpack.c.l.b16 %v5901
  %v5942 = vunpack.c.l.b16 %v5902
  %v5943 = vunpack.c.l.b16 %v5903
  %v5944 = vunpack.c.l.b16 %v5904
  %v5945 = vunpack.c.l.b16 %v5905
  %v5946 = vunpack.c.l.b16 %v5906
  %v5947 = vunpack.c.l.b16 %v5907
  %v5948 = vunpack.c.l.b16 %v5908
  %v5949 = vunpack.c.l.b16 %v5909
  %v5950 = vunpack.c.l.b16 %v5910
  %v5951 = vpack.c.b16 %v5936, %v5935
  %v5952 = vpack.c.b16 %v5938, %v5937
  %v5953 = vpack.c.b16 %v5940, %v5939
  %v5954 = vpack.c.b16 %v5942, %v5941
  %v5955 = vpack.c.b16 %v5944, %v5943
  %v5956 = vpack.c.b16 %v5946, %v5945
  %v5957 = vpack.c.b16 %v5948, %v5947
  %v5958 = vpack.c.b16 %v5950, %v5949
  %5967 = vmatpush.bf16.msra.mxu0 %v5918
  %5968 = vmatpush.bf16.msra.mxu0 %v5917
  %5969 = vmatpush.bf16.msra.mxu0 %v5916
  %5970 = vmatpush.bf16.msra.mxu0 %v5915
  %5971 = vmatpush.bf16.msra.mxu0 %v5914
  %5972 = vmatpush.bf16.msra.mxu0 %v5913
  %5973 = vmatpush.bf16.msra.mxu0 %v5912
  %5974 = vmatpush.bf16.msra.mxu0 %v5911
  %5975 = vmatmul.bf16.gmra.mxu0 %v5951
  %v5976 = vpop.f32.mrf.mxu0
  %v5977 = vadd.f32 0.0, %v5976
  %v5978 = vpop.f32.mrf.mxu0
  %v5979 = vadd.f32 0.0, %v5978
  %5980 = vmatmul.bf16.gmra.mxu0 %v5952
  %v5981 = vpop.f32.mrf.mxu0
  %v5982 = vadd.f32 0.0, %v5981
  %v5983 = vpop.f32.mrf.mxu0
  %v5984 = vadd.f32 0.0, %v5983
  %5985 = vmatmul.bf16.gmra.mxu0 %v5953
  %v5986 = vpop.f32.mrf.mxu0
  %v5987 = vadd.f32 0.0, %v5986
  %v5988 = vpop.f32.mrf.mxu0
  %v5989 = vadd.f32 0.0, %v5988
  %5990 = vmatmul.bf16.gmra.mxu0 %v5954
  %v5991 = vpop.f32.mrf.mxu0
  %v5992 = vadd.f32 0.0, %v5991
  %v5993 = vpop.f32.mrf.mxu0
  %v5994 = vadd.f32 0.0, %v5993
  %5995 = vmatmul.bf16.gmra.mxu0 %v5955
  %v5996 = vpop.f32.mrf.mxu0
  %v5997 = vadd.f32 0.0, %v5996
  %v5998 = vpop.f32.mrf.mxu0
  %v5999 = vadd.f32 0.0, %v5998
  %6000 = vmatmul.bf16.gmra.mxu0 %v5956
  %v6001 = vpop.f32.mrf.mxu0
  %v6002 = vadd.f32 0.0, %v6001
  %v6003 = vpop.f32.mrf.mxu0
  %v6004 = vadd.f32 0.0, %v6003
  %6005 = vmatmul.bf16.gmra.mxu0 %v5957
  %v6006 = vpop.f32.mrf.mxu0
  %v6007 = vadd.f32 0.0, %v6006
  %v6008 = vpop.f32.mrf.mxu0
  %v6009 = vadd.f32 0.0, %v6008
  %6010 = vmatmul.bf16.gmra.mxu0 %v5958
  %v6011 = vpop.f32.mrf.mxu0
  %v6012 = vadd.f32 0.0, %v6011
  %v6013 = vpop.f32.mrf.mxu0
  %v6014 = vadd.f32 0.0, %v6013
  %6015 = vdwg.mxu0
  %v6016 = vadd.f32 %v5804, %v5977
  %v6017 = vadd.f32 %v5805, %v5979
  %v6018 = vadd.f32 %v5806, %v5982
  %v6019 = vadd.f32 %v5807, %v5984
  %v6020 = vadd.f32 %v5808, %v5987
  %v6021 = vadd.f32 %v5809, %v5989
  %v6022 = vadd.f32 %v5810, %v5992
  %v6023 = vadd.f32 %v5811, %v5994
  %v6024 = vadd.f32 %v5812, %v5997
  %v6025 = vadd.f32 %v5813, %v5999
  %v6026 = vadd.f32 %v5814, %v6002
  %v6027 = vadd.f32 %v5815, %v6004
  %v6028 = vadd.f32 %v5816, %v6007
  %v6029 = vadd.f32 %v5817, %v6009
  %v6030 = vadd.f32 %v5818, %v6012
  %v6031 = vadd.f32 %v5819, %v6014
  %s6032 = scalar_lea.vmem %s0, 224
  %v6033 = vld [vmem:[%s6032] sm:$0xf]
  %v6034 = vld [vmem:[%s6032 + $0x4] sm:$0xf]
  %v6037 = vunpack.c.l.b16 %v6033
  %v6038 = vunpack.c.l.b16 %v6034
  %v6039 = vpack.c.b16 %v6038, %v6037
  %6041 = vmatpush.bf16.msra.mxu0 0
  %6042 = vmatpush.bf16.msra.mxu0 0
  %6043 = vmatpush.bf16.msra.mxu0 0
  %6044 = vmatpush.bf16.msra.mxu0 0
  %6045 = vmatpush.bf16.msra.mxu0 0
  %6046 = vmatpush.bf16.msra.mxu0 0
  %6047 = vmatpush.bf16.msra.mxu0 0
  %6048 = vmatpush.bf16.msra.mxu0 %v6039
  %6049 = vmatmul.bf16.gmra.mxu0 %v115
  %v6050 = vpop.f32.mrf.mxu0
  %v6051 = vadd.f32 %v49, %v6050
  %v6052 = vpop.f32.mrf.mxu0
  %v6053 = vadd.f32 %v50, %v6052
  %6054 = vmatmul.bf16.gmra.mxu0 %v118
  %v6055 = vpop.f32.mrf.mxu0
  %v6056 = vadd.f32 %v51, %v6055
  %v6057 = vpop.f32.mrf.mxu0
  %v6058 = vadd.f32 %v52, %v6057
  %6059 = vmatmul.bf16.gmra.mxu0 %v121
  %v6060 = vpop.f32.mrf.mxu0
  %v6061 = vadd.f32 %v53, %v6060
  %v6062 = vpop.f32.mrf.mxu0
  %v6063 = vadd.f32 %v54, %v6062
  %6064 = vmatmul.bf16.gmra.mxu0 %v124
  %v6065 = vpop.f32.mrf.mxu0
  %v6066 = vadd.f32 %v55, %v6065
  %v6067 = vpop.f32.mrf.mxu0
  %v6068 = vadd.f32 %v56, %v6067
  %6069 = vmatmul.bf16.gmra.mxu0 %v127
  %v6070 = vpop.f32.mrf.mxu0
  %v6071 = vadd.f32 %v57, %v6070
  %v6072 = vpop.f32.mrf.mxu0
  %v6073 = vadd.f32 %v58, %v6072
  %6074 = vmatmul.bf16.gmra.mxu0 %v130
  %v6075 = vpop.f32.mrf.mxu0
  %v6076 = vadd.f32 %v59, %v6075
  %v6077 = vpop.f32.mrf.mxu0
  %v6078 = vadd.f32 %v60, %v6077
  %6079 = vmatmul.bf16.gmra.mxu0 %v133
  %v6080 = vpop.f32.mrf.mxu0
  %v6081 = vadd.f32 %v61, %v6080
  %v6082 = vpop.f32.mrf.mxu0
  %v6083 = vadd.f32 %v62, %v6082
  %6084 = vmatmul.bf16.gmra.mxu0 %v136
  %v6085 = vpop.f32.mrf.mxu0
  %v6086 = vadd.f32 %v63, %v6085
  %v6087 = vpop.f32.mrf.mxu0
  %v6088 = vadd.f32 %v64, %v6087
  %6089 = vdwg.mxu0
  %v6090 = vmax.f32 %v6051, 0.0
  %v6091 = vmax.f32 %v6053, 0.0
  %v6092 = vmax.f32 %v6056, 0.0
  %v6093 = vmax.f32 %v6058, 0.0
  %v6094 = vmax.f32 %v6061, 0.0
  %v6095 = vmax.f32 %v6063, 0.0
  %v6096 = vmax.f32 %v6066, 0.0
  %v6097 = vmax.f32 %v6068, 0.0
  %v6098 = vmax.f32 %v6071, 0.0
  %v6099 = vmax.f32 %v6073, 0.0
  %v6100 = vmax.f32 %v6076, 0.0
  %v6101 = vmax.f32 %v6078, 0.0
  %v6102 = vmax.f32 %v6081, 0.0
  %v6103 = vmax.f32 %v6083, 0.0
  %v6104 = vmax.f32 %v6086, 0.0
  %v6105 = vmax.f32 %v6088, 0.0
  %s6106 = scalar_lea.vmem %s3, 1792
  %v6107 = vld [vmem:[%s6106] sm:$0xf]
  %v6108 = vld [vmem:[%s6106 + $0x4] sm:$0xf]
  %v6109 = vld [vmem:[%s6106 + $0x8] sm:$0xf]
  %v6110 = vld [vmem:[%s6106 + $0xc] sm:$0xf]
  %v6111 = vld [vmem:[%s6106 + $0x10] sm:$0xf]
  %v6112 = vld [vmem:[%s6106 + $0x14] sm:$0xf]
  %v6113 = vld [vmem:[%s6106 + $0x18] sm:$0xf]
  %v6114 = vld [vmem:[%s6106 + $0x1c] sm:$0xf]
  %v6115 = vld [vmem:[%s6106 + $0x20] sm:$0xf]
  %v6116 = vld [vmem:[%s6106 + $0x24] sm:$0xf]
  %v6117 = vld [vmem:[%s6106 + $0x28] sm:$0xf]
  %v6118 = vld [vmem:[%s6106 + $0x2c] sm:$0xf]
  %v6119 = vld [vmem:[%s6106 + $0x30] sm:$0xf]
  %v6120 = vld [vmem:[%s6106 + $0x34] sm:$0xf]
  %v6121 = vld [vmem:[%s6106 + $0x38] sm:$0xf]
  %v6122 = vld [vmem:[%s6106 + $0x3c] sm:$0xf]
  %v6123 = vpack.c.bf16 %v6091, %v6090
  %v6124 = vpack.c.bf16 %v6093, %v6092
  %v6125 = vpack.c.bf16 %v6095, %v6094
  %v6126 = vpack.c.bf16 %v6097, %v6096
  %v6127 = vpack.c.bf16 %v6099, %v6098
  %v6128 = vpack.c.bf16 %v6101, %v6100
  %v6129 = vpack.c.bf16 %v6103, %v6102
  %v6130 = vpack.c.bf16 %v6105, %v6104
  %v6147 = vunpack.c.l.b16 %v6107
  %v6148 = vunpack.c.l.b16 %v6108
  %v6149 = vunpack.c.l.b16 %v6109
  %v6150 = vunpack.c.l.b16 %v6110
  %v6151 = vunpack.c.l.b16 %v6111
  %v6152 = vunpack.c.l.b16 %v6112
  %v6153 = vunpack.c.l.b16 %v6113
  %v6154 = vunpack.c.l.b16 %v6114
  %v6155 = vunpack.c.l.b16 %v6115
  %v6156 = vunpack.c.l.b16 %v6116
  %v6157 = vunpack.c.l.b16 %v6117
  %v6158 = vunpack.c.l.b16 %v6118
  %v6159 = vunpack.c.l.b16 %v6119
  %v6160 = vunpack.c.l.b16 %v6120
  %v6161 = vunpack.c.l.b16 %v6121
  %v6162 = vunpack.c.l.b16 %v6122
  %v6163 = vpack.c.b16 %v6148, %v6147
  %v6164 = vpack.c.b16 %v6150, %v6149
  %v6165 = vpack.c.b16 %v6152, %v6151
  %v6166 = vpack.c.b16 %v6154, %v6153
  %v6167 = vpack.c.b16 %v6156, %v6155
  %v6168 = vpack.c.b16 %v6158, %v6157
  %v6169 = vpack.c.b16 %v6160, %v6159
  %v6170 = vpack.c.b16 %v6162, %v6161
  %6179 = vmatpush.bf16.msra.mxu0 %v6130
  %6180 = vmatpush.bf16.msra.mxu0 %v6129
  %6181 = vmatpush.bf16.msra.mxu0 %v6128
  %6182 = vmatpush.bf16.msra.mxu0 %v6127
  %6183 = vmatpush.bf16.msra.mxu0 %v6126
  %6184 = vmatpush.bf16.msra.mxu0 %v6125
  %6185 = vmatpush.bf16.msra.mxu0 %v6124
  %6186 = vmatpush.bf16.msra.mxu0 %v6123
  %6187 = vmatmul.bf16.gmra.mxu0 %v6163
  %v6188 = vpop.f32.mrf.mxu0
  %v6189 = vadd.f32 0.0, %v6188
  %v6190 = vpop.f32.mrf.mxu0
  %v6191 = vadd.f32 0.0, %v6190
  %6192 = vmatmul.bf16.gmra.mxu0 %v6164
  %v6193 = vpop.f32.mrf.mxu0
  %v6194 = vadd.f32 0.0, %v6193
  %v6195 = vpop.f32.mrf.mxu0
  %v6196 = vadd.f32 0.0, %v6195
  %6197 = vmatmul.bf16.gmra.mxu0 %v6165
  %v6198 = vpop.f32.mrf.mxu0
  %v6199 = vadd.f32 0.0, %v6198
  %v6200 = vpop.f32.mrf.mxu0
  %v6201 = vadd.f32 0.0, %v6200
  %6202 = vmatmul.bf16.gmra.mxu0 %v6166
  %v6203 = vpop.f32.mrf.mxu0
  %v6204 = vadd.f32 0.0, %v6203
  %v6205 = vpop.f32.mrf.mxu0
  %v6206 = vadd.f32 0.0, %v6205
  %6207 = vmatmul.bf16.gmra.mxu0 %v6167
  %v6208 = vpop.f32.mrf.mxu0
  %v6209 = vadd.f32 0.0, %v6208
  %v6210 = vpop.f32.mrf.mxu0
  %v6211 = vadd.f32 0.0, %v6210
  %6212 = vmatmul.bf16.gmra.mxu0 %v6168
  %v6213 = vpop.f32.mrf.mxu0
  %v6214 = vadd.f32 0.0, %v6213
  %v6215 = vpop.f32.mrf.mxu0
  %v6216 = vadd.f32 0.0, %v6215
  %6217 = vmatmul.bf16.gmra.mxu0 %v6169
  %v6218 = vpop.f32.mrf.mxu0
  %v6219 = vadd.f32 0.0, %v6218
  %v6220 = vpop.f32.mrf.mxu0
  %v6221 = vadd.f32 0.0, %v6220
  %6222 = vmatmul.bf16.gmra.mxu0 %v6170
  %v6223 = vpop.f32.mrf.mxu0
  %v6224 = vadd.f32 0.0, %v6223
  %v6225 = vpop.f32.mrf.mxu0
  %v6226 = vadd.f32 0.0, %v6225
  %6227 = vdwg.mxu0
  %v6228 = vadd.f32 %v6016, %v6189
  %v6229 = vadd.f32 %v6017, %v6191
  %v6230 = vadd.f32 %v6018, %v6194
  %v6231 = vadd.f32 %v6019, %v6196
  %v6232 = vadd.f32 %v6020, %v6199
  %v6233 = vadd.f32 %v6021, %v6201
  %v6234 = vadd.f32 %v6022, %v6204
  %v6235 = vadd.f32 %v6023, %v6206
  %v6236 = vadd.f32 %v6024, %v6209
  %v6237 = vadd.f32 %v6025, %v6211
  %v6238 = vadd.f32 %v6026, %v6214
  %v6239 = vadd.f32 %v6027, %v6216
  %v6240 = vadd.f32 %v6028, %v6219
  %v6241 = vadd.f32 %v6029, %v6221
  %v6242 = vadd.f32 %v6030, %v6224
  %v6243 = vadd.f32 %v6031, %v6226
  %s6244 = scalar_lea.vmem %s0, 232
  %v6245 = vld [vmem:[%s6244] sm:$0xf]
  %v6246 = vld [vmem:[%s6244 + $0x4] sm:$0xf]
  %v6249 = vunpack.c.l.b16 %v6245
  %v6250 = vunpack.c.l.b16 %v6246
  %v6251 = vpack.c.b16 %v6250, %v6249
  %6253 = vmatpush.bf16.msra.mxu0 0
  %6254 = vmatpush.bf16.msra.mxu0 0
  %6255 = vmatpush.bf16.msra.mxu0 0
  %6256 = vmatpush.bf16.msra.mxu0 0
  %6257 = vmatpush.bf16.msra.mxu0 0
  %6258 = vmatpush.bf16.msra.mxu0 0
  %6259 = vmatpush.bf16.msra.mxu0 0
  %6260 = vmatpush.bf16.msra.mxu0 %v6251
  %6261 = vmatmul.bf16.gmra.mxu0 %v115
  %v6262 = vpop.f32.mrf.mxu0
  %v6263 = vadd.f32 %v49, %v6262
  %v6264 = vpop.f32.mrf.mxu0
  %v6265 = vadd.f32 %v50, %v6264
  %6266 = vmatmul.bf16.gmra.mxu0 %v118
  %v6267 = vpop.f32.mrf.mxu0
  %v6268 = vadd.f32 %v51, %v6267
  %v6269 = vpop.f32.mrf.mxu0
  %v6270 = vadd.f32 %v52, %v6269
  %6271 = vmatmul.bf16.gmra.mxu0 %v121
  %v6272 = vpop.f32.mrf.mxu0
  %v6273 = vadd.f32 %v53, %v6272
  %v6274 = vpop.f32.mrf.mxu0
  %v6275 = vadd.f32 %v54, %v6274
  %6276 = vmatmul.bf16.gmra.mxu0 %v124
  %v6277 = vpop.f32.mrf.mxu0
  %v6278 = vadd.f32 %v55, %v6277
  %v6279 = vpop.f32.mrf.mxu0
  %v6280 = vadd.f32 %v56, %v6279
  %6281 = vmatmul.bf16.gmra.mxu0 %v127
  %v6282 = vpop.f32.mrf.mxu0
  %v6283 = vadd.f32 %v57, %v6282
  %v6284 = vpop.f32.mrf.mxu0
  %v6285 = vadd.f32 %v58, %v6284
  %6286 = vmatmul.bf16.gmra.mxu0 %v130
  %v6287 = vpop.f32.mrf.mxu0
  %v6288 = vadd.f32 %v59, %v6287
  %v6289 = vpop.f32.mrf.mxu0
  %v6290 = vadd.f32 %v60, %v6289
  %6291 = vmatmul.bf16.gmra.mxu0 %v133
  %v6292 = vpop.f32.mrf.mxu0
  %v6293 = vadd.f32 %v61, %v6292
  %v6294 = vpop.f32.mrf.mxu0
  %v6295 = vadd.f32 %v62, %v6294
  %6296 = vmatmul.bf16.gmra.mxu0 %v136
  %v6297 = vpop.f32.mrf.mxu0
  %v6298 = vadd.f32 %v63, %v6297
  %v6299 = vpop.f32.mrf.mxu0
  %v6300 = vadd.f32 %v64, %v6299
  %6301 = vdwg.mxu0
  %v6302 = vmax.f32 %v6263, 0.0
  %v6303 = vmax.f32 %v6265, 0.0
  %v6304 = vmax.f32 %v6268, 0.0
  %v6305 = vmax.f32 %v6270, 0.0
  %v6306 = vmax.f32 %v6273, 0.0
  %v6307 = vmax.f32 %v6275, 0.0
  %v6308 = vmax.f32 %v6278, 0.0
  %v6309 = vmax.f32 %v6280, 0.0
  %v6310 = vmax.f32 %v6283, 0.0
  %v6311 = vmax.f32 %v6285, 0.0
  %v6312 = vmax.f32 %v6288, 0.0
  %v6313 = vmax.f32 %v6290, 0.0
  %v6314 = vmax.f32 %v6293, 0.0
  %v6315 = vmax.f32 %v6295, 0.0
  %v6316 = vmax.f32 %v6298, 0.0
  %v6317 = vmax.f32 %v6300, 0.0
  %s6318 = scalar_lea.vmem %s3, 1856
  %v6319 = vld [vmem:[%s6318] sm:$0xf]
  %v6320 = vld [vmem:[%s6318 + $0x4] sm:$0xf]
  %v6321 = vld [vmem:[%s6318 + $0x8] sm:$0xf]
  %v6322 = vld [vmem:[%s6318 + $0xc] sm:$0xf]
  %v6323 = vld [vmem:[%s6318 + $0x10] sm:$0xf]
  %v6324 = vld [vmem:[%s6318 + $0x14] sm:$0xf]
  %v6325 = vld [vmem:[%s6318 + $0x18] sm:$0xf]
  %v6326 = vld [vmem:[%s6318 + $0x1c] sm:$0xf]
  %v6327 = vld [vmem:[%s6318 + $0x20] sm:$0xf]
  %v6328 = vld [vmem:[%s6318 + $0x24] sm:$0xf]
  %v6329 = vld [vmem:[%s6318 + $0x28] sm:$0xf]
  %v6330 = vld [vmem:[%s6318 + $0x2c] sm:$0xf]
  %v6331 = vld [vmem:[%s6318 + $0x30] sm:$0xf]
  %v6332 = vld [vmem:[%s6318 + $0x34] sm:$0xf]
  %v6333 = vld [vmem:[%s6318 + $0x38] sm:$0xf]
  %v6334 = vld [vmem:[%s6318 + $0x3c] sm:$0xf]
  %v6335 = vpack.c.bf16 %v6303, %v6302
  %v6336 = vpack.c.bf16 %v6305, %v6304
  %v6337 = vpack.c.bf16 %v6307, %v6306
  %v6338 = vpack.c.bf16 %v6309, %v6308
  %v6339 = vpack.c.bf16 %v6311, %v6310
  %v6340 = vpack.c.bf16 %v6313, %v6312
  %v6341 = vpack.c.bf16 %v6315, %v6314
  %v6342 = vpack.c.bf16 %v6317, %v6316
  %v6359 = vunpack.c.l.b16 %v6319
  %v6360 = vunpack.c.l.b16 %v6320
  %v6361 = vunpack.c.l.b16 %v6321
  %v6362 = vunpack.c.l.b16 %v6322
  %v6363 = vunpack.c.l.b16 %v6323
  %v6364 = vunpack.c.l.b16 %v6324
  %v6365 = vunpack.c.l.b16 %v6325
  %v6366 = vunpack.c.l.b16 %v6326
  %v6367 = vunpack.c.l.b16 %v6327
  %v6368 = vunpack.c.l.b16 %v6328
  %v6369 = vunpack.c.l.b16 %v6329
  %v6370 = vunpack.c.l.b16 %v6330
  %v6371 = vunpack.c.l.b16 %v6331
  %v6372 = vunpack.c.l.b16 %v6332
  %v6373 = vunpack.c.l.b16 %v6333
  %v6374 = vunpack.c.l.b16 %v6334
  %v6375 = vpack.c.b16 %v6360, %v6359
  %v6376 = vpack.c.b16 %v6362, %v6361
  %v6377 = vpack.c.b16 %v6364, %v6363
  %v6378 = vpack.c.b16 %v6366, %v6365
  %v6379 = vpack.c.b16 %v6368, %v6367
  %v6380 = vpack.c.b16 %v6370, %v6369
  %v6381 = vpack.c.b16 %v6372, %v6371
  %v6382 = vpack.c.b16 %v6374, %v6373
  %6391 = vmatpush.bf16.msra.mxu0 %v6342
  %6392 = vmatpush.bf16.msra.mxu0 %v6341
  %6393 = vmatpush.bf16.msra.mxu0 %v6340
  %6394 = vmatpush.bf16.msra.mxu0 %v6339
  %6395 = vmatpush.bf16.msra.mxu0 %v6338
  %6396 = vmatpush.bf16.msra.mxu0 %v6337
  %6397 = vmatpush.bf16.msra.mxu0 %v6336
  %6398 = vmatpush.bf16.msra.mxu0 %v6335
  %6399 = vmatmul.bf16.gmra.mxu0 %v6375
  %v6400 = vpop.f32.mrf.mxu0
  %v6401 = vadd.f32 0.0, %v6400
  %v6402 = vpop.f32.mrf.mxu0
  %v6403 = vadd.f32 0.0, %v6402
  %6404 = vmatmul.bf16.gmra.mxu0 %v6376
  %v6405 = vpop.f32.mrf.mxu0
  %v6406 = vadd.f32 0.0, %v6405
  %v6407 = vpop.f32.mrf.mxu0
  %v6408 = vadd.f32 0.0, %v6407
  %6409 = vmatmul.bf16.gmra.mxu0 %v6377
  %v6410 = vpop.f32.mrf.mxu0
  %v6411 = vadd.f32 0.0, %v6410
  %v6412 = vpop.f32.mrf.mxu0
  %v6413 = vadd.f32 0.0, %v6412
  %6414 = vmatmul.bf16.gmra.mxu0 %v6378
  %v6415 = vpop.f32.mrf.mxu0
  %v6416 = vadd.f32 0.0, %v6415
  %v6417 = vpop.f32.mrf.mxu0
  %v6418 = vadd.f32 0.0, %v6417
  %6419 = vmatmul.bf16.gmra.mxu0 %v6379
  %v6420 = vpop.f32.mrf.mxu0
  %v6421 = vadd.f32 0.0, %v6420
  %v6422 = vpop.f32.mrf.mxu0
  %v6423 = vadd.f32 0.0, %v6422
  %6424 = vmatmul.bf16.gmra.mxu0 %v6380
  %v6425 = vpop.f32.mrf.mxu0
  %v6426 = vadd.f32 0.0, %v6425
  %v6427 = vpop.f32.mrf.mxu0
  %v6428 = vadd.f32 0.0, %v6427
  %6429 = vmatmul.bf16.gmra.mxu0 %v6381
  %v6430 = vpop.f32.mrf.mxu0
  %v6431 = vadd.f32 0.0, %v6430
  %v6432 = vpop.f32.mrf.mxu0
  %v6433 = vadd.f32 0.0, %v6432
  %6434 = vmatmul.bf16.gmra.mxu0 %v6382
  %v6435 = vpop.f32.mrf.mxu0
  %v6436 = vadd.f32 0.0, %v6435
  %v6437 = vpop.f32.mrf.mxu0
  %v6438 = vadd.f32 0.0, %v6437
  %6439 = vdwg.mxu0
  %v6440 = vadd.f32 %v6228, %v6401
  %v6441 = vadd.f32 %v6229, %v6403
  %v6442 = vadd.f32 %v6230, %v6406
  %v6443 = vadd.f32 %v6231, %v6408
  %v6444 = vadd.f32 %v6232, %v6411
  %v6445 = vadd.f32 %v6233, %v6413
  %v6446 = vadd.f32 %v6234, %v6416
  %v6447 = vadd.f32 %v6235, %v6418
  %v6448 = vadd.f32 %v6236, %v6421
  %v6449 = vadd.f32 %v6237, %v6423
  %v6450 = vadd.f32 %v6238, %v6426
  %v6451 = vadd.f32 %v6239, %v6428
  %v6452 = vadd.f32 %v6240, %v6431
  %v6453 = vadd.f32 %v6241, %v6433
  %v6454 = vadd.f32 %v6242, %v6436
  %v6455 = vadd.f32 %v6243, %v6438
  %v6456 = vld [vmem:[%s4] sm:$0xff]
  %v6457 = vld [vmem:[%s4 + $0x8] sm:$0xff]
  %v6458 = vld [vmem:[%s4 + $0x10] sm:$0xff]
  %v6459 = vld [vmem:[%s4 + $0x18] sm:$0xff]
  %v6460 = vld [vmem:[%s4 + $0x20] sm:$0xff]
  %v6461 = vld [vmem:[%s4 + $0x28] sm:$0xff]
  %v6462 = vld [vmem:[%s4 + $0x30] sm:$0xff]
  %v6463 = vld [vmem:[%s4 + $0x38] sm:$0xff]
  %v6464 = vld [vmem:[%s4 + $0x40] sm:$0xff]
  %v6465 = vld [vmem:[%s4 + $0x48] sm:$0xff]
  %v6466 = vld [vmem:[%s4 + $0x50] sm:$0xff]
  %v6467 = vld [vmem:[%s4 + $0x58] sm:$0xff]
  %v6468 = vld [vmem:[%s4 + $0x60] sm:$0xff]
  %v6469 = vld [vmem:[%s4 + $0x68] sm:$0xff]
  %v6470 = vld [vmem:[%s4 + $0x70] sm:$0xff]
  %v6471 = vld [vmem:[%s4 + $0x78] sm:$0xff]
  %v6472 = vadd.f32 %v6440, %v6456
  %v6473 = vadd.f32 %v6441, %v6457
  %v6474 = vadd.f32 %v6442, %v6458
  %v6475 = vadd.f32 %v6443, %v6459
  %v6476 = vadd.f32 %v6444, %v6460
  %v6477 = vadd.f32 %v6445, %v6461
  %v6478 = vadd.f32 %v6446, %v6462
  %v6479 = vadd.f32 %v6447, %v6463
  %v6480 = vadd.f32 %v6448, %v6464
  %v6481 = vadd.f32 %v6449, %v6465
  %v6482 = vadd.f32 %v6450, %v6466
  %v6483 = vadd.f32 %v6451, %v6467
  %v6484 = vadd.f32 %v6452, %v6468
  %v6485 = vadd.f32 %v6453, %v6469
  %v6486 = vadd.f32 %v6454, %v6470
  %v6487 = vadd.f32 %v6455, %v6471
  %v6488 = vmax.f32 %v6472, 0.0
  %v6489 = vmax.f32 %v6473, 0.0
  %v6490 = vmax.f32 %v6474, 0.0
  %v6491 = vmax.f32 %v6475, 0.0
  %v6492 = vmax.f32 %v6476, 0.0
  %v6493 = vmax.f32 %v6477, 0.0
  %v6494 = vmax.f32 %v6478, 0.0
  %v6495 = vmax.f32 %v6479, 0.0
  %v6496 = vmax.f32 %v6480, 0.0
  %v6497 = vmax.f32 %v6481, 0.0
  %v6498 = vmax.f32 %v6482, 0.0
  %v6499 = vmax.f32 %v6483, 0.0
  %v6500 = vmax.f32 %v6484, 0.0
  %v6501 = vmax.f32 %v6485, 0.0
  %v6502 = vmax.f32 %v6486, 0.0
  %v6503 = vmax.f32 %v6487, 0.0
  %v6504 = vld [vmem:[%s5] sm:$0xf]
  %v6505 = vld [vmem:[%s5 + $0x4] sm:$0xf]
  %v6506 = vld [vmem:[%s5 + $0x8] sm:$0xf]
  %v6507 = vld [vmem:[%s5 + $0xc] sm:$0xf]
  %v6508 = vld [vmem:[%s5 + $0x10] sm:$0xf]
  %v6509 = vld [vmem:[%s5 + $0x14] sm:$0xf]
  %v6510 = vld [vmem:[%s5 + $0x18] sm:$0xf]
  %v6511 = vld [vmem:[%s5 + $0x1c] sm:$0xf]
  %v6512 = vld [vmem:[%s5 + $0x20] sm:$0xf]
  %v6513 = vld [vmem:[%s5 + $0x24] sm:$0xf]
  %v6514 = vld [vmem:[%s5 + $0x28] sm:$0xf]
  %v6515 = vld [vmem:[%s5 + $0x2c] sm:$0xf]
  %v6516 = vld [vmem:[%s5 + $0x30] sm:$0xf]
  %v6517 = vld [vmem:[%s5 + $0x34] sm:$0xf]
  %v6518 = vld [vmem:[%s5 + $0x38] sm:$0xf]
  %v6519 = vld [vmem:[%s5 + $0x3c] sm:$0xf]
  %v6520 = vpack.c.bf16 %v6489, %v6488
  %v6521 = vpack.c.bf16 %v6491, %v6490
  %v6522 = vpack.c.bf16 %v6493, %v6492
  %v6523 = vpack.c.bf16 %v6495, %v6494
  %v6524 = vpack.c.bf16 %v6497, %v6496
  %v6525 = vpack.c.bf16 %v6499, %v6498
  %v6526 = vpack.c.bf16 %v6501, %v6500
  %v6527 = vpack.c.bf16 %v6503, %v6502
  %v6528 = vld [vmem:[%s6] sm:$0xff]
  %v6529 = vld [vmem:[%s6 + $0x8] sm:$0xff]
  %v6530 = vld [vmem:[%s6 + $0x10] sm:$0xff]
  %v6531 = vld [vmem:[%s6 + $0x18] sm:$0xff]
  %v6532 = vld [vmem:[%s6 + $0x20] sm:$0xff]
  %v6533 = vld [vmem:[%s6 + $0x28] sm:$0xff]
  %v6534 = vld [vmem:[%s6 + $0x30] sm:$0xff]
  %v6535 = vld [vmem:[%s6 + $0x38] sm:$0xff]
  %v6536 = vld [vmem:[%s6 + $0x40] sm:$0xff]
  %v6537 = vld [vmem:[%s6 + $0x48] sm:$0xff]
  %v6538 = vld [vmem:[%s6 + $0x50] sm:$0xff]
  %v6539 = vld [vmem:[%s6 + $0x58] sm:$0xff]
  %v6540 = vld [vmem:[%s6 + $0x60] sm:$0xff]
  %v6541 = vld [vmem:[%s6 + $0x68] sm:$0xff]
  %v6542 = vld [vmem:[%s6 + $0x70] sm:$0xff]
  %v6543 = vld [vmem:[%s6 + $0x78] sm:$0xff]
  %v6560 = vunpack.c.l.b16 %v6504
  %v6561 = vunpack.c.l.b16 %v6505
  %v6562 = vunpack.c.l.b16 %v6506
  %v6563 = vunpack.c.l.b16 %v6507
  %v6564 = vunpack.c.l.b16 %v6508
  %v6565 = vunpack.c.l.b16 %v6509
  %v6566 = vunpack.c.l.b16 %v6510
  %v6567 = vunpack.c.l.b16 %v6511
  %v6568 = vunpack.c.l.b16 %v6512
  %v6569 = vunpack.c.l.b16 %v6513
  %v6570 = vunpack.c.l.b16 %v6514
  %v6571 = vunpack.c.l.b16 %v6515
  %v6572 = vunpack.c.l.b16 %v6516
  %v6573 = vunpack.c.l.b16 %v6517
  %v6574 = vunpack.c.l.b16 %v6518
  %v6575 = vunpack.c.l.b16 %v6519
  %v6576 = vpack.c.b16 %v6561, %v6560
  %v6577 = vpack.c.b16 %v6563, %v6562
  %v6578 = vpack.c.b16 %v6565, %v6564
  %v6579 = vpack.c.b16 %v6567, %v6566
  %v6580 = vpack.c.b16 %v6569, %v6568
  %v6581 = vpack.c.b16 %v6571, %v6570
  %v6582 = vpack.c.b16 %v6573, %v6572
  %v6583 = vpack.c.b16 %v6575, %v6574
  %6592 = vmatpush.bf16.msra.mxu0 %v6527
  %6593 = vmatpush.bf16.msra.mxu0 %v6526
  %6594 = vmatpush.bf16.msra.mxu0 %v6525
  %6595 = vmatpush.bf16.msra.mxu0 %v6524
  %6596 = vmatpush.bf16.msra.mxu0 %v6523
  %6597 = vmatpush.bf16.msra.mxu0 %v6522
  %6598 = vmatpush.bf16.msra.mxu0 %v6521
  %6599 = vmatpush.bf16.msra.mxu0 %v6520
  %6600 = vmatmul.bf16.gmra.mxu0 %v6576
  %v6601 = vpop.f32.mrf.mxu0
  %v6602 = vadd.f32 %v6528, %v6601
  %v6603 = vpop.f32.mrf.mxu0
  %v6604 = vadd.f32 %v6529, %v6603
  %6605 = vmatmul.bf16.gmra.mxu0 %v6577
  %v6606 = vpop.f32.mrf.mxu0
  %v6607 = vadd.f32 %v6530, %v6606
  %v6608 = vpop.f32.mrf.mxu0
  %v6609 = vadd.f32 %v6531, %v6608
  %6610 = vmatmul.bf16.gmra.mxu0 %v6578
  %v6611 = vpop.f32.mrf.mxu0
  %v6612 = vadd.f32 %v6532, %v6611
  %v6613 = vpop.f32.mrf.mxu0
  %v6614 = vadd.f32 %v6533, %v6613
  %6615 = vmatmul.bf16.gmra.mxu0 %v6579
  %v6616 = vpop.f32.mrf.mxu0
  %v6617 = vadd.f32 %v6534, %v6616
  %v6618 = vpop.f32.mrf.mxu0
  %v6619 = vadd.f32 %v6535, %v6618
  %6620 = vmatmul.bf16.gmra.mxu0 %v6580
  %v6621 = vpop.f32.mrf.mxu0
  %v6622 = vadd.f32 %v6536, %v6621
  %v6623 = vpop.f32.mrf.mxu0
  %v6624 = vadd.f32 %v6537, %v6623
  %6625 = vmatmul.bf16.gmra.mxu0 %v6581
  %v6626 = vpop.f32.mrf.mxu0
  %v6627 = vadd.f32 %v6538, %v6626
  %v6628 = vpop.f32.mrf.mxu0
  %v6629 = vadd.f32 %v6539, %v6628
  %6630 = vmatmul.bf16.gmra.mxu0 %v6582
  %v6631 = vpop.f32.mrf.mxu0
  %v6632 = vadd.f32 %v6540, %v6631
  %v6633 = vpop.f32.mrf.mxu0
  %v6634 = vadd.f32 %v6541, %v6633
  %6635 = vmatmul.bf16.gmra.mxu0 %v6583
  %v6636 = vpop.f32.mrf.mxu0
  %v6637 = vadd.f32 %v6542, %v6636
  %v6638 = vpop.f32.mrf.mxu0
  %v6639 = vadd.f32 %v6543, %v6638
  %6640 = vdwg.mxu0
  %v6641 = vmax.f32 %v6602, 0.0
  %v6642 = vmax.f32 %v6604, 0.0
  %v6643 = vmax.f32 %v6607, 0.0
  %v6644 = vmax.f32 %v6609, 0.0
  %v6645 = vmax.f32 %v6612, 0.0
  %v6646 = vmax.f32 %v6614, 0.0
  %v6647 = vmax.f32 %v6617, 0.0
  %v6648 = vmax.f32 %v6619, 0.0
  %v6649 = vmax.f32 %v6622, 0.0
  %v6650 = vmax.f32 %v6624, 0.0
  %v6651 = vmax.f32 %v6627, 0.0
  %v6652 = vmax.f32 %v6629, 0.0
  %v6653 = vmax.f32 %v6632, 0.0
  %v6654 = vmax.f32 %v6634, 0.0
  %v6655 = vmax.f32 %v6637, 0.0
  %v6656 = vmax.f32 %v6639, 0.0
  %v6657 = vld [vmem:[%s7] sm:$0xf]
  %v6658 = vld [vmem:[%s7 + $0x4] sm:$0xf]
  %v6659 = vld [vmem:[%s7 + $0x8] sm:$0xf]
  %v6660 = vld [vmem:[%s7 + $0xc] sm:$0xf]
  %v6661 = vld [vmem:[%s7 + $0x10] sm:$0xf]
  %v6662 = vld [vmem:[%s7 + $0x14] sm:$0xf]
  %v6663 = vld [vmem:[%s7 + $0x18] sm:$0xf]
  %v6664 = vld [vmem:[%s7 + $0x1c] sm:$0xf]
  %v6665 = vld [vmem:[%s7 + $0x20] sm:$0xf]
  %v6666 = vld [vmem:[%s7 + $0x24] sm:$0xf]
  %v6667 = vld [vmem:[%s7 + $0x28] sm:$0xf]
  %v6668 = vld [vmem:[%s7 + $0x2c] sm:$0xf]
  %v6669 = vld [vmem:[%s7 + $0x30] sm:$0xf]
  %v6670 = vld [vmem:[%s7 + $0x34] sm:$0xf]
  %v6671 = vld [vmem:[%s7 + $0x38] sm:$0xf]
  %v6672 = vld [vmem:[%s7 + $0x3c] sm:$0xf]
  %v6673 = vpack.c.bf16 %v6642, %v6641
  %v6674 = vpack.c.bf16 %v6644, %v6643
  %v6675 = vpack.c.bf16 %v6646, %v6645
  %v6676 = vpack.c.bf16 %v6648, %v6647
  %v6677 = vpack.c.bf16 %v6650, %v6649
  %v6678 = vpack.c.bf16 %v6652, %v6651
  %v6679 = vpack.c.bf16 %v6654, %v6653
  %v6680 = vpack.c.bf16 %v6656, %v6655
  %v6681 = vld [vmem:[%s8] sm:$0xff]
  %v6682 = vld [vmem:[%s8 + $0x8] sm:$0xff]
  %v6683 = vld [vmem:[%s8 + $0x10] sm:$0xff]
  %v6684 = vld [vmem:[%s8 + $0x18] sm:$0xff]
  %v6685 = vld [vmem:[%s8 + $0x20] sm:$0xff]
  %v6686 = vld [vmem:[%s8 + $0x28] sm:$0xff]
  %v6687 = vld [vmem:[%s8 + $0x30] sm:$0xff]
  %v6688 = vld [vmem:[%s8 + $0x38] sm:$0xff]
  %v6689 = vld [vmem:[%s8 + $0x40] sm:$0xff]
  %v6690 = vld [vmem:[%s8 + $0x48] sm:$0xff]
  %v6691 = vld [vmem:[%s8 + $0x50] sm:$0xff]
  %v6692 = vld [vmem:[%s8 + $0x58] sm:$0xff]
  %v6693 = vld [vmem:[%s8 + $0x60] sm:$0xff]
  %v6694 = vld [vmem:[%s8 + $0x68] sm:$0xff]
  %v6695 = vld [vmem:[%s8 + $0x70] sm:$0xff]
  %v6696 = vld [vmem:[%s8 + $0x78] sm:$0xff]
  %v6713 = vunpack.c.l.b16 %v6657
  %v6714 = vunpack.c.l.b16 %v6658
  %v6715 = vunpack.c.l.b16 %v6659
  %v6716 = vunpack.c.l.b16 %v6660
  %v6717 = vunpack.c.l.b16 %v6661
  %v6718 = vunpack.c.l.b16 %v6662
  %v6719 = vunpack.c.l.b16 %v6663
  %v6720 = vunpack.c.l.b16 %v6664
  %v6721 = vunpack.c.l.b16 %v6665
  %v6722 = vunpack.c.l.b16 %v6666
  %v6723 = vunpack.c.l.b16 %v6667
  %v6724 = vunpack.c.l.b16 %v6668
  %v6725 = vunpack.c.l.b16 %v6669
  %v6726 = vunpack.c.l.b16 %v6670
  %v6727 = vunpack.c.l.b16 %v6671
  %v6728 = vunpack.c.l.b16 %v6672
  %v6729 = vpack.c.b16 %v6714, %v6713
  %v6730 = vpack.c.b16 %v6716, %v6715
  %v6731 = vpack.c.b16 %v6718, %v6717
  %v6732 = vpack.c.b16 %v6720, %v6719
  %v6733 = vpack.c.b16 %v6722, %v6721
  %v6734 = vpack.c.b16 %v6724, %v6723
  %v6735 = vpack.c.b16 %v6726, %v6725
  %v6736 = vpack.c.b16 %v6728, %v6727
  %6745 = vmatpush.bf16.msra.mxu0 %v6680
  %6746 = vmatpush.bf16.msra.mxu0 %v6679
  %6747 = vmatpush.bf16.msra.mxu0 %v6678
  %6748 = vmatpush.bf16.msra.mxu0 %v6677
  %6749 = vmatpush.bf16.msra.mxu0 %v6676
  %6750 = vmatpush.bf16.msra.mxu0 %v6675
  %6751 = vmatpush.bf16.msra.mxu0 %v6674
  %6752 = vmatpush.bf16.msra.mxu0 %v6673
  %6753 = vmatmul.bf16.gmra.mxu0 %v6729
  %v6754 = vpop.f32.mrf.mxu0
  %v6755 = vadd.f32 %v6681, %v6754
  %v6756 = vpop.f32.mrf.mxu0
  %v6757 = vadd.f32 %v6682, %v6756
  %6758 = vmatmul.bf16.gmra.mxu0 %v6730
  %v6759 = vpop.f32.mrf.mxu0
  %v6760 = vadd.f32 %v6683, %v6759
  %v6761 = vpop.f32.mrf.mxu0
  %v6762 = vadd.f32 %v6684, %v6761
  %6763 = vmatmul.bf16.gmra.mxu0 %v6731
  %v6764 = vpop.f32.mrf.mxu0
  %v6765 = vadd.f32 %v6685, %v6764
  %v6766 = vpop.f32.mrf.mxu0
  %v6767 = vadd.f32 %v6686, %v6766
  %6768 = vmatmul.bf16.gmra.mxu0 %v6732
  %v6769 = vpop.f32.mrf.mxu0
  %v6770 = vadd.f32 %v6687, %v6769
  %v6771 = vpop.f32.mrf.mxu0
  %v6772 = vadd.f32 %v6688, %v6771
  %6773 = vmatmul.bf16.gmra.mxu0 %v6733
  %v6774 = vpop.f32.mrf.mxu0
  %v6775 = vadd.f32 %v6689, %v6774
  %v6776 = vpop.f32.mrf.mxu0
  %v6777 = vadd.f32 %v6690, %v6776
  %6778 = vmatmul.bf16.gmra.mxu0 %v6734
  %v6779 = vpop.f32.mrf.mxu0
  %v6780 = vadd.f32 %v6691, %v6779
  %v6781 = vpop.f32.mrf.mxu0
  %v6782 = vadd.f32 %v6692, %v6781
  %6783 = vmatmul.bf16.gmra.mxu0 %v6735
  %v6784 = vpop.f32.mrf.mxu0
  %v6785 = vadd.f32 %v6693, %v6784
  %v6786 = vpop.f32.mrf.mxu0
  %v6787 = vadd.f32 %v6694, %v6786
  %6788 = vmatmul.bf16.gmra.mxu0 %v6736
  %v6789 = vpop.f32.mrf.mxu0
  %v6790 = vadd.f32 %v6695, %v6789
  %v6791 = vpop.f32.mrf.mxu0
  %v6792 = vadd.f32 %v6696, %v6791
  %6793 = vdwg.mxu0
  %vm6794 = vcmask 7168
  %6795 = vst.msk [vmem:[%s9] sm:$0xff] %vm6794, %v6755
  %6796 = vst.msk [vmem:[%s9 + $0x8] sm:$0xff] %vm6794, %v6757
  %6797 = vst.msk [vmem:[%s9 + $0x10] sm:$0xff] %vm6794, %v6760
  %6798 = vst.msk [vmem:[%s9 + $0x18] sm:$0xff] %vm6794, %v6762
  %6799 = vst.msk [vmem:[%s9 + $0x20] sm:$0xff] %vm6794, %v6765
  %6800 = vst.msk [vmem:[%s9 + $0x28] sm:$0xff] %vm6794, %v6767
  %6801 = vst.msk [vmem:[%s9 + $0x30] sm:$0xff] %vm6794, %v6770
  %6802 = vst.msk [vmem:[%s9 + $0x38] sm:$0xff] %vm6794, %v6772
  %6803 = vst.msk [vmem:[%s9 + $0x40] sm:$0xff] %vm6794, %v6775
  %6804 = vst.msk [vmem:[%s9 + $0x48] sm:$0xff] %vm6794, %v6777
  %6805 = vst.msk [vmem:[%s9 + $0x50] sm:$0xff] %vm6794, %v6780
  %6806 = vst.msk [vmem:[%s9 + $0x58] sm:$0xff] %vm6794, %v6782
  %6807 = vst.msk [vmem:[%s9 + $0x60] sm:$0xff] %vm6794, %v6785
  %6808 = vst.msk [vmem:[%s9 + $0x68] sm:$0xff] %vm6794, %v6787
  %6809 = vst.msk [vmem:[%s9 + $0x70] sm:$0xff] %vm6794, %v6790
  %6810 = vst.msk [vmem:[%s9 + $0x78] sm:$0xff] %vm6794, %v6792
  // Predicated region
  $region38: #{dqn_forward.1} parent=0 // pred_check
    _
  $region39: #{dqn_forward.1} parent=0 // pred_check_branch
    %6812 = sbr.rel (0) target = $region41
  $region40: #{dqn_forward.1} parent=0 // pred_region
    _
  $region41: #{dqn_forward.1} parent=0 // pred_fallthru
    _
  // Predicated region
  $region42: #{dqn_forward.1} parent=0 // pred_check
    _
  $region43: #{dqn_forward.1} parent=0 // pred_check_branch
    %6814 = sbr.rel (0) target = $region45
  $region44: #{dqn_forward.1} parent=0 // pred_region
    _
  $region45: #{dqn_forward.1} parent=0 // pred_fallthru
    _

</llo_original>
